<compile_context>
chip_gen: v7x
topology: tpu7x:2x2x1
jax: 0.10.0
libtpu: 0.0.40
codegen_flags: <defaults>
</compile_context>

<pallas_src>
import jax
import jax.numpy as jnp
from jax import lax
from jax.experimental import pallas as pl
from jax.experimental.pallas import tpu as pltpu


# ----------------------------------------------------------------------------
# Kernel 1: KxK conv (stride 1) via in-VMEM im2col + single bf16 matmul,
#           plus per-image per-channel (sum, sumsq) stats.
# ----------------------------------------------------------------------------
def _make_conv_stats_kernel(KH, KW, pad, H, W, Ho, Wo, Cin, Cout, needs_im2col):
    def kernel(x_ref, w_ref, out_ref, stats_ref, *scratch):
        if needs_im2col:
            xpad_ref, patch_ref = scratch
            # Pad the image inside VMEM (avoids a jnp.pad HBM round trip).
            if pad > 0:
                xpad_ref[...] = jnp.zeros_like(xpad_ref)
                xpad_ref[pad:pad + H, pad:pad + W, :] = x_ref[0]
            else:
                xpad_ref[...] = x_ref[0]
            # im2col: (Ho*Wo, KH*KW*Cin) slab -> one matmul with K = KH*KW*Cin.
            for ky in range(KH):
                for kx in range(KW):
                    idx = ky * KW + kx
                    tap = xpad_ref[ky:ky + Ho, kx:kx + Wo, :]       # (Ho,Wo,Cin)
                    patch_ref[:, idx * Cin:(idx + 1) * Cin] = (
                        tap.reshape(Ho * Wo, Cin))
            patch = patch_ref[...]
        else:  # 1x1 conv, no padding
            patch = x_ref[0].reshape(Ho * Wo, Cin)

        acc = jnp.dot(patch, w_ref[...],
                      preferred_element_type=jnp.float32)           # (Ho*Wo,Cout) f32
        out_ref[...] = acc.reshape(1, Ho, Wo, Cout)
        stats_ref[...] = jnp.stack(
            [jnp.sum(acc, axis=0), jnp.sum(acc * acc, axis=0)],
            axis=0).reshape(1, 2, Cout)

    return kernel


def conv_with_stats(x_nhwc_bf16, w_kkio, pad):
    """stride-1 conv (NHWC, bf16 inputs, f32 out) + per-image (sum,sumsq)."""
    N, H, W, Cin = x_nhwc_bf16.shape
    KH, KW, _, Cout = w_kkio.shape
    Ho = H + 2 * pad - KH + 1
    Wo = W + 2 * pad - KW + 1
    K2 = KH * KW
    w2 = w_kkio.reshape(K2 * Cin, Cout).astype(jnp.bfloat16)

    needs_im2col = not (KH == 1 and KW == 1 and pad == 0)
    scratch_shapes = []
    if needs_im2col:
        scratch_shapes = [
            pltpu.VMEM((H + 2 * pad, W + 2 * pad, Cin), jnp.bfloat16),
            pltpu.VMEM((Ho * Wo, K2 * Cin), jnp.bfloat16),
        ]

    out, stats = pl.pallas_call(
        _make_conv_stats_kernel(KH, KW, pad, H, W, Ho, Wo, Cin, Cout,
                                needs_im2col),
        out_shape=(
            jax.ShapeDtypeStruct((N, Ho, Wo, Cout), jnp.float32),
            jax.ShapeDtypeStruct((N, 2, Cout), jnp.float32),
        ),
        grid_spec=pltpu.PrefetchScalarGridSpec(
            num_scalar_prefetch=0,
            grid=(N,),
            in_specs=[
                pl.BlockSpec((1, H, W, Cin), lambda n: (n, 0, 0, 0)),
                pl.BlockSpec((K2 * Cin, Cout), lambda n: (0, 0)),
            ],
            out_specs=[
                pl.BlockSpec((1, Ho, Wo, Cout), lambda n: (n, 0, 0, 0)),
                pl.BlockSpec((1, 2, Cout), lambda n: (n, 0, 0)),
            ],
            scratch_shapes=scratch_shapes,
        ),
        compiler_params=pltpu.CompilerParams(
            dimension_semantics=("parallel",)),
    )(x_nhwc_bf16, w2)
    return out, stats


# ----------------------------------------------------------------------------
# Kernel 2: lane-dense per-channel affine (folded BN) + ReLU, with optional
#           fused residual (plain, or match-branch conv output + its BN).
# ----------------------------------------------------------------------------
def _make_affine_kernel(mode):
    if mode == "plain":            # relu(x*s + b)
        def kernel(x_ref, s_ref, b_ref, o_ref):
            y = x_ref[...] * s_ref[...] + b_ref[...]
            o_ref[...] = jnp.maximum(y, 0.0).astype(o_ref.dtype)
    elif mode == "res":            # relu(x*s + b + r)
        def kernel(x_ref, s_ref, b_ref, r_ref, o_ref):
            y = (x_ref[...] * s_ref[...] + b_ref[...]
                 + r_ref[...].astype(jnp.float32))
            o_ref[...] = jnp.maximum(y, 0.0).astype(o_ref.dtype)
    else:                          # "res_affine": relu(x*s + b + m*sm + bm)
        def kernel(x_ref, s_ref, b_ref, m_ref, sm_ref, bm_ref, o_ref):
            y = (x_ref[...] * s_ref[...] + b_ref[...]
                 + m_ref[...] * sm_ref[...] + bm_ref[...])
            o_ref[...] = jnp.maximum(y, 0.0).astype(o_ref.dtype)
    return kernel


def _row_tile(rows, lane_bytes, target_bytes=1 << 20):
    """Largest row-tile (mult of 8, or full extent) dividing rows, ~<=1MiB."""
    max_t = max(1, min(rows, target_bytes // max(lane_bytes, 1)))
    for t in range(max_t, 0, -1):
        if rows % t == 0 and (t % 8 == 0 or t == rows):
            return t
    return rows


def _affine_apply(mode, x2d, scale, bias, extra, W, out_dtype):
    rows, L = x2d.shape
    TR = _row_tile(rows, L * 4)

    def tile_c(v):  # per-channel vec -> per (w,c) lane vector of length W*C
        return jnp.tile(v.astype(jnp.float32), W).reshape(1, L)

    row_spec = pl.BlockSpec((TR, L), lambda r: (r, 0))
    vec_spec = pl.BlockSpec((1, L), lambda r: (0, 0))

    in_arrays = [x2d, tile_c(scale), tile_c(bias)]
    in_specs = [row_spec, vec_spec, vec_spec]
    if mode == "res":
        (r2d,) = extra
        in_arrays.append(r2d)
        in_specs.append(row_spec)
    elif mode == "res_affine":
        m2d, sm, bm = extra
        in_arrays += [m2d, tile_c(sm), tile_c(bm)]
        in_specs += [row_spec, vec_spec, vec_spec]

    return pl.pallas_call(
        _make_affine_kernel(mode),
        out_shape=jax.ShapeDtypeStruct((rows, L), out_dtype),
        grid_spec=pltpu.PrefetchScalarGridSpec(
            num_scalar_prefetch=0,
            grid=(rows // TR,),
            in_specs=in_specs,
            out_specs=pl.BlockSpec((TR, L), lambda r: (r, 0)),
        ),
        compiler_params=pltpu.CompilerParams(
            dimension_semantics=("parallel",)),
    )(*in_arrays)


def _bn_fold(stats, gamma, beta, count, eps):
    """Reduce per-image (N,2,C) stats and fold BN into (scale, bias)."""
    s = jnp.sum(stats, axis=0)                                   # (2, C)
    mean = s[0] / count
    var = jnp.maximum(s[1] / count - mean * mean, 0.0)           # clamp >= 0
    scale = gamma * lax.rsqrt(var + eps)
    bias = beta - mean * scale
    return scale, bias


# ----------------------------------------------------------------------------
# BasicBlock forward (Pallas)
# ----------------------------------------------------------------------------
def basic_block_forward(x_nchw, params, *, eps=1e-5):
    x = jnp.transpose(x_nchw, (0, 2, 3, 1)).astype(jnp.float32)   # NCHW->NHWC
    N, H, W, Cin = x.shape
    Cout = params["g1"].shape[0]
    count = N * H * W
    xb = x.astype(jnp.bfloat16)                                   # MXU inputs

    # out = relu(bn1(conv1(x)))   (result stored bf16, feeds conv2)
    o1, s1 = conv_with_stats(xb, params["w1"], pad=1)
    sc1, bi1 = _bn_fold(s1, params["g1"], params["b1"], count, eps)
    a1 = _affine_apply("plain", o1.reshape(N * H, W * Cout), sc1, bi1,
                       (), W, jnp.bfloat16)
    a1 = a1.reshape(N, H, W, Cout)

    # bn2(conv2(out))
    o2, s2 = conv_with_stats(a1, params["w2"], pad=1)
    sc2, bi2 = _bn_fold(s2, params["g2"], params["b2"], count, eps)

    if params["match"] is not None:
        # residual = bn_m(conv1x1_m(x)), fused into the final affine kernel
        wm, gm, bm = params["match"]
        mo, sm = conv_with_stats(xb, wm, pad=0)
        scm, bim = _bn_fold(sm, gm, bm, count, eps)
        out2d = _affine_apply(
            "res_affine", o2.reshape(N * H, W * Cout), sc2, bi2,
            (mo.reshape(N * H, W * Cout), scm, bim), W, jnp.float32)
    else:
        assert Cin == Cout, "identity residual requires in_planes == out_planes"
        out2d = _affine_apply(
            "res", o2.reshape(N * H, W * Cout), sc2, bi2,
            (x.reshape(N * H, W * Cin),), W, jnp.float32)

    out = out2d.reshape(N, H, W, Cout)
    return jnp.transpose(out, (0, 3, 1, 2))                       # NHWC->NCHW


# ----------------------------------------------------------------------------
# Pure-JAX f32 reference (mirrors the PyTorch module, train-mode BN)
# ----------------------------------------------------------------------------
def _ref_forward(x, p_oihw):
    def conv(x, w, pad):
        return lax.conv_general_dilated(
            x, w, (1, 1), ((pad, pad), (pad, pad)),
            dimension_numbers=("NCHW", "OIHW", "NCHW"))

    def bn(x, g, b, eps=1e-5):
        mean = x.mean(axis=(0, 2, 3), keepdims=True)
        var = x.var(axis=(0, 2, 3), keepdims=True)
        return (x - mean) * lax.rsqrt(var + eps) * g.reshape(1, -1, 1, 1) \
            + b.reshape(1, -1, 1, 1)

    wm, gm, bm = p_oihw["match"]
    residual = bn(conv(x, wm, 0), gm, bm)
    out = jax.nn.relu(bn(conv(x, p_oihw["w1"], 1), p_oihw["g1"], p_oihw["b1"]))
    out = bn(conv(out, p_oihw["w2"], 1), p_oihw["g2"], p_oihw["b2"])
    return jax.nn.relu(out + residual)


def _oihw_to_hwio(w):
    return jnp.transpose(w, (2, 3, 1, 0))


if __name__ == "__main__":
    N, Cin, Cout, H, W = 2, 4, 8, 16, 16   # in_planes != out_planes -> match branch

    key = jax.random.PRNGKey(0)
    k = jax.random.split(key, 8)
    x = jax.random.normal(k[0], (N, Cin, H, W), jnp.float32)

    # deterministic parameter init (OIHW like PyTorch)
    w1_oihw = 0.1 * jax.random.normal(k[1], (Cout, Cin, 3, 3), jnp.float32)
    w2_oihw = 0.1 * jax.random.normal(k[2], (Cout, Cout, 3, 3), jnp.float32)
    wm_oihw = 0.1 * jax.random.normal(k[3], (Cout, Cin, 1, 1), jnp.float32)
    g1 = 1.0 + 0.1 * jax.random.normal(k[4], (Cout,), jnp.float32)
    b1 = 0.1 * jax.random.normal(k[5], (Cout,), jnp.float32)
    g2 = 1.0 + 0.1 * jax.random.normal(k[6], (Cout,), jnp.float32)
    b2 = 0.1 * jax.random.normal(k[7], (Cout,), jnp.float32)
    gm = jnp.ones((Cout,), jnp.float32)
    bm = jnp.zeros((Cout,), jnp.float32)

    params = {
        "w1": _oihw_to_hwio(w1_oihw), "g1": g1, "b1": b1,
        "w2": _oihw_to_hwio(w2_oihw), "g2": g2, "b2": b2,
        "match": (_oihw_to_hwio(wm_oihw), gm, bm),
    }
    params_ref = {
        "w1": w1_oihw, "g1": g1, "b1": b1,
        "w2": w2_oihw, "g2": g2, "b2": b2,
        "match": (wm_oihw, gm, bm),
    }

    out = jax.jit(basic_block_forward)(x, params)
    out = jax.block_until_ready(out)

    ref = _ref_forward(x, params_ref)
    assert out.shape == (N, Cout, H, W)
    # bf16 MXU inputs / bf16 intermediate activation vs f32 reference.
    err = float(jnp.max(jnp.abs(out - ref)))
    assert jnp.allclose(out, ref, atol=5e-2, rtol=5e-2), err

    print("KERNEL_OK")
</pallas_src>

<mosaic_0001>
module attributes {stable_mosaic.version = 11 : i64} {
  func.func @kernel(%arg0: i32, %arg1: memref<1x16x16x4xbf16, #tpu.memory_space<vmem>>, %arg2: memref<36x8xbf16, #tpu.memory_space<vmem>>, %arg3: memref<1x16x16x8xf32, #tpu.memory_space<vmem>>, %arg4: memref<1x2x8xf32, #tpu.memory_space<vmem>>, %arg5: memref<18x18x4xbf16, #tpu.memory_space<vmem>>, %arg6: memref<256x36xbf16, #tpu.memory_space<vmem>>) attributes {dimension_semantics = [#tpu.dimension_semantics<parallel>], iteration_bounds = array<i64: 2>, scalar_prefetch = 0 : i64, scratch_operands = 2 : i64, tpu.core_type = #tpu.core_type<tc>, window_params = [{transform_indices = @transform_0, window_bounds = array<i64: 1, 16, 16, 4>}, {pipeline_mode = #tpu.pipeline_mode<synchronous>, transform_indices = @transform_1, window_bounds = array<i64: 36, 8>}, {transform_indices = @transform_2, window_bounds = array<i64: 1, 16, 16, 8>}, {transform_indices = @transform_3, window_bounds = array<i64: 1, 2, 8>}]} {
    %cst = arith.constant 0.000000e+00 : bf16
    %0 = vector.broadcast %cst : bf16 to vector<18x18x4xbf16>
    %c0 = arith.constant 0 : index
    %c0_0 = arith.constant 0 : index
    %c0_1 = arith.constant 0 : index
    %1 = vector.load %arg5[%c0, %c0_0, %c0_1] : memref<18x18x4xbf16, #tpu.memory_space<vmem>>, vector<18x18x4xbf16>
    tpu.vector_store %arg5[%c0, %c0_0, %c0_1], %0 {strides = array<i32>} : memref<18x18x4xbf16, #tpu.memory_space<vmem>>, vector<18x18x4xbf16>,
    %c0_2 = arith.constant 0 : index
    %c0_3 = arith.constant 0 : index
    %c0_4 = arith.constant 0 : index
    %c0_5 = arith.constant 0 : index
    %2 = vector.load %arg1[%c0_2, %c0_3, %c0_4, %c0_5] : memref<1x16x16x4xbf16, #tpu.memory_space<vmem>>, vector<1x16x16x4xbf16>
    %3 = vector.shape_cast %2 : vector<1x16x16x4xbf16> to vector<16x16x4xbf16>
    %c1 = arith.constant 1 : index
    %c1_6 = arith.constant 1 : index
    %c0_7 = arith.constant 0 : index
    %4 = vector.load %arg5[%c1, %c1_6, %c0_7] : memref<18x18x4xbf16, #tpu.memory_space<vmem>>, vector<16x16x4xbf16>
    tpu.vector_store %arg5[%c1, %c1_6, %c0_7], %3 {strides = array<i32>} : memref<18x18x4xbf16, #tpu.memory_space<vmem>>, vector<16x16x4xbf16>,
    %c0_8 = arith.constant 0 : index
    %c0_9 = arith.constant 0 : index
    %c0_10 = arith.constant 0 : index
    %5 = vector.load %arg5[%c0_8, %c0_9, %c0_10] : memref<18x18x4xbf16, #tpu.memory_space<vmem>>, vector<16x16x4xbf16>
    %6 = vector.shape_cast %5 : vector<16x16x4xbf16> to vector<256x4xbf16>
    %c0_11 = arith.constant 0 : index
    %c0_12 = arith.constant 0 : index
    %7 = vector.load %arg6[%c0_11, %c0_12] : memref<256x36xbf16, #tpu.memory_space<vmem>>, vector<256x4xbf16>
    tpu.vector_store %arg6[%c0_11, %c0_12], %6 {strides = array<i32>} : memref<256x36xbf16, #tpu.memory_space<vmem>>, vector<256x4xbf16>,
    %c0_13 = arith.constant 0 : index
    %c1_14 = arith.constant 1 : index
    %c0_15 = arith.constant 0 : index
    %8 = vector.load %arg5[%c0_13, %c1_14, %c0_15] : memref<18x18x4xbf16, #tpu.memory_space<vmem>>, vector<16x16x4xbf16>
    %9 = vector.shape_cast %8 : vector<16x16x4xbf16> to vector<256x4xbf16>
    %c0_16 = arith.constant 0 : index
    %c4 = arith.constant 4 : index
    %10 = vector.load %arg6[%c0_16, %c4] : memref<256x36xbf16, #tpu.memory_space<vmem>>, vector<256x4xbf16>
    tpu.vector_store %arg6[%c0_16, %c4], %9 {strides = array<i32>} : memref<256x36xbf16, #tpu.memory_space<vmem>>, vector<256x4xbf16>,
    %c0_17 = arith.constant 0 : index
    %c2 = arith.constant 2 : index
    %c0_18 = arith.constant 0 : index
    %11 = vector.load %arg5[%c0_17, %c2, %c0_18] : memref<18x18x4xbf16, #tpu.memory_space<vmem>>, vector<16x16x4xbf16>
    %12 = vector.shape_cast %11 : vector<16x16x4xbf16> to vector<256x4xbf16>
    %c0_19 = arith.constant 0 : index
    %c8 = arith.constant 8 : index
    %13 = vector.load %arg6[%c0_19, %c8] : memref<256x36xbf16, #tpu.memory_space<vmem>>, vector<256x4xbf16>
    tpu.vector_store %arg6[%c0_19, %c8], %12 {strides = array<i32>} : memref<256x36xbf16, #tpu.memory_space<vmem>>, vector<256x4xbf16>,
    %c1_20 = arith.constant 1 : index
    %c0_21 = arith.constant 0 : index
    %c0_22 = arith.constant 0 : index
    %14 = vector.load %arg5[%c1_20, %c0_21, %c0_22] : memref<18x18x4xbf16, #tpu.memory_space<vmem>>, vector<16x16x4xbf16>
    %15 = vector.shape_cast %14 : vector<16x16x4xbf16> to vector<256x4xbf16>
    %c0_23 = arith.constant 0 : index
    %c12 = arith.constant 12 : index
    %16 = vector.load %arg6[%c0_23, %c12] : memref<256x36xbf16, #tpu.memory_space<vmem>>, vector<256x4xbf16>
    tpu.vector_store %arg6[%c0_23, %c12], %15 {strides = array<i32>} : memref<256x36xbf16, #tpu.memory_space<vmem>>, vector<256x4xbf16>,
    %c1_24 = arith.constant 1 : index
    %c1_25 = arith.constant 1 : index
    %c0_26 = arith.constant 0 : index
    %17 = vector.load %arg5[%c1_24, %c1_25, %c0_26] : memref<18x18x4xbf16, #tpu.memory_space<vmem>>, vector<16x16x4xbf16>
    %18 = vector.shape_cast %17 : vector<16x16x4xbf16> to vector<256x4xbf16>
    %c0_27 = arith.constant 0 : index
    %c16 = arith.constant 16 : index
    %19 = vector.load %arg6[%c0_27, %c16] : memref<256x36xbf16, #tpu.memory_space<vmem>>, vector<256x4xbf16>
    tpu.vector_store %arg6[%c0_27, %c16], %18 {strides = array<i32>} : memref<256x36xbf16, #tpu.memory_space<vmem>>, vector<256x4xbf16>,
    %c1_28 = arith.constant 1 : index
    %c2_29 = arith.constant 2 : index
    %c0_30 = arith.constant 0 : index
    %20 = vector.load %arg5[%c1_28, %c2_29, %c0_30] : memref<18x18x4xbf16, #tpu.memory_space<vmem>>, vector<16x16x4xbf16>
    %21 = vector.shape_cast %20 : vector<16x16x4xbf16> to vector<256x4xbf16>
    %c0_31 = arith.constant 0 : index
    %c20 = arith.constant 20 : index
    %22 = vector.load %arg6[%c0_31, %c20] : memref<256x36xbf16, #tpu.memory_space<vmem>>, vector<256x4xbf16>
    tpu.vector_store %arg6[%c0_31, %c20], %21 {strides = array<i32>} : memref<256x36xbf16, #tpu.memory_space<vmem>>, vector<256x4xbf16>,
    %c2_32 = arith.constant 2 : index
    %c0_33 = arith.constant 0 : index
    %c0_34 = arith.constant 0 : index
    %23 = vector.load %arg5[%c2_32, %c0_33, %c0_34] : memref<18x18x4xbf16, #tpu.memory_space<vmem>>, vector<16x16x4xbf16>
    %24 = vector.shape_cast %23 : vector<16x16x4xbf16> to vector<256x4xbf16>
    %c0_35 = arith.constant 0 : index
    %c24 = arith.constant 24 : index
    %25 = vector.load %arg6[%c0_35, %c24] : memref<256x36xbf16, #tpu.memory_space<vmem>>, vector<256x4xbf16>
    tpu.vector_store %arg6[%c0_35, %c24], %24 {strides = array<i32>} : memref<256x36xbf16, #tpu.memory_space<vmem>>, vector<256x4xbf16>,
    %c2_36 = arith.constant 2 : index
    %c1_37 = arith.constant 1 : index
    %c0_38 = arith.constant 0 : index
    %26 = vector.load %arg5[%c2_36, %c1_37, %c0_38] : memref<18x18x4xbf16, #tpu.memory_space<vmem>>, vector<16x16x4xbf16>
    %27 = vector.shape_cast %26 : vector<16x16x4xbf16> to vector<256x4xbf16>
    %c0_39 = arith.constant 0 : index
    %c28 = arith.constant 28 : index
    %28 = vector.load %arg6[%c0_39, %c28] : memref<256x36xbf16, #tpu.memory_space<vmem>>, vector<256x4xbf16>
    tpu.vector_store %arg6[%c0_39, %c28], %27 {strides = array<i32>} : memref<256x36xbf16, #tpu.memory_space<vmem>>, vector<256x4xbf16>,
    %c2_40 = arith.constant 2 : index
    %c2_41 = arith.constant 2 : index
    %c0_42 = arith.constant 0 : index
    %29 = vector.load %arg5[%c2_40, %c2_41, %c0_42] : memref<18x18x4xbf16, #tpu.memory_space<vmem>>, vector<16x16x4xbf16>
    %30 = vector.shape_cast %29 : vector<16x16x4xbf16> to vector<256x4xbf16>
    %c0_43 = arith.constant 0 : index
    %c32 = arith.constant 32 : index
    %31 = vector.load %arg6[%c0_43, %c32] : memref<256x36xbf16, #tpu.memory_space<vmem>>, vector<256x4xbf16>
    tpu.vector_store %arg6[%c0_43, %c32], %30 {strides = array<i32>} : memref<256x36xbf16, #tpu.memory_space<vmem>>, vector<256x4xbf16>,
    %c0_44 = arith.constant 0 : index
    %c0_45 = arith.constant 0 : index
    %32 = vector.load %arg6[%c0_44, %c0_45] : memref<256x36xbf16, #tpu.memory_space<vmem>>, vector<256x36xbf16>
    %c0_46 = arith.constant 0 : index
    %c0_47 = arith.constant 0 : index
    %33 = vector.load %arg2[%c0_46, %c0_47] : memref<36x8xbf16, #tpu.memory_space<vmem>>, vector<36x8xbf16>
    %cst_48 = arith.constant dense<0.000000e+00> : vector<256x8xf32>
    %34 = tpu.matmul %32, %33, %cst_48 {dimension_numbers = #tpu.dot_dimension_numbers<[1], [0], [0], [1], [0, 0, 1, 1], [], []>} : vector<256x36xbf16>, vector<36x8xbf16>, vector<256x8xf32> -> vector<256x8xf32>
    %35 = vector.shape_cast %34 : vector<256x8xf32> to vector<1x16x16x8xf32>
    %c0_49 = arith.constant 0 : index
    %c0_50 = arith.constant 0 : index
    %c0_51 = arith.constant 0 : index
    %c0_52 = arith.constant 0 : index
    %36 = vector.load %arg3[%c0_49, %c0_50, %c0_51, %c0_52] : memref<1x16x16x8xf32, #tpu.memory_space<vmem>>, vector<1x16x16x8xf32>
    tpu.vector_store %arg3[%c0_49, %c0_50, %c0_51, %c0_52], %35 {strides = array<i32>} : memref<1x16x16x8xf32, #tpu.memory_space<vmem>>, vector<1x16x16x8xf32>,
    %cst_53 = arith.constant dense<0.000000e+00> : vector<8xf32>
    %37 = vector.multi_reduction <add>, %34, %cst_53 [0] : vector<256x8xf32> to vector<8xf32>
    %38 = arith.mulf %34, %34 : vector<256x8xf32>
    %cst_54 = arith.constant dense<0.000000e+00> : vector<8xf32>
    %39 = vector.multi_reduction <add>, %38, %cst_54 [0] : vector<256x8xf32> to vector<8xf32>
    %40 = vector.shape_cast %37 : vector<8xf32> to vector<1x8xf32>
    %41 = vector.shape_cast %39 : vector<8xf32> to vector<1x8xf32>
    %42 = tpu.concatenate %40, %41 in 0 : vector<1x8xf32>, vector<1x8xf32> -> vector<2x8xf32>
    %43 = vector.shape_cast %42 : vector<2x8xf32> to vector<1x2x8xf32>
    %c0_55 = arith.constant 0 : index
    %c0_56 = arith.constant 0 : index
    %c0_57 = arith.constant 0 : index
    %44 = vector.load %arg4[%c0_55, %c0_56, %c0_57] : memref<1x2x8xf32, #tpu.memory_space<vmem>>, vector<1x2x8xf32>
    tpu.vector_store %arg4[%c0_55, %c0_56, %c0_57], %43 {strides = array<i32>} : memref<1x2x8xf32, #tpu.memory_space<vmem>>, vector<1x2x8xf32>,
    return
  }
  func.func @transform_0(%arg0: i32) -> (i32, i32, i32, i32) {
    %c0_i32 = arith.constant 0 : i32
    %c0_i32_0 = arith.constant 0 : i32
    %c0_i32_1 = arith.constant 0 : i32
    %c0_i32_2 = arith.constant 0 : i32
    return %arg0, %c0_i32, %c0_i32_0, %c0_i32_1 : i32, i32, i32, i32
  }
  func.func @transform_1(%arg0: i32) -> (i32, i32) {
    %c0_i32 = arith.constant 0 : i32
    %c0_i32_0 = arith.constant 0 : i32
    %c0_i32_1 = arith.constant 0 : i32
    return %c0_i32, %c0_i32_0 : i32, i32
  }
  func.func @transform_2(%arg0: i32) -> (i32, i32, i32, i32) {
    %c0_i32 = arith.constant 0 : i32
    %c0_i32_0 = arith.constant 0 : i32
    %c0_i32_1 = arith.constant 0 : i32
    %c0_i32_2 = arith.constant 0 : i32
    return %arg0, %c0_i32, %c0_i32_0, %c0_i32_1 : i32, i32, i32, i32
  }
  func.func @transform_3(%arg0: i32) -> (i32, i32, i32) {
    %c0_i32 = arith.constant 0 : i32
    %c0_i32_0 = arith.constant 0 : i32
    %c0_i32_1 = arith.constant 0 : i32
    return %arg0, %c0_i32, %c0_i32_0 : i32, i32, i32
  }
}

module attributes {stable_mosaic.version = 11 : i64} {
  func.func @kernel(%arg0: i32, %arg1: memref<32x128xf32, #tpu.memory_space<vmem>>, %arg2: memref<1x128xf32, #tpu.memory_space<vmem>>, %arg3: memref<1x128xf32, #tpu.memory_space<vmem>>, %arg4: memref<32x128xbf16, #tpu.memory_space<vmem>>) attributes {dimension_semantics = [#tpu.dimension_semantics<parallel>], iteration_bounds = array<i64: 1>, scalar_prefetch = 0 : i64, scratch_operands = 0 : i64, tpu.core_type = #tpu.core_type<tc>, window_params = [{transform_indices = @transform_0, window_bounds = array<i64: 32, 128>}, {pipeline_mode = #tpu.pipeline_mode<synchronous>, transform_indices = @transform_1, window_bounds = array<i64: 1, 128>}, {pipeline_mode = #tpu.pipeline_mode<synchronous>, transform_indices = @transform_2, window_bounds = array<i64: 1, 128>}, {transform_indices = @transform_3, window_bounds = array<i64: 32, 128>}]} {
    %c0 = arith.constant 0 : index
    %c0_0 = arith.constant 0 : index
    %0 = vector.load %arg1[%c0, %c0_0] : memref<32x128xf32, #tpu.memory_space<vmem>>, vector<32x128xf32>
    %c0_1 = arith.constant 0 : index
    %c0_2 = arith.constant 0 : index
    %1 = vector.load %arg2[%c0_1, %c0_2] : memref<1x128xf32, #tpu.memory_space<vmem>>, vector<1x128xf32>
    %2 = vector.broadcast %1 : vector<1x128xf32> to vector<32x128xf32>
    %3 = arith.mulf %0, %2 : vector<32x128xf32>
    %c0_3 = arith.constant 0 : index
    %c0_4 = arith.constant 0 : index
    %4 = vector.load %arg3[%c0_3, %c0_4] : memref<1x128xf32, #tpu.memory_space<vmem>>, vector<1x128xf32>
    %5 = vector.broadcast %4 : vector<1x128xf32> to vector<32x128xf32>
    %6 = arith.addf %3, %5 : vector<32x128xf32>
    %cst = arith.constant 0.000000e+00 : f32
    %7 = vector.broadcast %cst : f32 to vector<32x128xf32>
    %8 = arith.maximumf %6, %7 : vector<32x128xf32>
    %9 = arith.truncf %8 : vector<32x128xf32> to vector<32x128xbf16>
    %c0_5 = arith.constant 0 : index
    %c0_6 = arith.constant 0 : index
    %10 = vector.load %arg4[%c0_5, %c0_6] : memref<32x128xbf16, #tpu.memory_space<vmem>>, vector<32x128xbf16>
    tpu.vector_store %arg4[%c0_5, %c0_6], %9 {strides = array<i32>} : memref<32x128xbf16, #tpu.memory_space<vmem>>, vector<32x128xbf16>,
    return
  }
  func.func @transform_0(%arg0: i32) -> (i32, i32) {
    %c0_i32 = arith.constant 0 : i32
    %c0_i32_0 = arith.constant 0 : i32
    return %arg0, %c0_i32 : i32, i32
  }
  func.func @transform_1(%arg0: i32) -> (i32, i32) {
    %c0_i32 = arith.constant 0 : i32
    %c0_i32_0 = arith.constant 0 : i32
    %c0_i32_1 = arith.constant 0 : i32
    return %c0_i32, %c0_i32_0 : i32, i32
  }
  func.func @transform_2(%arg0: i32) -> (i32, i32) {
    %c0_i32 = arith.constant 0 : i32
    %c0_i32_0 = arith.constant 0 : i32
    %c0_i32_1 = arith.constant 0 : i32
    return %c0_i32, %c0_i32_0 : i32, i32
  }
  func.func @transform_3(%arg0: i32) -> (i32, i32) {
    %c0_i32 = arith.constant 0 : i32
    %c0_i32_0 = arith.constant 0 : i32
    return %arg0, %c0_i32 : i32, i32
  }
}

module attributes {stable_mosaic.version = 11 : i64} {
  func.func @kernel(%arg0: i32, %arg1: memref<1x16x16x8xbf16, #tpu.memory_space<vmem>>, %arg2: memref<72x8xbf16, #tpu.memory_space<vmem>>, %arg3: memref<1x16x16x8xf32, #tpu.memory_space<vmem>>, %arg4: memref<1x2x8xf32, #tpu.memory_space<vmem>>, %arg5: memref<18x18x8xbf16, #tpu.memory_space<vmem>>, %arg6: memref<256x72xbf16, #tpu.memory_space<vmem>>) attributes {dimension_semantics = [#tpu.dimension_semantics<parallel>], iteration_bounds = array<i64: 2>, scalar_prefetch = 0 : i64, scratch_operands = 2 : i64, tpu.core_type = #tpu.core_type<tc>, window_params = [{transform_indices = @transform_0, window_bounds = array<i64: 1, 16, 16, 8>}, {pipeline_mode = #tpu.pipeline_mode<synchronous>, transform_indices = @transform_1, window_bounds = array<i64: 72, 8>}, {transform_indices = @transform_2, window_bounds = array<i64: 1, 16, 16, 8>}, {transform_indices = @transform_3, window_bounds = array<i64: 1, 2, 8>}]} {
    %cst = arith.constant 0.000000e+00 : bf16
    %0 = vector.broadcast %cst : bf16 to vector<18x18x8xbf16>
    %c0 = arith.constant 0 : index
    %c0_0 = arith.constant 0 : index
    %c0_1 = arith.constant 0 : index
    %1 = vector.load %arg5[%c0, %c0_0, %c0_1] : memref<18x18x8xbf16, #tpu.memory_space<vmem>>, vector<18x18x8xbf16>
    tpu.vector_store %arg5[%c0, %c0_0, %c0_1], %0 {strides = array<i32>} : memref<18x18x8xbf16, #tpu.memory_space<vmem>>, vector<18x18x8xbf16>,
    %c0_2 = arith.constant 0 : index
    %c0_3 = arith.constant 0 : index
    %c0_4 = arith.constant 0 : index
    %c0_5 = arith.constant 0 : index
    %2 = vector.load %arg1[%c0_2, %c0_3, %c0_4, %c0_5] : memref<1x16x16x8xbf16, #tpu.memory_space<vmem>>, vector<1x16x16x8xbf16>
    %3 = vector.shape_cast %2 : vector<1x16x16x8xbf16> to vector<16x16x8xbf16>
    %c1 = arith.constant 1 : index
    %c1_6 = arith.constant 1 : index
    %c0_7 = arith.constant 0 : index
    %4 = vector.load %arg5[%c1, %c1_6, %c0_7] : memref<18x18x8xbf16, #tpu.memory_space<vmem>>, vector<16x16x8xbf16>
    tpu.vector_store %arg5[%c1, %c1_6, %c0_7], %3 {strides = array<i32>} : memref<18x18x8xbf16, #tpu.memory_space<vmem>>, vector<16x16x8xbf16>,
    %c0_8 = arith.constant 0 : index
    %c0_9 = arith.constant 0 : index
    %c0_10 = arith.constant 0 : index
    %5 = vector.load %arg5[%c0_8, %c0_9, %c0_10] : memref<18x18x8xbf16, #tpu.memory_space<vmem>>, vector<16x16x8xbf16>
    %6 = vector.shape_cast %5 : vector<16x16x8xbf16> to vector<256x8xbf16>
    %c0_11 = arith.constant 0 : index
    %c0_12 = arith.constant 0 : index
    %7 = vector.load %arg6[%c0_11, %c0_12] : memref<256x72xbf16, #tpu.memory_space<vmem>>, vector<256x8xbf16>
    tpu.vector_store %arg6[%c0_11, %c0_12], %6 {strides = array<i32>} : memref<256x72xbf16, #tpu.memory_space<vmem>>, vector<256x8xbf16>,
    %c0_13 = arith.constant 0 : index
    %c1_14 = arith.constant 1 : index
    %c0_15 = arith.constant 0 : index
    %8 = vector.load %arg5[%c0_13, %c1_14, %c0_15] : memref<18x18x8xbf16, #tpu.memory_space<vmem>>, vector<16x16x8xbf16>
    %9 = vector.shape_cast %8 : vector<16x16x8xbf16> to vector<256x8xbf16>
    %c0_16 = arith.constant 0 : index
    %c8 = arith.constant 8 : index
    %10 = vector.load %arg6[%c0_16, %c8] : memref<256x72xbf16, #tpu.memory_space<vmem>>, vector<256x8xbf16>
    tpu.vector_store %arg6[%c0_16, %c8], %9 {strides = array<i32>} : memref<256x72xbf16, #tpu.memory_space<vmem>>, vector<256x8xbf16>,
    %c0_17 = arith.constant 0 : index
    %c2 = arith.constant 2 : index
    %c0_18 = arith.constant 0 : index
    %11 = vector.load %arg5[%c0_17, %c2, %c0_18] : memref<18x18x8xbf16, #tpu.memory_space<vmem>>, vector<16x16x8xbf16>
    %12 = vector.shape_cast %11 : vector<16x16x8xbf16> to vector<256x8xbf16>
    %c0_19 = arith.constant 0 : index
    %c16 = arith.constant 16 : index
    %13 = vector.load %arg6[%c0_19, %c16] : memref<256x72xbf16, #tpu.memory_space<vmem>>, vector<256x8xbf16>
    tpu.vector_store %arg6[%c0_19, %c16], %12 {strides = array<i32>} : memref<256x72xbf16, #tpu.memory_space<vmem>>, vector<256x8xbf16>,
    %c1_20 = arith.constant 1 : index
    %c0_21 = arith.constant 0 : index
    %c0_22 = arith.constant 0 : index
    %14 = vector.load %arg5[%c1_20, %c0_21, %c0_22] : memref<18x18x8xbf16, #tpu.memory_space<vmem>>, vector<16x16x8xbf16>
    %15 = vector.shape_cast %14 : vector<16x16x8xbf16> to vector<256x8xbf16>
    %c0_23 = arith.constant 0 : index
    %c24 = arith.constant 24 : index
    %16 = vector.load %arg6[%c0_23, %c24] : memref<256x72xbf16, #tpu.memory_space<vmem>>, vector<256x8xbf16>
    tpu.vector_store %arg6[%c0_23, %c24], %15 {strides = array<i32>} : memref<256x72xbf16, #tpu.memory_space<vmem>>, vector<256x8xbf16>,
    %c1_24 = arith.constant 1 : index
    %c1_25 = arith.constant 1 : index
    %c0_26 = arith.constant 0 : index
    %17 = vector.load %arg5[%c1_24, %c1_25, %c0_26] : memref<18x18x8xbf16, #tpu.memory_space<vmem>>, vector<16x16x8xbf16>
    %18 = vector.shape_cast %17 : vector<16x16x8xbf16> to vector<256x8xbf16>
    %c0_27 = arith.constant 0 : index
    %c32 = arith.constant 32 : index
    %19 = vector.load %arg6[%c0_27, %c32] : memref<256x72xbf16, #tpu.memory_space<vmem>>, vector<256x8xbf16>
    tpu.vector_store %arg6[%c0_27, %c32], %18 {strides = array<i32>} : memref<256x72xbf16, #tpu.memory_space<vmem>>, vector<256x8xbf16>,
    %c1_28 = arith.constant 1 : index
    %c2_29 = arith.constant 2 : index
    %c0_30 = arith.constant 0 : index
    %20 = vector.load %arg5[%c1_28, %c2_29, %c0_30] : memref<18x18x8xbf16, #tpu.memory_space<vmem>>, vector<16x16x8xbf16>
    %21 = vector.shape_cast %20 : vector<16x16x8xbf16> to vector<256x8xbf16>
    %c0_31 = arith.constant 0 : index
    %c40 = arith.constant 40 : index
    %22 = vector.load %arg6[%c0_31, %c40] : memref<256x72xbf16, #tpu.memory_space<vmem>>, vector<256x8xbf16>
    tpu.vector_store %arg6[%c0_31, %c40], %21 {strides = array<i32>} : memref<256x72xbf16, #tpu.memory_space<vmem>>, vector<256x8xbf16>,
    %c2_32 = arith.constant 2 : index
    %c0_33 = arith.constant 0 : index
    %c0_34 = arith.constant 0 : index
    %23 = vector.load %arg5[%c2_32, %c0_33, %c0_34] : memref<18x18x8xbf16, #tpu.memory_space<vmem>>, vector<16x16x8xbf16>
    %24 = vector.shape_cast %23 : vector<16x16x8xbf16> to vector<256x8xbf16>
    %c0_35 = arith.constant 0 : index
    %c48 = arith.constant 48 : index
    %25 = vector.load %arg6[%c0_35, %c48] : memref<256x72xbf16, #tpu.memory_space<vmem>>, vector<256x8xbf16>
    tpu.vector_store %arg6[%c0_35, %c48], %24 {strides = array<i32>} : memref<256x72xbf16, #tpu.memory_space<vmem>>, vector<256x8xbf16>,
    %c2_36 = arith.constant 2 : index
    %c1_37 = arith.constant 1 : index
    %c0_38 = arith.constant 0 : index
    %26 = vector.load %arg5[%c2_36, %c1_37, %c0_38] : memref<18x18x8xbf16, #tpu.memory_space<vmem>>, vector<16x16x8xbf16>
    %27 = vector.shape_cast %26 : vector<16x16x8xbf16> to vector<256x8xbf16>
    %c0_39 = arith.constant 0 : index
    %c56 = arith.constant 56 : index
    %28 = vector.load %arg6[%c0_39, %c56] : memref<256x72xbf16, #tpu.memory_space<vmem>>, vector<256x8xbf16>
    tpu.vector_store %arg6[%c0_39, %c56], %27 {strides = array<i32>} : memref<256x72xbf16, #tpu.memory_space<vmem>>, vector<256x8xbf16>,
    %c2_40 = arith.constant 2 : index
    %c2_41 = arith.constant 2 : index
    %c0_42 = arith.constant 0 : index
    %29 = vector.load %arg5[%c2_40, %c2_41, %c0_42] : memref<18x18x8xbf16, #tpu.memory_space<vmem>>, vector<16x16x8xbf16>
    %30 = vector.shape_cast %29 : vector<16x16x8xbf16> to vector<256x8xbf16>
    %c0_43 = arith.constant 0 : index
    %c64 = arith.constant 64 : index
    %31 = vector.load %arg6[%c0_43, %c64] : memref<256x72xbf16, #tpu.memory_space<vmem>>, vector<256x8xbf16>
    tpu.vector_store %arg6[%c0_43, %c64], %30 {strides = array<i32>} : memref<256x72xbf16, #tpu.memory_space<vmem>>, vector<256x8xbf16>,
    %c0_44 = arith.constant 0 : index
    %c0_45 = arith.constant 0 : index
    %32 = vector.load %arg6[%c0_44, %c0_45] : memref<256x72xbf16, #tpu.memory_space<vmem>>, vector<256x72xbf16>
    %c0_46 = arith.constant 0 : index
    %c0_47 = arith.constant 0 : index
    %33 = vector.load %arg2[%c0_46, %c0_47] : memref<72x8xbf16, #tpu.memory_space<vmem>>, vector<72x8xbf16>
    %cst_48 = arith.constant dense<0.000000e+00> : vector<256x8xf32>
    %34 = tpu.matmul %32, %33, %cst_48 {dimension_numbers = #tpu.dot_dimension_numbers<[1], [0], [0], [1], [0, 0, 1, 1], [], []>} : vector<256x72xbf16>, vector<72x8xbf16>, vector<256x8xf32> -> vector<256x8xf32>
    %35 = vector.shape_cast %34 : vector<256x8xf32> to vector<1x16x16x8xf32>
    %c0_49 = arith.constant 0 : index
    %c0_50 = arith.constant 0 : index
    %c0_51 = arith.constant 0 : index
    %c0_52 = arith.constant 0 : index
    %36 = vector.load %arg3[%c0_49, %c0_50, %c0_51, %c0_52] : memref<1x16x16x8xf32, #tpu.memory_space<vmem>>, vector<1x16x16x8xf32>
    tpu.vector_store %arg3[%c0_49, %c0_50, %c0_51, %c0_52], %35 {strides = array<i32>} : memref<1x16x16x8xf32, #tpu.memory_space<vmem>>, vector<1x16x16x8xf32>,
    %cst_53 = arith.constant dense<0.000000e+00> : vector<8xf32>
    %37 = vector.multi_reduction <add>, %34, %cst_53 [0] : vector<256x8xf32> to vector<8xf32>
    %38 = arith.mulf %34, %34 : vector<256x8xf32>
    %cst_54 = arith.constant dense<0.000000e+00> : vector<8xf32>
    %39 = vector.multi_reduction <add>, %38, %cst_54 [0] : vector<256x8xf32> to vector<8xf32>
    %40 = vector.shape_cast %37 : vector<8xf32> to vector<1x8xf32>
    %41 = vector.shape_cast %39 : vector<8xf32> to vector<1x8xf32>
    %42 = tpu.concatenate %40, %41 in 0 : vector<1x8xf32>, vector<1x8xf32> -> vector<2x8xf32>
    %43 = vector.shape_cast %42 : vector<2x8xf32> to vector<1x2x8xf32>
    %c0_55 = arith.constant 0 : index
    %c0_56 = arith.constant 0 : index
    %c0_57 = arith.constant 0 : index
    %44 = vector.load %arg4[%c0_55, %c0_56, %c0_57] : memref<1x2x8xf32, #tpu.memory_space<vmem>>, vector<1x2x8xf32>
    tpu.vector_store %arg4[%c0_55, %c0_56, %c0_57], %43 {strides = array<i32>} : memref<1x2x8xf32, #tpu.memory_space<vmem>>, vector<1x2x8xf32>,
    return
  }
  func.func @transform_0(%arg0: i32) -> (i32, i32, i32, i32) {
    %c0_i32 = arith.constant 0 : i32
    %c0_i32_0 = arith.constant 0 : i32
    %c0_i32_1 = arith.constant 0 : i32
    %c0_i32_2 = arith.constant 0 : i32
    return %arg0, %c0_i32, %c0_i32_0, %c0_i32_1 : i32, i32, i32, i32
  }
  func.func @transform_1(%arg0: i32) -> (i32, i32) {
    %c0_i32 = arith.constant 0 : i32
    %c0_i32_0 = arith.constant 0 : i32
    %c0_i32_1 = arith.constant 0 : i32
    return %c0_i32, %c0_i32_0 : i32, i32
  }
  func.func @transform_2(%arg0: i32) -> (i32, i32, i32, i32) {
    %c0_i32 = arith.constant 0 : i32
    %c0_i32_0 = arith.constant 0 : i32
    %c0_i32_1 = arith.constant 0 : i32
    %c0_i32_2 = arith.constant 0 : i32
    return %arg0, %c0_i32, %c0_i32_0, %c0_i32_1 : i32, i32, i32, i32
  }
  func.func @transform_3(%arg0: i32) -> (i32, i32, i32) {
    %c0_i32 = arith.constant 0 : i32
    %c0_i32_0 = arith.constant 0 : i32
    %c0_i32_1 = arith.constant 0 : i32
    return %arg0, %c0_i32, %c0_i32_0 : i32, i32, i32
  }
}

module attributes {stable_mosaic.version = 11 : i64} {
  func.func @kernel(%arg0: i32, %arg1: memref<1x16x16x4xbf16, #tpu.memory_space<vmem>>, %arg2: memref<4x8xbf16, #tpu.memory_space<vmem>>, %arg3: memref<1x16x16x8xf32, #tpu.memory_space<vmem>>, %arg4: memref<1x2x8xf32, #tpu.memory_space<vmem>>) attributes {dimension_semantics = [#tpu.dimension_semantics<parallel>], iteration_bounds = array<i64: 2>, scalar_prefetch = 0 : i64, scratch_operands = 0 : i64, tpu.core_type = #tpu.core_type<tc>, window_params = [{transform_indices = @transform_0, window_bounds = array<i64: 1, 16, 16, 4>}, {pipeline_mode = #tpu.pipeline_mode<synchronous>, transform_indices = @transform_1, window_bounds = array<i64: 4, 8>}, {transform_indices = @transform_2, window_bounds = array<i64: 1, 16, 16, 8>}, {transform_indices = @transform_3, window_bounds = array<i64: 1, 2, 8>}]} {
    %c0 = arith.constant 0 : index
    %c0_0 = arith.constant 0 : index
    %c0_1 = arith.constant 0 : index
    %c0_2 = arith.constant 0 : index
    %0 = vector.load %arg1[%c0, %c0_0, %c0_1, %c0_2] : memref<1x16x16x4xbf16, #tpu.memory_space<vmem>>, vector<1x16x16x4xbf16>
    %1 = vector.shape_cast %0 : vector<1x16x16x4xbf16> to vector<16x16x4xbf16>
    %2 = vector.shape_cast %1 : vector<16x16x4xbf16> to vector<256x4xbf16>
    %c0_3 = arith.constant 0 : index
    %c0_4 = arith.constant 0 : index
    %3 = vector.load %arg2[%c0_3, %c0_4] : memref<4x8xbf16, #tpu.memory_space<vmem>>, vector<4x8xbf16>
    %cst = arith.constant dense<0.000000e+00> : vector<256x8xf32>
    %4 = tpu.matmul %2, %3, %cst {dimension_numbers = #tpu.dot_dimension_numbers<[1], [0], [0], [1], [0, 0, 1, 1], [], []>} : vector<256x4xbf16>, vector<4x8xbf16>, vector<256x8xf32> -> vector<256x8xf32>
    %5 = vector.shape_cast %4 : vector<256x8xf32> to vector<1x16x16x8xf32>
    %c0_5 = arith.constant 0 : index
    %c0_6 = arith.constant 0 : index
    %c0_7 = arith.constant 0 : index
    %c0_8 = arith.constant 0 : index
    %6 = vector.load %arg3[%c0_5, %c0_6, %c0_7, %c0_8] : memref<1x16x16x8xf32, #tpu.memory_space<vmem>>, vector<1x16x16x8xf32>
    tpu.vector_store %arg3[%c0_5, %c0_6, %c0_7, %c0_8], %5 {strides = array<i32>} : memref<1x16x16x8xf32, #tpu.memory_space<vmem>>, vector<1x16x16x8xf32>,
    %cst_9 = arith.constant dense<0.000000e+00> : vector<8xf32>
    %7 = vector.multi_reduction <add>, %4, %cst_9 [0] : vector<256x8xf32> to vector<8xf32>
    %8 = arith.mulf %4, %4 : vector<256x8xf32>
    %cst_10 = arith.constant dense<0.000000e+00> : vector<8xf32>
    %9 = vector.multi_reduction <add>, %8, %cst_10 [0] : vector<256x8xf32> to vector<8xf32>
    %10 = vector.shape_cast %7 : vector<8xf32> to vector<1x8xf32>
    %11 = vector.shape_cast %9 : vector<8xf32> to vector<1x8xf32>
    %12 = tpu.concatenate %10, %11 in 0 : vector<1x8xf32>, vector<1x8xf32> -> vector<2x8xf32>
    %13 = vector.shape_cast %12 : vector<2x8xf32> to vector<1x2x8xf32>
    %c0_11 = arith.constant 0 : index
    %c0_12 = arith.constant 0 : index
    %c0_13 = arith.constant 0 : index
    %14 = vector.load %arg4[%c0_11, %c0_12, %c0_13] : memref<1x2x8xf32, #tpu.memory_space<vmem>>, vector<1x2x8xf32>
    tpu.vector_store %arg4[%c0_11, %c0_12, %c0_13], %13 {strides = array<i32>} : memref<1x2x8xf32, #tpu.memory_space<vmem>>, vector<1x2x8xf32>,
    return
  }
  func.func @transform_0(%arg0: i32) -> (i32, i32, i32, i32) {
    %c0_i32 = arith.constant 0 : i32
    %c0_i32_0 = arith.constant 0 : i32
    %c0_i32_1 = arith.constant 0 : i32
    %c0_i32_2 = arith.constant 0 : i32
    return %arg0, %c0_i32, %c0_i32_0, %c0_i32_1 : i32, i32, i32, i32
  }
  func.func @transform_1(%arg0: i32) -> (i32, i32) {
    %c0_i32 = arith.constant 0 : i32
    %c0_i32_0 = arith.constant 0 : i32
    %c0_i32_1 = arith.constant 0 : i32
    return %c0_i32, %c0_i32_0 : i32, i32
  }
  func.func @transform_2(%arg0: i32) -> (i32, i32, i32, i32) {
    %c0_i32 = arith.constant 0 : i32
    %c0_i32_0 = arith.constant 0 : i32
    %c0_i32_1 = arith.constant 0 : i32
    %c0_i32_2 = arith.constant 0 : i32
    return %arg0, %c0_i32, %c0_i32_0, %c0_i32_1 : i32, i32, i32, i32
  }
  func.func @transform_3(%arg0: i32) -> (i32, i32, i32) {
    %c0_i32 = arith.constant 0 : i32
    %c0_i32_0 = arith.constant 0 : i32
    %c0_i32_1 = arith.constant 0 : i32
    return %arg0, %c0_i32, %c0_i32_0 : i32, i32, i32
  }
}

module attributes {stable_mosaic.version = 11 : i64} {
  func.func @kernel(%arg0: i32, %arg1: memref<32x128xf32, #tpu.memory_space<vmem>>, %arg2: memref<1x128xf32, #tpu.memory_space<vmem>>, %arg3: memref<1x128xf32, #tpu.memory_space<vmem>>, %arg4: memref<32x128xf32, #tpu.memory_space<vmem>>, %arg5: memref<1x128xf32, #tpu.memory_space<vmem>>, %arg6: memref<1x128xf32, #tpu.memory_space<vmem>>, %arg7: memref<32x128xf32, #tpu.memory_space<vmem>>) attributes {dimension_semantics = [#tpu.dimension_semantics<parallel>], iteration_bounds = array<i64: 1>, scalar_prefetch = 0 : i64, scratch_operands = 0 : i64, tpu.core_type = #tpu.core_type<tc>, window_params = [{transform_indices = @transform_0, window_bounds = array<i64: 32, 128>}, {pipeline_mode = #tpu.pipeline_mode<synchronous>, transform_indices = @transform_1, window_bounds = array<i64: 1, 128>}, {pipeline_mode = #tpu.pipeline_mode<synchronous>, transform_indices = @transform_2, window_bounds = array<i64: 1, 128>}, {transform_indices = @transform_3, window_bounds = array<i64: 32, 128>}, {pipeline_mode = #tpu.pipeline_mode<synchronous>, transform_indices = @transform_4, window_bounds = array<i64: 1, 128>}, {pipeline_mode = #tpu.pipeline_mode<synchronous>, transform_indices = @transform_5, window_bounds = array<i64: 1, 128>}, {transform_indices = @transform_6, window_bounds = array<i64: 32, 128>}]} {
    %c0 = arith.constant 0 : index
    %c0_0 = arith.constant 0 : index
    %0 = vector.load %arg1[%c0, %c0_0] : memref<32x128xf32, #tpu.memory_space<vmem>>, vector<32x128xf32>
    %c0_1 = arith.constant 0 : index
    %c0_2 = arith.constant 0 : index
    %1 = vector.load %arg2[%c0_1, %c0_2] : memref<1x128xf32, #tpu.memory_space<vmem>>, vector<1x128xf32>
    %2 = vector.broadcast %1 : vector<1x128xf32> to vector<32x128xf32>
    %3 = arith.mulf %0, %2 : vector<32x128xf32>
    %c0_3 = arith.constant 0 : index
    %c0_4 = arith.constant 0 : index
    %4 = vector.load %arg3[%c0_3, %c0_4] : memref<1x128xf32, #tpu.memory_space<vmem>>, vector<1x128xf32>
    %5 = vector.broadcast %4 : vector<1x128xf32> to vector<32x128xf32>
    %6 = arith.addf %3, %5 : vector<32x128xf32>
    %c0_5 = arith.constant 0 : index
    %c0_6 = arith.constant 0 : index
    %7 = vector.load %arg4[%c0_5, %c0_6] : memref<32x128xf32, #tpu.memory_space<vmem>>, vector<32x128xf32>
    %c0_7 = arith.constant 0 : index
    %c0_8 = arith.constant 0 : index
    %8 = vector.load %arg5[%c0_7, %c0_8] : memref<1x128xf32, #tpu.memory_space<vmem>>, vector<1x128xf32>
    %9 = vector.broadcast %8 : vector<1x128xf32> to vector<32x128xf32>
    %10 = arith.mulf %7, %9 : vector<32x128xf32>
    %11 = arith.addf %6, %10 : vector<32x128xf32>
    %c0_9 = arith.constant 0 : index
    %c0_10 = arith.constant 0 : index
    %12 = vector.load %arg6[%c0_9, %c0_10] : memref<1x128xf32, #tpu.memory_space<vmem>>, vector<1x128xf32>
    %13 = vector.broadcast %12 : vector<1x128xf32> to vector<32x128xf32>
    %14 = arith.addf %11, %13 : vector<32x128xf32>
    %cst = arith.constant 0.000000e+00 : f32
    %15 = vector.broadcast %cst : f32 to vector<32x128xf32>
    %16 = arith.maximumf %14, %15 : vector<32x128xf32>
    %c0_11 = arith.constant 0 : index
    %c0_12 = arith.constant 0 : index
    %17 = vector.load %arg7[%c0_11, %c0_12] : memref<32x128xf32, #tpu.memory_space<vmem>>, vector<32x128xf32>
    tpu.vector_store %arg7[%c0_11, %c0_12], %16 {strides = array<i32>} : memref<32x128xf32, #tpu.memory_space<vmem>>, vector<32x128xf32>,
    return
  }
  func.func @transform_0(%arg0: i32) -> (i32, i32) {
    %c0_i32 = arith.constant 0 : i32
    %c0_i32_0 = arith.constant 0 : i32
    return %arg0, %c0_i32 : i32, i32
  }
  func.func @transform_1(%arg0: i32) -> (i32, i32) {
    %c0_i32 = arith.constant 0 : i32
    %c0_i32_0 = arith.constant 0 : i32
    %c0_i32_1 = arith.constant 0 : i32
    return %c0_i32, %c0_i32_0 : i32, i32
  }
  func.func @transform_2(%arg0: i32) -> (i32, i32) {
    %c0_i32 = arith.constant 0 : i32
    %c0_i32_0 = arith.constant 0 : i32
    %c0_i32_1 = arith.constant 0 : i32
    return %c0_i32, %c0_i32_0 : i32, i32
  }
  func.func @transform_3(%arg0: i32) -> (i32, i32) {
    %c0_i32 = arith.constant 0 : i32
    %c0_i32_0 = arith.constant 0 : i32
    return %arg0, %c0_i32 : i32, i32
  }
  func.func @transform_4(%arg0: i32) -> (i32, i32) {
    %c0_i32 = arith.constant 0 : i32
    %c0_i32_0 = arith.constant 0 : i32
    %c0_i32_1 = arith.constant 0 : i32
    return %c0_i32, %c0_i32_0 : i32, i32
  }
  func.func @transform_5(%arg0: i32) -> (i32, i32) {
    %c0_i32 = arith.constant 0 : i32
    %c0_i32_0 = arith.constant 0 : i32
    %c0_i32_1 = arith.constant 0 : i32
    return %c0_i32, %c0_i32_0 : i32, i32
  }
  func.func @transform_6(%arg0: i32) -> (i32, i32) {
    %c0_i32 = arith.constant 0 : i32
    %c0_i32_0 = arith.constant 0 : i32
    return %arg0, %c0_i32 : i32, i32
  }
}

</mosaic_0001>

<llo_original>
// kernel: tile.33
$region0: #{tile.33}
  #allocation0 [shape = 's32[1]{0}', space=sflag, size = 0x4, scoped, tag = 'scoped memory for tile.33']
  %s0 = inlined_call_operand.vmem [shape: f32[8], index: 0, kind: input, shape index: {}]
  %s1 = inlined_call_operand.vmem [shape: f32[16,8], index: 1, kind: output, shape index: {}]
  // Predicated region
  $region2: #{tile.33} parent=0 // pred_check
    _
  $region3: #{tile.33} parent=0 // pred_check_branch
    %3 = sbr.rel (0) target = $region5
  $region4: #{tile.33} parent=0 // pred_region
    _
  $region5: #{tile.33} parent=0 // pred_fallthru
    _
  %v4 = vld [vmem:[%s0] ss:$0 sm:$0xff]
  %5 = vst [vmem:[%s1] sm:$0xff] %v4
  %s6 = scalar_lea.vmem %s1, 8
  %7 = vst [vmem:[%s6] sm:$0xff] %v4

// kernel: tile.34
$region0: #{tile.34}
  %s0 = inlined_call_operand.vmem [shape: f32[16,8], index: 0, kind: input, shape index: {}]
  %s1 = inlined_call_operand.vmem [shape: f32[1,128], index: 1, kind: output, shape index: {}]
  $region1: #{tile.34} parent=0
    #allocation0 [shape = 'u8[4096]{0}', space=vmem, size = 0x1000, scoped, tag = 'scoped mem for output reshape']
    %v2 = vld [vmem:[%s0] sm:$0x1]
    %vm3 = vcmask 64512
    %4 = vst.msk [vmem:[#allocation0] sm:$0x1] %vm3, %v2
    %s5 = scalar_lea.vmem %s0, 15
    %v6 = vld [vmem:[%s5] sm:$0x1]
    %7 = vrot.lane.b32.xlu0 %v6, 120
    %v8 = vpop.permute.xlu0 %7
    %vm9 = vcmask 1048512
    %10 = vst.msk [vmem:[#allocation0] sm:$0x1] %vm9, %v8
    %s11 = scalar_lea.vmem %s0, 14
    %v12 = vld [vmem:[%s11] sm:$0x1]
    %13 = vrot.lane.b32.xlu0 %v12, 112
    %v14 = vpop.permute.xlu0 %13
    %vm15 = vcmask 982912
    %16 = vst.msk [vmem:[#allocation0] sm:$0x1] %vm15, %v14
    %s17 = scalar_lea.vmem %s0, 13
    %v18 = vld [vmem:[%s17] sm:$0x1]
    %19 = vrot.lane.b32.xlu0 %v18, 104
    %v20 = vpop.permute.xlu0 %19
    %vm21 = vcmask 917312
    %22 = vst.msk [vmem:[#allocation0] sm:$0x1] %vm21, %v20
    %s23 = scalar_lea.vmem %s0, 12
    %v24 = vld [vmem:[%s23] sm:$0x1]
    %25 = vrot.lane.b32.xlu0 %v24, 96
    %v26 = vpop.permute.xlu0 %25
    %vm27 = vcmask 851712
    %28 = vst.msk [vmem:[#allocation0] sm:$0x1] %vm27, %v26
    %s29 = scalar_lea.vmem %s0, 11
    %v30 = vld [vmem:[%s29] sm:$0x1]
    %31 = vrot.lane.b32.xlu0 %v30, 88
    %v32 = vpop.permute.xlu0 %31
    %vm33 = vcmask 786112
    %34 = vst.msk [vmem:[#allocation0] sm:$0x1] %vm33, %v32
    %s35 = scalar_lea.vmem %s0, 10
    %v36 = vld [vmem:[%s35] sm:$0x1]
    %37 = vrot.lane.b32.xlu0 %v36, 80
    %v38 = vpop.permute.xlu0 %37
    %vm39 = vcmask 720512
    %40 = vst.msk [vmem:[#allocation0] sm:$0x1] %vm39, %v38
    %s41 = scalar_lea.vmem %s0, 9
    %v42 = vld [vmem:[%s41] sm:$0x1]
    %43 = vrot.lane.b32.xlu0 %v42, 72
    %v44 = vpop.permute.xlu0 %43
    %vm45 = vcmask 654912
    %46 = vst.msk [vmem:[#allocation0] sm:$0x1] %vm45, %v44
    %s47 = scalar_lea.vmem %s0, 8
    %v48 = vld [vmem:[%s47] sm:$0x1]
    %49 = vrot.lane.b32.xlu0 %v48, 64
    %v50 = vpop.permute.xlu0 %49
    %vm51 = vcmask 589312
    %52 = vst.msk [vmem:[#allocation0] sm:$0x1] %vm51, %v50
    %s53 = scalar_lea.vmem %s0, 7
    %v54 = vld [vmem:[%s53] sm:$0x1]
    %55 = vrot.lane.b32.xlu0 %v54, 56
    %v56 = vpop.permute.xlu0 %55
    %vm57 = vcmask 523712
    %58 = vst.msk [vmem:[#allocation0] sm:$0x1] %vm57, %v56
    %s59 = scalar_lea.vmem %s0, 6
    %v60 = vld [vmem:[%s59] sm:$0x1]
    %61 = vrot.lane.b32.xlu0 %v60, 48
    %v62 = vpop.permute.xlu0 %61
    %vm63 = vcmask 458112
    %64 = vst.msk [vmem:[#allocation0] sm:$0x1] %vm63, %v62
    %s65 = scalar_lea.vmem %s0, 5
    %v66 = vld [vmem:[%s65] sm:$0x1]
    %67 = vrot.lane.b32.xlu0 %v66, 40
    %v68 = vpop.permute.xlu0 %67
    %vm69 = vcmask 392512
    %70 = vst.msk [vmem:[#allocation0] sm:$0x1] %vm69, %v68
    %s71 = scalar_lea.vmem %s0, 4
    %v72 = vld [vmem:[%s71] sm:$0x1]
    %73 = vrot.lane.b32.xlu0 %v72, 32
    %v74 = vpop.permute.xlu0 %73
    %vm75 = vcmask 326912
    %76 = vst.msk [vmem:[#allocation0] sm:$0x1] %vm75, %v74
    %s77 = scalar_lea.vmem %s0, 3
    %v78 = vld [vmem:[%s77] sm:$0x1]
    %79 = vrot.lane.b32.xlu0 %v78, 24
    %v80 = vpop.permute.xlu0 %79
    %vm81 = vcmask 261312
    %82 = vst.msk [vmem:[#allocation0] sm:$0x1] %vm81, %v80
    %s83 = scalar_lea.vmem %s0, 2
    %v84 = vld [vmem:[%s83] sm:$0x1]
    %85 = vrot.lane.b32.xlu0 %v84, 16
    %v86 = vpop.permute.xlu0 %85
    %vm87 = vcmask 195712
    %88 = vst.msk [vmem:[#allocation0] sm:$0x1] %vm87, %v86
    %s89 = scalar_lea.vmem %s0, 1
    %v90 = vld [vmem:[%s89] sm:$0x1]
    %91 = vrot.lane.b32.xlu0 %v90, 8
    %v92 = vpop.permute.xlu0 %91
    %vm93 = vcmask 130112
    %94 = vst.msk [vmem:[#allocation0] sm:$0x1] %vm93, %v92
    %s96 = sshllo.u32 0, 1
    %v98 = vld [vmem:[#allocation0] sm:%s96]
    %s99 = sshllo.u32 0, 1
    %100 = vst [vmem:[%s1] sm:%s99] %v98

// kernel: basic_block_forward.6
$region0: #{basic_block_forward.6}
  #allocation0 [shape = 'u32[]', space=smem, size = 0x4, offset = 0x4, fixed_abs, tag = 'smem constant byte address 0x4 - core index']
  #allocation1 [shape = 'u32[144,128]{1,0:T(1,128)}', space=vmem, size = 0x12000, scoped, tag = 'internal scratch']
  %s0 = inlined_call_operand.vmem [shape: f32[32,128], index: 0, kind: input, shape index: {}]
  %s1 = inlined_call_operand.vmem [shape: f32[1,128], index: 1, kind: input, shape index: {}]
  %s2 = inlined_call_operand.vmem [shape: f32[1,128], index: 2, kind: input, shape index: {}]
  %s3 = inlined_call_operand.vmem [shape: bf16[32,128], index: 3, kind: output, shape index: {}]
  %s4 = sld [smem:[#allocation0]]
  $region22: #{basic_block_forward.6} parent=0
    _
  %s6 = ssub.s32 1, %s4
  %s7 = scalar_select 0, %s6, %s4
  // Predicated region
  $region2: #{basic_block_forward.6} parent=0 // pred_check
    _
  $region3: #{basic_block_forward.6} parent=0 // pred_check_branch
    %9 = sbr.rel (0) target = $region5
  $region4: #{basic_block_forward.6} parent=0 // pred_region
    _
  $region5: #{basic_block_forward.6} parent=0 // pred_fallthru
    _
  // Predicated region
  $region6: #{basic_block_forward.6} parent=0 // pred_check
    _
  $region7: #{basic_block_forward.6} parent=0 // pred_check_branch
    %11 = sbr.rel (0) target = $region9
  $region8: #{basic_block_forward.6} parent=0 // pred_region
    _
  $region9: #{basic_block_forward.6} parent=0 // pred_fallthru
    _
  // Predicated region
  $region10: #{basic_block_forward.6} parent=0 // pred_check
    _
  $region11: #{basic_block_forward.6} parent=0 // pred_check_branch
    %13 = sbr.rel (0) target = $region13
  $region12: #{basic_block_forward.6} parent=0 // pred_region
    _
  $region13: #{basic_block_forward.6} parent=0 // pred_fallthru
    _
  %v14 = vld [vmem:[%s0] sm:$0xff]
  %v15 = vld [vmem:[%s0 + $0x8] sm:$0xff]
  %v16 = vld [vmem:[%s0 + $0x10] sm:$0xff]
  %v17 = vld [vmem:[%s0 + $0x18] sm:$0xff]
  %v18 = vld [vmem:[%s1] sm:$0x1]
  %v20 = vlaneseq
  %v21 = vshrl.u32 %v20, 7
  %v22 = vsub.s32 0, %v21
  %v23 = vrot.slane %v18, %v22
  %v25 = vmul.f32 %v14, %v23
  %v26 = vmul.f32 %v15, %v23
  %v27 = vmul.f32 %v16, %v23
  %v28 = vmul.f32 %v17, %v23
  %v29 = vld [vmem:[%s2] sm:$0x1]
  %v31 = vlaneseq
  %v32 = vshrl.u32 %v31, 7
  %v33 = vsub.s32 0, %v32
  %v34 = vrot.slane %v29, %v33
  %v36 = vadd.f32 %v25, %v34
  %v37 = vadd.f32 %v26, %v34
  %v38 = vadd.f32 %v27, %v34
  %v39 = vadd.f32 %v28, %v34
  %v40 = vmax.f32 %v36, 0.0
  %v41 = vmax.f32 %v37, 0.0
  %v42 = vmax.f32 %v38, 0.0
  %v43 = vmax.f32 %v39, 0.0
  %v44 = vpack.c.bf16 %v41, %v40
  %v45 = vpack.c.bf16 %v43, %v42
  %v48 = vunpack.c.l.b16 %v44
  %v49 = vunpack.c.h.b16 %v44
  %v50 = vunpack.c.l.b16 %v45
  %v51 = vunpack.c.h.b16 %v45
  %v52 = vpack.c.b16 %v48, %v48
  %v53 = vpack.c.b16 %v49, %v49
  %v54 = vpack.c.b16 %v50, %v50
  %v55 = vpack.c.b16 %v51, %v51
  %60 = vst [vmem:[%s3] sm:$0xf] %v52
  %61 = vst [vmem:[%s3 + $0x4] sm:$0xf] %v53
  %62 = vst [vmem:[%s3 + $0x8] sm:$0xf] %v54
  %63 = vst [vmem:[%s3 + $0xc] sm:$0xf] %v55
  // Predicated region
  $region14: #{basic_block_forward.6} parent=0 // pred_check
    _
  $region15: #{basic_block_forward.6} parent=0 // pred_check_branch
    %65 = sbr.rel (0) target = $region17
  $region16: #{basic_block_forward.6} parent=0 // pred_region
    _
  $region17: #{basic_block_forward.6} parent=0 // pred_fallthru
    _
  // Predicated region
  $region18: #{basic_block_forward.6} parent=0 // pred_check
    _
  $region19: #{basic_block_forward.6} parent=0 // pred_check_branch
    %67 = sbr.rel (0) target = $region21
  $region20: #{basic_block_forward.6} parent=0 // pred_region
    _
  $region21: #{basic_block_forward.6} parent=0 // pred_fallthru
    _

// kernel: basic_block_forward.9
$region0: #{basic_block_forward.9}
  #allocation0 [shape = 'u32[]', space=smem, size = 0x4, offset = 0x4, fixed_abs, tag = 'smem constant byte address 0x4 - core index']
  #allocation1 [shape = 'u32[144,128]{1,0:T(1,128)}', space=vmem, size = 0x12000, scoped, tag = 'internal scratch']
  %s0 = inlined_call_operand.vmem [shape: f32[32,128], index: 0, kind: input, shape index: {}]
  %s1 = inlined_call_operand.vmem [shape: f32[1,128], index: 1, kind: input, shape index: {}]
  %s2 = inlined_call_operand.vmem [shape: f32[1,128], index: 2, kind: input, shape index: {}]
  %s3 = inlined_call_operand.vmem [shape: f32[32,128], index: 3, kind: input, shape index: {}]
  %s4 = inlined_call_operand.vmem [shape: f32[1,128], index: 4, kind: input, shape index: {}]
  %s5 = inlined_call_operand.vmem [shape: f32[1,128], index: 5, kind: input, shape index: {}]
  %s6 = inlined_call_operand.vmem [shape: f32[32,128], index: 6, kind: output, shape index: {}]
  %s7 = sld [smem:[#allocation0]]
  $region34: #{basic_block_forward.9} parent=0
    _
  %s9 = ssub.s32 1, %s7
  %s10 = scalar_select 0, %s9, %s7
  // Predicated region
  $region2: #{basic_block_forward.9} parent=0 // pred_check
    _
  $region3: #{basic_block_forward.9} parent=0 // pred_check_branch
    %12 = sbr.rel (0) target = $region5
  $region4: #{basic_block_forward.9} parent=0 // pred_region
    _
  $region5: #{basic_block_forward.9} parent=0 // pred_fallthru
    _
  // Predicated region
  $region6: #{basic_block_forward.9} parent=0 // pred_check
    _
  $region7: #{basic_block_forward.9} parent=0 // pred_check_branch
    %14 = sbr.rel (0) target = $region9
  $region8: #{basic_block_forward.9} parent=0 // pred_region
    _
  $region9: #{basic_block_forward.9} parent=0 // pred_fallthru
    _
  // Predicated region
  $region10: #{basic_block_forward.9} parent=0 // pred_check
    _
  $region11: #{basic_block_forward.9} parent=0 // pred_check_branch
    %16 = sbr.rel (0) target = $region13
  $region12: #{basic_block_forward.9} parent=0 // pred_region
    _
  $region13: #{basic_block_forward.9} parent=0 // pred_fallthru
    _
  // Predicated region
  $region14: #{basic_block_forward.9} parent=0 // pred_check
    _
  $region15: #{basic_block_forward.9} parent=0 // pred_check_branch
    %18 = sbr.rel (0) target = $region17
  $region16: #{basic_block_forward.9} parent=0 // pred_region
    _
  $region17: #{basic_block_forward.9} parent=0 // pred_fallthru
    _
  // Predicated region
  $region18: #{basic_block_forward.9} parent=0 // pred_check
    _
  $region19: #{basic_block_forward.9} parent=0 // pred_check_branch
    %20 = sbr.rel (0) target = $region21
  $region20: #{basic_block_forward.9} parent=0 // pred_region
    _
  $region21: #{basic_block_forward.9} parent=0 // pred_fallthru
    _
  // Predicated region
  $region22: #{basic_block_forward.9} parent=0 // pred_check
    _
  $region23: #{basic_block_forward.9} parent=0 // pred_check_branch
    %22 = sbr.rel (0) target = $region25
  $region24: #{basic_block_forward.9} parent=0 // pred_region
    _
  $region25: #{basic_block_forward.9} parent=0 // pred_fallthru
    _
  %v23 = vld [vmem:[%s0] sm:$0xff]
  %v24 = vld [vmem:[%s0 + $0x8] sm:$0xff]
  %v25 = vld [vmem:[%s0 + $0x10] sm:$0xff]
  %v26 = vld [vmem:[%s0 + $0x18] sm:$0xff]
  %v27 = vld [vmem:[%s1] sm:$0x1]
  %v29 = vlaneseq
  %v30 = vshrl.u32 %v29, 7
  %v31 = vsub.s32 0, %v30
  %v32 = vrot.slane %v27, %v31
  %v34 = vmul.f32 %v23, %v32
  %v35 = vmul.f32 %v24, %v32
  %v36 = vmul.f32 %v25, %v32
  %v37 = vmul.f32 %v26, %v32
  %v38 = vld [vmem:[%s2] sm:$0x1]
  %v40 = vlaneseq
  %v41 = vshrl.u32 %v40, 7
  %v42 = vsub.s32 0, %v41
  %v43 = vrot.slane %v38, %v42
  %v45 = vadd.f32 %v34, %v43
  %v46 = vadd.f32 %v35, %v43
  %v47 = vadd.f32 %v36, %v43
  %v48 = vadd.f32 %v37, %v43
  %v49 = vld [vmem:[%s3] sm:$0xff]
  %v50 = vld [vmem:[%s3 + $0x8] sm:$0xff]
  %v51 = vld [vmem:[%s3 + $0x10] sm:$0xff]
  %v52 = vld [vmem:[%s3 + $0x18] sm:$0xff]
  %v53 = vld [vmem:[%s4] sm:$0x1]
  %v55 = vlaneseq
  %v56 = vshrl.u32 %v55, 7
  %v57 = vsub.s32 0, %v56
  %v58 = vrot.slane %v53, %v57
  %v60 = vmul.f32 %v49, %v58
  %v61 = vmul.f32 %v50, %v58
  %v62 = vmul.f32 %v51, %v58
  %v63 = vmul.f32 %v52, %v58
  %v64 = vadd.f32 %v45, %v60
  %v65 = vadd.f32 %v46, %v61
  %v66 = vadd.f32 %v47, %v62
  %v67 = vadd.f32 %v48, %v63
  %v68 = vld [vmem:[%s5] sm:$0x1]
  %v70 = vlaneseq
  %v71 = vshrl.u32 %v70, 7
  %v72 = vsub.s32 0, %v71
  %v73 = vrot.slane %v68, %v72
  %v75 = vadd.f32 %v64, %v73
  %v76 = vadd.f32 %v65, %v73
  %v77 = vadd.f32 %v66, %v73
  %v78 = vadd.f32 %v67, %v73
  %v79 = vmax.f32 %v75, 0.0
  %v80 = vmax.f32 %v76, 0.0
  %v81 = vmax.f32 %v77, 0.0
  %v82 = vmax.f32 %v78, 0.0
  %83 = vst [vmem:[%s6] sm:$0xff] %v79
  %84 = vst [vmem:[%s6 + $0x8] sm:$0xff] %v80
  %85 = vst [vmem:[%s6 + $0x10] sm:$0xff] %v81
  %86 = vst [vmem:[%s6 + $0x18] sm:$0xff] %v82
  // Predicated region
  $region26: #{basic_block_forward.9} parent=0 // pred_check
    _
  $region27: #{basic_block_forward.9} parent=0 // pred_check_branch
    %88 = sbr.rel (0) target = $region29
  $region28: #{basic_block_forward.9} parent=0 // pred_region
    _
  $region29: #{basic_block_forward.9} parent=0 // pred_fallthru
    _
  // Predicated region
  $region30: #{basic_block_forward.9} parent=0 // pred_check
    _
  $region31: #{basic_block_forward.9} parent=0 // pred_check_branch
    %90 = sbr.rel (0) target = $region33
  $region32: #{basic_block_forward.9} parent=0 // pred_region
    _
  $region33: #{basic_block_forward.9} parent=0 // pred_fallthru
    _

// kernel: basic_block_forward.8
$region0: #{basic_block_forward.8}
  #allocation0 [shape = 'u32[]', space=smem, size = 0x4, offset = 0x4, fixed_abs, tag = 'smem constant byte address 0x4 - core index']
  #allocation1 [shape = 'u32[144,128]{1,0:T(1,128)}', space=vmem, size = 0x12000, scoped, tag = 'internal scratch']
  %s0 = inlined_call_operand.vmem [shape: bf16[2,16,16,4], index: 0, kind: input, shape index: {}]
  %s1 = inlined_call_operand.vmem [shape: bf16[4,8], index: 1, kind: input, shape index: {}]
  %s2 = inlined_call_operand.vmem [shape: f32[2,16,16,8], index: 2, kind: output, shape index: {0}]
  %s3 = inlined_call_operand.vmem [shape: f32[2,2,8], index: 3, kind: output, shape index: {1}]
  %4 = xla_tuple %s2, %s3
  %s5 = sld [smem:[#allocation0]]
  $region49: #{basic_block_forward.8} parent=0
    _
  %s7 = ssub.s32 1, %s5
  %s8 = scalar_select 0, %s7, %s5
  loop: start=0, step=1, limit=4
  $region2: #{basic_block_forward.8} parent=0 // loop_pre_header
    _
  $region3: #{basic_block_forward.8} parent=0 // loop_header
    %s10 = sphi 0, %s14
    %p11 = scmp.ge.s32.totalorder %s10, 4
    %s20 = sphi 0, %s22
    %s23 = sphi 0, %s20
    %s24 = sphi 0, %s23
    %s40 = sphi 0, %s24
    %s44 = sphi 0, %s44
    %s46 = sphi 0, %s44
    %s47 = sphi 0, %s46
    %s61 = sphi 0, %s47
    %s67 = sphi 0, %s69
    %s70 = sphi 0, %s67
    %s71 = sphi 0, %s70
    %s87 = sphi 0, %s71
    %s93 = sphi 0, %s95
    %s96 = sphi 0, %s93
    %s97 = sphi 0, %s96
    %s113 = sphi 0, %s97
  $region4: #{basic_block_forward.8} parent=0 // loop_header_branch
    %13 = sbr.rel (%p11) target = $region8
  $region5: #{basic_block_forward.8} parent=0 // loop_body
    %s15 = ssub.s32 %s10, 1
    %s16 = ssub.s32 %s10, 2
    %s17 = sadd.s32 %s10, 1
    %s18 = ssub.s32 %s10, %s17
    %p19 = scmp.eq.s32.totalorder %s18, 0
    %s21 = sadd.s32 %s20, 1
    %s22 = scalar_select %p19, %s20, %s21
    %p25 = pneg %p19
    %p26 = scmp.eq.s32.totalorder %s10, 1
    %p27 = por %p25, %p26
    %p28 = scmp.ne.s32.totalorder %s20, %s23
    %p29 = scmp.eq.s32.totalorder %s10, 0
    %p30 = por %p28, %p29
    %p31 = scmp.ne.s32.totalorder %s20, %s23
    %p32 = scmp.eq.s32.totalorder %s15, 1
    %p33 = por %p31, %p32
    %p34 = scmp.ne.s32.totalorder %s23, %s24
    %p35 = scmp.eq.s32.totalorder %s15, 0
    %p36 = por %p34, %p35
    %p37 = scmp.ne.s32.totalorder %s23, %s24
    %p38 = scmp.eq.s32.totalorder %s16, 1
    %p39 = por %p37, %p38
    %p41 = scmp.ne.s32.totalorder %s24, %s40
    %p42 = scmp.eq.s32.totalorder %s16, 0
    %p43 = por %p41, %p42
    %s45 = sadd.s32 %s44, 1
    %p48 = scmp.eq.s32.totalorder %s10, 1
    %p49 = scmp.ne.s32.totalorder %s44, %s46
    %p50 = scmp.eq.s32.totalorder %s10, 0
    %p51 = por %p49, %p50
    %p52 = scmp.ne.s32.totalorder %s44, %s46
    %p53 = scmp.eq.s32.totalorder %s15, 1
    %p54 = por %p52, %p53
    %p55 = scmp.ne.s32.totalorder %s46, %s47
    %p56 = scmp.eq.s32.totalorder %s15, 0
    %p57 = por %p55, %p56
    %p58 = scmp.ne.s32.totalorder %s46, %s47
    %p59 = scmp.eq.s32.totalorder %s16, 1
    %p60 = por %p58, %p59
    %p62 = scmp.ne.s32.totalorder %s47, %s61
    %p63 = scmp.eq.s32.totalorder %s16, 0
    %p64 = por %p62, %p63
    %s65 = ssub.s32 %s10, %s17
    %p66 = scmp.eq.s32.totalorder %s65, 0
    %s68 = sadd.s32 %s67, 1
    %s69 = scalar_select %p66, %s67, %s68
    %p72 = pneg %p66
    %p73 = scmp.eq.s32.totalorder %s10, 1
    %p74 = por %p72, %p73
    %p75 = scmp.ne.s32.totalorder %s67, %s70
    %p76 = scmp.eq.s32.totalorder %s10, 0
    %p77 = por %p75, %p76
    %p78 = scmp.ne.s32.totalorder %s67, %s70
    %p79 = scmp.eq.s32.totalorder %s15, 1
    %p80 = por %p78, %p79
    %p81 = scmp.ne.s32.totalorder %s70, %s71
    %p82 = scmp.eq.s32.totalorder %s15, 0
    %p83 = por %p81, %p82
    %p84 = scmp.ne.s32.totalorder %s70, %s71
    %p85 = scmp.eq.s32.totalorder %s16, 1
    %p86 = por %p84, %p85
    %p88 = scmp.ne.s32.totalorder %s71, %s87
    %p89 = scmp.eq.s32.totalorder %s16, 0
    %p90 = por %p88, %p89
    %s91 = ssub.s32 %s10, %s17
    %p92 = scmp.eq.s32.totalorder %s91, 0
    %s94 = sadd.s32 %s93, 1
    %s95 = scalar_select %p92, %s93, %s94
    %p98 = pneg %p92
    %p99 = scmp.eq.s32.totalorder %s10, 1
    %p100 = por %p98, %p99
    %p101 = scmp.ne.s32.totalorder %s93, %s96
    %p102 = scmp.eq.s32.totalorder %s10, 0
    %p103 = por %p101, %p102
    %p104 = scmp.ne.s32.totalorder %s93, %s96
    %p105 = scmp.eq.s32.totalorder %s15, 1
    %p106 = por %p104, %p105
    %p107 = scmp.ne.s32.totalorder %s96, %s97
    %p108 = scmp.eq.s32.totalorder %s15, 0
    %p109 = por %p107, %p108
    %p110 = scmp.ne.s32.totalorder %s96, %s97
    %p111 = scmp.eq.s32.totalorder %s16, 1
    %p112 = por %p110, %p111
    %p114 = scmp.ne.s32.totalorder %s97, %s113
    %p115 = scmp.eq.s32.totalorder %s16, 0
    %p116 = por %p114, %p115
    %p117 = scmp.le.s32.totalorder 1, %s10
    %p118 = scmp.lt.s32.totalorder %s10, 3
    %p119 = pnand %p117, %p118
    %p120 = pneg %p119
    // Predicated region
    $region9: #{basic_block_forward.8} parent=5 // pred_check
      _
    $region10: #{basic_block_forward.8} parent=5 // pred_check_branch
      %122 = sbr.rel (%p119) target = $region12
    $region11: #{basic_block_forward.8} parent=5 // pred_region
      %s123 = ssub.s32 %s10, 1
      // Predicated region
      $region13: #{basic_block_forward.8} parent=11 // pred_check
        %p124 = pneg %p57
      $region14: #{basic_block_forward.8} parent=11 // pred_check_branch
        %126 = sbr.rel (%p124) target = $region16
      $region15: #{basic_block_forward.8} parent=11 // pred_region
        _
      $region16: #{basic_block_forward.8} parent=11 // pred_fallthru
        _
    $region12: #{basic_block_forward.8} parent=5 // pred_fallthru
      _
    %p127 = scmp.lt.s32.totalorder %s10, 2
    // Predicated region
    $region17: #{basic_block_forward.8} parent=5 // pred_check
      %p128 = pneg %p127
    $region18: #{basic_block_forward.8} parent=5 // pred_check_branch
      %130 = sbr.rel (%p128) target = $region20
    $region19: #{basic_block_forward.8} parent=5 // pred_region
      // Predicated region
      $region21: #{basic_block_forward.8} parent=19 // pred_check
        %p131 = pneg %p30
      $region22: #{basic_block_forward.8} parent=19 // pred_check_branch
        %133 = sbr.rel (%p131) target = $region24
      $region23: #{basic_block_forward.8} parent=19 // pred_region
        %p134 = scmp.lt.s32.totalorder %s10, 1
        %s135 = scalar_select %p134, %s10, 1
        %s136 = smul.addr %s135, 32
        %s137 = smul.addr %s136, 4
        %s138 = scalar_lea.vmem %s0, %s137
      $region24: #{basic_block_forward.8} parent=19 // pred_fallthru
        _
    $region20: #{basic_block_forward.8} parent=5 // pred_fallthru
      _
    %p139 = scmp.le.s32.totalorder 1, %s10
    %p140 = scmp.lt.s32.totalorder %s10, 3
    %p141 = pnand %p139, %p140
    %p142 = pneg %p141
    // Predicated region
    $region25: #{basic_block_forward.8} parent=5 // pred_check
      _
    $region26: #{basic_block_forward.8} parent=5 // pred_check_branch
      %144 = sbr.rel (%p141) target = $region28
    $region27: #{basic_block_forward.8} parent=5 // pred_region
      %s145 = ssub.s32 %s10, 1
      %p146 = scmp.lt.s32.totalorder %s15, 1
      %s147 = scalar_select %p146, %s15, 1
      %s148 = smul.addr %s147, 32
      %s149 = smul.addr %s148, 4
      %s150 = scalar_lea.vmem %s0, %s149
      %p151 = pneg %p36
      %p152 = pneg %p33
      %p153 = pneg %p57
      %p154 = pneg %p54
      %p155 = pneg %p83
      %p156 = pneg %p80
      %p157 = scmp.lt.s32.totalorder %s15, 1
      %s158 = scalar_select %p157, %s15, 1
      %s159 = smul.addr %s158, 32
      %s160 = smul.addr %s159, 8
      %s161 = scalar_lea.vmem %s2, %s160
      %p162 = pneg %p109
      %p163 = pneg %p106
      %p164 = scmp.lt.s32.totalorder %s15, 1
      %s165 = scalar_select %p164, %s15, 1
      %s166 = smul.addr %s165, 2
      %s167 = scalar_lea.vmem %s3, %s166
      %p168 = scmp.lt.s32.totalorder %s15, 1
      %s169 = scalar_select %p168, %s15, 1
      %s170 = smul.addr %s169, 32
      %s171 = smul.addr %s170, 4
      %s172 = scalar_lea.vmem %s0, %s171
      %p173 = scmp.lt.s32.totalorder %s15, 1
      %s174 = scalar_select %p173, %s15, 1
      %s175 = smul.addr %s174, 32
      %s176 = smul.addr %s175, 8
      %s177 = scalar_lea.vmem %s2, %s176
      %p178 = scmp.lt.s32.totalorder %s15, 1
      %s179 = scalar_select %p178, %s15, 1
      %s180 = smul.addr %s179, 2
      %s181 = scalar_lea.vmem %s3, %s180
      %v183 = vld [vmem:[%s172] sm:$0xf]
      %v184 = vld [vmem:[%s172 + $0x4] sm:$0xf]
      %v185 = vld [vmem:[%s172 + $0x8] sm:$0xf]
      %v186 = vld [vmem:[%s172 + $0xc] sm:$0xf]
      %v187 = vld [vmem:[%s172 + $0x10] sm:$0xf]
      %v188 = vld [vmem:[%s172 + $0x14] sm:$0xf]
      %v189 = vld [vmem:[%s172 + $0x18] sm:$0xf]
      %v190 = vld [vmem:[%s172 + $0x1c] sm:$0xf]
      %v191 = vld [vmem:[%s172 + $0x20] sm:$0xf]
      %v192 = vld [vmem:[%s172 + $0x24] sm:$0xf]
      %v193 = vld [vmem:[%s172 + $0x28] sm:$0xf]
      %v194 = vld [vmem:[%s172 + $0x2c] sm:$0xf]
      %v195 = vld [vmem:[%s172 + $0x30] sm:$0xf]
      %v196 = vld [vmem:[%s172 + $0x34] sm:$0xf]
      %v197 = vld [vmem:[%s172 + $0x38] sm:$0xf]
      %v198 = vld [vmem:[%s172 + $0x3c] sm:$0xf]
      %v199 = vld [vmem:[%s172 + $0x40] sm:$0xf]
      %v200 = vld [vmem:[%s172 + $0x44] sm:$0xf]
      %v201 = vld [vmem:[%s172 + $0x48] sm:$0xf]
      %v202 = vld [vmem:[%s172 + $0x4c] sm:$0xf]
      %v203 = vld [vmem:[%s172 + $0x50] sm:$0xf]
      %v204 = vld [vmem:[%s172 + $0x54] sm:$0xf]
      %v205 = vld [vmem:[%s172 + $0x58] sm:$0xf]
      %v206 = vld [vmem:[%s172 + $0x5c] sm:$0xf]
      %v207 = vld [vmem:[%s172 + $0x60] sm:$0xf]
      %v208 = vld [vmem:[%s172 + $0x64] sm:$0xf]
      %v209 = vld [vmem:[%s172 + $0x68] sm:$0xf]
      %v210 = vld [vmem:[%s172 + $0x6c] sm:$0xf]
      %v211 = vld [vmem:[%s172 + $0x70] sm:$0xf]
      %v212 = vld [vmem:[%s172 + $0x74] sm:$0xf]
      %v213 = vld [vmem:[%s172 + $0x78] sm:$0xf]
      %v214 = vld [vmem:[%s172 + $0x7c] sm:$0xf]
      %v215 = vld [vmem:[%s1] sm:$0x3]
      %v248 = vunpack.c.l.b16 %v183
      %v249 = vunpack.c.l.b16 %v184
      %v250 = vunpack.c.l.b16 %v185
      %v251 = vunpack.c.l.b16 %v186
      %v252 = vunpack.c.l.b16 %v187
      %v253 = vunpack.c.l.b16 %v188
      %v254 = vunpack.c.l.b16 %v189
      %v255 = vunpack.c.l.b16 %v190
      %v256 = vunpack.c.l.b16 %v191
      %v257 = vunpack.c.l.b16 %v192
      %v258 = vunpack.c.l.b16 %v193
      %v259 = vunpack.c.l.b16 %v194
      %v260 = vunpack.c.l.b16 %v195
      %v261 = vunpack.c.l.b16 %v196
      %v262 = vunpack.c.l.b16 %v197
      %v263 = vunpack.c.l.b16 %v198
      %v264 = vunpack.c.l.b16 %v199
      %v265 = vunpack.c.l.b16 %v200
      %v266 = vunpack.c.l.b16 %v201
      %v267 = vunpack.c.l.b16 %v202
      %v268 = vunpack.c.l.b16 %v203
      %v269 = vunpack.c.l.b16 %v204
      %v270 = vunpack.c.l.b16 %v205
      %v271 = vunpack.c.l.b16 %v206
      %v272 = vunpack.c.l.b16 %v207
      %v273 = vunpack.c.l.b16 %v208
      %v274 = vunpack.c.l.b16 %v209
      %v275 = vunpack.c.l.b16 %v210
      %v276 = vunpack.c.l.b16 %v211
      %v277 = vunpack.c.l.b16 %v212
      %v278 = vunpack.c.l.b16 %v213
      %v279 = vunpack.c.l.b16 %v214
      %v280 = vpack.c.b16 %v249, %v248
      %v281 = vpack.c.b16 %v251, %v250
      %v282 = vpack.c.b16 %v253, %v252
      %v283 = vpack.c.b16 %v255, %v254
      %v284 = vpack.c.b16 %v257, %v256
      %v285 = vpack.c.b16 %v259, %v258
      %v286 = vpack.c.b16 %v261, %v260
      %v287 = vpack.c.b16 %v263, %v262
      %v288 = vpack.c.b16 %v265, %v264
      %v289 = vpack.c.b16 %v267, %v266
      %v290 = vpack.c.b16 %v269, %v268
      %v291 = vpack.c.b16 %v271, %v270
      %v292 = vpack.c.b16 %v273, %v272
      %v293 = vpack.c.b16 %v275, %v274
      %v294 = vpack.c.b16 %v277, %v276
      %v295 = vpack.c.b16 %v279, %v278
      %vm296 = vcmask 31744
      %v298 = vsel %vm296, %v280, 0
      %v301 = vsel %vm296, %v281, 0
      %v304 = vsel %vm296, %v282, 0
      %v307 = vsel %vm296, %v283, 0
      %v310 = vsel %vm296, %v284, 0
      %v313 = vsel %vm296, %v285, 0
      %v316 = vsel %vm296, %v286, 0
      %v319 = vsel %vm296, %v287, 0
      %v322 = vsel %vm296, %v288, 0
      %v325 = vsel %vm296, %v289, 0
      %v328 = vsel %vm296, %v290, 0
      %v331 = vsel %vm296, %v291, 0
      %v334 = vsel %vm296, %v292, 0
      %v337 = vsel %vm296, %v293, 0
      %v340 = vsel %vm296, %v294, 0
      %v343 = vsel %vm296, %v295, 0
      %vm345 = vcmask 1041408
      %v347 = vsel %vm345, %v215, 0
      %349 = vmatprep.subr.bf16.mxu0 0
      %350 = vmatpush1.bf16.msra.mxu0 %v347
      %351 = vmatprep.subr.bf16.mxu0 0
      %352 = vmatpush1.bf16.msra.mxu0 0
      %353 = vmatprep.subr.bf16.mxu0 0
      %354 = vmatpush1.bf16.msra.mxu0 0
      %355 = vmatprep.subr.bf16.mxu0 0
      %356 = vmatpush1.bf16.msra.mxu0 0
      %357 = vmatprep.subr.bf16.mxu0 0
      %358 = vmatpush1.bf16.msra.mxu0 0
      %359 = vmatprep.subr.bf16.mxu0 0
      %360 = vmatpush1.bf16.msra.mxu0 0
      %361 = vmatprep.subr.bf16.mxu0 0
      %362 = vmatpush1.bf16.msra.mxu0 0
      %363 = vmatprep.subr.bf16.mxu0 0
      %364 = vmatpush1.bf16.msra.mxu0 0
      %365 = vmatprep.subr.bf16.mxu0 0
      %366 = vmatpush1.bf16.msra.mxu0 0
      %367 = vmatprep.subr.bf16.mxu0 0
      %368 = vmatpush1.bf16.msra.mxu0 0
      %369 = vmatprep.subr.bf16.mxu0 0
      %370 = vmatpush1.bf16.msra.mxu0 0
      %371 = vmatprep.subr.bf16.mxu0 0
      %372 = vmatpush1.bf16.msra.mxu0 0
      %373 = vmatprep.subr.bf16.mxu0 0
      %374 = vmatpush1.bf16.msra.mxu0 0
      %375 = vmatprep.subr.bf16.mxu0 0
      %376 = vmatpush1.bf16.msra.mxu0 0
      %377 = vmatprep.subr.bf16.mxu0 0
      %378 = vmatpush1.bf16.msra.mxu0 0
      %379 = vmatprep.subr.bf16.mxu0 0
      %380 = vmatpush1.bf16.msra.mxu0 0
      %381 = vmatprep.mubr.bf16.mxu0 0
      %382 = vmatmul.mubr.bf16.gmra.mrb[0].mxu0 %v298
      %v383 = vpop.f32.mrb[0].mxu0
      %v384 = vadd.f32 0.0, %v383
      %v385 = vpop.f32.mrb[0].mxu0
      %v386 = vpop.f32.mrb[0].mxu0
      %v387 = vadd.f32 0.0, %v386
      %v388 = vpop.f32.mrb[0].mxu0
      %389 = vmatprep.mubr.bf16.mxu0 0
      %390 = vmatmul.mubr.bf16.gmra.mrb[0].mxu0 %v301
      %v391 = vpop.f32.mrb[0].mxu0
      %v392 = vadd.f32 0.0, %v391
      %v393 = vpop.f32.mrb[0].mxu0
      %v394 = vpop.f32.mrb[0].mxu0
      %v395 = vadd.f32 0.0, %v394
      %v396 = vpop.f32.mrb[0].mxu0
      %397 = vmatprep.mubr.bf16.mxu0 0
      %398 = vmatmul.mubr.bf16.gmra.mrb[0].mxu0 %v304
      %v399 = vpop.f32.mrb[0].mxu0
      %v400 = vadd.f32 0.0, %v399
      %v401 = vpop.f32.mrb[0].mxu0
      %v402 = vpop.f32.mrb[0].mxu0
      %v403 = vadd.f32 0.0, %v402
      %v404 = vpop.f32.mrb[0].mxu0
      %405 = vmatprep.mubr.bf16.mxu0 0
      %406 = vmatmul.mubr.bf16.gmra.mrb[0].mxu0 %v307
      %v407 = vpop.f32.mrb[0].mxu0
      %v408 = vadd.f32 0.0, %v407
      %v409 = vpop.f32.mrb[0].mxu0
      %v410 = vpop.f32.mrb[0].mxu0
      %v411 = vadd.f32 0.0, %v410
      %v412 = vpop.f32.mrb[0].mxu0
      %413 = vmatprep.mubr.bf16.mxu0 0
      %414 = vmatmul.mubr.bf16.gmra.mrb[0].mxu0 %v310
      %v415 = vpop.f32.mrb[0].mxu0
      %v416 = vadd.f32 0.0, %v415
      %v417 = vpop.f32.mrb[0].mxu0
      %v418 = vpop.f32.mrb[0].mxu0
      %v419 = vadd.f32 0.0, %v418
      %v420 = vpop.f32.mrb[0].mxu0
      %421 = vmatprep.mubr.bf16.mxu0 0
      %422 = vmatmul.mubr.bf16.gmra.mrb[0].mxu0 %v313
      %v423 = vpop.f32.mrb[0].mxu0
      %v424 = vadd.f32 0.0, %v423
      %v425 = vpop.f32.mrb[0].mxu0
      %v426 = vpop.f32.mrb[0].mxu0
      %v427 = vadd.f32 0.0, %v426
      %v428 = vpop.f32.mrb[0].mxu0
      %429 = vmatprep.mubr.bf16.mxu0 0
      %430 = vmatmul.mubr.bf16.gmra.mrb[0].mxu0 %v316
      %v431 = vpop.f32.mrb[0].mxu0
      %v432 = vadd.f32 0.0, %v431
      %v433 = vpop.f32.mrb[0].mxu0
      %v434 = vpop.f32.mrb[0].mxu0
      %v435 = vadd.f32 0.0, %v434
      %v436 = vpop.f32.mrb[0].mxu0
      %437 = vmatprep.mubr.bf16.mxu0 0
      %438 = vmatmul.mubr.bf16.gmra.mrb[0].mxu0 %v319
      %v439 = vpop.f32.mrb[0].mxu0
      %v440 = vadd.f32 0.0, %v439
      %v441 = vpop.f32.mrb[0].mxu0
      %v442 = vpop.f32.mrb[0].mxu0
      %v443 = vadd.f32 0.0, %v442
      %v444 = vpop.f32.mrb[0].mxu0
      %445 = vmatprep.mubr.bf16.mxu0 0
      %446 = vmatmul.mubr.bf16.gmra.mrb[0].mxu0 %v322
      %v447 = vpop.f32.mrb[0].mxu0
      %v448 = vadd.f32 0.0, %v447
      %v449 = vpop.f32.mrb[0].mxu0
      %v450 = vpop.f32.mrb[0].mxu0
      %v451 = vadd.f32 0.0, %v450
      %v452 = vpop.f32.mrb[0].mxu0
      %453 = vmatprep.mubr.bf16.mxu0 0
      %454 = vmatmul.mubr.bf16.gmra.mrb[0].mxu0 %v325
      %v455 = vpop.f32.mrb[0].mxu0
      %v456 = vadd.f32 0.0, %v455
      %v457 = vpop.f32.mrb[0].mxu0
      %v458 = vpop.f32.mrb[0].mxu0
      %v459 = vadd.f32 0.0, %v458
      %v460 = vpop.f32.mrb[0].mxu0
      %461 = vmatprep.mubr.bf16.mxu0 0
      %462 = vmatmul.mubr.bf16.gmra.mrb[0].mxu0 %v328
      %v463 = vpop.f32.mrb[0].mxu0
      %v464 = vadd.f32 0.0, %v463
      %v465 = vpop.f32.mrb[0].mxu0
      %v466 = vpop.f32.mrb[0].mxu0
      %v467 = vadd.f32 0.0, %v466
      %v468 = vpop.f32.mrb[0].mxu0
      %469 = vmatprep.mubr.bf16.mxu0 0
      %470 = vmatmul.mubr.bf16.gmra.mrb[0].mxu0 %v331
      %v471 = vpop.f32.mrb[0].mxu0
      %v472 = vadd.f32 0.0, %v471
      %v473 = vpop.f32.mrb[0].mxu0
      %v474 = vpop.f32.mrb[0].mxu0
      %v475 = vadd.f32 0.0, %v474
      %v476 = vpop.f32.mrb[0].mxu0
      %477 = vmatprep.mubr.bf16.mxu0 0
      %478 = vmatmul.mubr.bf16.gmra.mrb[0].mxu0 %v334
      %v479 = vpop.f32.mrb[0].mxu0
      %v480 = vadd.f32 0.0, %v479
      %v481 = vpop.f32.mrb[0].mxu0
      %v482 = vpop.f32.mrb[0].mxu0
      %v483 = vadd.f32 0.0, %v482
      %v484 = vpop.f32.mrb[0].mxu0
      %485 = vmatprep.mubr.bf16.mxu0 0
      %486 = vmatmul.mubr.bf16.gmra.mrb[0].mxu0 %v337
      %v487 = vpop.f32.mrb[0].mxu0
      %v488 = vadd.f32 0.0, %v487
      %v489 = vpop.f32.mrb[0].mxu0
      %v490 = vpop.f32.mrb[0].mxu0
      %v491 = vadd.f32 0.0, %v490
      %v492 = vpop.f32.mrb[0].mxu0
      %493 = vmatprep.mubr.bf16.mxu0 0
      %494 = vmatmul.mubr.bf16.gmra.mrb[0].mxu0 %v340
      %v495 = vpop.f32.mrb[0].mxu0
      %v496 = vadd.f32 0.0, %v495
      %v497 = vpop.f32.mrb[0].mxu0
      %v498 = vpop.f32.mrb[0].mxu0
      %v499 = vadd.f32 0.0, %v498
      %v500 = vpop.f32.mrb[0].mxu0
      %501 = vmatprep.mubr.bf16.mxu0 0
      %502 = vmatmul.mubr.bf16.gmra.mrb[0].mxu0 %v343
      %v503 = vpop.f32.mrb[0].mxu0
      %v504 = vadd.f32 0.0, %v503
      %v505 = vpop.f32.mrb[0].mxu0
      %v506 = vpop.f32.mrb[0].mxu0
      %v507 = vadd.f32 0.0, %v506
      %v508 = vpop.f32.mrb[0].mxu0
      %509 = vdwg.mxu0
      %vm510 = vcmask 64512
      %511 = vst.msk [vmem:[%s177] sm:$0xff] %vm510, %v384
      %512 = vst.msk [vmem:[%s177 + $0x8] sm:$0xff] %vm510, %v387
      %513 = vst.msk [vmem:[%s177 + $0x10] sm:$0xff] %vm510, %v392
      %514 = vst.msk [vmem:[%s177 + $0x18] sm:$0xff] %vm510, %v395
      %515 = vst.msk [vmem:[%s177 + $0x20] sm:$0xff] %vm510, %v400
      %516 = vst.msk [vmem:[%s177 + $0x28] sm:$0xff] %vm510, %v403
      %517 = vst.msk [vmem:[%s177 + $0x30] sm:$0xff] %vm510, %v408
      %518 = vst.msk [vmem:[%s177 + $0x38] sm:$0xff] %vm510, %v411
      %519 = vst.msk [vmem:[%s177 + $0x40] sm:$0xff] %vm510, %v416
      %520 = vst.msk [vmem:[%s177 + $0x48] sm:$0xff] %vm510, %v419
      %521 = vst.msk [vmem:[%s177 + $0x50] sm:$0xff] %vm510, %v424
      %522 = vst.msk [vmem:[%s177 + $0x58] sm:$0xff] %vm510, %v427
      %523 = vst.msk [vmem:[%s177 + $0x60] sm:$0xff] %vm510, %v432
      %524 = vst.msk [vmem:[%s177 + $0x68] sm:$0xff] %vm510, %v435
      %525 = vst.msk [vmem:[%s177 + $0x70] sm:$0xff] %vm510, %v440
      %526 = vst.msk [vmem:[%s177 + $0x78] sm:$0xff] %vm510, %v443
      %527 = vst.msk [vmem:[%s177 + $0x80] sm:$0xff] %vm510, %v448
      %528 = vst.msk [vmem:[%s177 + $0x88] sm:$0xff] %vm510, %v451
      %529 = vst.msk [vmem:[%s177 + $0x90] sm:$0xff] %vm510, %v456
      %530 = vst.msk [vmem:[%s177 + $0x98] sm:$0xff] %vm510, %v459
      %531 = vst.msk [vmem:[%s177 + $0xa0] sm:$0xff] %vm510, %v464
      %532 = vst.msk [vmem:[%s177 + $0xa8] sm:$0xff] %vm510, %v467
      %533 = vst.msk [vmem:[%s177 + $0xb0] sm:$0xff] %vm510, %v472
      %534 = vst.msk [vmem:[%s177 + $0xb8] sm:$0xff] %vm510, %v475
      %535 = vst.msk [vmem:[%s177 + $0xc0] sm:$0xff] %vm510, %v480
      %536 = vst.msk [vmem:[%s177 + $0xc8] sm:$0xff] %vm510, %v483
      %537 = vst.msk [vmem:[%s177 + $0xd0] sm:$0xff] %vm510, %v488
      %538 = vst.msk [vmem:[%s177 + $0xd8] sm:$0xff] %vm510, %v491
      %539 = vst.msk [vmem:[%s177 + $0xe0] sm:$0xff] %vm510, %v496
      %540 = vst.msk [vmem:[%s177 + $0xe8] sm:$0xff] %vm510, %v499
      %541 = vst.msk [vmem:[%s177 + $0xf0] sm:$0xff] %vm510, %v504
      %542 = vst.msk [vmem:[%s177 + $0xf8] sm:$0xff] %vm510, %v507
      %v543 = vsel %vm510, %v384, 0.0
      %v544 = vsel %vm510, %v387, 0.0
      %v545 = vadd.f32 %v543, %v544
      %v546 = vsel %vm510, %v392, 0.0
      %v547 = vadd.f32 %v545, %v546
      %v548 = vsel %vm510, %v395, 0.0
      %v549 = vadd.f32 %v547, %v548
      %v550 = vsel %vm510, %v400, 0.0
      %v551 = vadd.f32 %v549, %v550
      %v552 = vsel %vm510, %v403, 0.0
      %v553 = vadd.f32 %v551, %v552
      %v554 = vsel %vm510, %v408, 0.0
      %v555 = vadd.f32 %v553, %v554
      %v556 = vsel %vm510, %v411, 0.0
      %v557 = vadd.f32 %v555, %v556
      %v558 = vsel %vm510, %v416, 0.0
      %v559 = vadd.f32 %v557, %v558
      %v560 = vsel %vm510, %v419, 0.0
      %v561 = vadd.f32 %v559, %v560
      %v562 = vsel %vm510, %v424, 0.0
      %v563 = vadd.f32 %v561, %v562
      %v564 = vsel %vm510, %v427, 0.0
      %v565 = vadd.f32 %v563, %v564
      %v566 = vsel %vm510, %v432, 0.0
      %v567 = vadd.f32 %v565, %v566
      %v568 = vsel %vm510, %v435, 0.0
      %v569 = vadd.f32 %v567, %v568
      %v570 = vsel %vm510, %v440, 0.0
      %v571 = vadd.f32 %v569, %v570
      %v572 = vsel %vm510, %v443, 0.0
      %v573 = vadd.f32 %v571, %v572
      %v574 = vsel %vm510, %v448, 0.0
      %v575 = vadd.f32 %v573, %v574
      %v576 = vsel %vm510, %v451, 0.0
      %v577 = vadd.f32 %v575, %v576
      %v578 = vsel %vm510, %v456, 0.0
      %v579 = vadd.f32 %v577, %v578
      %v580 = vsel %vm510, %v459, 0.0
      %v581 = vadd.f32 %v579, %v580
      %v582 = vsel %vm510, %v464, 0.0
      %v583 = vadd.f32 %v581, %v582
      %v584 = vsel %vm510, %v467, 0.0
      %v585 = vadd.f32 %v583, %v584
      %v586 = vsel %vm510, %v472, 0.0
      %v587 = vadd.f32 %v585, %v586
      %v588 = vsel %vm510, %v475, 0.0
      %v589 = vadd.f32 %v587, %v588
      %v590 = vsel %vm510, %v480, 0.0
      %v591 = vadd.f32 %v589, %v590
      %v592 = vsel %vm510, %v483, 0.0
      %v593 = vadd.f32 %v591, %v592
      %v594 = vsel %vm510, %v488, 0.0
      %v595 = vadd.f32 %v593, %v594
      %v596 = vsel %vm510, %v491, 0.0
      %v597 = vadd.f32 %v595, %v596
      %v598 = vsel %vm510, %v496, 0.0
      %v599 = vadd.f32 %v597, %v598
      %v600 = vsel %vm510, %v499, 0.0
      %v601 = vadd.f32 %v599, %v600
      %v602 = vsel %vm510, %v504, 0.0
      %v603 = vadd.f32 %v601, %v602
      %v604 = vsel %vm510, %v507, 0.0
      %v605 = vadd.f32 %v603, %v604
      %v606 = vrot.slane %v605, 4
      %v607 = vadd.f32 %v605, %v606
      %v608 = vrot.slane %v607, 2
      %v609 = vadd.f32 %v607, %v608
      %v610 = vrot.slane %v609, 1
      %v611 = vadd.f32 %v609, %v610
      %v612 = vmul.f32 %v384, %v384
      %v613 = vmul.f32 %v387, %v387
      %v614 = vmul.f32 %v392, %v392
      %v615 = vmul.f32 %v395, %v395
      %v616 = vmul.f32 %v400, %v400
      %v617 = vmul.f32 %v403, %v403
      %v618 = vmul.f32 %v408, %v408
      %v619 = vmul.f32 %v411, %v411
      %v620 = vmul.f32 %v416, %v416
      %v621 = vmul.f32 %v419, %v419
      %v622 = vmul.f32 %v424, %v424
      %v623 = vmul.f32 %v427, %v427
      %v624 = vmul.f32 %v432, %v432
      %v625 = vmul.f32 %v435, %v435
      %v626 = vmul.f32 %v440, %v440
      %v627 = vmul.f32 %v443, %v443
      %v628 = vmul.f32 %v448, %v448
      %v629 = vmul.f32 %v451, %v451
      %v630 = vmul.f32 %v456, %v456
      %v631 = vmul.f32 %v459, %v459
      %v632 = vmul.f32 %v464, %v464
      %v633 = vmul.f32 %v467, %v467
      %v634 = vmul.f32 %v472, %v472
      %v635 = vmul.f32 %v475, %v475
      %v636 = vmul.f32 %v480, %v480
      %v637 = vmul.f32 %v483, %v483
      %v638 = vmul.f32 %v488, %v488
      %v639 = vmul.f32 %v491, %v491
      %v640 = vmul.f32 %v496, %v496
      %v641 = vmul.f32 %v499, %v499
      %v642 = vmul.f32 %v504, %v504
      %v643 = vmul.f32 %v507, %v507
      %v644 = vsel %vm510, %v612, 0.0
      %v645 = vsel %vm510, %v613, 0.0
      %v646 = vadd.f32 %v644, %v645
      %v647 = vsel %vm510, %v614, 0.0
      %v648 = vadd.f32 %v646, %v647
      %v649 = vsel %vm510, %v615, 0.0
      %v650 = vadd.f32 %v648, %v649
      %v651 = vsel %vm510, %v616, 0.0
      %v652 = vadd.f32 %v650, %v651
      %v653 = vsel %vm510, %v617, 0.0
      %v654 = vadd.f32 %v652, %v653
      %v655 = vsel %vm510, %v618, 0.0
      %v656 = vadd.f32 %v654, %v655
      %v657 = vsel %vm510, %v619, 0.0
      %v658 = vadd.f32 %v656, %v657
      %v659 = vsel %vm510, %v620, 0.0
      %v660 = vadd.f32 %v658, %v659
      %v661 = vsel %vm510, %v621, 0.0
      %v662 = vadd.f32 %v660, %v661
      %v663 = vsel %vm510, %v622, 0.0
      %v664 = vadd.f32 %v662, %v663
      %v665 = vsel %vm510, %v623, 0.0
      %v666 = vadd.f32 %v664, %v665
      %v667 = vsel %vm510, %v624, 0.0
      %v668 = vadd.f32 %v666, %v667
      %v669 = vsel %vm510, %v625, 0.0
      %v670 = vadd.f32 %v668, %v669
      %v671 = vsel %vm510, %v626, 0.0
      %v672 = vadd.f32 %v670, %v671
      %v673 = vsel %vm510, %v627, 0.0
      %v674 = vadd.f32 %v672, %v673
      %v675 = vsel %vm510, %v628, 0.0
      %v676 = vadd.f32 %v674, %v675
      %v677 = vsel %vm510, %v629, 0.0
      %v678 = vadd.f32 %v676, %v677
      %v679 = vsel %vm510, %v630, 0.0
      %v680 = vadd.f32 %v678, %v679
      %v681 = vsel %vm510, %v631, 0.0
      %v682 = vadd.f32 %v680, %v681
      %v683 = vsel %vm510, %v632, 0.0
      %v684 = vadd.f32 %v682, %v683
      %v685 = vsel %vm510, %v633, 0.0
      %v686 = vadd.f32 %v684, %v685
      %v687 = vsel %vm510, %v634, 0.0
      %v688 = vadd.f32 %v686, %v687
      %v689 = vsel %vm510, %v635, 0.0
      %v690 = vadd.f32 %v688, %v689
      %v691 = vsel %vm510, %v636, 0.0
      %v692 = vadd.f32 %v690, %v691
      %v693 = vsel %vm510, %v637, 0.0
      %v694 = vadd.f32 %v692, %v693
      %v695 = vsel %vm510, %v638, 0.0
      %v696 = vadd.f32 %v694, %v695
      %v697 = vsel %vm510, %v639, 0.0
      %v698 = vadd.f32 %v696, %v697
      %v699 = vsel %vm510, %v640, 0.0
      %v700 = vadd.f32 %v698, %v699
      %v701 = vsel %vm510, %v641, 0.0
      %v702 = vadd.f32 %v700, %v701
      %v703 = vsel %vm510, %v642, 0.0
      %v704 = vadd.f32 %v702, %v703
      %v705 = vsel %vm510, %v643, 0.0
      %v706 = vadd.f32 %v704, %v705
      %v707 = vrot.slane %v706, 4
      %v708 = vadd.f32 %v706, %v707
      %v709 = vrot.slane %v708, 2
      %v710 = vadd.f32 %v708, %v709
      %v711 = vrot.slane %v710, 1
      %v712 = vadd.f32 %v710, %v711
      %vm713 = vcmask 1040384
      %v714 = vsel %vm713, %v611, %v712
      %vm715 = vcmask 58368
      %716 = vst.msk [vmem:[%s181] sm:$0x3] %vm715, %v714
      %p717 = scmp.lt.s32.totalorder %s15, 1
      %s718 = scalar_select %p717, %s15, 1
      %s719 = smul.addr %s718, 32
      %s720 = smul.addr %s719, 8
      %s721 = scalar_lea.vmem %s2, %s720
      %p722 = scmp.lt.s32.totalorder %s15, 1
      %s723 = scalar_select %p722, %s15, 1
      %s724 = smul.addr %s723, 2
      %s725 = scalar_lea.vmem %s3, %s724
      // Predicated region
      $region29: #{basic_block_forward.8} parent=27 // pred_check
        %p726 = pneg %p80
      $region30: #{basic_block_forward.8} parent=27 // pred_check_branch
        %728 = sbr.rel (%p726) target = $region32
      $region31: #{basic_block_forward.8} parent=27 // pred_region
        _
      $region32: #{basic_block_forward.8} parent=27 // pred_fallthru
        _
      // Predicated region
      $region33: #{basic_block_forward.8} parent=27 // pred_check
        %p729 = pneg %p106
      $region34: #{basic_block_forward.8} parent=27 // pred_check_branch
        %731 = sbr.rel (%p729) target = $region36
      $region35: #{basic_block_forward.8} parent=27 // pred_region
        _
      $region36: #{basic_block_forward.8} parent=27 // pred_fallthru
        _
    $region28: #{basic_block_forward.8} parent=5 // pred_fallthru
      _
    %p732 = scmp.le.s32.totalorder 2, %s10
    // Predicated region
    $region37: #{basic_block_forward.8} parent=5 // pred_check
      %p733 = pneg %p732
    $region38: #{basic_block_forward.8} parent=5 // pred_check_branch
      %735 = sbr.rel (%p733) target = $region40
    $region39: #{basic_block_forward.8} parent=5 // pred_region
      %s736 = ssub.s32 %s10, 2
      // Predicated region
      $region41: #{basic_block_forward.8} parent=39 // pred_check
        %p737 = pneg %p86
      $region42: #{basic_block_forward.8} parent=39 // pred_check_branch
        %739 = sbr.rel (%p737) target = $region44
      $region43: #{basic_block_forward.8} parent=39 // pred_region
        %p740 = scmp.lt.s32.totalorder %s16, 1
        %s741 = scalar_select %p740, %s16, 1
        %s742 = smul.addr %s741, 32
        %s743 = smul.addr %s742, 8
        %s744 = scalar_lea.vmem %s2, %s743
      $region44: #{basic_block_forward.8} parent=39 // pred_fallthru
        _
      // Predicated region
      $region45: #{basic_block_forward.8} parent=39 // pred_check
        %p745 = pneg %p112
      $region46: #{basic_block_forward.8} parent=39 // pred_check_branch
        %747 = sbr.rel (%p745) target = $region48
      $region47: #{basic_block_forward.8} parent=39 // pred_region
        %p748 = scmp.lt.s32.totalorder %s16, 1
        %s749 = scalar_select %p748, %s16, 1
        %s750 = smul.addr %s749, 2
        %s751 = scalar_lea.vmem %s3, %s750
      $region48: #{basic_block_forward.8} parent=39 // pred_fallthru
        _
    $region40: #{basic_block_forward.8} parent=5 // pred_fallthru
      _
  $region6: #{basic_block_forward.8} parent=0 // loop_footer
    %s14 = sadd.s32 1, %s10
  $region7: #{basic_block_forward.8} parent=0 // loop_footer_branch
    %9 = sbr.rel target = $region3
  $region8: #{basic_block_forward.8} parent=0 // loop_exit
    _

// kernel: basic_block_forward.5
$region0: #{basic_block_forward.5}
  #allocation0 [shape = 'u32[]', space=smem, size = 0x4, offset = 0x4, fixed_abs, tag = 'smem constant byte address 0x4 - core index']
  #allocation1 [shape = 'u32[144,128]{1,0:T(1,128)}', space=vmem, size = 0x12000, scoped, tag = 'internal scratch']
  #allocation2 [shape = 'bf16[18,18,4]{2,1,0:T(8,128)(2,1)}', space=vmem, size = 0x1b000, scoped, tag = 'scratch operand']
  #allocation3 [shape = 'bf16[256,36]{1,0:T(16,128)(2,1)}', space=vmem, size = 0x10000, scoped, tag = 'scratch operand']
  %s0 = inlined_call_operand.vmem [shape: bf16[2,16,16,4], index: 0, kind: input, shape index: {}]
  %s1 = inlined_call_operand.vmem [shape: bf16[36,8], index: 1, kind: input, shape index: {}]
  %s2 = inlined_call_operand.vmem [shape: f32[2,16,16,8], index: 2, kind: output, shape index: {0}]
  %s3 = inlined_call_operand.vmem [shape: f32[2,2,8], index: 3, kind: output, shape index: {1}]
  %4 = xla_tuple %s2, %s3
  %s5 = sld [smem:[#allocation0]]
  $region49: #{basic_block_forward.5} parent=0
    _
  %s7 = ssub.s32 1, %s5
  %s8 = scalar_select 0, %s7, %s5
  loop: start=0, step=1, limit=4
  $region2: #{basic_block_forward.5} parent=0 // loop_pre_header
    _
  $region3: #{basic_block_forward.5} parent=0 // loop_header
    %s10 = sphi 0, %s14
    %p11 = scmp.ge.s32.totalorder %s10, 4
    %s20 = sphi 0, %s22
    %s23 = sphi 0, %s20
    %s24 = sphi 0, %s23
    %s40 = sphi 0, %s24
    %s44 = sphi 0, %s44
    %s46 = sphi 0, %s44
    %s47 = sphi 0, %s46
    %s61 = sphi 0, %s47
    %s67 = sphi 0, %s69
    %s70 = sphi 0, %s67
    %s71 = sphi 0, %s70
    %s87 = sphi 0, %s71
    %s93 = sphi 0, %s95
    %s96 = sphi 0, %s93
    %s97 = sphi 0, %s96
    %s113 = sphi 0, %s97
  $region4: #{basic_block_forward.5} parent=0 // loop_header_branch
    %13 = sbr.rel (%p11) target = $region8
  $region5: #{basic_block_forward.5} parent=0 // loop_body
    %s15 = ssub.s32 %s10, 1
    %s16 = ssub.s32 %s10, 2
    %s17 = sadd.s32 %s10, 1
    %s18 = ssub.s32 %s10, %s17
    %p19 = scmp.eq.s32.totalorder %s18, 0
    %s21 = sadd.s32 %s20, 1
    %s22 = scalar_select %p19, %s20, %s21
    %p25 = pneg %p19
    %p26 = scmp.eq.s32.totalorder %s10, 1
    %p27 = por %p25, %p26
    %p28 = scmp.ne.s32.totalorder %s20, %s23
    %p29 = scmp.eq.s32.totalorder %s10, 0
    %p30 = por %p28, %p29
    %p31 = scmp.ne.s32.totalorder %s20, %s23
    %p32 = scmp.eq.s32.totalorder %s15, 1
    %p33 = por %p31, %p32
    %p34 = scmp.ne.s32.totalorder %s23, %s24
    %p35 = scmp.eq.s32.totalorder %s15, 0
    %p36 = por %p34, %p35
    %p37 = scmp.ne.s32.totalorder %s23, %s24
    %p38 = scmp.eq.s32.totalorder %s16, 1
    %p39 = por %p37, %p38
    %p41 = scmp.ne.s32.totalorder %s24, %s40
    %p42 = scmp.eq.s32.totalorder %s16, 0
    %p43 = por %p41, %p42
    %s45 = sadd.s32 %s44, 1
    %p48 = scmp.eq.s32.totalorder %s10, 1
    %p49 = scmp.ne.s32.totalorder %s44, %s46
    %p50 = scmp.eq.s32.totalorder %s10, 0
    %p51 = por %p49, %p50
    %p52 = scmp.ne.s32.totalorder %s44, %s46
    %p53 = scmp.eq.s32.totalorder %s15, 1
    %p54 = por %p52, %p53
    %p55 = scmp.ne.s32.totalorder %s46, %s47
    %p56 = scmp.eq.s32.totalorder %s15, 0
    %p57 = por %p55, %p56
    %p58 = scmp.ne.s32.totalorder %s46, %s47
    %p59 = scmp.eq.s32.totalorder %s16, 1
    %p60 = por %p58, %p59
    %p62 = scmp.ne.s32.totalorder %s47, %s61
    %p63 = scmp.eq.s32.totalorder %s16, 0
    %p64 = por %p62, %p63
    %s65 = ssub.s32 %s10, %s17
    %p66 = scmp.eq.s32.totalorder %s65, 0
    %s68 = sadd.s32 %s67, 1
    %s69 = scalar_select %p66, %s67, %s68
    %p72 = pneg %p66
    %p73 = scmp.eq.s32.totalorder %s10, 1
    %p74 = por %p72, %p73
    %p75 = scmp.ne.s32.totalorder %s67, %s70
    %p76 = scmp.eq.s32.totalorder %s10, 0
    %p77 = por %p75, %p76
    %p78 = scmp.ne.s32.totalorder %s67, %s70
    %p79 = scmp.eq.s32.totalorder %s15, 1
    %p80 = por %p78, %p79
    %p81 = scmp.ne.s32.totalorder %s70, %s71
    %p82 = scmp.eq.s32.totalorder %s15, 0
    %p83 = por %p81, %p82
    %p84 = scmp.ne.s32.totalorder %s70, %s71
    %p85 = scmp.eq.s32.totalorder %s16, 1
    %p86 = por %p84, %p85
    %p88 = scmp.ne.s32.totalorder %s71, %s87
    %p89 = scmp.eq.s32.totalorder %s16, 0
    %p90 = por %p88, %p89
    %s91 = ssub.s32 %s10, %s17
    %p92 = scmp.eq.s32.totalorder %s91, 0
    %s94 = sadd.s32 %s93, 1
    %s95 = scalar_select %p92, %s93, %s94
    %p98 = pneg %p92
    %p99 = scmp.eq.s32.totalorder %s10, 1
    %p100 = por %p98, %p99
    %p101 = scmp.ne.s32.totalorder %s93, %s96
    %p102 = scmp.eq.s32.totalorder %s10, 0
    %p103 = por %p101, %p102
    %p104 = scmp.ne.s32.totalorder %s93, %s96
    %p105 = scmp.eq.s32.totalorder %s15, 1
    %p106 = por %p104, %p105
    %p107 = scmp.ne.s32.totalorder %s96, %s97
    %p108 = scmp.eq.s32.totalorder %s15, 0
    %p109 = por %p107, %p108
    %p110 = scmp.ne.s32.totalorder %s96, %s97
    %p111 = scmp.eq.s32.totalorder %s16, 1
    %p112 = por %p110, %p111
    %p114 = scmp.ne.s32.totalorder %s97, %s113
    %p115 = scmp.eq.s32.totalorder %s16, 0
    %p116 = por %p114, %p115
    %p117 = scmp.le.s32.totalorder 1, %s10
    %p118 = scmp.lt.s32.totalorder %s10, 3
    %p119 = pnand %p117, %p118
    %p120 = pneg %p119
    // Predicated region
    $region9: #{basic_block_forward.5} parent=5 // pred_check
      _
    $region10: #{basic_block_forward.5} parent=5 // pred_check_branch
      %122 = sbr.rel (%p119) target = $region12
    $region11: #{basic_block_forward.5} parent=5 // pred_region
      %s123 = ssub.s32 %s10, 1
      // Predicated region
      $region13: #{basic_block_forward.5} parent=11 // pred_check
        %p124 = pneg %p57
      $region14: #{basic_block_forward.5} parent=11 // pred_check_branch
        %126 = sbr.rel (%p124) target = $region16
      $region15: #{basic_block_forward.5} parent=11 // pred_region
        _
      $region16: #{basic_block_forward.5} parent=11 // pred_fallthru
        _
    $region12: #{basic_block_forward.5} parent=5 // pred_fallthru
      _
    %p127 = scmp.lt.s32.totalorder %s10, 2
    // Predicated region
    $region17: #{basic_block_forward.5} parent=5 // pred_check
      %p128 = pneg %p127
    $region18: #{basic_block_forward.5} parent=5 // pred_check_branch
      %130 = sbr.rel (%p128) target = $region20
    $region19: #{basic_block_forward.5} parent=5 // pred_region
      // Predicated region
      $region21: #{basic_block_forward.5} parent=19 // pred_check
        %p131 = pneg %p30
      $region22: #{basic_block_forward.5} parent=19 // pred_check_branch
        %133 = sbr.rel (%p131) target = $region24
      $region23: #{basic_block_forward.5} parent=19 // pred_region
        %p134 = scmp.lt.s32.totalorder %s10, 1
        %s135 = scalar_select %p134, %s10, 1
        %s136 = smul.addr %s135, 32
        %s137 = smul.addr %s136, 4
        %s138 = scalar_lea.vmem %s0, %s137
      $region24: #{basic_block_forward.5} parent=19 // pred_fallthru
        _
    $region20: #{basic_block_forward.5} parent=5 // pred_fallthru
      _
    %p139 = scmp.le.s32.totalorder 1, %s10
    %p140 = scmp.lt.s32.totalorder %s10, 3
    %p141 = pnand %p139, %p140
    %p142 = pneg %p141
    // Predicated region
    $region25: #{basic_block_forward.5} parent=5 // pred_check
      _
    $region26: #{basic_block_forward.5} parent=5 // pred_check_branch
      %144 = sbr.rel (%p141) target = $region28
    $region27: #{basic_block_forward.5} parent=5 // pred_region
      %s145 = ssub.s32 %s10, 1
      %p146 = scmp.lt.s32.totalorder %s15, 1
      %s147 = scalar_select %p146, %s15, 1
      %s148 = smul.addr %s147, 32
      %s149 = smul.addr %s148, 4
      %s150 = scalar_lea.vmem %s0, %s149
      %p151 = pneg %p36
      %p152 = pneg %p33
      %p153 = pneg %p57
      %p154 = pneg %p54
      %p155 = pneg %p83
      %p156 = pneg %p80
      %p157 = scmp.lt.s32.totalorder %s15, 1
      %s158 = scalar_select %p157, %s15, 1
      %s159 = smul.addr %s158, 32
      %s160 = smul.addr %s159, 8
      %s161 = scalar_lea.vmem %s2, %s160
      %p162 = pneg %p109
      %p163 = pneg %p106
      %p164 = scmp.lt.s32.totalorder %s15, 1
      %s165 = scalar_select %p164, %s15, 1
      %s166 = smul.addr %s165, 2
      %s167 = scalar_lea.vmem %s3, %s166
      %p168 = scmp.lt.s32.totalorder %s15, 1
      %s169 = scalar_select %p168, %s15, 1
      %s170 = smul.addr %s169, 32
      %s171 = smul.addr %s170, 4
      %s172 = scalar_lea.vmem %s0, %s171
      %p173 = scmp.lt.s32.totalorder %s15, 1
      %s174 = scalar_select %p173, %s15, 1
      %s175 = smul.addr %s174, 32
      %s176 = smul.addr %s175, 8
      %s177 = scalar_lea.vmem %s2, %s176
      %p178 = scmp.lt.s32.totalorder %s15, 1
      %s179 = scalar_select %p178, %s15, 1
      %s180 = smul.addr %s179, 2
      %s181 = scalar_lea.vmem %s3, %s180
      %vm183 = vcmask 27648
      %184 = vst.msk [vmem:[#allocation2] sm:$0xf] %vm183, 0
      %185 = vst.msk [vmem:[#allocation2 + $0x4] sm:$0xf] %vm183, 0
      %vm186 = vcmask 24576
      %187 = vst.msk [vmem:[#allocation2 + $0x8] sm:$0x1] %vm186, 0
      %188 = vst.msk [vmem:[#allocation2 + $0xc] sm:$0xf] %vm183, 0
      %189 = vst.msk [vmem:[#allocation2 + $0x10] sm:$0xf] %vm183, 0
      %190 = vst.msk [vmem:[#allocation2 + $0x14] sm:$0x1] %vm186, 0
      %191 = vst.msk [vmem:[#allocation2 + $0x18] sm:$0xf] %vm183, 0
      %192 = vst.msk [vmem:[#allocation2 + $0x1c] sm:$0xf] %vm183, 0
      %193 = vst.msk [vmem:[#allocation2 + $0x20] sm:$0x1] %vm186, 0
      %194 = vst.msk [vmem:[#allocation2 + $0x24] sm:$0xf] %vm183, 0
      %195 = vst.msk [vmem:[#allocation2 + $0x28] sm:$0xf] %vm183, 0
      %196 = vst.msk [vmem:[#allocation2 + $0x2c] sm:$0x1] %vm186, 0
      %197 = vst.msk [vmem:[#allocation2 + $0x30] sm:$0xf] %vm183, 0
      %198 = vst.msk [vmem:[#allocation2 + $0x34] sm:$0xf] %vm183, 0
      %199 = vst.msk [vmem:[#allocation2 + $0x38] sm:$0x1] %vm186, 0
      %200 = vst.msk [vmem:[#allocation2 + $0x3c] sm:$0xf] %vm183, 0
      %201 = vst.msk [vmem:[#allocation2 + $0x40] sm:$0xf] %vm183, 0
      %202 = vst.msk [vmem:[#allocation2 + $0x44] sm:$0x1] %vm186, 0
      %203 = vst.msk [vmem:[#allocation2 + $0x48] sm:$0xf] %vm183, 0
      %204 = vst.msk [vmem:[#allocation2 + $0x4c] sm:$0xf] %vm183, 0
      %205 = vst.msk [vmem:[#allocation2 + $0x50] sm:$0x1] %vm186, 0
      %206 = vst.msk [vmem:[#allocation2 + $0x54] sm:$0xf] %vm183, 0
      %207 = vst.msk [vmem:[#allocation2 + $0x58] sm:$0xf] %vm183, 0
      %208 = vst.msk [vmem:[#allocation2 + $0x5c] sm:$0x1] %vm186, 0
      %209 = vst.msk [vmem:[#allocation2 + $0x60] sm:$0xf] %vm183, 0
      %210 = vst.msk [vmem:[#allocation2 + $0x64] sm:$0xf] %vm183, 0
      %211 = vst.msk [vmem:[#allocation2 + $0x68] sm:$0x1] %vm186, 0
      %212 = vst.msk [vmem:[#allocation2 + $0x6c] sm:$0xf] %vm183, 0
      %213 = vst.msk [vmem:[#allocation2 + $0x70] sm:$0xf] %vm183, 0
      %214 = vst.msk [vmem:[#allocation2 + $0x74] sm:$0x1] %vm186, 0
      %215 = vst.msk [vmem:[#allocation2 + $0x78] sm:$0xf] %vm183, 0
      %216 = vst.msk [vmem:[#allocation2 + $0x7c] sm:$0xf] %vm183, 0
      %217 = vst.msk [vmem:[#allocation2 + $0x80] sm:$0x1] %vm186, 0
      %218 = vst.msk [vmem:[#allocation2 + $0x84] sm:$0xf] %vm183, 0
      %219 = vst.msk [vmem:[#allocation2 + $0x88] sm:$0xf] %vm183, 0
      %220 = vst.msk [vmem:[#allocation2 + $0x8c] sm:$0x1] %vm186, 0
      %221 = vst.msk [vmem:[#allocation2 + $0x90] sm:$0xf] %vm183, 0
      %222 = vst.msk [vmem:[#allocation2 + $0x94] sm:$0xf] %vm183, 0
      %223 = vst.msk [vmem:[#allocation2 + $0x98] sm:$0x1] %vm186, 0
      %224 = vst.msk [vmem:[#allocation2 + $0x9c] sm:$0xf] %vm183, 0
      %225 = vst.msk [vmem:[#allocation2 + $0xa0] sm:$0xf] %vm183, 0
      %226 = vst.msk [vmem:[#allocation2 + $0xa4] sm:$0x1] %vm186, 0
      %227 = vst.msk [vmem:[#allocation2 + $0xa8] sm:$0xf] %vm183, 0
      %228 = vst.msk [vmem:[#allocation2 + $0xac] sm:$0xf] %vm183, 0
      %229 = vst.msk [vmem:[#allocation2 + $0xb0] sm:$0x1] %vm186, 0
      %230 = vst.msk [vmem:[#allocation2 + $0xb4] sm:$0xf] %vm183, 0
      %231 = vst.msk [vmem:[#allocation2 + $0xb8] sm:$0xf] %vm183, 0
      %232 = vst.msk [vmem:[#allocation2 + $0xbc] sm:$0x1] %vm186, 0
      %233 = vst.msk [vmem:[#allocation2 + $0xc0] sm:$0xf] %vm183, 0
      %234 = vst.msk [vmem:[#allocation2 + $0xc4] sm:$0xf] %vm183, 0
      %235 = vst.msk [vmem:[#allocation2 + $0xc8] sm:$0x1] %vm186, 0
      %236 = vst.msk [vmem:[#allocation2 + $0xcc] sm:$0xf] %vm183, 0
      %237 = vst.msk [vmem:[#allocation2 + $0xd0] sm:$0xf] %vm183, 0
      %238 = vst.msk [vmem:[#allocation2 + $0xd4] sm:$0x1] %vm186, 0
      %v239 = vld [vmem:[%s172] sm:$0xf]
      %v240 = vld [vmem:[%s172 + $0x4] sm:$0xf]
      %v241 = vld [vmem:[%s172 + $0x8] sm:$0xf]
      %v242 = vld [vmem:[%s172 + $0xc] sm:$0xf]
      %v243 = vld [vmem:[%s172 + $0x10] sm:$0xf]
      %v244 = vld [vmem:[%s172 + $0x14] sm:$0xf]
      %v245 = vld [vmem:[%s172 + $0x18] sm:$0xf]
      %v246 = vld [vmem:[%s172 + $0x1c] sm:$0xf]
      %v247 = vld [vmem:[%s172 + $0x20] sm:$0xf]
      %v248 = vld [vmem:[%s172 + $0x24] sm:$0xf]
      %v249 = vld [vmem:[%s172 + $0x28] sm:$0xf]
      %v250 = vld [vmem:[%s172 + $0x2c] sm:$0xf]
      %v251 = vld [vmem:[%s172 + $0x30] sm:$0xf]
      %v252 = vld [vmem:[%s172 + $0x34] sm:$0xf]
      %v253 = vld [vmem:[%s172 + $0x38] sm:$0xf]
      %v254 = vld [vmem:[%s172 + $0x3c] sm:$0xf]
      %v255 = vld [vmem:[%s172 + $0x40] sm:$0xf]
      %v256 = vld [vmem:[%s172 + $0x44] sm:$0xf]
      %v257 = vld [vmem:[%s172 + $0x48] sm:$0xf]
      %v258 = vld [vmem:[%s172 + $0x4c] sm:$0xf]
      %v259 = vld [vmem:[%s172 + $0x50] sm:$0xf]
      %v260 = vld [vmem:[%s172 + $0x54] sm:$0xf]
      %v261 = vld [vmem:[%s172 + $0x58] sm:$0xf]
      %v262 = vld [vmem:[%s172 + $0x5c] sm:$0xf]
      %v263 = vld [vmem:[%s172 + $0x60] sm:$0xf]
      %v264 = vld [vmem:[%s172 + $0x64] sm:$0xf]
      %v265 = vld [vmem:[%s172 + $0x68] sm:$0xf]
      %v266 = vld [vmem:[%s172 + $0x6c] sm:$0xf]
      %v267 = vld [vmem:[%s172 + $0x70] sm:$0xf]
      %v268 = vld [vmem:[%s172 + $0x74] sm:$0xf]
      %v269 = vld [vmem:[%s172 + $0x78] sm:$0xf]
      %v270 = vld [vmem:[%s172 + $0x7c] sm:$0xf]
      %vm271 = vsmask.f32 256
      %vm272 = vsmask.f32 4368
      %vm273 = vmor %vm271, %vm272
      %v275 = vshrl.u32 %v239, 16
      %v277 = vrot.slane %v275, 7
      %v278 = vshll.u32 %v239, 16
      %v280 = vor.u32 %v277, %v278
      %v281 = vrot.slane %v277, 4
      %v283 = vshrl.u32 %v240, 16
      %v285 = vrot.slane %v283, 7
      %v286 = vshll.u32 %v240, 16
      %v288 = vor.u32 %v285, %v286
      %v289 = vsel %vm273, %v281, %v288
      %v290 = vrot.slane %v285, 4
      %v292 = vshrl.u32 %v241, 16
      %v294 = vrot.slane %v292, 7
      %v295 = vshll.u32 %v241, 16
      %v297 = vor.u32 %v294, %v295
      %v298 = vrot.slane %v294, 4
      %v300 = vshrl.u32 %v242, 16
      %v302 = vrot.slane %v300, 7
      %v303 = vshll.u32 %v242, 16
      %v305 = vor.u32 %v302, %v303
      %v306 = vsel %vm273, %v298, %v305
      %v307 = vrot.slane %v302, 4
      %v309 = vshrl.u32 %v243, 16
      %v311 = vrot.slane %v309, 7
      %v312 = vshll.u32 %v243, 16
      %v314 = vor.u32 %v311, %v312
      %v315 = vrot.slane %v311, 4
      %v317 = vshrl.u32 %v244, 16
      %v319 = vrot.slane %v317, 7
      %v320 = vshll.u32 %v244, 16
      %v322 = vor.u32 %v319, %v320
      %v323 = vsel %vm273, %v315, %v322
      %v324 = vrot.slane %v319, 4
      %v326 = vshrl.u32 %v245, 16
      %v328 = vrot.slane %v326, 7
      %v329 = vshll.u32 %v245, 16
      %v331 = vor.u32 %v328, %v329
      %v332 = vrot.slane %v328, 4
      %v334 = vshrl.u32 %v246, 16
      %v336 = vrot.slane %v334, 7
      %v337 = vshll.u32 %v246, 16
      %v339 = vor.u32 %v336, %v337
      %v340 = vsel %vm273, %v332, %v339
      %v341 = vrot.slane %v336, 4
      %v343 = vshrl.u32 %v247, 16
      %v345 = vrot.slane %v343, 7
      %v346 = vshll.u32 %v247, 16
      %v348 = vor.u32 %v345, %v346
      %v349 = vrot.slane %v345, 4
      %v351 = vshrl.u32 %v248, 16
      %v353 = vrot.slane %v351, 7
      %v354 = vshll.u32 %v248, 16
      %v356 = vor.u32 %v353, %v354
      %v357 = vsel %vm273, %v349, %v356
      %v358 = vrot.slane %v353, 4
      %v360 = vshrl.u32 %v249, 16
      %v362 = vrot.slane %v360, 7
      %v363 = vshll.u32 %v249, 16
      %v365 = vor.u32 %v362, %v363
      %v366 = vrot.slane %v362, 4
      %v368 = vshrl.u32 %v250, 16
      %v370 = vrot.slane %v368, 7
      %v371 = vshll.u32 %v250, 16
      %v373 = vor.u32 %v370, %v371
      %v374 = vsel %vm273, %v366, %v373
      %v375 = vrot.slane %v370, 4
      %v377 = vshrl.u32 %v251, 16
      %v379 = vrot.slane %v377, 7
      %v380 = vshll.u32 %v251, 16
      %v382 = vor.u32 %v379, %v380
      %v383 = vrot.slane %v379, 4
      %v385 = vshrl.u32 %v252, 16
      %v387 = vrot.slane %v385, 7
      %v388 = vshll.u32 %v252, 16
      %v390 = vor.u32 %v387, %v388
      %v391 = vsel %vm273, %v383, %v390
      %v392 = vrot.slane %v387, 4
      %v394 = vshrl.u32 %v253, 16
      %v396 = vrot.slane %v394, 7
      %v397 = vshll.u32 %v253, 16
      %v399 = vor.u32 %v396, %v397
      %v400 = vrot.slane %v396, 4
      %v402 = vshrl.u32 %v254, 16
      %v404 = vrot.slane %v402, 7
      %v405 = vshll.u32 %v254, 16
      %v407 = vor.u32 %v404, %v405
      %v408 = vsel %vm273, %v400, %v407
      %v409 = vrot.slane %v404, 4
      %v411 = vshrl.u32 %v255, 16
      %v413 = vrot.slane %v411, 7
      %v414 = vshll.u32 %v255, 16
      %v416 = vor.u32 %v413, %v414
      %v417 = vrot.slane %v413, 4
      %v419 = vshrl.u32 %v256, 16
      %v421 = vrot.slane %v419, 7
      %v422 = vshll.u32 %v256, 16
      %v424 = vor.u32 %v421, %v422
      %v425 = vsel %vm273, %v417, %v424
      %v426 = vrot.slane %v421, 4
      %v428 = vshrl.u32 %v257, 16
      %v430 = vrot.slane %v428, 7
      %v431 = vshll.u32 %v257, 16
      %v433 = vor.u32 %v430, %v431
      %v434 = vrot.slane %v430, 4
      %v436 = vshrl.u32 %v258, 16
      %v438 = vrot.slane %v436, 7
      %v439 = vshll.u32 %v258, 16
      %v441 = vor.u32 %v438, %v439
      %v442 = vsel %vm273, %v434, %v441
      %v443 = vrot.slane %v438, 4
      %v445 = vshrl.u32 %v259, 16
      %v447 = vrot.slane %v445, 7
      %v448 = vshll.u32 %v259, 16
      %v450 = vor.u32 %v447, %v448
      %v451 = vrot.slane %v447, 4
      %v453 = vshrl.u32 %v260, 16
      %v455 = vrot.slane %v453, 7
      %v456 = vshll.u32 %v260, 16
      %v458 = vor.u32 %v455, %v456
      %v459 = vsel %vm273, %v451, %v458
      %v460 = vrot.slane %v455, 4
      %v462 = vshrl.u32 %v261, 16
      %v464 = vrot.slane %v462, 7
      %v465 = vshll.u32 %v261, 16
      %v467 = vor.u32 %v464, %v465
      %v468 = vrot.slane %v464, 4
      %v470 = vshrl.u32 %v262, 16
      %v472 = vrot.slane %v470, 7
      %v473 = vshll.u32 %v262, 16
      %v475 = vor.u32 %v472, %v473
      %v476 = vsel %vm273, %v468, %v475
      %v477 = vrot.slane %v472, 4
      %v479 = vshrl.u32 %v263, 16
      %v481 = vrot.slane %v479, 7
      %v482 = vshll.u32 %v263, 16
      %v484 = vor.u32 %v481, %v482
      %v485 = vrot.slane %v481, 4
      %v487 = vshrl.u32 %v264, 16
      %v489 = vrot.slane %v487, 7
      %v490 = vshll.u32 %v264, 16
      %v492 = vor.u32 %v489, %v490
      %v493 = vsel %vm273, %v485, %v492
      %v494 = vrot.slane %v489, 4
      %v496 = vshrl.u32 %v265, 16
      %v498 = vrot.slane %v496, 7
      %v499 = vshll.u32 %v265, 16
      %v501 = vor.u32 %v498, %v499
      %v502 = vrot.slane %v498, 4
      %v504 = vshrl.u32 %v266, 16
      %v506 = vrot.slane %v504, 7
      %v507 = vshll.u32 %v266, 16
      %v509 = vor.u32 %v506, %v507
      %v510 = vsel %vm273, %v502, %v509
      %v511 = vrot.slane %v506, 4
      %v513 = vshrl.u32 %v267, 16
      %v515 = vrot.slane %v513, 7
      %v516 = vshll.u32 %v267, 16
      %v518 = vor.u32 %v515, %v516
      %v519 = vrot.slane %v515, 4
      %v521 = vshrl.u32 %v268, 16
      %v523 = vrot.slane %v521, 7
      %v524 = vshll.u32 %v268, 16
      %v526 = vor.u32 %v523, %v524
      %v527 = vsel %vm273, %v519, %v526
      %v528 = vrot.slane %v523, 4
      %v530 = vshrl.u32 %v269, 16
      %v532 = vrot.slane %v530, 7
      %v533 = vshll.u32 %v269, 16
      %v535 = vor.u32 %v532, %v533
      %v536 = vrot.slane %v532, 4
      %v538 = vshrl.u32 %v270, 16
      %v540 = vrot.slane %v538, 7
      %v541 = vshll.u32 %v270, 16
      %v543 = vor.u32 %v540, %v541
      %v544 = vsel %vm273, %v536, %v543
      %v545 = vrot.slane %v540, 4
      %s594 = scalar_lea.vmem [#allocation2], 12
      %vm595 = vcmask 27648
      %vm596 = vsmask.f32 7938
      %vm597 = vmand %vm595, %vm596
      %v598 = vld [vmem:[%s594] sm:$0xf]
      %v599 = vsel %vm597, %v280, %v598
      %600 = vst [vmem:[%s594] sm:$0xf] %v599
      %601 = vst.msk [vmem:[%s594 + $0x4] sm:$0xf] %vm183, %v289
      %vm602 = vcmask 24576
      %vm603 = vmand %vm602, %vm271
      %v604 = vld [vmem:[%s594 + $0x8] sm:$0x1]
      %v605 = vsel %vm603, %v290, %v604
      %606 = vst [vmem:[%s594 + $0x8] sm:$0x1] %v605
      %v607 = vld [vmem:[%s594 + $0xc] sm:$0xf]
      %v608 = vsel %vm597, %v297, %v607
      %609 = vst [vmem:[%s594 + $0xc] sm:$0xf] %v608
      %610 = vst.msk [vmem:[%s594 + $0x10] sm:$0xf] %vm183, %v306
      %v611 = vld [vmem:[%s594 + $0x14] sm:$0x1]
      %v612 = vsel %vm603, %v307, %v611
      %613 = vst [vmem:[%s594 + $0x14] sm:$0x1] %v612
      %v614 = vld [vmem:[%s594 + $0x18] sm:$0xf]
      %v615 = vsel %vm597, %v314, %v614
      %616 = vst [vmem:[%s594 + $0x18] sm:$0xf] %v615
      %617 = vst.msk [vmem:[%s594 + $0x1c] sm:$0xf] %vm183, %v323
      %v618 = vld [vmem:[%s594 + $0x20] sm:$0x1]
      %v619 = vsel %vm603, %v324, %v618
      %620 = vst [vmem:[%s594 + $0x20] sm:$0x1] %v619
      %v621 = vld [vmem:[%s594 + $0x24] sm:$0xf]
      %v622 = vsel %vm597, %v331, %v621
      %623 = vst [vmem:[%s594 + $0x24] sm:$0xf] %v622
      %624 = vst.msk [vmem:[%s594 + $0x28] sm:$0xf] %vm183, %v340
      %v625 = vld [vmem:[%s594 + $0x2c] sm:$0x1]
      %v626 = vsel %vm603, %v341, %v625
      %627 = vst [vmem:[%s594 + $0x2c] sm:$0x1] %v626
      %v628 = vld [vmem:[%s594 + $0x30] sm:$0xf]
      %v629 = vsel %vm597, %v348, %v628
      %630 = vst [vmem:[%s594 + $0x30] sm:$0xf] %v629
      %631 = vst.msk [vmem:[%s594 + $0x34] sm:$0xf] %vm183, %v357
      %v632 = vld [vmem:[%s594 + $0x38] sm:$0x1]
      %v633 = vsel %vm603, %v358, %v632
      %634 = vst [vmem:[%s594 + $0x38] sm:$0x1] %v633
      %v635 = vld [vmem:[%s594 + $0x3c] sm:$0xf]
      %v636 = vsel %vm597, %v365, %v635
      %637 = vst [vmem:[%s594 + $0x3c] sm:$0xf] %v636
      %638 = vst.msk [vmem:[%s594 + $0x40] sm:$0xf] %vm183, %v374
      %v639 = vld [vmem:[%s594 + $0x44] sm:$0x1]
      %v640 = vsel %vm603, %v375, %v639
      %641 = vst [vmem:[%s594 + $0x44] sm:$0x1] %v640
      %v642 = vld [vmem:[%s594 + $0x48] sm:$0xf]
      %v643 = vsel %vm597, %v382, %v642
      %644 = vst [vmem:[%s594 + $0x48] sm:$0xf] %v643
      %645 = vst.msk [vmem:[%s594 + $0x4c] sm:$0xf] %vm183, %v391
      %v646 = vld [vmem:[%s594 + $0x50] sm:$0x1]
      %v647 = vsel %vm603, %v392, %v646
      %648 = vst [vmem:[%s594 + $0x50] sm:$0x1] %v647
      %v649 = vld [vmem:[%s594 + $0x54] sm:$0xf]
      %v650 = vsel %vm597, %v399, %v649
      %651 = vst [vmem:[%s594 + $0x54] sm:$0xf] %v650
      %652 = vst.msk [vmem:[%s594 + $0x58] sm:$0xf] %vm183, %v408
      %v653 = vld [vmem:[%s594 + $0x5c] sm:$0x1]
      %v654 = vsel %vm603, %v409, %v653
      %655 = vst [vmem:[%s594 + $0x5c] sm:$0x1] %v654
      %v656 = vld [vmem:[%s594 + $0x60] sm:$0xf]
      %v657 = vsel %vm597, %v416, %v656
      %658 = vst [vmem:[%s594 + $0x60] sm:$0xf] %v657
      %659 = vst.msk [vmem:[%s594 + $0x64] sm:$0xf] %vm183, %v425
      %v660 = vld [vmem:[%s594 + $0x68] sm:$0x1]
      %v661 = vsel %vm603, %v426, %v660
      %662 = vst [vmem:[%s594 + $0x68] sm:$0x1] %v661
      %v663 = vld [vmem:[%s594 + $0x6c] sm:$0xf]
      %v664 = vsel %vm597, %v433, %v663
      %665 = vst [vmem:[%s594 + $0x6c] sm:$0xf] %v664
      %666 = vst.msk [vmem:[%s594 + $0x70] sm:$0xf] %vm183, %v442
      %v667 = vld [vmem:[%s594 + $0x74] sm:$0x1]
      %v668 = vsel %vm603, %v443, %v667
      %669 = vst [vmem:[%s594 + $0x74] sm:$0x1] %v668
      %v670 = vld [vmem:[%s594 + $0x78] sm:$0xf]
      %v671 = vsel %vm597, %v450, %v670
      %672 = vst [vmem:[%s594 + $0x78] sm:$0xf] %v671
      %673 = vst.msk [vmem:[%s594 + $0x7c] sm:$0xf] %vm183, %v459
      %v674 = vld [vmem:[%s594 + $0x80] sm:$0x1]
      %v675 = vsel %vm603, %v460, %v674
      %676 = vst [vmem:[%s594 + $0x80] sm:$0x1] %v675
      %v677 = vld [vmem:[%s594 + $0x84] sm:$0xf]
      %v678 = vsel %vm597, %v467, %v677
      %679 = vst [vmem:[%s594 + $0x84] sm:$0xf] %v678
      %680 = vst.msk [vmem:[%s594 + $0x88] sm:$0xf] %vm183, %v476
      %v681 = vld [vmem:[%s594 + $0x8c] sm:$0x1]
      %v682 = vsel %vm603, %v477, %v681
      %683 = vst [vmem:[%s594 + $0x8c] sm:$0x1] %v682
      %v684 = vld [vmem:[%s594 + $0x90] sm:$0xf]
      %v685 = vsel %vm597, %v484, %v684
      %686 = vst [vmem:[%s594 + $0x90] sm:$0xf] %v685
      %687 = vst.msk [vmem:[%s594 + $0x94] sm:$0xf] %vm183, %v493
      %v688 = vld [vmem:[%s594 + $0x98] sm:$0x1]
      %v689 = vsel %vm603, %v494, %v688
      %690 = vst [vmem:[%s594 + $0x98] sm:$0x1] %v689
      %v691 = vld [vmem:[%s594 + $0x9c] sm:$0xf]
      %v692 = vsel %vm597, %v501, %v691
      %693 = vst [vmem:[%s594 + $0x9c] sm:$0xf] %v692
      %694 = vst.msk [vmem:[%s594 + $0xa0] sm:$0xf] %vm183, %v510
      %v695 = vld [vmem:[%s594 + $0xa4] sm:$0x1]
      %v696 = vsel %vm603, %v511, %v695
      %697 = vst [vmem:[%s594 + $0xa4] sm:$0x1] %v696
      %v698 = vld [vmem:[%s594 + $0xa8] sm:$0xf]
      %v699 = vsel %vm597, %v518, %v698
      %700 = vst [vmem:[%s594 + $0xa8] sm:$0xf] %v699
      %701 = vst.msk [vmem:[%s594 + $0xac] sm:$0xf] %vm183, %v527
      %v702 = vld [vmem:[%s594 + $0xb0] sm:$0x1]
      %v703 = vsel %vm603, %v528, %v702
      %704 = vst [vmem:[%s594 + $0xb0] sm:$0x1] %v703
      %v705 = vld [vmem:[%s594 + $0xb4] sm:$0xf]
      %v706 = vsel %vm597, %v535, %v705
      %707 = vst [vmem:[%s594 + $0xb4] sm:$0xf] %v706
      %708 = vst.msk [vmem:[%s594 + $0xb8] sm:$0xf] %vm183, %v544
      %v709 = vld [vmem:[%s594 + $0xbc] sm:$0x1]
      %v710 = vsel %vm603, %v545, %v709
      %711 = vst [vmem:[%s594 + $0xbc] sm:$0x1] %v710
      %v712 = vld [vmem:[#allocation2] sm:$0xf]
      %v713 = vld [vmem:[#allocation2 + $0x4] sm:$0xf]
      %v714 = vld [vmem:[#allocation2 + $0xc] sm:$0xf]
      %v715 = vld [vmem:[#allocation2 + $0x10] sm:$0xf]
      %v716 = vld [vmem:[#allocation2 + $0x18] sm:$0xf]
      %v717 = vld [vmem:[#allocation2 + $0x1c] sm:$0xf]
      %v718 = vld [vmem:[#allocation2 + $0x24] sm:$0xf]
      %v719 = vld [vmem:[#allocation2 + $0x28] sm:$0xf]
      %v720 = vld [vmem:[#allocation2 + $0x30] sm:$0xf]
      %v721 = vld [vmem:[#allocation2 + $0x34] sm:$0xf]
      %v722 = vld [vmem:[#allocation2 + $0x3c] sm:$0xf]
      %v723 = vld [vmem:[#allocation2 + $0x40] sm:$0xf]
      %v724 = vld [vmem:[#allocation2 + $0x48] sm:$0xf]
      %v725 = vld [vmem:[#allocation2 + $0x4c] sm:$0xf]
      %v726 = vld [vmem:[#allocation2 + $0x54] sm:$0xf]
      %v727 = vld [vmem:[#allocation2 + $0x58] sm:$0xf]
      %v728 = vld [vmem:[#allocation2 + $0x60] sm:$0xf]
      %v729 = vld [vmem:[#allocation2 + $0x64] sm:$0xf]
      %v730 = vld [vmem:[#allocation2 + $0x6c] sm:$0xf]
      %v731 = vld [vmem:[#allocation2 + $0x70] sm:$0xf]
      %v732 = vld [vmem:[#allocation2 + $0x78] sm:$0xf]
      %v733 = vld [vmem:[#allocation2 + $0x7c] sm:$0xf]
      %v734 = vld [vmem:[#allocation2 + $0x84] sm:$0xf]
      %v735 = vld [vmem:[#allocation2 + $0x88] sm:$0xf]
      %v736 = vld [vmem:[#allocation2 + $0x90] sm:$0xf]
      %v737 = vld [vmem:[#allocation2 + $0x94] sm:$0xf]
      %v738 = vld [vmem:[#allocation2 + $0x9c] sm:$0xf]
      %v739 = vld [vmem:[#allocation2 + $0xa0] sm:$0xf]
      %v740 = vld [vmem:[#allocation2 + $0xa8] sm:$0xf]
      %v741 = vld [vmem:[#allocation2 + $0xac] sm:$0xf]
      %v742 = vld [vmem:[#allocation2 + $0xb4] sm:$0xf]
      %v743 = vld [vmem:[#allocation2 + $0xb8] sm:$0xf]
      %v776 = vunpack.c.l.b16 %v712
      %v777 = vunpack.c.l.b16 %v713
      %v778 = vunpack.c.l.b16 %v714
      %v779 = vunpack.c.l.b16 %v715
      %v780 = vunpack.c.l.b16 %v716
      %v781 = vunpack.c.l.b16 %v717
      %v782 = vunpack.c.l.b16 %v718
      %v783 = vunpack.c.l.b16 %v719
      %v784 = vunpack.c.l.b16 %v720
      %v785 = vunpack.c.l.b16 %v721
      %v786 = vunpack.c.l.b16 %v722
      %v787 = vunpack.c.l.b16 %v723
      %v788 = vunpack.c.l.b16 %v724
      %v789 = vunpack.c.l.b16 %v725
      %v790 = vunpack.c.l.b16 %v726
      %v791 = vunpack.c.l.b16 %v727
      %v792 = vunpack.c.l.b16 %v728
      %v793 = vunpack.c.l.b16 %v729
      %v794 = vunpack.c.l.b16 %v730
      %v795 = vunpack.c.l.b16 %v731
      %v796 = vunpack.c.l.b16 %v732
      %v797 = vunpack.c.l.b16 %v733
      %v798 = vunpack.c.l.b16 %v734
      %v799 = vunpack.c.l.b16 %v735
      %v800 = vunpack.c.l.b16 %v736
      %v801 = vunpack.c.l.b16 %v737
      %v802 = vunpack.c.l.b16 %v738
      %v803 = vunpack.c.l.b16 %v739
      %v804 = vunpack.c.l.b16 %v740
      %v805 = vunpack.c.l.b16 %v741
      %v806 = vunpack.c.l.b16 %v742
      %v807 = vunpack.c.l.b16 %v743
      %v808 = vpack.c.b16 %v777, %v776
      %v809 = vpack.c.b16 %v779, %v778
      %v810 = vpack.c.b16 %v781, %v780
      %v811 = vpack.c.b16 %v783, %v782
      %v812 = vpack.c.b16 %v785, %v784
      %v813 = vpack.c.b16 %v787, %v786
      %v814 = vpack.c.b16 %v789, %v788
      %v815 = vpack.c.b16 %v791, %v790
      %v816 = vpack.c.b16 %v793, %v792
      %v817 = vpack.c.b16 %v795, %v794
      %v818 = vpack.c.b16 %v797, %v796
      %v819 = vpack.c.b16 %v799, %v798
      %v820 = vpack.c.b16 %v801, %v800
      %v821 = vpack.c.b16 %v803, %v802
      %v822 = vpack.c.b16 %v805, %v804
      %v823 = vpack.c.b16 %v807, %v806
      %vm840 = vcmask 31744
      %841 = vst.msk [vmem:[#allocation3] sm:$0xff] %vm840, %v808
      %842 = vst.msk [vmem:[#allocation3 + $0x8] sm:$0xff] %vm840, %v809
      %843 = vst.msk [vmem:[#allocation3 + $0x10] sm:$0xff] %vm840, %v810
      %844 = vst.msk [vmem:[#allocation3 + $0x18] sm:$0xff] %vm840, %v811
      %845 = vst.msk [vmem:[#allocation3 + $0x20] sm:$0xff] %vm840, %v812
      %846 = vst.msk [vmem:[#allocation3 + $0x28] sm:$0xff] %vm840, %v813
      %847 = vst.msk [vmem:[#allocation3 + $0x30] sm:$0xff] %vm840, %v814
      %848 = vst.msk [vmem:[#allocation3 + $0x38] sm:$0xff] %vm840, %v815
      %849 = vst.msk [vmem:[#allocation3 + $0x40] sm:$0xff] %vm840, %v816
      %850 = vst.msk [vmem:[#allocation3 + $0x48] sm:$0xff] %vm840, %v817
      %851 = vst.msk [vmem:[#allocation3 + $0x50] sm:$0xff] %vm840, %v818
      %852 = vst.msk [vmem:[#allocation3 + $0x58] sm:$0xff] %vm840, %v819
      %853 = vst.msk [vmem:[#allocation3 + $0x60] sm:$0xff] %vm840, %v820
      %854 = vst.msk [vmem:[#allocation3 + $0x68] sm:$0xff] %vm840, %v821
      %855 = vst.msk [vmem:[#allocation3 + $0x70] sm:$0xff] %vm840, %v822
      %856 = vst.msk [vmem:[#allocation3 + $0x78] sm:$0xff] %vm840, %v823
      %v857 = vld [vmem:[#allocation2] sm:$0xf]
      %v858 = vld [vmem:[#allocation2 + $0x4] sm:$0xf]
      %v859 = vld [vmem:[#allocation2 + $0x8] sm:$0x1]
      %v860 = vld [vmem:[#allocation2 + $0xc] sm:$0xf]
      %v861 = vld [vmem:[#allocation2 + $0x10] sm:$0xf]
      %v862 = vld [vmem:[#allocation2 + $0x14] sm:$0x1]
      %v863 = vld [vmem:[#allocation2 + $0x18] sm:$0xf]
      %v864 = vld [vmem:[#allocation2 + $0x1c] sm:$0xf]
      %v865 = vld [vmem:[#allocation2 + $0x20] sm:$0x1]
      %v866 = vld [vmem:[#allocation2 + $0x24] sm:$0xf]
      %v867 = vld [vmem:[#allocation2 + $0x28] sm:$0xf]
      %v868 = vld [vmem:[#allocation2 + $0x2c] sm:$0x1]
      %v869 = vld [vmem:[#allocation2 + $0x30] sm:$0xf]
      %v870 = vld [vmem:[#allocation2 + $0x34] sm:$0xf]
      %v871 = vld [vmem:[#allocation2 + $0x38] sm:$0x1]
      %v872 = vld [vmem:[#allocation2 + $0x3c] sm:$0xf]
      %v873 = vld [vmem:[#allocation2 + $0x40] sm:$0xf]
      %v874 = vld [vmem:[#allocation2 + $0x44] sm:$0x1]
      %v875 = vld [vmem:[#allocation2 + $0x48] sm:$0xf]
      %v876 = vld [vmem:[#allocation2 + $0x4c] sm:$0xf]
      %v877 = vld [vmem:[#allocation2 + $0x50] sm:$0x1]
      %v878 = vld [vmem:[#allocation2 + $0x54] sm:$0xf]
      %v879 = vld [vmem:[#allocation2 + $0x58] sm:$0xf]
      %v880 = vld [vmem:[#allocation2 + $0x5c] sm:$0x1]
      %v881 = vld [vmem:[#allocation2 + $0x60] sm:$0xf]
      %v882 = vld [vmem:[#allocation2 + $0x64] sm:$0xf]
      %v883 = vld [vmem:[#allocation2 + $0x68] sm:$0x1]
      %v884 = vld [vmem:[#allocation2 + $0x6c] sm:$0xf]
      %v885 = vld [vmem:[#allocation2 + $0x70] sm:$0xf]
      %v886 = vld [vmem:[#allocation2 + $0x74] sm:$0x1]
      %v887 = vld [vmem:[#allocation2 + $0x78] sm:$0xf]
      %v888 = vld [vmem:[#allocation2 + $0x7c] sm:$0xf]
      %v889 = vld [vmem:[#allocation2 + $0x80] sm:$0x1]
      %v890 = vld [vmem:[#allocation2 + $0x84] sm:$0xf]
      %v891 = vld [vmem:[#allocation2 + $0x88] sm:$0xf]
      %v892 = vld [vmem:[#allocation2 + $0x8c] sm:$0x1]
      %v893 = vld [vmem:[#allocation2 + $0x90] sm:$0xf]
      %v894 = vld [vmem:[#allocation2 + $0x94] sm:$0xf]
      %v895 = vld [vmem:[#allocation2 + $0x98] sm:$0x1]
      %v896 = vld [vmem:[#allocation2 + $0x9c] sm:$0xf]
      %v897 = vld [vmem:[#allocation2 + $0xa0] sm:$0xf]
      %v898 = vld [vmem:[#allocation2 + $0xa4] sm:$0x1]
      %v899 = vld [vmem:[#allocation2 + $0xa8] sm:$0xf]
      %v900 = vld [vmem:[#allocation2 + $0xac] sm:$0xf]
      %v901 = vld [vmem:[#allocation2 + $0xb0] sm:$0x1]
      %v902 = vld [vmem:[#allocation2 + $0xb4] sm:$0xf]
      %v903 = vld [vmem:[#allocation2 + $0xb8] sm:$0xf]
      %v904 = vld [vmem:[#allocation2 + $0xbc] sm:$0x1]
      %vm905 = vsmask.f32 3328
      %vm906 = vsmask.f32 7440
      %vm907 = vmor %vm905, %vm906
      %v909 = vshrl.u32 %v857, 16
      %v911 = vrot.slane %v909, 4
      %v912 = vshll.u32 %v857, 16
      %v914 = vrot.slane %v912, 5
      %v915 = vor.u32 %v911, %v914
      %v916 = vrot.slane %v915, 4
      %v918 = vshll.u32 %v858, 16
      %v920 = vrot.slane %v918, 5
      %v921 = vsel %vm907, %v916, %v920
      %v922 = vshrl.u32 %v858, 16
      %v924 = vrot.slane %v922, 4
      %v925 = vor.u32 %v924, %v920
      %v926 = vrot.slane %v925, 4
      %v928 = vshll.u32 %v859, 16
      %v930 = vrot.slane %v928, 5
      %v931 = vsel %vm907, %v926, %v930
      %v933 = vshrl.u32 %v860, 16
      %v935 = vrot.slane %v933, 4
      %v936 = vshll.u32 %v860, 16
      %v938 = vrot.slane %v936, 5
      %v939 = vor.u32 %v935, %v938
      %v940 = vrot.slane %v939, 4
      %v942 = vshll.u32 %v861, 16
      %v944 = vrot.slane %v942, 5
      %v945 = vsel %vm907, %v940, %v944
      %v946 = vshrl.u32 %v861, 16
      %v948 = vrot.slane %v946, 4
      %v949 = vor.u32 %v948, %v944
      %v950 = vrot.slane %v949, 4
      %v952 = vshll.u32 %v862, 16
      %v954 = vrot.slane %v952, 5
      %v955 = vsel %vm907, %v950, %v954
      %v957 = vshrl.u32 %v863, 16
      %v959 = vrot.slane %v957, 4
      %v960 = vshll.u32 %v863, 16
      %v962 = vrot.slane %v960, 5
      %v963 = vor.u32 %v959, %v962
      %v964 = vrot.slane %v963, 4
      %v966 = vshll.u32 %v864, 16
      %v968 = vrot.slane %v966, 5
      %v969 = vsel %vm907, %v964, %v968
      %v970 = vshrl.u32 %v864, 16
      %v972 = vrot.slane %v970, 4
      %v973 = vor.u32 %v972, %v968
      %v974 = vrot.slane %v973, 4
      %v976 = vshll.u32 %v865, 16
      %v978 = vrot.slane %v976, 5
      %v979 = vsel %vm907, %v974, %v978
      %v981 = vshrl.u32 %v866, 16
      %v983 = vrot.slane %v981, 4
      %v984 = vshll.u32 %v866, 16
      %v986 = vrot.slane %v984, 5
      %v987 = vor.u32 %v983, %v986
      %v988 = vrot.slane %v987, 4
      %v990 = vshll.u32 %v867, 16
      %v992 = vrot.slane %v990, 5
      %v993 = vsel %vm907, %v988, %v992
      %v994 = vshrl.u32 %v867, 16
      %v996 = vrot.slane %v994, 4
      %v997 = vor.u32 %v996, %v992
      %v998 = vrot.slane %v997, 4
      %v1000 = vshll.u32 %v868, 16
      %v1002 = vrot.slane %v1000, 5
      %v1003 = vsel %vm907, %v998, %v1002
      %v1005 = vshrl.u32 %v869, 16
      %v1007 = vrot.slane %v1005, 4
      %v1008 = vshll.u32 %v869, 16
      %v1010 = vrot.slane %v1008, 5
      %v1011 = vor.u32 %v1007, %v1010
      %v1012 = vrot.slane %v1011, 4
      %v1014 = vshll.u32 %v870, 16
      %v1016 = vrot.slane %v1014, 5
      %v1017 = vsel %vm907, %v1012, %v1016
      %v1018 = vshrl.u32 %v870, 16
      %v1020 = vrot.slane %v1018, 4
      %v1021 = vor.u32 %v1020, %v1016
      %v1022 = vrot.slane %v1021, 4
      %v1024 = vshll.u32 %v871, 16
      %v1026 = vrot.slane %v1024, 5
      %v1027 = vsel %vm907, %v1022, %v1026
      %v1029 = vshrl.u32 %v872, 16
      %v1031 = vrot.slane %v1029, 4
      %v1032 = vshll.u32 %v872, 16
      %v1034 = vrot.slane %v1032, 5
      %v1035 = vor.u32 %v1031, %v1034
      %v1036 = vrot.slane %v1035, 4
      %v1038 = vshll.u32 %v873, 16
      %v1040 = vrot.slane %v1038, 5
      %v1041 = vsel %vm907, %v1036, %v1040
      %v1042 = vshrl.u32 %v873, 16
      %v1044 = vrot.slane %v1042, 4
      %v1045 = vor.u32 %v1044, %v1040
      %v1046 = vrot.slane %v1045, 4
      %v1048 = vshll.u32 %v874, 16
      %v1050 = vrot.slane %v1048, 5
      %v1051 = vsel %vm907, %v1046, %v1050
      %v1053 = vshrl.u32 %v875, 16
      %v1055 = vrot.slane %v1053, 4
      %v1056 = vshll.u32 %v875, 16
      %v1058 = vrot.slane %v1056, 5
      %v1059 = vor.u32 %v1055, %v1058
      %v1060 = vrot.slane %v1059, 4
      %v1062 = vshll.u32 %v876, 16
      %v1064 = vrot.slane %v1062, 5
      %v1065 = vsel %vm907, %v1060, %v1064
      %v1066 = vshrl.u32 %v876, 16
      %v1068 = vrot.slane %v1066, 4
      %v1069 = vor.u32 %v1068, %v1064
      %v1070 = vrot.slane %v1069, 4
      %v1072 = vshll.u32 %v877, 16
      %v1074 = vrot.slane %v1072, 5
      %v1075 = vsel %vm907, %v1070, %v1074
      %v1077 = vshrl.u32 %v878, 16
      %v1079 = vrot.slane %v1077, 4
      %v1080 = vshll.u32 %v878, 16
      %v1082 = vrot.slane %v1080, 5
      %v1083 = vor.u32 %v1079, %v1082
      %v1084 = vrot.slane %v1083, 4
      %v1086 = vshll.u32 %v879, 16
      %v1088 = vrot.slane %v1086, 5
      %v1089 = vsel %vm907, %v1084, %v1088
      %v1090 = vshrl.u32 %v879, 16
      %v1092 = vrot.slane %v1090, 4
      %v1093 = vor.u32 %v1092, %v1088
      %v1094 = vrot.slane %v1093, 4
      %v1096 = vshll.u32 %v880, 16
      %v1098 = vrot.slane %v1096, 5
      %v1099 = vsel %vm907, %v1094, %v1098
      %v1101 = vshrl.u32 %v881, 16
      %v1103 = vrot.slane %v1101, 4
      %v1104 = vshll.u32 %v881, 16
      %v1106 = vrot.slane %v1104, 5
      %v1107 = vor.u32 %v1103, %v1106
      %v1108 = vrot.slane %v1107, 4
      %v1110 = vshll.u32 %v882, 16
      %v1112 = vrot.slane %v1110, 5
      %v1113 = vsel %vm907, %v1108, %v1112
      %v1114 = vshrl.u32 %v882, 16
      %v1116 = vrot.slane %v1114, 4
      %v1117 = vor.u32 %v1116, %v1112
      %v1118 = vrot.slane %v1117, 4
      %v1120 = vshll.u32 %v883, 16
      %v1122 = vrot.slane %v1120, 5
      %v1123 = vsel %vm907, %v1118, %v1122
      %v1125 = vshrl.u32 %v884, 16
      %v1127 = vrot.slane %v1125, 4
      %v1128 = vshll.u32 %v884, 16
      %v1130 = vrot.slane %v1128, 5
      %v1131 = vor.u32 %v1127, %v1130
      %v1132 = vrot.slane %v1131, 4
      %v1134 = vshll.u32 %v885, 16
      %v1136 = vrot.slane %v1134, 5
      %v1137 = vsel %vm907, %v1132, %v1136
      %v1138 = vshrl.u32 %v885, 16
      %v1140 = vrot.slane %v1138, 4
      %v1141 = vor.u32 %v1140, %v1136
      %v1142 = vrot.slane %v1141, 4
      %v1144 = vshll.u32 %v886, 16
      %v1146 = vrot.slane %v1144, 5
      %v1147 = vsel %vm907, %v1142, %v1146
      %v1149 = vshrl.u32 %v887, 16
      %v1151 = vrot.slane %v1149, 4
      %v1152 = vshll.u32 %v887, 16
      %v1154 = vrot.slane %v1152, 5
      %v1155 = vor.u32 %v1151, %v1154
      %v1156 = vrot.slane %v1155, 4
      %v1158 = vshll.u32 %v888, 16
      %v1160 = vrot.slane %v1158, 5
      %v1161 = vsel %vm907, %v1156, %v1160
      %v1162 = vshrl.u32 %v888, 16
      %v1164 = vrot.slane %v1162, 4
      %v1165 = vor.u32 %v1164, %v1160
      %v1166 = vrot.slane %v1165, 4
      %v1168 = vshll.u32 %v889, 16
      %v1170 = vrot.slane %v1168, 5
      %v1171 = vsel %vm907, %v1166, %v1170
      %v1173 = vshrl.u32 %v890, 16
      %v1175 = vrot.slane %v1173, 4
      %v1176 = vshll.u32 %v890, 16
      %v1178 = vrot.slane %v1176, 5
      %v1179 = vor.u32 %v1175, %v1178
      %v1180 = vrot.slane %v1179, 4
      %v1182 = vshll.u32 %v891, 16
      %v1184 = vrot.slane %v1182, 5
      %v1185 = vsel %vm907, %v1180, %v1184
      %v1186 = vshrl.u32 %v891, 16
      %v1188 = vrot.slane %v1186, 4
      %v1189 = vor.u32 %v1188, %v1184
      %v1190 = vrot.slane %v1189, 4
      %v1192 = vshll.u32 %v892, 16
      %v1194 = vrot.slane %v1192, 5
      %v1195 = vsel %vm907, %v1190, %v1194
      %v1197 = vshrl.u32 %v893, 16
      %v1199 = vrot.slane %v1197, 4
      %v1200 = vshll.u32 %v893, 16
      %v1202 = vrot.slane %v1200, 5
      %v1203 = vor.u32 %v1199, %v1202
      %v1204 = vrot.slane %v1203, 4
      %v1206 = vshll.u32 %v894, 16
      %v1208 = vrot.slane %v1206, 5
      %v1209 = vsel %vm907, %v1204, %v1208
      %v1210 = vshrl.u32 %v894, 16
      %v1212 = vrot.slane %v1210, 4
      %v1213 = vor.u32 %v1212, %v1208
      %v1214 = vrot.slane %v1213, 4
      %v1216 = vshll.u32 %v895, 16
      %v1218 = vrot.slane %v1216, 5
      %v1219 = vsel %vm907, %v1214, %v1218
      %v1221 = vshrl.u32 %v896, 16
      %v1223 = vrot.slane %v1221, 4
      %v1224 = vshll.u32 %v896, 16
      %v1226 = vrot.slane %v1224, 5
      %v1227 = vor.u32 %v1223, %v1226
      %v1228 = vrot.slane %v1227, 4
      %v1230 = vshll.u32 %v897, 16
      %v1232 = vrot.slane %v1230, 5
      %v1233 = vsel %vm907, %v1228, %v1232
      %v1234 = vshrl.u32 %v897, 16
      %v1236 = vrot.slane %v1234, 4
      %v1237 = vor.u32 %v1236, %v1232
      %v1238 = vrot.slane %v1237, 4
      %v1240 = vshll.u32 %v898, 16
      %v1242 = vrot.slane %v1240, 5
      %v1243 = vsel %vm907, %v1238, %v1242
      %v1245 = vshrl.u32 %v899, 16
      %v1247 = vrot.slane %v1245, 4
      %v1248 = vshll.u32 %v899, 16
      %v1250 = vrot.slane %v1248, 5
      %v1251 = vor.u32 %v1247, %v1250
      %v1252 = vrot.slane %v1251, 4
      %v1254 = vshll.u32 %v900, 16
      %v1256 = vrot.slane %v1254, 5
      %v1257 = vsel %vm907, %v1252, %v1256
      %v1258 = vshrl.u32 %v900, 16
      %v1260 = vrot.slane %v1258, 4
      %v1261 = vor.u32 %v1260, %v1256
      %v1262 = vrot.slane %v1261, 4
      %v1264 = vshll.u32 %v901, 16
      %v1266 = vrot.slane %v1264, 5
      %v1267 = vsel %vm907, %v1262, %v1266
      %v1269 = vshrl.u32 %v902, 16
      %v1271 = vrot.slane %v1269, 4
      %v1272 = vshll.u32 %v902, 16
      %v1274 = vrot.slane %v1272, 5
      %v1275 = vor.u32 %v1271, %v1274
      %v1276 = vrot.slane %v1275, 4
      %v1278 = vshll.u32 %v903, 16
      %v1280 = vrot.slane %v1278, 5
      %v1281 = vsel %vm907, %v1276, %v1280
      %v1282 = vshrl.u32 %v903, 16
      %v1284 = vrot.slane %v1282, 4
      %v1285 = vor.u32 %v1284, %v1280
      %v1286 = vrot.slane %v1285, 4
      %v1288 = vshll.u32 %v904, 16
      %v1290 = vrot.slane %v1288, 5
      %v1291 = vsel %vm907, %v1286, %v1290
      %v1292 = vunpack.c.l.b16 %v921
      %v1293 = vunpack.c.l.b16 %v931
      %v1294 = vunpack.c.l.b16 %v945
      %v1295 = vunpack.c.l.b16 %v955
      %v1296 = vunpack.c.l.b16 %v969
      %v1297 = vunpack.c.l.b16 %v979
      %v1298 = vunpack.c.l.b16 %v993
      %v1299 = vunpack.c.l.b16 %v1003
      %v1300 = vunpack.c.l.b16 %v1017
      %v1301 = vunpack.c.l.b16 %v1027
      %v1302 = vunpack.c.l.b16 %v1041
      %v1303 = vunpack.c.l.b16 %v1051
      %v1304 = vunpack.c.l.b16 %v1065
      %v1305 = vunpack.c.l.b16 %v1075
      %v1306 = vunpack.c.l.b16 %v1089
      %v1307 = vunpack.c.l.b16 %v1099
      %v1308 = vunpack.c.l.b16 %v1113
      %v1309 = vunpack.c.l.b16 %v1123
      %v1310 = vunpack.c.l.b16 %v1137
      %v1311 = vunpack.c.l.b16 %v1147
      %v1312 = vunpack.c.l.b16 %v1161
      %v1313 = vunpack.c.l.b16 %v1171
      %v1314 = vunpack.c.l.b16 %v1185
      %v1315 = vunpack.c.l.b16 %v1195
      %v1316 = vunpack.c.l.b16 %v1209
      %v1317 = vunpack.c.l.b16 %v1219
      %v1318 = vunpack.c.l.b16 %v1233
      %v1319 = vunpack.c.l.b16 %v1243
      %v1320 = vunpack.c.l.b16 %v1257
      %v1321 = vunpack.c.l.b16 %v1267
      %v1322 = vunpack.c.l.b16 %v1281
      %v1323 = vunpack.c.l.b16 %v1291
      %v1324 = vpack.c.b16 %v1293, %v1292
      %v1325 = vpack.c.b16 %v1295, %v1294
      %v1326 = vpack.c.b16 %v1297, %v1296
      %v1327 = vpack.c.b16 %v1299, %v1298
      %v1328 = vpack.c.b16 %v1301, %v1300
      %v1329 = vpack.c.b16 %v1303, %v1302
      %v1330 = vpack.c.b16 %v1305, %v1304
      %v1331 = vpack.c.b16 %v1307, %v1306
      %v1332 = vpack.c.b16 %v1309, %v1308
      %v1333 = vpack.c.b16 %v1311, %v1310
      %v1334 = vpack.c.b16 %v1313, %v1312
      %v1335 = vpack.c.b16 %v1315, %v1314
      %v1336 = vpack.c.b16 %v1317, %v1316
      %v1337 = vpack.c.b16 %v1319, %v1318
      %v1338 = vpack.c.b16 %v1321, %v1320
      %v1339 = vpack.c.b16 %v1323, %v1322
      %1340 = vrot.lane.b32.xlu0 %v1324, 4
      %v1341 = vpop.permute.xlu0 %1340
      %1342 = vrot.lane.b32.xlu0 %v1325, 4
      %v1343 = vpop.permute.xlu0 %1342
      %1344 = vrot.lane.b32.xlu0 %v1326, 4
      %v1345 = vpop.permute.xlu0 %1344
      %1346 = vrot.lane.b32.xlu0 %v1327, 4
      %v1347 = vpop.permute.xlu0 %1346
      %1348 = vrot.lane.b32.xlu0 %v1328, 4
      %v1349 = vpop.permute.xlu0 %1348
      %1350 = vrot.lane.b32.xlu0 %v1329, 4
      %v1351 = vpop.permute.xlu0 %1350
      %1352 = vrot.lane.b32.xlu0 %v1330, 4
      %v1353 = vpop.permute.xlu0 %1352
      %1354 = vrot.lane.b32.xlu0 %v1331, 4
      %v1355 = vpop.permute.xlu0 %1354
      %1356 = vrot.lane.b32.xlu0 %v1332, 4
      %v1357 = vpop.permute.xlu0 %1356
      %1358 = vrot.lane.b32.xlu0 %v1333, 4
      %v1359 = vpop.permute.xlu0 %1358
      %1360 = vrot.lane.b32.xlu0 %v1334, 4
      %v1361 = vpop.permute.xlu0 %1360
      %1362 = vrot.lane.b32.xlu0 %v1335, 4
      %v1363 = vpop.permute.xlu0 %1362
      %1364 = vrot.lane.b32.xlu0 %v1336, 4
      %v1365 = vpop.permute.xlu0 %1364
      %1366 = vrot.lane.b32.xlu0 %v1337, 4
      %v1367 = vpop.permute.xlu0 %1366
      %1368 = vrot.lane.b32.xlu0 %v1338, 4
      %v1369 = vpop.permute.xlu0 %1368
      %1370 = vrot.lane.b32.xlu0 %v1339, 4
      %v1371 = vpop.permute.xlu0 %1370
      %vm1388 = vcmask 64544
      %1389 = vst.msk [vmem:[#allocation3] sm:$0xff] %vm1388, %v1341
      %1390 = vst.msk [vmem:[#allocation3 + $0x8] sm:$0xff] %vm1388, %v1343
      %1391 = vst.msk [vmem:[#allocation3 + $0x10] sm:$0xff] %vm1388, %v1345
      %1392 = vst.msk [vmem:[#allocation3 + $0x18] sm:$0xff] %vm1388, %v1347
      %1393 = vst.msk [vmem:[#allocation3 + $0x20] sm:$0xff] %vm1388, %v1349
      %1394 = vst.msk [vmem:[#allocation3 + $0x28] sm:$0xff] %vm1388, %v1351
      %1395 = vst.msk [vmem:[#allocation3 + $0x30] sm:$0xff] %vm1388, %v1353
      %1396 = vst.msk [vmem:[#allocation3 + $0x38] sm:$0xff] %vm1388, %v1355
      %1397 = vst.msk [vmem:[#allocation3 + $0x40] sm:$0xff] %vm1388, %v1357
      %1398 = vst.msk [vmem:[#allocation3 + $0x48] sm:$0xff] %vm1388, %v1359
      %1399 = vst.msk [vmem:[#allocation3 + $0x50] sm:$0xff] %vm1388, %v1361
      %1400 = vst.msk [vmem:[#allocation3 + $0x58] sm:$0xff] %vm1388, %v1363
      %1401 = vst.msk [vmem:[#allocation3 + $0x60] sm:$0xff] %vm1388, %v1365
      %1402 = vst.msk [vmem:[#allocation3 + $0x68] sm:$0xff] %vm1388, %v1367
      %1403 = vst.msk [vmem:[#allocation3 + $0x70] sm:$0xff] %vm1388, %v1369
      %1404 = vst.msk [vmem:[#allocation3 + $0x78] sm:$0xff] %vm1388, %v1371
      %v1405 = vld [vmem:[#allocation2] sm:$0xe]
      %v1406 = vld [vmem:[#allocation2 + $0x4] sm:$0xf]
      %v1407 = vld [vmem:[#allocation2 + $0x8] sm:$0x1]
      %v1408 = vld [vmem:[#allocation2 + $0xc] sm:$0xe]
      %v1409 = vld [vmem:[#allocation2 + $0x10] sm:$0xf]
      %v1410 = vld [vmem:[#allocation2 + $0x14] sm:$0x1]
      %v1411 = vld [vmem:[#allocation2 + $0x18] sm:$0xe]
      %v1412 = vld [vmem:[#allocation2 + $0x1c] sm:$0xf]
      %v1413 = vld [vmem:[#allocation2 + $0x20] sm:$0x1]
      %v1414 = vld [vmem:[#allocation2 + $0x24] sm:$0xe]
      %v1415 = vld [vmem:[#allocation2 + $0x28] sm:$0xf]
      %v1416 = vld [vmem:[#allocation2 + $0x2c] sm:$0x1]
      %v1417 = vld [vmem:[#allocation2 + $0x30] sm:$0xe]
      %v1418 = vld [vmem:[#allocation2 + $0x34] sm:$0xf]
      %v1419 = vld [vmem:[#allocation2 + $0x38] sm:$0x1]
      %v1420 = vld [vmem:[#allocation2 + $0x3c] sm:$0xe]
      %v1421 = vld [vmem:[#allocation2 + $0x40] sm:$0xf]
      %v1422 = vld [vmem:[#allocation2 + $0x44] sm:$0x1]
      %v1423 = vld [vmem:[#allocation2 + $0x48] sm:$0xe]
      %v1424 = vld [vmem:[#allocation2 + $0x4c] sm:$0xf]
      %v1425 = vld [vmem:[#allocation2 + $0x50] sm:$0x1]
      %v1426 = vld [vmem:[#allocation2 + $0x54] sm:$0xe]
      %v1427 = vld [vmem:[#allocation2 + $0x58] sm:$0xf]
      %v1428 = vld [vmem:[#allocation2 + $0x5c] sm:$0x1]
      %v1429 = vld [vmem:[#allocation2 + $0x60] sm:$0xe]
      %v1430 = vld [vmem:[#allocation2 + $0x64] sm:$0xf]
      %v1431 = vld [vmem:[#allocation2 + $0x68] sm:$0x1]
      %v1432 = vld [vmem:[#allocation2 + $0x6c] sm:$0xe]
      %v1433 = vld [vmem:[#allocation2 + $0x70] sm:$0xf]
      %v1434 = vld [vmem:[#allocation2 + $0x74] sm:$0x1]
      %v1435 = vld [vmem:[#allocation2 + $0x78] sm:$0xe]
      %v1436 = vld [vmem:[#allocation2 + $0x7c] sm:$0xf]
      %v1437 = vld [vmem:[#allocation2 + $0x80] sm:$0x1]
      %v1438 = vld [vmem:[#allocation2 + $0x84] sm:$0xe]
      %v1439 = vld [vmem:[#allocation2 + $0x88] sm:$0xf]
      %v1440 = vld [vmem:[#allocation2 + $0x8c] sm:$0x1]
      %v1441 = vld [vmem:[#allocation2 + $0x90] sm:$0xe]
      %v1442 = vld [vmem:[#allocation2 + $0x94] sm:$0xf]
      %v1443 = vld [vmem:[#allocation2 + $0x98] sm:$0x1]
      %v1444 = vld [vmem:[#allocation2 + $0x9c] sm:$0xe]
      %v1445 = vld [vmem:[#allocation2 + $0xa0] sm:$0xf]
      %v1446 = vld [vmem:[#allocation2 + $0xa4] sm:$0x1]
      %v1447 = vld [vmem:[#allocation2 + $0xa8] sm:$0xe]
      %v1448 = vld [vmem:[#allocation2 + $0xac] sm:$0xf]
      %v1449 = vld [vmem:[#allocation2 + $0xb0] sm:$0x1]
      %v1450 = vld [vmem:[#allocation2 + $0xb4] sm:$0xe]
      %v1451 = vld [vmem:[#allocation2 + $0xb8] sm:$0xf]
      %v1452 = vld [vmem:[#allocation2 + $0xbc] sm:$0x1]
      %vm1501 = vcmask 1042432
      %vm1502 = vcmask 1046532
      %vm1503 = vmor %vm1501, %vm1502
      %v1504 = vrot.slane %v1405, 5
      %v1505 = vrot.slane %v1504, 4
      %v1506 = vrot.slane %v1406, 5
      %v1507 = vsel %vm1503, %v1505, %v1506
      %v1508 = vrot.slane %v1506, 4
      %v1509 = vrot.slane %v1407, 5
      %v1510 = vsel %vm1503, %v1508, %v1509
      %v1511 = vrot.slane %v1408, 5
      %v1512 = vrot.slane %v1511, 4
      %v1513 = vrot.slane %v1409, 5
      %v1514 = vsel %vm1503, %v1512, %v1513
      %v1515 = vrot.slane %v1513, 4
      %v1516 = vrot.slane %v1410, 5
      %v1517 = vsel %vm1503, %v1515, %v1516
      %v1518 = vrot.slane %v1411, 5
      %v1519 = vrot.slane %v1518, 4
      %v1520 = vrot.slane %v1412, 5
      %v1521 = vsel %vm1503, %v1519, %v1520
      %v1522 = vrot.slane %v1520, 4
      %v1523 = vrot.slane %v1413, 5
      %v1524 = vsel %vm1503, %v1522, %v1523
      %v1525 = vrot.slane %v1414, 5
      %v1526 = vrot.slane %v1525, 4
      %v1527 = vrot.slane %v1415, 5
      %v1528 = vsel %vm1503, %v1526, %v1527
      %v1529 = vrot.slane %v1527, 4
      %v1530 = vrot.slane %v1416, 5
      %v1531 = vsel %vm1503, %v1529, %v1530
      %v1532 = vrot.slane %v1417, 5
      %v1533 = vrot.slane %v1532, 4
      %v1534 = vrot.slane %v1418, 5
      %v1535 = vsel %vm1503, %v1533, %v1534
      %v1536 = vrot.slane %v1534, 4
      %v1537 = vrot.slane %v1419, 5
      %v1538 = vsel %vm1503, %v1536, %v1537
      %v1539 = vrot.slane %v1420, 5
      %v1540 = vrot.slane %v1539, 4
      %v1541 = vrot.slane %v1421, 5
      %v1542 = vsel %vm1503, %v1540, %v1541
      %v1543 = vrot.slane %v1541, 4
      %v1544 = vrot.slane %v1422, 5
      %v1545 = vsel %vm1503, %v1543, %v1544
      %v1546 = vrot.slane %v1423, 5
      %v1547 = vrot.slane %v1546, 4
      %v1548 = vrot.slane %v1424, 5
      %v1549 = vsel %vm1503, %v1547, %v1548
      %v1550 = vrot.slane %v1548, 4
      %v1551 = vrot.slane %v1425, 5
      %v1552 = vsel %vm1503, %v1550, %v1551
      %v1553 = vrot.slane %v1426, 5
      %v1554 = vrot.slane %v1553, 4
      %v1555 = vrot.slane %v1427, 5
      %v1556 = vsel %vm1503, %v1554, %v1555
      %v1557 = vrot.slane %v1555, 4
      %v1558 = vrot.slane %v1428, 5
      %v1559 = vsel %vm1503, %v1557, %v1558
      %v1560 = vrot.slane %v1429, 5
      %v1561 = vrot.slane %v1560, 4
      %v1562 = vrot.slane %v1430, 5
      %v1563 = vsel %vm1503, %v1561, %v1562
      %v1564 = vrot.slane %v1562, 4
      %v1565 = vrot.slane %v1431, 5
      %v1566 = vsel %vm1503, %v1564, %v1565
      %v1567 = vrot.slane %v1432, 5
      %v1568 = vrot.slane %v1567, 4
      %v1569 = vrot.slane %v1433, 5
      %v1570 = vsel %vm1503, %v1568, %v1569
      %v1571 = vrot.slane %v1569, 4
      %v1572 = vrot.slane %v1434, 5
      %v1573 = vsel %vm1503, %v1571, %v1572
      %v1574 = vrot.slane %v1435, 5
      %v1575 = vrot.slane %v1574, 4
      %v1576 = vrot.slane %v1436, 5
      %v1577 = vsel %vm1503, %v1575, %v1576
      %v1578 = vrot.slane %v1576, 4
      %v1579 = vrot.slane %v1437, 5
      %v1580 = vsel %vm1503, %v1578, %v1579
      %v1581 = vrot.slane %v1438, 5
      %v1582 = vrot.slane %v1581, 4
      %v1583 = vrot.slane %v1439, 5
      %v1584 = vsel %vm1503, %v1582, %v1583
      %v1585 = vrot.slane %v1583, 4
      %v1586 = vrot.slane %v1440, 5
      %v1587 = vsel %vm1503, %v1585, %v1586
      %v1588 = vrot.slane %v1441, 5
      %v1589 = vrot.slane %v1588, 4
      %v1590 = vrot.slane %v1442, 5
      %v1591 = vsel %vm1503, %v1589, %v1590
      %v1592 = vrot.slane %v1590, 4
      %v1593 = vrot.slane %v1443, 5
      %v1594 = vsel %vm1503, %v1592, %v1593
      %v1595 = vrot.slane %v1444, 5
      %v1596 = vrot.slane %v1595, 4
      %v1597 = vrot.slane %v1445, 5
      %v1598 = vsel %vm1503, %v1596, %v1597
      %v1599 = vrot.slane %v1597, 4
      %v1600 = vrot.slane %v1446, 5
      %v1601 = vsel %vm1503, %v1599, %v1600
      %v1602 = vrot.slane %v1447, 5
      %v1603 = vrot.slane %v1602, 4
      %v1604 = vrot.slane %v1448, 5
      %v1605 = vsel %vm1503, %v1603, %v1604
      %v1606 = vrot.slane %v1604, 4
      %v1607 = vrot.slane %v1449, 5
      %v1608 = vsel %vm1503, %v1606, %v1607
      %v1609 = vrot.slane %v1450, 5
      %v1610 = vrot.slane %v1609, 4
      %v1611 = vrot.slane %v1451, 5
      %v1612 = vsel %vm1503, %v1610, %v1611
      %v1613 = vrot.slane %v1611, 4
      %v1614 = vrot.slane %v1452, 5
      %v1615 = vsel %vm1503, %v1613, %v1614
      %v1616 = vunpack.c.l.b16 %v1507
      %v1617 = vunpack.c.l.b16 %v1510
      %v1618 = vunpack.c.l.b16 %v1514
      %v1619 = vunpack.c.l.b16 %v1517
      %v1620 = vunpack.c.l.b16 %v1521
      %v1621 = vunpack.c.l.b16 %v1524
      %v1622 = vunpack.c.l.b16 %v1528
      %v1623 = vunpack.c.l.b16 %v1531
      %v1624 = vunpack.c.l.b16 %v1535
      %v1625 = vunpack.c.l.b16 %v1538
      %v1626 = vunpack.c.l.b16 %v1542
      %v1627 = vunpack.c.l.b16 %v1545
      %v1628 = vunpack.c.l.b16 %v1549
      %v1629 = vunpack.c.l.b16 %v1552
      %v1630 = vunpack.c.l.b16 %v1556
      %v1631 = vunpack.c.l.b16 %v1559
      %v1632 = vunpack.c.l.b16 %v1563
      %v1633 = vunpack.c.l.b16 %v1566
      %v1634 = vunpack.c.l.b16 %v1570
      %v1635 = vunpack.c.l.b16 %v1573
      %v1636 = vunpack.c.l.b16 %v1577
      %v1637 = vunpack.c.l.b16 %v1580
      %v1638 = vunpack.c.l.b16 %v1584
      %v1639 = vunpack.c.l.b16 %v1587
      %v1640 = vunpack.c.l.b16 %v1591
      %v1641 = vunpack.c.l.b16 %v1594
      %v1642 = vunpack.c.l.b16 %v1598
      %v1643 = vunpack.c.l.b16 %v1601
      %v1644 = vunpack.c.l.b16 %v1605
      %v1645 = vunpack.c.l.b16 %v1608
      %v1646 = vunpack.c.l.b16 %v1612
      %v1647 = vunpack.c.l.b16 %v1615
      %v1648 = vpack.c.b16 %v1617, %v1616
      %v1649 = vpack.c.b16 %v1619, %v1618
      %v1650 = vpack.c.b16 %v1621, %v1620
      %v1651 = vpack.c.b16 %v1623, %v1622
      %v1652 = vpack.c.b16 %v1625, %v1624
      %v1653 = vpack.c.b16 %v1627, %v1626
      %v1654 = vpack.c.b16 %v1629, %v1628
      %v1655 = vpack.c.b16 %v1631, %v1630
      %v1656 = vpack.c.b16 %v1633, %v1632
      %v1657 = vpack.c.b16 %v1635, %v1634
      %v1658 = vpack.c.b16 %v1637, %v1636
      %v1659 = vpack.c.b16 %v1639, %v1638
      %v1660 = vpack.c.b16 %v1641, %v1640
      %v1661 = vpack.c.b16 %v1643, %v1642
      %v1662 = vpack.c.b16 %v1645, %v1644
      %v1663 = vpack.c.b16 %v1647, %v1646
      %1664 = vrot.lane.b32.xlu0 %v1648, 8
      %v1665 = vpop.permute.xlu0 %1664
      %1666 = vrot.lane.b32.xlu0 %v1649, 8
      %v1667 = vpop.permute.xlu0 %1666
      %1668 = vrot.lane.b32.xlu0 %v1650, 8
      %v1669 = vpop.permute.xlu0 %1668
      %1670 = vrot.lane.b32.xlu0 %v1651, 8
      %v1671 = vpop.permute.xlu0 %1670
      %1672 = vrot.lane.b32.xlu0 %v1652, 8
      %v1673 = vpop.permute.xlu0 %1672
      %1674 = vrot.lane.b32.xlu0 %v1653, 8
      %v1675 = vpop.permute.xlu0 %1674
      %1676 = vrot.lane.b32.xlu0 %v1654, 8
      %v1677 = vpop.permute.xlu0 %1676
      %1678 = vrot.lane.b32.xlu0 %v1655, 8
      %v1679 = vpop.permute.xlu0 %1678
      %1680 = vrot.lane.b32.xlu0 %v1656, 8
      %v1681 = vpop.permute.xlu0 %1680
      %1682 = vrot.lane.b32.xlu0 %v1657, 8
      %v1683 = vpop.permute.xlu0 %1682
      %1684 = vrot.lane.b32.xlu0 %v1658, 8
      %v1685 = vpop.permute.xlu0 %1684
      %1686 = vrot.lane.b32.xlu0 %v1659, 8
      %v1687 = vpop.permute.xlu0 %1686
      %1688 = vrot.lane.b32.xlu0 %v1660, 8
      %v1689 = vpop.permute.xlu0 %1688
      %1690 = vrot.lane.b32.xlu0 %v1661, 8
      %v1691 = vpop.permute.xlu0 %1690
      %1692 = vrot.lane.b32.xlu0 %v1662, 8
      %v1693 = vpop.permute.xlu0 %1692
      %1694 = vrot.lane.b32.xlu0 %v1663, 8
      %v1695 = vpop.permute.xlu0 %1694
      %vm1712 = vcmask 97344
      %1713 = vst.msk [vmem:[#allocation3] sm:$0xff] %vm1712, %v1665
      %1714 = vst.msk [vmem:[#allocation3 + $0x8] sm:$0xff] %vm1712, %v1667
      %1715 = vst.msk [vmem:[#allocation3 + $0x10] sm:$0xff] %vm1712, %v1669
      %1716 = vst.msk [vmem:[#allocation3 + $0x18] sm:$0xff] %vm1712, %v1671
      %1717 = vst.msk [vmem:[#allocation3 + $0x20] sm:$0xff] %vm1712, %v1673
      %1718 = vst.msk [vmem:[#allocation3 + $0x28] sm:$0xff] %vm1712, %v1675
      %1719 = vst.msk [vmem:[#allocation3 + $0x30] sm:$0xff] %vm1712, %v1677
      %1720 = vst.msk [vmem:[#allocation3 + $0x38] sm:$0xff] %vm1712, %v1679
      %1721 = vst.msk [vmem:[#allocation3 + $0x40] sm:$0xff] %vm1712, %v1681
      %1722 = vst.msk [vmem:[#allocation3 + $0x48] sm:$0xff] %vm1712, %v1683
      %1723 = vst.msk [vmem:[#allocation3 + $0x50] sm:$0xff] %vm1712, %v1685
      %1724 = vst.msk [vmem:[#allocation3 + $0x58] sm:$0xff] %vm1712, %v1687
      %1725 = vst.msk [vmem:[#allocation3 + $0x60] sm:$0xff] %vm1712, %v1689
      %1726 = vst.msk [vmem:[#allocation3 + $0x68] sm:$0xff] %vm1712, %v1691
      %1727 = vst.msk [vmem:[#allocation3 + $0x70] sm:$0xff] %vm1712, %v1693
      %1728 = vst.msk [vmem:[#allocation3 + $0x78] sm:$0xff] %vm1712, %v1695
      %v1729 = vld [vmem:[%s594] sm:$0xf]
      %v1730 = vld [vmem:[%s594 + $0x4] sm:$0xf]
      %v1731 = vld [vmem:[%s594 + $0xc] sm:$0xf]
      %v1732 = vld [vmem:[%s594 + $0x10] sm:$0xf]
      %v1733 = vld [vmem:[%s594 + $0x18] sm:$0xf]
      %v1734 = vld [vmem:[%s594 + $0x1c] sm:$0xf]
      %v1735 = vld [vmem:[%s594 + $0x24] sm:$0xf]
      %v1736 = vld [vmem:[%s594 + $0x28] sm:$0xf]
      %v1737 = vld [vmem:[%s594 + $0x30] sm:$0xf]
      %v1738 = vld [vmem:[%s594 + $0x34] sm:$0xf]
      %v1739 = vld [vmem:[%s594 + $0x3c] sm:$0xf]
      %v1740 = vld [vmem:[%s594 + $0x40] sm:$0xf]
      %v1741 = vld [vmem:[%s594 + $0x48] sm:$0xf]
      %v1742 = vld [vmem:[%s594 + $0x4c] sm:$0xf]
      %v1743 = vld [vmem:[%s594 + $0x54] sm:$0xf]
      %v1744 = vld [vmem:[%s594 + $0x58] sm:$0xf]
      %v1745 = vld [vmem:[%s594 + $0x60] sm:$0xf]
      %v1746 = vld [vmem:[%s594 + $0x64] sm:$0xf]
      %v1747 = vld [vmem:[%s594 + $0x6c] sm:$0xf]
      %v1748 = vld [vmem:[%s594 + $0x70] sm:$0xf]
      %v1749 = vld [vmem:[%s594 + $0x78] sm:$0xf]
      %v1750 = vld [vmem:[%s594 + $0x7c] sm:$0xf]
      %v1751 = vld [vmem:[%s594 + $0x84] sm:$0xf]
      %v1752 = vld [vmem:[%s594 + $0x88] sm:$0xf]
      %v1753 = vld [vmem:[%s594 + $0x90] sm:$0xf]
      %v1754 = vld [vmem:[%s594 + $0x94] sm:$0xf]
      %v1755 = vld [vmem:[%s594 + $0x9c] sm:$0xf]
      %v1756 = vld [vmem:[%s594 + $0xa0] sm:$0xf]
      %v1757 = vld [vmem:[%s594 + $0xa8] sm:$0xf]
      %v1758 = vld [vmem:[%s594 + $0xac] sm:$0xf]
      %v1759 = vld [vmem:[%s594 + $0xb4] sm:$0xf]
      %v1760 = vld [vmem:[%s594 + $0xb8] sm:$0xf]
      %v1793 = vunpack.c.l.b16 %v1729
      %v1794 = vunpack.c.l.b16 %v1730
      %v1795 = vunpack.c.l.b16 %v1731
      %v1796 = vunpack.c.l.b16 %v1732
      %v1797 = vunpack.c.l.b16 %v1733
      %v1798 = vunpack.c.l.b16 %v1734
      %v1799 = vunpack.c.l.b16 %v1735
      %v1800 = vunpack.c.l.b16 %v1736
      %v1801 = vunpack.c.l.b16 %v1737
      %v1802 = vunpack.c.l.b16 %v1738
      %v1803 = vunpack.c.l.b16 %v1739
      %v1804 = vunpack.c.l.b16 %v1740
      %v1805 = vunpack.c.l.b16 %v1741
      %v1806 = vunpack.c.l.b16 %v1742
      %v1807 = vunpack.c.l.b16 %v1743
      %v1808 = vunpack.c.l.b16 %v1744
      %v1809 = vunpack.c.l.b16 %v1745
      %v1810 = vunpack.c.l.b16 %v1746
      %v1811 = vunpack.c.l.b16 %v1747
      %v1812 = vunpack.c.l.b16 %v1748
      %v1813 = vunpack.c.l.b16 %v1749
      %v1814 = vunpack.c.l.b16 %v1750
      %v1815 = vunpack.c.l.b16 %v1751
      %v1816 = vunpack.c.l.b16 %v1752
      %v1817 = vunpack.c.l.b16 %v1753
      %v1818 = vunpack.c.l.b16 %v1754
      %v1819 = vunpack.c.l.b16 %v1755
      %v1820 = vunpack.c.l.b16 %v1756
      %v1821 = vunpack.c.l.b16 %v1757
      %v1822 = vunpack.c.l.b16 %v1758
      %v1823 = vunpack.c.l.b16 %v1759
      %v1824 = vunpack.c.l.b16 %v1760
      %v1825 = vpack.c.b16 %v1794, %v1793
      %v1826 = vpack.c.b16 %v1796, %v1795
      %v1827 = vpack.c.b16 %v1798, %v1797
      %v1828 = vpack.c.b16 %v1800, %v1799
      %v1829 = vpack.c.b16 %v1802, %v1801
      %v1830 = vpack.c.b16 %v1804, %v1803
      %v1831 = vpack.c.b16 %v1806, %v1805
      %v1832 = vpack.c.b16 %v1808, %v1807
      %v1833 = vpack.c.b16 %v1810, %v1809
      %v1834 = vpack.c.b16 %v1812, %v1811
      %v1835 = vpack.c.b16 %v1814, %v1813
      %v1836 = vpack.c.b16 %v1816, %v1815
      %v1837 = vpack.c.b16 %v1818, %v1817
      %v1838 = vpack.c.b16 %v1820, %v1819
      %v1839 = vpack.c.b16 %v1822, %v1821
      %v1840 = vpack.c.b16 %v1824, %v1823
      %1841 = vrot.lane.b32.xlu0 %v1825, 12
      %v1842 = vpop.permute.xlu0 %1841
      %1843 = vrot.lane.b32.xlu0 %v1826, 12
      %v1844 = vpop.permute.xlu0 %1843
      %1845 = vrot.lane.b32.xlu0 %v1827, 12
      %v1846 = vpop.permute.xlu0 %1845
      %1847 = vrot.lane.b32.xlu0 %v1828, 12
      %v1848 = vpop.permute.xlu0 %1847
      %1849 = vrot.lane.b32.xlu0 %v1829, 12
      %v1850 = vpop.permute.xlu0 %1849
      %1851 = vrot.lane.b32.xlu0 %v1830, 12
      %v1852 = vpop.permute.xlu0 %1851
      %1853 = vrot.lane.b32.xlu0 %v1831, 12
      %v1854 = vpop.permute.xlu0 %1853
      %1855 = vrot.lane.b32.xlu0 %v1832, 12
      %v1856 = vpop.permute.xlu0 %1855
      %1857 = vrot.lane.b32.xlu0 %v1833, 12
      %v1858 = vpop.permute.xlu0 %1857
      %1859 = vrot.lane.b32.xlu0 %v1834, 12
      %v1860 = vpop.permute.xlu0 %1859
      %1861 = vrot.lane.b32.xlu0 %v1835, 12
      %v1862 = vpop.permute.xlu0 %1861
      %1863 = vrot.lane.b32.xlu0 %v1836, 12
      %v1864 = vpop.permute.xlu0 %1863
      %1865 = vrot.lane.b32.xlu0 %v1837, 12
      %v1866 = vpop.permute.xlu0 %1865
      %1867 = vrot.lane.b32.xlu0 %v1838, 12
      %v1868 = vpop.permute.xlu0 %1867
      %1869 = vrot.lane.b32.xlu0 %v1839, 12
      %v1870 = vpop.permute.xlu0 %1869
      %1871 = vrot.lane.b32.xlu0 %v1840, 12
      %v1872 = vpop.permute.xlu0 %1871
      %vm1889 = vcmask 130144
      %1890 = vst.msk [vmem:[#allocation3] sm:$0xff] %vm1889, %v1842
      %1891 = vst.msk [vmem:[#allocation3 + $0x8] sm:$0xff] %vm1889, %v1844
      %1892 = vst.msk [vmem:[#allocation3 + $0x10] sm:$0xff] %vm1889, %v1846
      %1893 = vst.msk [vmem:[#allocation3 + $0x18] sm:$0xff] %vm1889, %v1848
      %1894 = vst.msk [vmem:[#allocation3 + $0x20] sm:$0xff] %vm1889, %v1850
      %1895 = vst.msk [vmem:[#allocation3 + $0x28] sm:$0xff] %vm1889, %v1852
      %1896 = vst.msk [vmem:[#allocation3 + $0x30] sm:$0xff] %vm1889, %v1854
      %1897 = vst.msk [vmem:[#allocation3 + $0x38] sm:$0xff] %vm1889, %v1856
      %1898 = vst.msk [vmem:[#allocation3 + $0x40] sm:$0xff] %vm1889, %v1858
      %1899 = vst.msk [vmem:[#allocation3 + $0x48] sm:$0xff] %vm1889, %v1860
      %1900 = vst.msk [vmem:[#allocation3 + $0x50] sm:$0xff] %vm1889, %v1862
      %1901 = vst.msk [vmem:[#allocation3 + $0x58] sm:$0xff] %vm1889, %v1864
      %1902 = vst.msk [vmem:[#allocation3 + $0x60] sm:$0xff] %vm1889, %v1866
      %1903 = vst.msk [vmem:[#allocation3 + $0x68] sm:$0xff] %vm1889, %v1868
      %1904 = vst.msk [vmem:[#allocation3 + $0x70] sm:$0xff] %vm1889, %v1870
      %1905 = vst.msk [vmem:[#allocation3 + $0x78] sm:$0xff] %vm1889, %v1872
      %v1906 = vld [vmem:[%s594] sm:$0xf]
      %v1907 = vld [vmem:[%s594 + $0x4] sm:$0xf]
      %v1908 = vld [vmem:[%s594 + $0x8] sm:$0x1]
      %v1909 = vld [vmem:[%s594 + $0xc] sm:$0xf]
      %v1910 = vld [vmem:[%s594 + $0x10] sm:$0xf]
      %v1911 = vld [vmem:[%s594 + $0x14] sm:$0x1]
      %v1912 = vld [vmem:[%s594 + $0x18] sm:$0xf]
      %v1913 = vld [vmem:[%s594 + $0x1c] sm:$0xf]
      %v1914 = vld [vmem:[%s594 + $0x20] sm:$0x1]
      %v1915 = vld [vmem:[%s594 + $0x24] sm:$0xf]
      %v1916 = vld [vmem:[%s594 + $0x28] sm:$0xf]
      %v1917 = vld [vmem:[%s594 + $0x2c] sm:$0x1]
      %v1918 = vld [vmem:[%s594 + $0x30] sm:$0xf]
      %v1919 = vld [vmem:[%s594 + $0x34] sm:$0xf]
      %v1920 = vld [vmem:[%s594 + $0x38] sm:$0x1]
      %v1921 = vld [vmem:[%s594 + $0x3c] sm:$0xf]
      %v1922 = vld [vmem:[%s594 + $0x40] sm:$0xf]
      %v1923 = vld [vmem:[%s594 + $0x44] sm:$0x1]
      %v1924 = vld [vmem:[%s594 + $0x48] sm:$0xf]
      %v1925 = vld [vmem:[%s594 + $0x4c] sm:$0xf]
      %v1926 = vld [vmem:[%s594 + $0x50] sm:$0x1]
      %v1927 = vld [vmem:[%s594 + $0x54] sm:$0xf]
      %v1928 = vld [vmem:[%s594 + $0x58] sm:$0xf]
      %v1929 = vld [vmem:[%s594 + $0x5c] sm:$0x1]
      %v1930 = vld [vmem:[%s594 + $0x60] sm:$0xf]
      %v1931 = vld [vmem:[%s594 + $0x64] sm:$0xf]
      %v1932 = vld [vmem:[%s594 + $0x68] sm:$0x1]
      %v1933 = vld [vmem:[%s594 + $0x6c] sm:$0xf]
      %v1934 = vld [vmem:[%s594 + $0x70] sm:$0xf]
      %v1935 = vld [vmem:[%s594 + $0x74] sm:$0x1]
      %v1936 = vld [vmem:[%s594 + $0x78] sm:$0xf]
      %v1937 = vld [vmem:[%s594 + $0x7c] sm:$0xf]
      %v1938 = vld [vmem:[%s594 + $0x80] sm:$0x1]
      %v1939 = vld [vmem:[%s594 + $0x84] sm:$0xf]
      %v1940 = vld [vmem:[%s594 + $0x88] sm:$0xf]
      %v1941 = vld [vmem:[%s594 + $0x8c] sm:$0x1]
      %v1942 = vld [vmem:[%s594 + $0x90] sm:$0xf]
      %v1943 = vld [vmem:[%s594 + $0x94] sm:$0xf]
      %v1944 = vld [vmem:[%s594 + $0x98] sm:$0x1]
      %v1945 = vld [vmem:[%s594 + $0x9c] sm:$0xf]
      %v1946 = vld [vmem:[%s594 + $0xa0] sm:$0xf]
      %v1947 = vld [vmem:[%s594 + $0xa4] sm:$0x1]
      %v1948 = vld [vmem:[%s594 + $0xa8] sm:$0xf]
      %v1949 = vld [vmem:[%s594 + $0xac] sm:$0xf]
      %v1950 = vld [vmem:[%s594 + $0xb0] sm:$0x1]
      %v1951 = vld [vmem:[%s594 + $0xb4] sm:$0xf]
      %v1952 = vld [vmem:[%s594 + $0xb8] sm:$0xf]
      %v1953 = vld [vmem:[%s594 + $0xbc] sm:$0x1]
      %v1955 = vshrl.u32 %v1906, 16
      %v1957 = vrot.slane %v1955, 4
      %v1958 = vshll.u32 %v1906, 16
      %v1960 = vrot.slane %v1958, 5
      %v1961 = vor.u32 %v1957, %v1960
      %v1962 = vrot.slane %v1961, 4
      %v1964 = vshll.u32 %v1907, 16
      %v1966 = vrot.slane %v1964, 5
      %v1967 = vsel %vm907, %v1962, %v1966
      %v1968 = vshrl.u32 %v1907, 16
      %v1970 = vrot.slane %v1968, 4
      %v1971 = vor.u32 %v1970, %v1966
      %v1972 = vrot.slane %v1971, 4
      %v1974 = vshll.u32 %v1908, 16
      %v1976 = vrot.slane %v1974, 5
      %v1977 = vsel %vm907, %v1972, %v1976
      %v1979 = vshrl.u32 %v1909, 16
      %v1981 = vrot.slane %v1979, 4
      %v1982 = vshll.u32 %v1909, 16
      %v1984 = vrot.slane %v1982, 5
      %v1985 = vor.u32 %v1981, %v1984
      %v1986 = vrot.slane %v1985, 4
      %v1988 = vshll.u32 %v1910, 16
      %v1990 = vrot.slane %v1988, 5
      %v1991 = vsel %vm907, %v1986, %v1990
      %v1992 = vshrl.u32 %v1910, 16
      %v1994 = vrot.slane %v1992, 4
      %v1995 = vor.u32 %v1994, %v1990
      %v1996 = vrot.slane %v1995, 4
      %v1998 = vshll.u32 %v1911, 16
      %v2000 = vrot.slane %v1998, 5
      %v2001 = vsel %vm907, %v1996, %v2000
      %v2003 = vshrl.u32 %v1912, 16
      %v2005 = vrot.slane %v2003, 4
      %v2006 = vshll.u32 %v1912, 16
      %v2008 = vrot.slane %v2006, 5
      %v2009 = vor.u32 %v2005, %v2008
      %v2010 = vrot.slane %v2009, 4
      %v2012 = vshll.u32 %v1913, 16
      %v2014 = vrot.slane %v2012, 5
      %v2015 = vsel %vm907, %v2010, %v2014
      %v2016 = vshrl.u32 %v1913, 16
      %v2018 = vrot.slane %v2016, 4
      %v2019 = vor.u32 %v2018, %v2014
      %v2020 = vrot.slane %v2019, 4
      %v2022 = vshll.u32 %v1914, 16
      %v2024 = vrot.slane %v2022, 5
      %v2025 = vsel %vm907, %v2020, %v2024
      %v2027 = vshrl.u32 %v1915, 16
      %v2029 = vrot.slane %v2027, 4
      %v2030 = vshll.u32 %v1915, 16
      %v2032 = vrot.slane %v2030, 5
      %v2033 = vor.u32 %v2029, %v2032
      %v2034 = vrot.slane %v2033, 4
      %v2036 = vshll.u32 %v1916, 16
      %v2038 = vrot.slane %v2036, 5
      %v2039 = vsel %vm907, %v2034, %v2038
      %v2040 = vshrl.u32 %v1916, 16
      %v2042 = vrot.slane %v2040, 4
      %v2043 = vor.u32 %v2042, %v2038
      %v2044 = vrot.slane %v2043, 4
      %v2046 = vshll.u32 %v1917, 16
      %v2048 = vrot.slane %v2046, 5
      %v2049 = vsel %vm907, %v2044, %v2048
      %v2051 = vshrl.u32 %v1918, 16
      %v2053 = vrot.slane %v2051, 4
      %v2054 = vshll.u32 %v1918, 16
      %v2056 = vrot.slane %v2054, 5
      %v2057 = vor.u32 %v2053, %v2056
      %v2058 = vrot.slane %v2057, 4
      %v2060 = vshll.u32 %v1919, 16
      %v2062 = vrot.slane %v2060, 5
      %v2063 = vsel %vm907, %v2058, %v2062
      %v2064 = vshrl.u32 %v1919, 16
      %v2066 = vrot.slane %v2064, 4
      %v2067 = vor.u32 %v2066, %v2062
      %v2068 = vrot.slane %v2067, 4
      %v2070 = vshll.u32 %v1920, 16
      %v2072 = vrot.slane %v2070, 5
      %v2073 = vsel %vm907, %v2068, %v2072
      %v2075 = vshrl.u32 %v1921, 16
      %v2077 = vrot.slane %v2075, 4
      %v2078 = vshll.u32 %v1921, 16
      %v2080 = vrot.slane %v2078, 5
      %v2081 = vor.u32 %v2077, %v2080
      %v2082 = vrot.slane %v2081, 4
      %v2084 = vshll.u32 %v1922, 16
      %v2086 = vrot.slane %v2084, 5
      %v2087 = vsel %vm907, %v2082, %v2086
      %v2088 = vshrl.u32 %v1922, 16
      %v2090 = vrot.slane %v2088, 4
      %v2091 = vor.u32 %v2090, %v2086
      %v2092 = vrot.slane %v2091, 4
      %v2094 = vshll.u32 %v1923, 16
      %v2096 = vrot.slane %v2094, 5
      %v2097 = vsel %vm907, %v2092, %v2096
      %v2099 = vshrl.u32 %v1924, 16
      %v2101 = vrot.slane %v2099, 4
      %v2102 = vshll.u32 %v1924, 16
      %v2104 = vrot.slane %v2102, 5
      %v2105 = vor.u32 %v2101, %v2104
      %v2106 = vrot.slane %v2105, 4
      %v2108 = vshll.u32 %v1925, 16
      %v2110 = vrot.slane %v2108, 5
      %v2111 = vsel %vm907, %v2106, %v2110
      %v2112 = vshrl.u32 %v1925, 16
      %v2114 = vrot.slane %v2112, 4
      %v2115 = vor.u32 %v2114, %v2110
      %v2116 = vrot.slane %v2115, 4
      %v2118 = vshll.u32 %v1926, 16
      %v2120 = vrot.slane %v2118, 5
      %v2121 = vsel %vm907, %v2116, %v2120
      %v2123 = vshrl.u32 %v1927, 16
      %v2125 = vrot.slane %v2123, 4
      %v2126 = vshll.u32 %v1927, 16
      %v2128 = vrot.slane %v2126, 5
      %v2129 = vor.u32 %v2125, %v2128
      %v2130 = vrot.slane %v2129, 4
      %v2132 = vshll.u32 %v1928, 16
      %v2134 = vrot.slane %v2132, 5
      %v2135 = vsel %vm907, %v2130, %v2134
      %v2136 = vshrl.u32 %v1928, 16
      %v2138 = vrot.slane %v2136, 4
      %v2139 = vor.u32 %v2138, %v2134
      %v2140 = vrot.slane %v2139, 4
      %v2142 = vshll.u32 %v1929, 16
      %v2144 = vrot.slane %v2142, 5
      %v2145 = vsel %vm907, %v2140, %v2144
      %v2147 = vshrl.u32 %v1930, 16
      %v2149 = vrot.slane %v2147, 4
      %v2150 = vshll.u32 %v1930, 16
      %v2152 = vrot.slane %v2150, 5
      %v2153 = vor.u32 %v2149, %v2152
      %v2154 = vrot.slane %v2153, 4
      %v2156 = vshll.u32 %v1931, 16
      %v2158 = vrot.slane %v2156, 5
      %v2159 = vsel %vm907, %v2154, %v2158
      %v2160 = vshrl.u32 %v1931, 16
      %v2162 = vrot.slane %v2160, 4
      %v2163 = vor.u32 %v2162, %v2158
      %v2164 = vrot.slane %v2163, 4
      %v2166 = vshll.u32 %v1932, 16
      %v2168 = vrot.slane %v2166, 5
      %v2169 = vsel %vm907, %v2164, %v2168
      %v2171 = vshrl.u32 %v1933, 16
      %v2173 = vrot.slane %v2171, 4
      %v2174 = vshll.u32 %v1933, 16
      %v2176 = vrot.slane %v2174, 5
      %v2177 = vor.u32 %v2173, %v2176
      %v2178 = vrot.slane %v2177, 4
      %v2180 = vshll.u32 %v1934, 16
      %v2182 = vrot.slane %v2180, 5
      %v2183 = vsel %vm907, %v2178, %v2182
      %v2184 = vshrl.u32 %v1934, 16
      %v2186 = vrot.slane %v2184, 4
      %v2187 = vor.u32 %v2186, %v2182
      %v2188 = vrot.slane %v2187, 4
      %v2190 = vshll.u32 %v1935, 16
      %v2192 = vrot.slane %v2190, 5
      %v2193 = vsel %vm907, %v2188, %v2192
      %v2195 = vshrl.u32 %v1936, 16
      %v2197 = vrot.slane %v2195, 4
      %v2198 = vshll.u32 %v1936, 16
      %v2200 = vrot.slane %v2198, 5
      %v2201 = vor.u32 %v2197, %v2200
      %v2202 = vrot.slane %v2201, 4
      %v2204 = vshll.u32 %v1937, 16
      %v2206 = vrot.slane %v2204, 5
      %v2207 = vsel %vm907, %v2202, %v2206
      %v2208 = vshrl.u32 %v1937, 16
      %v2210 = vrot.slane %v2208, 4
      %v2211 = vor.u32 %v2210, %v2206
      %v2212 = vrot.slane %v2211, 4
      %v2214 = vshll.u32 %v1938, 16
      %v2216 = vrot.slane %v2214, 5
      %v2217 = vsel %vm907, %v2212, %v2216
      %v2219 = vshrl.u32 %v1939, 16
      %v2221 = vrot.slane %v2219, 4
      %v2222 = vshll.u32 %v1939, 16
      %v2224 = vrot.slane %v2222, 5
      %v2225 = vor.u32 %v2221, %v2224
      %v2226 = vrot.slane %v2225, 4
      %v2228 = vshll.u32 %v1940, 16
      %v2230 = vrot.slane %v2228, 5
      %v2231 = vsel %vm907, %v2226, %v2230
      %v2232 = vshrl.u32 %v1940, 16
      %v2234 = vrot.slane %v2232, 4
      %v2235 = vor.u32 %v2234, %v2230
      %v2236 = vrot.slane %v2235, 4
      %v2238 = vshll.u32 %v1941, 16
      %v2240 = vrot.slane %v2238, 5
      %v2241 = vsel %vm907, %v2236, %v2240
      %v2243 = vshrl.u32 %v1942, 16
      %v2245 = vrot.slane %v2243, 4
      %v2246 = vshll.u32 %v1942, 16
      %v2248 = vrot.slane %v2246, 5
      %v2249 = vor.u32 %v2245, %v2248
      %v2250 = vrot.slane %v2249, 4
      %v2252 = vshll.u32 %v1943, 16
      %v2254 = vrot.slane %v2252, 5
      %v2255 = vsel %vm907, %v2250, %v2254
      %v2256 = vshrl.u32 %v1943, 16
      %v2258 = vrot.slane %v2256, 4
      %v2259 = vor.u32 %v2258, %v2254
      %v2260 = vrot.slane %v2259, 4
      %v2262 = vshll.u32 %v1944, 16
      %v2264 = vrot.slane %v2262, 5
      %v2265 = vsel %vm907, %v2260, %v2264
      %v2267 = vshrl.u32 %v1945, 16
      %v2269 = vrot.slane %v2267, 4
      %v2270 = vshll.u32 %v1945, 16
      %v2272 = vrot.slane %v2270, 5
      %v2273 = vor.u32 %v2269, %v2272
      %v2274 = vrot.slane %v2273, 4
      %v2276 = vshll.u32 %v1946, 16
      %v2278 = vrot.slane %v2276, 5
      %v2279 = vsel %vm907, %v2274, %v2278
      %v2280 = vshrl.u32 %v1946, 16
      %v2282 = vrot.slane %v2280, 4
      %v2283 = vor.u32 %v2282, %v2278
      %v2284 = vrot.slane %v2283, 4
      %v2286 = vshll.u32 %v1947, 16
      %v2288 = vrot.slane %v2286, 5
      %v2289 = vsel %vm907, %v2284, %v2288
      %v2291 = vshrl.u32 %v1948, 16
      %v2293 = vrot.slane %v2291, 4
      %v2294 = vshll.u32 %v1948, 16
      %v2296 = vrot.slane %v2294, 5
      %v2297 = vor.u32 %v2293, %v2296
      %v2298 = vrot.slane %v2297, 4
      %v2300 = vshll.u32 %v1949, 16
      %v2302 = vrot.slane %v2300, 5
      %v2303 = vsel %vm907, %v2298, %v2302
      %v2304 = vshrl.u32 %v1949, 16
      %v2306 = vrot.slane %v2304, 4
      %v2307 = vor.u32 %v2306, %v2302
      %v2308 = vrot.slane %v2307, 4
      %v2310 = vshll.u32 %v1950, 16
      %v2312 = vrot.slane %v2310, 5
      %v2313 = vsel %vm907, %v2308, %v2312
      %v2315 = vshrl.u32 %v1951, 16
      %v2317 = vrot.slane %v2315, 4
      %v2318 = vshll.u32 %v1951, 16
      %v2320 = vrot.slane %v2318, 5
      %v2321 = vor.u32 %v2317, %v2320
      %v2322 = vrot.slane %v2321, 4
      %v2324 = vshll.u32 %v1952, 16
      %v2326 = vrot.slane %v2324, 5
      %v2327 = vsel %vm907, %v2322, %v2326
      %v2328 = vshrl.u32 %v1952, 16
      %v2330 = vrot.slane %v2328, 4
      %v2331 = vor.u32 %v2330, %v2326
      %v2332 = vrot.slane %v2331, 4
      %v2334 = vshll.u32 %v1953, 16
      %v2336 = vrot.slane %v2334, 5
      %v2337 = vsel %vm907, %v2332, %v2336
      %v2338 = vunpack.c.l.b16 %v1967
      %v2339 = vunpack.c.l.b16 %v1977
      %v2340 = vunpack.c.l.b16 %v1991
      %v2341 = vunpack.c.l.b16 %v2001
      %v2342 = vunpack.c.l.b16 %v2015
      %v2343 = vunpack.c.l.b16 %v2025
      %v2344 = vunpack.c.l.b16 %v2039
      %v2345 = vunpack.c.l.b16 %v2049
      %v2346 = vunpack.c.l.b16 %v2063
      %v2347 = vunpack.c.l.b16 %v2073
      %v2348 = vunpack.c.l.b16 %v2087
      %v2349 = vunpack.c.l.b16 %v2097
      %v2350 = vunpack.c.l.b16 %v2111
      %v2351 = vunpack.c.l.b16 %v2121
      %v2352 = vunpack.c.l.b16 %v2135
      %v2353 = vunpack.c.l.b16 %v2145
      %v2354 = vunpack.c.l.b16 %v2159
      %v2355 = vunpack.c.l.b16 %v2169
      %v2356 = vunpack.c.l.b16 %v2183
      %v2357 = vunpack.c.l.b16 %v2193
      %v2358 = vunpack.c.l.b16 %v2207
      %v2359 = vunpack.c.l.b16 %v2217
      %v2360 = vunpack.c.l.b16 %v2231
      %v2361 = vunpack.c.l.b16 %v2241
      %v2362 = vunpack.c.l.b16 %v2255
      %v2363 = vunpack.c.l.b16 %v2265
      %v2364 = vunpack.c.l.b16 %v2279
      %v2365 = vunpack.c.l.b16 %v2289
      %v2366 = vunpack.c.l.b16 %v2303
      %v2367 = vunpack.c.l.b16 %v2313
      %v2368 = vunpack.c.l.b16 %v2327
      %v2369 = vunpack.c.l.b16 %v2337
      %v2370 = vpack.c.b16 %v2339, %v2338
      %v2371 = vpack.c.b16 %v2341, %v2340
      %v2372 = vpack.c.b16 %v2343, %v2342
      %v2373 = vpack.c.b16 %v2345, %v2344
      %v2374 = vpack.c.b16 %v2347, %v2346
      %v2375 = vpack.c.b16 %v2349, %v2348
      %v2376 = vpack.c.b16 %v2351, %v2350
      %v2377 = vpack.c.b16 %v2353, %v2352
      %v2378 = vpack.c.b16 %v2355, %v2354
      %v2379 = vpack.c.b16 %v2357, %v2356
      %v2380 = vpack.c.b16 %v2359, %v2358
      %v2381 = vpack.c.b16 %v2361, %v2360
      %v2382 = vpack.c.b16 %v2363, %v2362
      %v2383 = vpack.c.b16 %v2365, %v2364
      %v2384 = vpack.c.b16 %v2367, %v2366
      %v2385 = vpack.c.b16 %v2369, %v2368
      %2386 = vrot.lane.b32.xlu0 %v2370, 16
      %v2387 = vpop.permute.xlu0 %2386
      %2388 = vrot.lane.b32.xlu0 %v2371, 16
      %v2389 = vpop.permute.xlu0 %2388
      %2390 = vrot.lane.b32.xlu0 %v2372, 16
      %v2391 = vpop.permute.xlu0 %2390
      %2392 = vrot.lane.b32.xlu0 %v2373, 16
      %v2393 = vpop.permute.xlu0 %2392
      %2394 = vrot.lane.b32.xlu0 %v2374, 16
      %v2395 = vpop.permute.xlu0 %2394
      %2396 = vrot.lane.b32.xlu0 %v2375, 16
      %v2397 = vpop.permute.xlu0 %2396
      %2398 = vrot.lane.b32.xlu0 %v2376, 16
      %v2399 = vpop.permute.xlu0 %2398
      %2400 = vrot.lane.b32.xlu0 %v2377, 16
      %v2401 = vpop.permute.xlu0 %2400
      %2402 = vrot.lane.b32.xlu0 %v2378, 16
      %v2403 = vpop.permute.xlu0 %2402
      %2404 = vrot.lane.b32.xlu0 %v2379, 16
      %v2405 = vpop.permute.xlu0 %2404
      %2406 = vrot.lane.b32.xlu0 %v2380, 16
      %v2407 = vpop.permute.xlu0 %2406
      %2408 = vrot.lane.b32.xlu0 %v2381, 16
      %v2409 = vpop.permute.xlu0 %2408
      %2410 = vrot.lane.b32.xlu0 %v2382, 16
      %v2411 = vpop.permute.xlu0 %2410
      %2412 = vrot.lane.b32.xlu0 %v2383, 16
      %v2413 = vpop.permute.xlu0 %2412
      %2414 = vrot.lane.b32.xlu0 %v2384, 16
      %v2415 = vpop.permute.xlu0 %2414
      %2416 = vrot.lane.b32.xlu0 %v2385, 16
      %v2417 = vpop.permute.xlu0 %2416
      %vm2434 = vcmask 162944
      %2435 = vst.msk [vmem:[#allocation3] sm:$0xff] %vm2434, %v2387
      %2436 = vst.msk [vmem:[#allocation3 + $0x8] sm:$0xff] %vm2434, %v2389
      %2437 = vst.msk [vmem:[#allocation3 + $0x10] sm:$0xff] %vm2434, %v2391
      %2438 = vst.msk [vmem:[#allocation3 + $0x18] sm:$0xff] %vm2434, %v2393
      %2439 = vst.msk [vmem:[#allocation3 + $0x20] sm:$0xff] %vm2434, %v2395
      %2440 = vst.msk [vmem:[#allocation3 + $0x28] sm:$0xff] %vm2434, %v2397
      %2441 = vst.msk [vmem:[#allocation3 + $0x30] sm:$0xff] %vm2434, %v2399
      %2442 = vst.msk [vmem:[#allocation3 + $0x38] sm:$0xff] %vm2434, %v2401
      %2443 = vst.msk [vmem:[#allocation3 + $0x40] sm:$0xff] %vm2434, %v2403
      %2444 = vst.msk [vmem:[#allocation3 + $0x48] sm:$0xff] %vm2434, %v2405
      %2445 = vst.msk [vmem:[#allocation3 + $0x50] sm:$0xff] %vm2434, %v2407
      %2446 = vst.msk [vmem:[#allocation3 + $0x58] sm:$0xff] %vm2434, %v2409
      %2447 = vst.msk [vmem:[#allocation3 + $0x60] sm:$0xff] %vm2434, %v2411
      %2448 = vst.msk [vmem:[#allocation3 + $0x68] sm:$0xff] %vm2434, %v2413
      %2449 = vst.msk [vmem:[#allocation3 + $0x70] sm:$0xff] %vm2434, %v2415
      %2450 = vst.msk [vmem:[#allocation3 + $0x78] sm:$0xff] %vm2434, %v2417
      %v2451 = vld [vmem:[%s594] sm:$0xe]
      %v2452 = vld [vmem:[%s594 + $0x4] sm:$0xf]
      %v2453 = vld [vmem:[%s594 + $0x8] sm:$0x1]
      %v2454 = vld [vmem:[%s594 + $0xc] sm:$0xe]
      %v2455 = vld [vmem:[%s594 + $0x10] sm:$0xf]
      %v2456 = vld [vmem:[%s594 + $0x14] sm:$0x1]
      %v2457 = vld [vmem:[%s594 + $0x18] sm:$0xe]
      %v2458 = vld [vmem:[%s594 + $0x1c] sm:$0xf]
      %v2459 = vld [vmem:[%s594 + $0x20] sm:$0x1]
      %v2460 = vld [vmem:[%s594 + $0x24] sm:$0xe]
      %v2461 = vld [vmem:[%s594 + $0x28] sm:$0xf]
      %v2462 = vld [vmem:[%s594 + $0x2c] sm:$0x1]
      %v2463 = vld [vmem:[%s594 + $0x30] sm:$0xe]
      %v2464 = vld [vmem:[%s594 + $0x34] sm:$0xf]
      %v2465 = vld [vmem:[%s594 + $0x38] sm:$0x1]
      %v2466 = vld [vmem:[%s594 + $0x3c] sm:$0xe]
      %v2467 = vld [vmem:[%s594 + $0x40] sm:$0xf]
      %v2468 = vld [vmem:[%s594 + $0x44] sm:$0x1]
      %v2469 = vld [vmem:[%s594 + $0x48] sm:$0xe]
      %v2470 = vld [vmem:[%s594 + $0x4c] sm:$0xf]
      %v2471 = vld [vmem:[%s594 + $0x50] sm:$0x1]
      %v2472 = vld [vmem:[%s594 + $0x54] sm:$0xe]
      %v2473 = vld [vmem:[%s594 + $0x58] sm:$0xf]
      %v2474 = vld [vmem:[%s594 + $0x5c] sm:$0x1]
      %v2475 = vld [vmem:[%s594 + $0x60] sm:$0xe]
      %v2476 = vld [vmem:[%s594 + $0x64] sm:$0xf]
      %v2477 = vld [vmem:[%s594 + $0x68] sm:$0x1]
      %v2478 = vld [vmem:[%s594 + $0x6c] sm:$0xe]
      %v2479 = vld [vmem:[%s594 + $0x70] sm:$0xf]
      %v2480 = vld [vmem:[%s594 + $0x74] sm:$0x1]
      %v2481 = vld [vmem:[%s594 + $0x78] sm:$0xe]
      %v2482 = vld [vmem:[%s594 + $0x7c] sm:$0xf]
      %v2483 = vld [vmem:[%s594 + $0x80] sm:$0x1]
      %v2484 = vld [vmem:[%s594 + $0x84] sm:$0xe]
      %v2485 = vld [vmem:[%s594 + $0x88] sm:$0xf]
      %v2486 = vld [vmem:[%s594 + $0x8c] sm:$0x1]
      %v2487 = vld [vmem:[%s594 + $0x90] sm:$0xe]
      %v2488 = vld [vmem:[%s594 + $0x94] sm:$0xf]
      %v2489 = vld [vmem:[%s594 + $0x98] sm:$0x1]
      %v2490 = vld [vmem:[%s594 + $0x9c] sm:$0xe]
      %v2491 = vld [vmem:[%s594 + $0xa0] sm:$0xf]
      %v2492 = vld [vmem:[%s594 + $0xa4] sm:$0x1]
      %v2493 = vld [vmem:[%s594 + $0xa8] sm:$0xe]
      %v2494 = vld [vmem:[%s594 + $0xac] sm:$0xf]
      %v2495 = vld [vmem:[%s594 + $0xb0] sm:$0x1]
      %v2496 = vld [vmem:[%s594 + $0xb4] sm:$0xe]
      %v2497 = vld [vmem:[%s594 + $0xb8] sm:$0xf]
      %v2498 = vld [vmem:[%s594 + $0xbc] sm:$0x1]
      %v2547 = vrot.slane %v2451, 5
      %v2548 = vrot.slane %v2547, 4
      %v2549 = vrot.slane %v2452, 5
      %v2550 = vsel %vm1503, %v2548, %v2549
      %v2551 = vrot.slane %v2549, 4
      %v2552 = vrot.slane %v2453, 5
      %v2553 = vsel %vm1503, %v2551, %v2552
      %v2554 = vrot.slane %v2454, 5
      %v2555 = vrot.slane %v2554, 4
      %v2556 = vrot.slane %v2455, 5
      %v2557 = vsel %vm1503, %v2555, %v2556
      %v2558 = vrot.slane %v2556, 4
      %v2559 = vrot.slane %v2456, 5
      %v2560 = vsel %vm1503, %v2558, %v2559
      %v2561 = vrot.slane %v2457, 5
      %v2562 = vrot.slane %v2561, 4
      %v2563 = vrot.slane %v2458, 5
      %v2564 = vsel %vm1503, %v2562, %v2563
      %v2565 = vrot.slane %v2563, 4
      %v2566 = vrot.slane %v2459, 5
      %v2567 = vsel %vm1503, %v2565, %v2566
      %v2568 = vrot.slane %v2460, 5
      %v2569 = vrot.slane %v2568, 4
      %v2570 = vrot.slane %v2461, 5
      %v2571 = vsel %vm1503, %v2569, %v2570
      %v2572 = vrot.slane %v2570, 4
      %v2573 = vrot.slane %v2462, 5
      %v2574 = vsel %vm1503, %v2572, %v2573
      %v2575 = vrot.slane %v2463, 5
      %v2576 = vrot.slane %v2575, 4
      %v2577 = vrot.slane %v2464, 5
      %v2578 = vsel %vm1503, %v2576, %v2577
      %v2579 = vrot.slane %v2577, 4
      %v2580 = vrot.slane %v2465, 5
      %v2581 = vsel %vm1503, %v2579, %v2580
      %v2582 = vrot.slane %v2466, 5
      %v2583 = vrot.slane %v2582, 4
      %v2584 = vrot.slane %v2467, 5
      %v2585 = vsel %vm1503, %v2583, %v2584
      %v2586 = vrot.slane %v2584, 4
      %v2587 = vrot.slane %v2468, 5
      %v2588 = vsel %vm1503, %v2586, %v2587
      %v2589 = vrot.slane %v2469, 5
      %v2590 = vrot.slane %v2589, 4
      %v2591 = vrot.slane %v2470, 5
      %v2592 = vsel %vm1503, %v2590, %v2591
      %v2593 = vrot.slane %v2591, 4
      %v2594 = vrot.slane %v2471, 5
      %v2595 = vsel %vm1503, %v2593, %v2594
      %v2596 = vrot.slane %v2472, 5
      %v2597 = vrot.slane %v2596, 4
      %v2598 = vrot.slane %v2473, 5
      %v2599 = vsel %vm1503, %v2597, %v2598
      %v2600 = vrot.slane %v2598, 4
      %v2601 = vrot.slane %v2474, 5
      %v2602 = vsel %vm1503, %v2600, %v2601
      %v2603 = vrot.slane %v2475, 5
      %v2604 = vrot.slane %v2603, 4
      %v2605 = vrot.slane %v2476, 5
      %v2606 = vsel %vm1503, %v2604, %v2605
      %v2607 = vrot.slane %v2605, 4
      %v2608 = vrot.slane %v2477, 5
      %v2609 = vsel %vm1503, %v2607, %v2608
      %v2610 = vrot.slane %v2478, 5
      %v2611 = vrot.slane %v2610, 4
      %v2612 = vrot.slane %v2479, 5
      %v2613 = vsel %vm1503, %v2611, %v2612
      %v2614 = vrot.slane %v2612, 4
      %v2615 = vrot.slane %v2480, 5
      %v2616 = vsel %vm1503, %v2614, %v2615
      %v2617 = vrot.slane %v2481, 5
      %v2618 = vrot.slane %v2617, 4
      %v2619 = vrot.slane %v2482, 5
      %v2620 = vsel %vm1503, %v2618, %v2619
      %v2621 = vrot.slane %v2619, 4
      %v2622 = vrot.slane %v2483, 5
      %v2623 = vsel %vm1503, %v2621, %v2622
      %v2624 = vrot.slane %v2484, 5
      %v2625 = vrot.slane %v2624, 4
      %v2626 = vrot.slane %v2485, 5
      %v2627 = vsel %vm1503, %v2625, %v2626
      %v2628 = vrot.slane %v2626, 4
      %v2629 = vrot.slane %v2486, 5
      %v2630 = vsel %vm1503, %v2628, %v2629
      %v2631 = vrot.slane %v2487, 5
      %v2632 = vrot.slane %v2631, 4
      %v2633 = vrot.slane %v2488, 5
      %v2634 = vsel %vm1503, %v2632, %v2633
      %v2635 = vrot.slane %v2633, 4
      %v2636 = vrot.slane %v2489, 5
      %v2637 = vsel %vm1503, %v2635, %v2636
      %v2638 = vrot.slane %v2490, 5
      %v2639 = vrot.slane %v2638, 4
      %v2640 = vrot.slane %v2491, 5
      %v2641 = vsel %vm1503, %v2639, %v2640
      %v2642 = vrot.slane %v2640, 4
      %v2643 = vrot.slane %v2492, 5
      %v2644 = vsel %vm1503, %v2642, %v2643
      %v2645 = vrot.slane %v2493, 5
      %v2646 = vrot.slane %v2645, 4
      %v2647 = vrot.slane %v2494, 5
      %v2648 = vsel %vm1503, %v2646, %v2647
      %v2649 = vrot.slane %v2647, 4
      %v2650 = vrot.slane %v2495, 5
      %v2651 = vsel %vm1503, %v2649, %v2650
      %v2652 = vrot.slane %v2496, 5
      %v2653 = vrot.slane %v2652, 4
      %v2654 = vrot.slane %v2497, 5
      %v2655 = vsel %vm1503, %v2653, %v2654
      %v2656 = vrot.slane %v2654, 4
      %v2657 = vrot.slane %v2498, 5
      %v2658 = vsel %vm1503, %v2656, %v2657
      %v2659 = vunpack.c.l.b16 %v2550
      %v2660 = vunpack.c.l.b16 %v2553
      %v2661 = vunpack.c.l.b16 %v2557
      %v2662 = vunpack.c.l.b16 %v2560
      %v2663 = vunpack.c.l.b16 %v2564
      %v2664 = vunpack.c.l.b16 %v2567
      %v2665 = vunpack.c.l.b16 %v2571
      %v2666 = vunpack.c.l.b16 %v2574
      %v2667 = vunpack.c.l.b16 %v2578
      %v2668 = vunpack.c.l.b16 %v2581
      %v2669 = vunpack.c.l.b16 %v2585
      %v2670 = vunpack.c.l.b16 %v2588
      %v2671 = vunpack.c.l.b16 %v2592
      %v2672 = vunpack.c.l.b16 %v2595
      %v2673 = vunpack.c.l.b16 %v2599
      %v2674 = vunpack.c.l.b16 %v2602
      %v2675 = vunpack.c.l.b16 %v2606
      %v2676 = vunpack.c.l.b16 %v2609
      %v2677 = vunpack.c.l.b16 %v2613
      %v2678 = vunpack.c.l.b16 %v2616
      %v2679 = vunpack.c.l.b16 %v2620
      %v2680 = vunpack.c.l.b16 %v2623
      %v2681 = vunpack.c.l.b16 %v2627
      %v2682 = vunpack.c.l.b16 %v2630
      %v2683 = vunpack.c.l.b16 %v2634
      %v2684 = vunpack.c.l.b16 %v2637
      %v2685 = vunpack.c.l.b16 %v2641
      %v2686 = vunpack.c.l.b16 %v2644
      %v2687 = vunpack.c.l.b16 %v2648
      %v2688 = vunpack.c.l.b16 %v2651
      %v2689 = vunpack.c.l.b16 %v2655
      %v2690 = vunpack.c.l.b16 %v2658
      %v2691 = vpack.c.b16 %v2660, %v2659
      %v2692 = vpack.c.b16 %v2662, %v2661
      %v2693 = vpack.c.b16 %v2664, %v2663
      %v2694 = vpack.c.b16 %v2666, %v2665
      %v2695 = vpack.c.b16 %v2668, %v2667
      %v2696 = vpack.c.b16 %v2670, %v2669
      %v2697 = vpack.c.b16 %v2672, %v2671
      %v2698 = vpack.c.b16 %v2674, %v2673
      %v2699 = vpack.c.b16 %v2676, %v2675
      %v2700 = vpack.c.b16 %v2678, %v2677
      %v2701 = vpack.c.b16 %v2680, %v2679
      %v2702 = vpack.c.b16 %v2682, %v2681
      %v2703 = vpack.c.b16 %v2684, %v2683
      %v2704 = vpack.c.b16 %v2686, %v2685
      %v2705 = vpack.c.b16 %v2688, %v2687
      %v2706 = vpack.c.b16 %v2690, %v2689
      %2707 = vrot.lane.b32.xlu0 %v2691, 20
      %v2708 = vpop.permute.xlu0 %2707
      %2709 = vrot.lane.b32.xlu0 %v2692, 20
      %v2710 = vpop.permute.xlu0 %2709
      %2711 = vrot.lane.b32.xlu0 %v2693, 20
      %v2712 = vpop.permute.xlu0 %2711
      %2713 = vrot.lane.b32.xlu0 %v2694, 20
      %v2714 = vpop.permute.xlu0 %2713
      %2715 = vrot.lane.b32.xlu0 %v2695, 20
      %v2716 = vpop.permute.xlu0 %2715
      %2717 = vrot.lane.b32.xlu0 %v2696, 20
      %v2718 = vpop.permute.xlu0 %2717
      %2719 = vrot.lane.b32.xlu0 %v2697, 20
      %v2720 = vpop.permute.xlu0 %2719
      %2721 = vrot.lane.b32.xlu0 %v2698, 20
      %v2722 = vpop.permute.xlu0 %2721
      %2723 = vrot.lane.b32.xlu0 %v2699, 20
      %v2724 = vpop.permute.xlu0 %2723
      %2725 = vrot.lane.b32.xlu0 %v2700, 20
      %v2726 = vpop.permute.xlu0 %2725
      %2727 = vrot.lane.b32.xlu0 %v2701, 20
      %v2728 = vpop.permute.xlu0 %2727
      %2729 = vrot.lane.b32.xlu0 %v2702, 20
      %v2730 = vpop.permute.xlu0 %2729
      %2731 = vrot.lane.b32.xlu0 %v2703, 20
      %v2732 = vpop.permute.xlu0 %2731
      %2733 = vrot.lane.b32.xlu0 %v2704, 20
      %v2734 = vpop.permute.xlu0 %2733
      %2735 = vrot.lane.b32.xlu0 %v2705, 20
      %v2736 = vpop.permute.xlu0 %2735
      %2737 = vrot.lane.b32.xlu0 %v2706, 20
      %v2738 = vpop.permute.xlu0 %2737
      %vm2755 = vcmask 195744
      %2756 = vst.msk [vmem:[#allocation3] sm:$0xff] %vm2755, %v2708
      %2757 = vst.msk [vmem:[#allocation3 + $0x8] sm:$0xff] %vm2755, %v2710
      %2758 = vst.msk [vmem:[#allocation3 + $0x10] sm:$0xff] %vm2755, %v2712
      %2759 = vst.msk [vmem:[#allocation3 + $0x18] sm:$0xff] %vm2755, %v2714
      %2760 = vst.msk [vmem:[#allocation3 + $0x20] sm:$0xff] %vm2755, %v2716
      %2761 = vst.msk [vmem:[#allocation3 + $0x28] sm:$0xff] %vm2755, %v2718
      %2762 = vst.msk [vmem:[#allocation3 + $0x30] sm:$0xff] %vm2755, %v2720
      %2763 = vst.msk [vmem:[#allocation3 + $0x38] sm:$0xff] %vm2755, %v2722
      %2764 = vst.msk [vmem:[#allocation3 + $0x40] sm:$0xff] %vm2755, %v2724
      %2765 = vst.msk [vmem:[#allocation3 + $0x48] sm:$0xff] %vm2755, %v2726
      %2766 = vst.msk [vmem:[#allocation3 + $0x50] sm:$0xff] %vm2755, %v2728
      %2767 = vst.msk [vmem:[#allocation3 + $0x58] sm:$0xff] %vm2755, %v2730
      %2768 = vst.msk [vmem:[#allocation3 + $0x60] sm:$0xff] %vm2755, %v2732
      %2769 = vst.msk [vmem:[#allocation3 + $0x68] sm:$0xff] %vm2755, %v2734
      %2770 = vst.msk [vmem:[#allocation3 + $0x70] sm:$0xff] %vm2755, %v2736
      %2771 = vst.msk [vmem:[#allocation3 + $0x78] sm:$0xff] %vm2755, %v2738
      %s2772 = scalar_lea.vmem [#allocation2], 24
      %v2773 = vld [vmem:[%s2772] sm:$0xf]
      %v2774 = vld [vmem:[%s2772 + $0x4] sm:$0xf]
      %v2775 = vld [vmem:[%s2772 + $0xc] sm:$0xf]
      %v2776 = vld [vmem:[%s2772 + $0x10] sm:$0xf]
      %v2777 = vld [vmem:[%s2772 + $0x18] sm:$0xf]
      %v2778 = vld [vmem:[%s2772 + $0x1c] sm:$0xf]
      %v2779 = vld [vmem:[%s2772 + $0x24] sm:$0xf]
      %v2780 = vld [vmem:[%s2772 + $0x28] sm:$0xf]
      %v2781 = vld [vmem:[%s2772 + $0x30] sm:$0xf]
      %v2782 = vld [vmem:[%s2772 + $0x34] sm:$0xf]
      %v2783 = vld [vmem:[%s2772 + $0x3c] sm:$0xf]
      %v2784 = vld [vmem:[%s2772 + $0x40] sm:$0xf]
      %v2785 = vld [vmem:[%s2772 + $0x48] sm:$0xf]
      %v2786 = vld [vmem:[%s2772 + $0x4c] sm:$0xf]
      %v2787 = vld [vmem:[%s2772 + $0x54] sm:$0xf]
      %v2788 = vld [vmem:[%s2772 + $0x58] sm:$0xf]
      %v2789 = vld [vmem:[%s2772 + $0x60] sm:$0xf]
      %v2790 = vld [vmem:[%s2772 + $0x64] sm:$0xf]
      %v2791 = vld [vmem:[%s2772 + $0x6c] sm:$0xf]
      %v2792 = vld [vmem:[%s2772 + $0x70] sm:$0xf]
      %v2793 = vld [vmem:[%s2772 + $0x78] sm:$0xf]
      %v2794 = vld [vmem:[%s2772 + $0x7c] sm:$0xf]
      %v2795 = vld [vmem:[%s2772 + $0x84] sm:$0xf]
      %v2796 = vld [vmem:[%s2772 + $0x88] sm:$0xf]
      %v2797 = vld [vmem:[%s2772 + $0x90] sm:$0xf]
      %v2798 = vld [vmem:[%s2772 + $0x94] sm:$0xf]
      %v2799 = vld [vmem:[%s2772 + $0x9c] sm:$0xf]
      %v2800 = vld [vmem:[%s2772 + $0xa0] sm:$0xf]
      %v2801 = vld [vmem:[%s2772 + $0xa8] sm:$0xf]
      %v2802 = vld [vmem:[%s2772 + $0xac] sm:$0xf]
      %v2803 = vld [vmem:[%s2772 + $0xb4] sm:$0xf]
      %v2804 = vld [vmem:[%s2772 + $0xb8] sm:$0xf]
      %v2837 = vunpack.c.l.b16 %v2773
      %v2838 = vunpack.c.l.b16 %v2774
      %v2839 = vunpack.c.l.b16 %v2775
      %v2840 = vunpack.c.l.b16 %v2776
      %v2841 = vunpack.c.l.b16 %v2777
      %v2842 = vunpack.c.l.b16 %v2778
      %v2843 = vunpack.c.l.b16 %v2779
      %v2844 = vunpack.c.l.b16 %v2780
      %v2845 = vunpack.c.l.b16 %v2781
      %v2846 = vunpack.c.l.b16 %v2782
      %v2847 = vunpack.c.l.b16 %v2783
      %v2848 = vunpack.c.l.b16 %v2784
      %v2849 = vunpack.c.l.b16 %v2785
      %v2850 = vunpack.c.l.b16 %v2786
      %v2851 = vunpack.c.l.b16 %v2787
      %v2852 = vunpack.c.l.b16 %v2788
      %v2853 = vunpack.c.l.b16 %v2789
      %v2854 = vunpack.c.l.b16 %v2790
      %v2855 = vunpack.c.l.b16 %v2791
      %v2856 = vunpack.c.l.b16 %v2792
      %v2857 = vunpack.c.l.b16 %v2793
      %v2858 = vunpack.c.l.b16 %v2794
      %v2859 = vunpack.c.l.b16 %v2795
      %v2860 = vunpack.c.l.b16 %v2796
      %v2861 = vunpack.c.l.b16 %v2797
      %v2862 = vunpack.c.l.b16 %v2798
      %v2863 = vunpack.c.l.b16 %v2799
      %v2864 = vunpack.c.l.b16 %v2800
      %v2865 = vunpack.c.l.b16 %v2801
      %v2866 = vunpack.c.l.b16 %v2802
      %v2867 = vunpack.c.l.b16 %v2803
      %v2868 = vunpack.c.l.b16 %v2804
      %v2869 = vpack.c.b16 %v2838, %v2837
      %v2870 = vpack.c.b16 %v2840, %v2839
      %v2871 = vpack.c.b16 %v2842, %v2841
      %v2872 = vpack.c.b16 %v2844, %v2843
      %v2873 = vpack.c.b16 %v2846, %v2845
      %v2874 = vpack.c.b16 %v2848, %v2847
      %v2875 = vpack.c.b16 %v2850, %v2849
      %v2876 = vpack.c.b16 %v2852, %v2851
      %v2877 = vpack.c.b16 %v2854, %v2853
      %v2878 = vpack.c.b16 %v2856, %v2855
      %v2879 = vpack.c.b16 %v2858, %v2857
      %v2880 = vpack.c.b16 %v2860, %v2859
      %v2881 = vpack.c.b16 %v2862, %v2861
      %v2882 = vpack.c.b16 %v2864, %v2863
      %v2883 = vpack.c.b16 %v2866, %v2865
      %v2884 = vpack.c.b16 %v2868, %v2867
      %2885 = vrot.lane.b32.xlu0 %v2869, 24
      %v2886 = vpop.permute.xlu0 %2885
      %2887 = vrot.lane.b32.xlu0 %v2870, 24
      %v2888 = vpop.permute.xlu0 %2887
      %2889 = vrot.lane.b32.xlu0 %v2871, 24
      %v2890 = vpop.permute.xlu0 %2889
      %2891 = vrot.lane.b32.xlu0 %v2872, 24
      %v2892 = vpop.permute.xlu0 %2891
      %2893 = vrot.lane.b32.xlu0 %v2873, 24
      %v2894 = vpop.permute.xlu0 %2893
      %2895 = vrot.lane.b32.xlu0 %v2874, 24
      %v2896 = vpop.permute.xlu0 %2895
      %2897 = vrot.lane.b32.xlu0 %v2875, 24
      %v2898 = vpop.permute.xlu0 %2897
      %2899 = vrot.lane.b32.xlu0 %v2876, 24
      %v2900 = vpop.permute.xlu0 %2899
      %2901 = vrot.lane.b32.xlu0 %v2877, 24
      %v2902 = vpop.permute.xlu0 %2901
      %2903 = vrot.lane.b32.xlu0 %v2878, 24
      %v2904 = vpop.permute.xlu0 %2903
      %2905 = vrot.lane.b32.xlu0 %v2879, 24
      %v2906 = vpop.permute.xlu0 %2905
      %2907 = vrot.lane.b32.xlu0 %v2880, 24
      %v2908 = vpop.permute.xlu0 %2907
      %2909 = vrot.lane.b32.xlu0 %v2881, 24
      %v2910 = vpop.permute.xlu0 %2909
      %2911 = vrot.lane.b32.xlu0 %v2882, 24
      %v2912 = vpop.permute.xlu0 %2911
      %2913 = vrot.lane.b32.xlu0 %v2883, 24
      %v2914 = vpop.permute.xlu0 %2913
      %2915 = vrot.lane.b32.xlu0 %v2884, 24
      %v2916 = vpop.permute.xlu0 %2915
      %vm2933 = vcmask 228544
      %2934 = vst.msk [vmem:[#allocation3] sm:$0xff] %vm2933, %v2886
      %2935 = vst.msk [vmem:[#allocation3 + $0x8] sm:$0xff] %vm2933, %v2888
      %2936 = vst.msk [vmem:[#allocation3 + $0x10] sm:$0xff] %vm2933, %v2890
      %2937 = vst.msk [vmem:[#allocation3 + $0x18] sm:$0xff] %vm2933, %v2892
      %2938 = vst.msk [vmem:[#allocation3 + $0x20] sm:$0xff] %vm2933, %v2894
      %2939 = vst.msk [vmem:[#allocation3 + $0x28] sm:$0xff] %vm2933, %v2896
      %2940 = vst.msk [vmem:[#allocation3 + $0x30] sm:$0xff] %vm2933, %v2898
      %2941 = vst.msk [vmem:[#allocation3 + $0x38] sm:$0xff] %vm2933, %v2900
      %2942 = vst.msk [vmem:[#allocation3 + $0x40] sm:$0xff] %vm2933, %v2902
      %2943 = vst.msk [vmem:[#allocation3 + $0x48] sm:$0xff] %vm2933, %v2904
      %2944 = vst.msk [vmem:[#allocation3 + $0x50] sm:$0xff] %vm2933, %v2906
      %2945 = vst.msk [vmem:[#allocation3 + $0x58] sm:$0xff] %vm2933, %v2908
      %2946 = vst.msk [vmem:[#allocation3 + $0x60] sm:$0xff] %vm2933, %v2910
      %2947 = vst.msk [vmem:[#allocation3 + $0x68] sm:$0xff] %vm2933, %v2912
      %2948 = vst.msk [vmem:[#allocation3 + $0x70] sm:$0xff] %vm2933, %v2914
      %2949 = vst.msk [vmem:[#allocation3 + $0x78] sm:$0xff] %vm2933, %v2916
      %v2950 = vld [vmem:[%s2772] sm:$0xf]
      %v2951 = vld [vmem:[%s2772 + $0x4] sm:$0xf]
      %v2952 = vld [vmem:[%s2772 + $0x8] sm:$0x1]
      %v2953 = vld [vmem:[%s2772 + $0xc] sm:$0xf]
      %v2954 = vld [vmem:[%s2772 + $0x10] sm:$0xf]
      %v2955 = vld [vmem:[%s2772 + $0x14] sm:$0x1]
      %v2956 = vld [vmem:[%s2772 + $0x18] sm:$0xf]
      %v2957 = vld [vmem:[%s2772 + $0x1c] sm:$0xf]
      %v2958 = vld [vmem:[%s2772 + $0x20] sm:$0x1]
      %v2959 = vld [vmem:[%s2772 + $0x24] sm:$0xf]
      %v2960 = vld [vmem:[%s2772 + $0x28] sm:$0xf]
      %v2961 = vld [vmem:[%s2772 + $0x2c] sm:$0x1]
      %v2962 = vld [vmem:[%s2772 + $0x30] sm:$0xf]
      %v2963 = vld [vmem:[%s2772 + $0x34] sm:$0xf]
      %v2964 = vld [vmem:[%s2772 + $0x38] sm:$0x1]
      %v2965 = vld [vmem:[%s2772 + $0x3c] sm:$0xf]
      %v2966 = vld [vmem:[%s2772 + $0x40] sm:$0xf]
      %v2967 = vld [vmem:[%s2772 + $0x44] sm:$0x1]
      %v2968 = vld [vmem:[%s2772 + $0x48] sm:$0xf]
      %v2969 = vld [vmem:[%s2772 + $0x4c] sm:$0xf]
      %v2970 = vld [vmem:[%s2772 + $0x50] sm:$0x1]
      %v2971 = vld [vmem:[%s2772 + $0x54] sm:$0xf]
      %v2972 = vld [vmem:[%s2772 + $0x58] sm:$0xf]
      %v2973 = vld [vmem:[%s2772 + $0x5c] sm:$0x1]
      %v2974 = vld [vmem:[%s2772 + $0x60] sm:$0xf]
      %v2975 = vld [vmem:[%s2772 + $0x64] sm:$0xf]
      %v2976 = vld [vmem:[%s2772 + $0x68] sm:$0x1]
      %v2977 = vld [vmem:[%s2772 + $0x6c] sm:$0xf]
      %v2978 = vld [vmem:[%s2772 + $0x70] sm:$0xf]
      %v2979 = vld [vmem:[%s2772 + $0x74] sm:$0x1]
      %v2980 = vld [vmem:[%s2772 + $0x78] sm:$0xf]
      %v2981 = vld [vmem:[%s2772 + $0x7c] sm:$0xf]
      %v2982 = vld [vmem:[%s2772 + $0x80] sm:$0x1]
      %v2983 = vld [vmem:[%s2772 + $0x84] sm:$0xf]
      %v2984 = vld [vmem:[%s2772 + $0x88] sm:$0xf]
      %v2985 = vld [vmem:[%s2772 + $0x8c] sm:$0x1]
      %v2986 = vld [vmem:[%s2772 + $0x90] sm:$0xf]
      %v2987 = vld [vmem:[%s2772 + $0x94] sm:$0xf]
      %v2988 = vld [vmem:[%s2772 + $0x98] sm:$0x1]
      %v2989 = vld [vmem:[%s2772 + $0x9c] sm:$0xf]
      %v2990 = vld [vmem:[%s2772 + $0xa0] sm:$0xf]
      %v2991 = vld [vmem:[%s2772 + $0xa4] sm:$0x1]
      %v2992 = vld [vmem:[%s2772 + $0xa8] sm:$0xf]
      %v2993 = vld [vmem:[%s2772 + $0xac] sm:$0xf]
      %v2994 = vld [vmem:[%s2772 + $0xb0] sm:$0x1]
      %v2995 = vld [vmem:[%s2772 + $0xb4] sm:$0xf]
      %v2996 = vld [vmem:[%s2772 + $0xb8] sm:$0xf]
      %v2997 = vld [vmem:[%s2772 + $0xbc] sm:$0x1]
      %v2999 = vshrl.u32 %v2950, 16
      %v3001 = vrot.slane %v2999, 4
      %v3002 = vshll.u32 %v2950, 16
      %v3004 = vrot.slane %v3002, 5
      %v3005 = vor.u32 %v3001, %v3004
      %v3006 = vrot.slane %v3005, 4
      %v3008 = vshll.u32 %v2951, 16
      %v3010 = vrot.slane %v3008, 5
      %v3011 = vsel %vm907, %v3006, %v3010
      %v3012 = vshrl.u32 %v2951, 16
      %v3014 = vrot.slane %v3012, 4
      %v3015 = vor.u32 %v3014, %v3010
      %v3016 = vrot.slane %v3015, 4
      %v3018 = vshll.u32 %v2952, 16
      %v3020 = vrot.slane %v3018, 5
      %v3021 = vsel %vm907, %v3016, %v3020
      %v3023 = vshrl.u32 %v2953, 16
      %v3025 = vrot.slane %v3023, 4
      %v3026 = vshll.u32 %v2953, 16
      %v3028 = vrot.slane %v3026, 5
      %v3029 = vor.u32 %v3025, %v3028
      %v3030 = vrot.slane %v3029, 4
      %v3032 = vshll.u32 %v2954, 16
      %v3034 = vrot.slane %v3032, 5
      %v3035 = vsel %vm907, %v3030, %v3034
      %v3036 = vshrl.u32 %v2954, 16
      %v3038 = vrot.slane %v3036, 4
      %v3039 = vor.u32 %v3038, %v3034
      %v3040 = vrot.slane %v3039, 4
      %v3042 = vshll.u32 %v2955, 16
      %v3044 = vrot.slane %v3042, 5
      %v3045 = vsel %vm907, %v3040, %v3044
      %v3047 = vshrl.u32 %v2956, 16
      %v3049 = vrot.slane %v3047, 4
      %v3050 = vshll.u32 %v2956, 16
      %v3052 = vrot.slane %v3050, 5
      %v3053 = vor.u32 %v3049, %v3052
      %v3054 = vrot.slane %v3053, 4
      %v3056 = vshll.u32 %v2957, 16
      %v3058 = vrot.slane %v3056, 5
      %v3059 = vsel %vm907, %v3054, %v3058
      %v3060 = vshrl.u32 %v2957, 16
      %v3062 = vrot.slane %v3060, 4
      %v3063 = vor.u32 %v3062, %v3058
      %v3064 = vrot.slane %v3063, 4
      %v3066 = vshll.u32 %v2958, 16
      %v3068 = vrot.slane %v3066, 5
      %v3069 = vsel %vm907, %v3064, %v3068
      %v3071 = vshrl.u32 %v2959, 16
      %v3073 = vrot.slane %v3071, 4
      %v3074 = vshll.u32 %v2959, 16
      %v3076 = vrot.slane %v3074, 5
      %v3077 = vor.u32 %v3073, %v3076
      %v3078 = vrot.slane %v3077, 4
      %v3080 = vshll.u32 %v2960, 16
      %v3082 = vrot.slane %v3080, 5
      %v3083 = vsel %vm907, %v3078, %v3082
      %v3084 = vshrl.u32 %v2960, 16
      %v3086 = vrot.slane %v3084, 4
      %v3087 = vor.u32 %v3086, %v3082
      %v3088 = vrot.slane %v3087, 4
      %v3090 = vshll.u32 %v2961, 16
      %v3092 = vrot.slane %v3090, 5
      %v3093 = vsel %vm907, %v3088, %v3092
      %v3095 = vshrl.u32 %v2962, 16
      %v3097 = vrot.slane %v3095, 4
      %v3098 = vshll.u32 %v2962, 16
      %v3100 = vrot.slane %v3098, 5
      %v3101 = vor.u32 %v3097, %v3100
      %v3102 = vrot.slane %v3101, 4
      %v3104 = vshll.u32 %v2963, 16
      %v3106 = vrot.slane %v3104, 5
      %v3107 = vsel %vm907, %v3102, %v3106
      %v3108 = vshrl.u32 %v2963, 16
      %v3110 = vrot.slane %v3108, 4
      %v3111 = vor.u32 %v3110, %v3106
      %v3112 = vrot.slane %v3111, 4
      %v3114 = vshll.u32 %v2964, 16
      %v3116 = vrot.slane %v3114, 5
      %v3117 = vsel %vm907, %v3112, %v3116
      %v3119 = vshrl.u32 %v2965, 16
      %v3121 = vrot.slane %v3119, 4
      %v3122 = vshll.u32 %v2965, 16
      %v3124 = vrot.slane %v3122, 5
      %v3125 = vor.u32 %v3121, %v3124
      %v3126 = vrot.slane %v3125, 4
      %v3128 = vshll.u32 %v2966, 16
      %v3130 = vrot.slane %v3128, 5
      %v3131 = vsel %vm907, %v3126, %v3130
      %v3132 = vshrl.u32 %v2966, 16
      %v3134 = vrot.slane %v3132, 4
      %v3135 = vor.u32 %v3134, %v3130
      %v3136 = vrot.slane %v3135, 4
      %v3138 = vshll.u32 %v2967, 16
      %v3140 = vrot.slane %v3138, 5
      %v3141 = vsel %vm907, %v3136, %v3140
      %v3143 = vshrl.u32 %v2968, 16
      %v3145 = vrot.slane %v3143, 4
      %v3146 = vshll.u32 %v2968, 16
      %v3148 = vrot.slane %v3146, 5
      %v3149 = vor.u32 %v3145, %v3148
      %v3150 = vrot.slane %v3149, 4
      %v3152 = vshll.u32 %v2969, 16
      %v3154 = vrot.slane %v3152, 5
      %v3155 = vsel %vm907, %v3150, %v3154
      %v3156 = vshrl.u32 %v2969, 16
      %v3158 = vrot.slane %v3156, 4
      %v3159 = vor.u32 %v3158, %v3154
      %v3160 = vrot.slane %v3159, 4
      %v3162 = vshll.u32 %v2970, 16
      %v3164 = vrot.slane %v3162, 5
      %v3165 = vsel %vm907, %v3160, %v3164
      %v3167 = vshrl.u32 %v2971, 16
      %v3169 = vrot.slane %v3167, 4
      %v3170 = vshll.u32 %v2971, 16
      %v3172 = vrot.slane %v3170, 5
      %v3173 = vor.u32 %v3169, %v3172
      %v3174 = vrot.slane %v3173, 4
      %v3176 = vshll.u32 %v2972, 16
      %v3178 = vrot.slane %v3176, 5
      %v3179 = vsel %vm907, %v3174, %v3178
      %v3180 = vshrl.u32 %v2972, 16
      %v3182 = vrot.slane %v3180, 4
      %v3183 = vor.u32 %v3182, %v3178
      %v3184 = vrot.slane %v3183, 4
      %v3186 = vshll.u32 %v2973, 16
      %v3188 = vrot.slane %v3186, 5
      %v3189 = vsel %vm907, %v3184, %v3188
      %v3191 = vshrl.u32 %v2974, 16
      %v3193 = vrot.slane %v3191, 4
      %v3194 = vshll.u32 %v2974, 16
      %v3196 = vrot.slane %v3194, 5
      %v3197 = vor.u32 %v3193, %v3196
      %v3198 = vrot.slane %v3197, 4
      %v3200 = vshll.u32 %v2975, 16
      %v3202 = vrot.slane %v3200, 5
      %v3203 = vsel %vm907, %v3198, %v3202
      %v3204 = vshrl.u32 %v2975, 16
      %v3206 = vrot.slane %v3204, 4
      %v3207 = vor.u32 %v3206, %v3202
      %v3208 = vrot.slane %v3207, 4
      %v3210 = vshll.u32 %v2976, 16
      %v3212 = vrot.slane %v3210, 5
      %v3213 = vsel %vm907, %v3208, %v3212
      %v3215 = vshrl.u32 %v2977, 16
      %v3217 = vrot.slane %v3215, 4
      %v3218 = vshll.u32 %v2977, 16
      %v3220 = vrot.slane %v3218, 5
      %v3221 = vor.u32 %v3217, %v3220
      %v3222 = vrot.slane %v3221, 4
      %v3224 = vshll.u32 %v2978, 16
      %v3226 = vrot.slane %v3224, 5
      %v3227 = vsel %vm907, %v3222, %v3226
      %v3228 = vshrl.u32 %v2978, 16
      %v3230 = vrot.slane %v3228, 4
      %v3231 = vor.u32 %v3230, %v3226
      %v3232 = vrot.slane %v3231, 4
      %v3234 = vshll.u32 %v2979, 16
      %v3236 = vrot.slane %v3234, 5
      %v3237 = vsel %vm907, %v3232, %v3236
      %v3239 = vshrl.u32 %v2980, 16
      %v3241 = vrot.slane %v3239, 4
      %v3242 = vshll.u32 %v2980, 16
      %v3244 = vrot.slane %v3242, 5
      %v3245 = vor.u32 %v3241, %v3244
      %v3246 = vrot.slane %v3245, 4
      %v3248 = vshll.u32 %v2981, 16
      %v3250 = vrot.slane %v3248, 5
      %v3251 = vsel %vm907, %v3246, %v3250
      %v3252 = vshrl.u32 %v2981, 16
      %v3254 = vrot.slane %v3252, 4
      %v3255 = vor.u32 %v3254, %v3250
      %v3256 = vrot.slane %v3255, 4
      %v3258 = vshll.u32 %v2982, 16
      %v3260 = vrot.slane %v3258, 5
      %v3261 = vsel %vm907, %v3256, %v3260
      %v3263 = vshrl.u32 %v2983, 16
      %v3265 = vrot.slane %v3263, 4
      %v3266 = vshll.u32 %v2983, 16
      %v3268 = vrot.slane %v3266, 5
      %v3269 = vor.u32 %v3265, %v3268
      %v3270 = vrot.slane %v3269, 4
      %v3272 = vshll.u32 %v2984, 16
      %v3274 = vrot.slane %v3272, 5
      %v3275 = vsel %vm907, %v3270, %v3274
      %v3276 = vshrl.u32 %v2984, 16
      %v3278 = vrot.slane %v3276, 4
      %v3279 = vor.u32 %v3278, %v3274
      %v3280 = vrot.slane %v3279, 4
      %v3282 = vshll.u32 %v2985, 16
      %v3284 = vrot.slane %v3282, 5
      %v3285 = vsel %vm907, %v3280, %v3284
      %v3287 = vshrl.u32 %v2986, 16
      %v3289 = vrot.slane %v3287, 4
      %v3290 = vshll.u32 %v2986, 16
      %v3292 = vrot.slane %v3290, 5
      %v3293 = vor.u32 %v3289, %v3292
      %v3294 = vrot.slane %v3293, 4
      %v3296 = vshll.u32 %v2987, 16
      %v3298 = vrot.slane %v3296, 5
      %v3299 = vsel %vm907, %v3294, %v3298
      %v3300 = vshrl.u32 %v2987, 16
      %v3302 = vrot.slane %v3300, 4
      %v3303 = vor.u32 %v3302, %v3298
      %v3304 = vrot.slane %v3303, 4
      %v3306 = vshll.u32 %v2988, 16
      %v3308 = vrot.slane %v3306, 5
      %v3309 = vsel %vm907, %v3304, %v3308
      %v3311 = vshrl.u32 %v2989, 16
      %v3313 = vrot.slane %v3311, 4
      %v3314 = vshll.u32 %v2989, 16
      %v3316 = vrot.slane %v3314, 5
      %v3317 = vor.u32 %v3313, %v3316
      %v3318 = vrot.slane %v3317, 4
      %v3320 = vshll.u32 %v2990, 16
      %v3322 = vrot.slane %v3320, 5
      %v3323 = vsel %vm907, %v3318, %v3322
      %v3324 = vshrl.u32 %v2990, 16
      %v3326 = vrot.slane %v3324, 4
      %v3327 = vor.u32 %v3326, %v3322
      %v3328 = vrot.slane %v3327, 4
      %v3330 = vshll.u32 %v2991, 16
      %v3332 = vrot.slane %v3330, 5
      %v3333 = vsel %vm907, %v3328, %v3332
      %v3335 = vshrl.u32 %v2992, 16
      %v3337 = vrot.slane %v3335, 4
      %v3338 = vshll.u32 %v2992, 16
      %v3340 = vrot.slane %v3338, 5
      %v3341 = vor.u32 %v3337, %v3340
      %v3342 = vrot.slane %v3341, 4
      %v3344 = vshll.u32 %v2993, 16
      %v3346 = vrot.slane %v3344, 5
      %v3347 = vsel %vm907, %v3342, %v3346
      %v3348 = vshrl.u32 %v2993, 16
      %v3350 = vrot.slane %v3348, 4
      %v3351 = vor.u32 %v3350, %v3346
      %v3352 = vrot.slane %v3351, 4
      %v3354 = vshll.u32 %v2994, 16
      %v3356 = vrot.slane %v3354, 5
      %v3357 = vsel %vm907, %v3352, %v3356
      %v3359 = vshrl.u32 %v2995, 16
      %v3361 = vrot.slane %v3359, 4
      %v3362 = vshll.u32 %v2995, 16
      %v3364 = vrot.slane %v3362, 5
      %v3365 = vor.u32 %v3361, %v3364
      %v3366 = vrot.slane %v3365, 4
      %v3368 = vshll.u32 %v2996, 16
      %v3370 = vrot.slane %v3368, 5
      %v3371 = vsel %vm907, %v3366, %v3370
      %v3372 = vshrl.u32 %v2996, 16
      %v3374 = vrot.slane %v3372, 4
      %v3375 = vor.u32 %v3374, %v3370
      %v3376 = vrot.slane %v3375, 4
      %v3378 = vshll.u32 %v2997, 16
      %v3380 = vrot.slane %v3378, 5
      %v3381 = vsel %vm907, %v3376, %v3380
      %v3382 = vunpack.c.l.b16 %v3011
      %v3383 = vunpack.c.l.b16 %v3021
      %v3384 = vunpack.c.l.b16 %v3035
      %v3385 = vunpack.c.l.b16 %v3045
      %v3386 = vunpack.c.l.b16 %v3059
      %v3387 = vunpack.c.l.b16 %v3069
      %v3388 = vunpack.c.l.b16 %v3083
      %v3389 = vunpack.c.l.b16 %v3093
      %v3390 = vunpack.c.l.b16 %v3107
      %v3391 = vunpack.c.l.b16 %v3117
      %v3392 = vunpack.c.l.b16 %v3131
      %v3393 = vunpack.c.l.b16 %v3141
      %v3394 = vunpack.c.l.b16 %v3155
      %v3395 = vunpack.c.l.b16 %v3165
      %v3396 = vunpack.c.l.b16 %v3179
      %v3397 = vunpack.c.l.b16 %v3189
      %v3398 = vunpack.c.l.b16 %v3203
      %v3399 = vunpack.c.l.b16 %v3213
      %v3400 = vunpack.c.l.b16 %v3227
      %v3401 = vunpack.c.l.b16 %v3237
      %v3402 = vunpack.c.l.b16 %v3251
      %v3403 = vunpack.c.l.b16 %v3261
      %v3404 = vunpack.c.l.b16 %v3275
      %v3405 = vunpack.c.l.b16 %v3285
      %v3406 = vunpack.c.l.b16 %v3299
      %v3407 = vunpack.c.l.b16 %v3309
      %v3408 = vunpack.c.l.b16 %v3323
      %v3409 = vunpack.c.l.b16 %v3333
      %v3410 = vunpack.c.l.b16 %v3347
      %v3411 = vunpack.c.l.b16 %v3357
      %v3412 = vunpack.c.l.b16 %v3371
      %v3413 = vunpack.c.l.b16 %v3381
      %v3414 = vpack.c.b16 %v3383, %v3382
      %v3415 = vpack.c.b16 %v3385, %v3384
      %v3416 = vpack.c.b16 %v3387, %v3386
      %v3417 = vpack.c.b16 %v3389, %v3388
      %v3418 = vpack.c.b16 %v3391, %v3390
      %v3419 = vpack.c.b16 %v3393, %v3392
      %v3420 = vpack.c.b16 %v3395, %v3394
      %v3421 = vpack.c.b16 %v3397, %v3396
      %v3422 = vpack.c.b16 %v3399, %v3398
      %v3423 = vpack.c.b16 %v3401, %v3400
      %v3424 = vpack.c.b16 %v3403, %v3402
      %v3425 = vpack.c.b16 %v3405, %v3404
      %v3426 = vpack.c.b16 %v3407, %v3406
      %v3427 = vpack.c.b16 %v3409, %v3408
      %v3428 = vpack.c.b16 %v3411, %v3410
      %v3429 = vpack.c.b16 %v3413, %v3412
      %3430 = vrot.lane.b32.xlu0 %v3414, 28
      %v3431 = vpop.permute.xlu0 %3430
      %3432 = vrot.lane.b32.xlu0 %v3415, 28
      %v3433 = vpop.permute.xlu0 %3432
      %3434 = vrot.lane.b32.xlu0 %v3416, 28
      %v3435 = vpop.permute.xlu0 %3434
      %3436 = vrot.lane.b32.xlu0 %v3417, 28
      %v3437 = vpop.permute.xlu0 %3436
      %3438 = vrot.lane.b32.xlu0 %v3418, 28
      %v3439 = vpop.permute.xlu0 %3438
      %3440 = vrot.lane.b32.xlu0 %v3419, 28
      %v3441 = vpop.permute.xlu0 %3440
      %3442 = vrot.lane.b32.xlu0 %v3420, 28
      %v3443 = vpop.permute.xlu0 %3442
      %3444 = vrot.lane.b32.xlu0 %v3421, 28
      %v3445 = vpop.permute.xlu0 %3444
      %3446 = vrot.lane.b32.xlu0 %v3422, 28
      %v3447 = vpop.permute.xlu0 %3446
      %3448 = vrot.lane.b32.xlu0 %v3423, 28
      %v3449 = vpop.permute.xlu0 %3448
      %3450 = vrot.lane.b32.xlu0 %v3424, 28
      %v3451 = vpop.permute.xlu0 %3450
      %3452 = vrot.lane.b32.xlu0 %v3425, 28
      %v3453 = vpop.permute.xlu0 %3452
      %3454 = vrot.lane.b32.xlu0 %v3426, 28
      %v3455 = vpop.permute.xlu0 %3454
      %3456 = vrot.lane.b32.xlu0 %v3427, 28
      %v3457 = vpop.permute.xlu0 %3456
      %3458 = vrot.lane.b32.xlu0 %v3428, 28
      %v3459 = vpop.permute.xlu0 %3458
      %3460 = vrot.lane.b32.xlu0 %v3429, 28
      %v3461 = vpop.permute.xlu0 %3460
      %vm3478 = vcmask 261344
      %3479 = vst.msk [vmem:[#allocation3] sm:$0xff] %vm3478, %v3431
      %3480 = vst.msk [vmem:[#allocation3 + $0x8] sm:$0xff] %vm3478, %v3433
      %3481 = vst.msk [vmem:[#allocation3 + $0x10] sm:$0xff] %vm3478, %v3435
      %3482 = vst.msk [vmem:[#allocation3 + $0x18] sm:$0xff] %vm3478, %v3437
      %3483 = vst.msk [vmem:[#allocation3 + $0x20] sm:$0xff] %vm3478, %v3439
      %3484 = vst.msk [vmem:[#allocation3 + $0x28] sm:$0xff] %vm3478, %v3441
      %3485 = vst.msk [vmem:[#allocation3 + $0x30] sm:$0xff] %vm3478, %v3443
      %3486 = vst.msk [vmem:[#allocation3 + $0x38] sm:$0xff] %vm3478, %v3445
      %3487 = vst.msk [vmem:[#allocation3 + $0x40] sm:$0xff] %vm3478, %v3447
      %3488 = vst.msk [vmem:[#allocation3 + $0x48] sm:$0xff] %vm3478, %v3449
      %3489 = vst.msk [vmem:[#allocation3 + $0x50] sm:$0xff] %vm3478, %v3451
      %3490 = vst.msk [vmem:[#allocation3 + $0x58] sm:$0xff] %vm3478, %v3453
      %3491 = vst.msk [vmem:[#allocation3 + $0x60] sm:$0xff] %vm3478, %v3455
      %3492 = vst.msk [vmem:[#allocation3 + $0x68] sm:$0xff] %vm3478, %v3457
      %3493 = vst.msk [vmem:[#allocation3 + $0x70] sm:$0xff] %vm3478, %v3459
      %3494 = vst.msk [vmem:[#allocation3 + $0x78] sm:$0xff] %vm3478, %v3461
      %v3495 = vld [vmem:[%s2772] sm:$0xe]
      %v3496 = vld [vmem:[%s2772 + $0x4] sm:$0xf]
      %v3497 = vld [vmem:[%s2772 + $0x8] sm:$0x1]
      %v3498 = vld [vmem:[%s2772 + $0xc] sm:$0xe]
      %v3499 = vld [vmem:[%s2772 + $0x10] sm:$0xf]
      %v3500 = vld [vmem:[%s2772 + $0x14] sm:$0x1]
      %v3501 = vld [vmem:[%s2772 + $0x18] sm:$0xe]
      %v3502 = vld [vmem:[%s2772 + $0x1c] sm:$0xf]
      %v3503 = vld [vmem:[%s2772 + $0x20] sm:$0x1]
      %v3504 = vld [vmem:[%s2772 + $0x24] sm:$0xe]
      %v3505 = vld [vmem:[%s2772 + $0x28] sm:$0xf]
      %v3506 = vld [vmem:[%s2772 + $0x2c] sm:$0x1]
      %v3507 = vld [vmem:[%s2772 + $0x30] sm:$0xe]
      %v3508 = vld [vmem:[%s2772 + $0x34] sm:$0xf]
      %v3509 = vld [vmem:[%s2772 + $0x38] sm:$0x1]
      %v3510 = vld [vmem:[%s2772 + $0x3c] sm:$0xe]
      %v3511 = vld [vmem:[%s2772 + $0x40] sm:$0xf]
      %v3512 = vld [vmem:[%s2772 + $0x44] sm:$0x1]
      %v3513 = vld [vmem:[%s2772 + $0x48] sm:$0xe]
      %v3514 = vld [vmem:[%s2772 + $0x4c] sm:$0xf]
      %v3515 = vld [vmem:[%s2772 + $0x50] sm:$0x1]
      %v3516 = vld [vmem:[%s2772 + $0x54] sm:$0xe]
      %v3517 = vld [vmem:[%s2772 + $0x58] sm:$0xf]
      %v3518 = vld [vmem:[%s2772 + $0x5c] sm:$0x1]
      %v3519 = vld [vmem:[%s2772 + $0x60] sm:$0xe]
      %v3520 = vld [vmem:[%s2772 + $0x64] sm:$0xf]
      %v3521 = vld [vmem:[%s2772 + $0x68] sm:$0x1]
      %v3522 = vld [vmem:[%s2772 + $0x6c] sm:$0xe]
      %v3523 = vld [vmem:[%s2772 + $0x70] sm:$0xf]
      %v3524 = vld [vmem:[%s2772 + $0x74] sm:$0x1]
      %v3525 = vld [vmem:[%s2772 + $0x78] sm:$0xe]
      %v3526 = vld [vmem:[%s2772 + $0x7c] sm:$0xf]
      %v3527 = vld [vmem:[%s2772 + $0x80] sm:$0x1]
      %v3528 = vld [vmem:[%s2772 + $0x84] sm:$0xe]
      %v3529 = vld [vmem:[%s2772 + $0x88] sm:$0xf]
      %v3530 = vld [vmem:[%s2772 + $0x8c] sm:$0x1]
      %v3531 = vld [vmem:[%s2772 + $0x90] sm:$0xe]
      %v3532 = vld [vmem:[%s2772 + $0x94] sm:$0xf]
      %v3533 = vld [vmem:[%s2772 + $0x98] sm:$0x1]
      %v3534 = vld [vmem:[%s2772 + $0x9c] sm:$0xe]
      %v3535 = vld [vmem:[%s2772 + $0xa0] sm:$0xf]
      %v3536 = vld [vmem:[%s2772 + $0xa4] sm:$0x1]
      %v3537 = vld [vmem:[%s2772 + $0xa8] sm:$0xe]
      %v3538 = vld [vmem:[%s2772 + $0xac] sm:$0xf]
      %v3539 = vld [vmem:[%s2772 + $0xb0] sm:$0x1]
      %v3540 = vld [vmem:[%s2772 + $0xb4] sm:$0xe]
      %v3541 = vld [vmem:[%s2772 + $0xb8] sm:$0xf]
      %v3542 = vld [vmem:[%s2772 + $0xbc] sm:$0x1]
      %v3591 = vrot.slane %v3495, 5
      %v3592 = vrot.slane %v3591, 4
      %v3593 = vrot.slane %v3496, 5
      %v3594 = vsel %vm1503, %v3592, %v3593
      %v3595 = vrot.slane %v3593, 4
      %v3596 = vrot.slane %v3497, 5
      %v3597 = vsel %vm1503, %v3595, %v3596
      %v3598 = vrot.slane %v3498, 5
      %v3599 = vrot.slane %v3598, 4
      %v3600 = vrot.slane %v3499, 5
      %v3601 = vsel %vm1503, %v3599, %v3600
      %v3602 = vrot.slane %v3600, 4
      %v3603 = vrot.slane %v3500, 5
      %v3604 = vsel %vm1503, %v3602, %v3603
      %v3605 = vrot.slane %v3501, 5
      %v3606 = vrot.slane %v3605, 4
      %v3607 = vrot.slane %v3502, 5
      %v3608 = vsel %vm1503, %v3606, %v3607
      %v3609 = vrot.slane %v3607, 4
      %v3610 = vrot.slane %v3503, 5
      %v3611 = vsel %vm1503, %v3609, %v3610
      %v3612 = vrot.slane %v3504, 5
      %v3613 = vrot.slane %v3612, 4
      %v3614 = vrot.slane %v3505, 5
      %v3615 = vsel %vm1503, %v3613, %v3614
      %v3616 = vrot.slane %v3614, 4
      %v3617 = vrot.slane %v3506, 5
      %v3618 = vsel %vm1503, %v3616, %v3617
      %v3619 = vrot.slane %v3507, 5
      %v3620 = vrot.slane %v3619, 4
      %v3621 = vrot.slane %v3508, 5
      %v3622 = vsel %vm1503, %v3620, %v3621
      %v3623 = vrot.slane %v3621, 4
      %v3624 = vrot.slane %v3509, 5
      %v3625 = vsel %vm1503, %v3623, %v3624
      %v3626 = vrot.slane %v3510, 5
      %v3627 = vrot.slane %v3626, 4
      %v3628 = vrot.slane %v3511, 5
      %v3629 = vsel %vm1503, %v3627, %v3628
      %v3630 = vrot.slane %v3628, 4
      %v3631 = vrot.slane %v3512, 5
      %v3632 = vsel %vm1503, %v3630, %v3631
      %v3633 = vrot.slane %v3513, 5
      %v3634 = vrot.slane %v3633, 4
      %v3635 = vrot.slane %v3514, 5
      %v3636 = vsel %vm1503, %v3634, %v3635
      %v3637 = vrot.slane %v3635, 4
      %v3638 = vrot.slane %v3515, 5
      %v3639 = vsel %vm1503, %v3637, %v3638
      %v3640 = vrot.slane %v3516, 5
      %v3641 = vrot.slane %v3640, 4
      %v3642 = vrot.slane %v3517, 5
      %v3643 = vsel %vm1503, %v3641, %v3642
      %v3644 = vrot.slane %v3642, 4
      %v3645 = vrot.slane %v3518, 5
      %v3646 = vsel %vm1503, %v3644, %v3645
      %v3647 = vrot.slane %v3519, 5
      %v3648 = vrot.slane %v3647, 4
      %v3649 = vrot.slane %v3520, 5
      %v3650 = vsel %vm1503, %v3648, %v3649
      %v3651 = vrot.slane %v3649, 4
      %v3652 = vrot.slane %v3521, 5
      %v3653 = vsel %vm1503, %v3651, %v3652
      %v3654 = vrot.slane %v3522, 5
      %v3655 = vrot.slane %v3654, 4
      %v3656 = vrot.slane %v3523, 5
      %v3657 = vsel %vm1503, %v3655, %v3656
      %v3658 = vrot.slane %v3656, 4
      %v3659 = vrot.slane %v3524, 5
      %v3660 = vsel %vm1503, %v3658, %v3659
      %v3661 = vrot.slane %v3525, 5
      %v3662 = vrot.slane %v3661, 4
      %v3663 = vrot.slane %v3526, 5
      %v3664 = vsel %vm1503, %v3662, %v3663
      %v3665 = vrot.slane %v3663, 4
      %v3666 = vrot.slane %v3527, 5
      %v3667 = vsel %vm1503, %v3665, %v3666
      %v3668 = vrot.slane %v3528, 5
      %v3669 = vrot.slane %v3668, 4
      %v3670 = vrot.slane %v3529, 5
      %v3671 = vsel %vm1503, %v3669, %v3670
      %v3672 = vrot.slane %v3670, 4
      %v3673 = vrot.slane %v3530, 5
      %v3674 = vsel %vm1503, %v3672, %v3673
      %v3675 = vrot.slane %v3531, 5
      %v3676 = vrot.slane %v3675, 4
      %v3677 = vrot.slane %v3532, 5
      %v3678 = vsel %vm1503, %v3676, %v3677
      %v3679 = vrot.slane %v3677, 4
      %v3680 = vrot.slane %v3533, 5
      %v3681 = vsel %vm1503, %v3679, %v3680
      %v3682 = vrot.slane %v3534, 5
      %v3683 = vrot.slane %v3682, 4
      %v3684 = vrot.slane %v3535, 5
      %v3685 = vsel %vm1503, %v3683, %v3684
      %v3686 = vrot.slane %v3684, 4
      %v3687 = vrot.slane %v3536, 5
      %v3688 = vsel %vm1503, %v3686, %v3687
      %v3689 = vrot.slane %v3537, 5
      %v3690 = vrot.slane %v3689, 4
      %v3691 = vrot.slane %v3538, 5
      %v3692 = vsel %vm1503, %v3690, %v3691
      %v3693 = vrot.slane %v3691, 4
      %v3694 = vrot.slane %v3539, 5
      %v3695 = vsel %vm1503, %v3693, %v3694
      %v3696 = vrot.slane %v3540, 5
      %v3697 = vrot.slane %v3696, 4
      %v3698 = vrot.slane %v3541, 5
      %v3699 = vsel %vm1503, %v3697, %v3698
      %v3700 = vrot.slane %v3698, 4
      %v3701 = vrot.slane %v3542, 5
      %v3702 = vsel %vm1503, %v3700, %v3701
      %v3703 = vunpack.c.l.b16 %v3594
      %v3704 = vunpack.c.l.b16 %v3597
      %v3705 = vunpack.c.l.b16 %v3601
      %v3706 = vunpack.c.l.b16 %v3604
      %v3707 = vunpack.c.l.b16 %v3608
      %v3708 = vunpack.c.l.b16 %v3611
      %v3709 = vunpack.c.l.b16 %v3615
      %v3710 = vunpack.c.l.b16 %v3618
      %v3711 = vunpack.c.l.b16 %v3622
      %v3712 = vunpack.c.l.b16 %v3625
      %v3713 = vunpack.c.l.b16 %v3629
      %v3714 = vunpack.c.l.b16 %v3632
      %v3715 = vunpack.c.l.b16 %v3636
      %v3716 = vunpack.c.l.b16 %v3639
      %v3717 = vunpack.c.l.b16 %v3643
      %v3718 = vunpack.c.l.b16 %v3646
      %v3719 = vunpack.c.l.b16 %v3650
      %v3720 = vunpack.c.l.b16 %v3653
      %v3721 = vunpack.c.l.b16 %v3657
      %v3722 = vunpack.c.l.b16 %v3660
      %v3723 = vunpack.c.l.b16 %v3664
      %v3724 = vunpack.c.l.b16 %v3667
      %v3725 = vunpack.c.l.b16 %v3671
      %v3726 = vunpack.c.l.b16 %v3674
      %v3727 = vunpack.c.l.b16 %v3678
      %v3728 = vunpack.c.l.b16 %v3681
      %v3729 = vunpack.c.l.b16 %v3685
      %v3730 = vunpack.c.l.b16 %v3688
      %v3731 = vunpack.c.l.b16 %v3692
      %v3732 = vunpack.c.l.b16 %v3695
      %v3733 = vunpack.c.l.b16 %v3699
      %v3734 = vunpack.c.l.b16 %v3702
      %v3735 = vpack.c.b16 %v3704, %v3703
      %v3736 = vpack.c.b16 %v3706, %v3705
      %v3737 = vpack.c.b16 %v3708, %v3707
      %v3738 = vpack.c.b16 %v3710, %v3709
      %v3739 = vpack.c.b16 %v3712, %v3711
      %v3740 = vpack.c.b16 %v3714, %v3713
      %v3741 = vpack.c.b16 %v3716, %v3715
      %v3742 = vpack.c.b16 %v3718, %v3717
      %v3743 = vpack.c.b16 %v3720, %v3719
      %v3744 = vpack.c.b16 %v3722, %v3721
      %v3745 = vpack.c.b16 %v3724, %v3723
      %v3746 = vpack.c.b16 %v3726, %v3725
      %v3747 = vpack.c.b16 %v3728, %v3727
      %v3748 = vpack.c.b16 %v3730, %v3729
      %v3749 = vpack.c.b16 %v3732, %v3731
      %v3750 = vpack.c.b16 %v3734, %v3733
      %3751 = vrot.lane.b32.xlu0 %v3735, 32
      %v3752 = vpop.permute.xlu0 %3751
      %3753 = vrot.lane.b32.xlu0 %v3736, 32
      %v3754 = vpop.permute.xlu0 %3753
      %3755 = vrot.lane.b32.xlu0 %v3737, 32
      %v3756 = vpop.permute.xlu0 %3755
      %3757 = vrot.lane.b32.xlu0 %v3738, 32
      %v3758 = vpop.permute.xlu0 %3757
      %3759 = vrot.lane.b32.xlu0 %v3739, 32
      %v3760 = vpop.permute.xlu0 %3759
      %3761 = vrot.lane.b32.xlu0 %v3740, 32
      %v3762 = vpop.permute.xlu0 %3761
      %3763 = vrot.lane.b32.xlu0 %v3741, 32
      %v3764 = vpop.permute.xlu0 %3763
      %3765 = vrot.lane.b32.xlu0 %v3742, 32
      %v3766 = vpop.permute.xlu0 %3765
      %3767 = vrot.lane.b32.xlu0 %v3743, 32
      %v3768 = vpop.permute.xlu0 %3767
      %3769 = vrot.lane.b32.xlu0 %v3744, 32
      %v3770 = vpop.permute.xlu0 %3769
      %3771 = vrot.lane.b32.xlu0 %v3745, 32
      %v3772 = vpop.permute.xlu0 %3771
      %3773 = vrot.lane.b32.xlu0 %v3746, 32
      %v3774 = vpop.permute.xlu0 %3773
      %3775 = vrot.lane.b32.xlu0 %v3747, 32
      %v3776 = vpop.permute.xlu0 %3775
      %3777 = vrot.lane.b32.xlu0 %v3748, 32
      %v3778 = vpop.permute.xlu0 %3777
      %3779 = vrot.lane.b32.xlu0 %v3749, 32
      %v3780 = vpop.permute.xlu0 %3779
      %3781 = vrot.lane.b32.xlu0 %v3750, 32
      %v3782 = vpop.permute.xlu0 %3781
      %vm3799 = vcmask 294144
      %3800 = vst.msk [vmem:[#allocation3] sm:$0xff] %vm3799, %v3752
      %3801 = vst.msk [vmem:[#allocation3 + $0x8] sm:$0xff] %vm3799, %v3754
      %3802 = vst.msk [vmem:[#allocation3 + $0x10] sm:$0xff] %vm3799, %v3756
      %3803 = vst.msk [vmem:[#allocation3 + $0x18] sm:$0xff] %vm3799, %v3758
      %3804 = vst.msk [vmem:[#allocation3 + $0x20] sm:$0xff] %vm3799, %v3760
      %3805 = vst.msk [vmem:[#allocation3 + $0x28] sm:$0xff] %vm3799, %v3762
      %3806 = vst.msk [vmem:[#allocation3 + $0x30] sm:$0xff] %vm3799, %v3764
      %3807 = vst.msk [vmem:[#allocation3 + $0x38] sm:$0xff] %vm3799, %v3766
      %3808 = vst.msk [vmem:[#allocation3 + $0x40] sm:$0xff] %vm3799, %v3768
      %3809 = vst.msk [vmem:[#allocation3 + $0x48] sm:$0xff] %vm3799, %v3770
      %3810 = vst.msk [vmem:[#allocation3 + $0x50] sm:$0xff] %vm3799, %v3772
      %3811 = vst.msk [vmem:[#allocation3 + $0x58] sm:$0xff] %vm3799, %v3774
      %3812 = vst.msk [vmem:[#allocation3 + $0x60] sm:$0xff] %vm3799, %v3776
      %3813 = vst.msk [vmem:[#allocation3 + $0x68] sm:$0xff] %vm3799, %v3778
      %3814 = vst.msk [vmem:[#allocation3 + $0x70] sm:$0xff] %vm3799, %v3780
      %3815 = vst.msk [vmem:[#allocation3 + $0x78] sm:$0xff] %vm3799, %v3782
      %v3816 = vld [vmem:[#allocation3] sm:$0xff]
      %v3817 = vld [vmem:[#allocation3 + $0x8] sm:$0xff]
      %v3818 = vld [vmem:[#allocation3 + $0x10] sm:$0xff]
      %v3819 = vld [vmem:[#allocation3 + $0x18] sm:$0xff]
      %v3820 = vld [vmem:[#allocation3 + $0x20] sm:$0xff]
      %v3821 = vld [vmem:[#allocation3 + $0x28] sm:$0xff]
      %v3822 = vld [vmem:[#allocation3 + $0x30] sm:$0xff]
      %v3823 = vld [vmem:[#allocation3 + $0x38] sm:$0xff]
      %v3824 = vld [vmem:[#allocation3 + $0x40] sm:$0xff]
      %v3825 = vld [vmem:[#allocation3 + $0x48] sm:$0xff]
      %v3826 = vld [vmem:[#allocation3 + $0x50] sm:$0xff]
      %v3827 = vld [vmem:[#allocation3 + $0x58] sm:$0xff]
      %v3828 = vld [vmem:[#allocation3 + $0x60] sm:$0xff]
      %v3829 = vld [vmem:[#allocation3 + $0x68] sm:$0xff]
      %v3830 = vld [vmem:[#allocation3 + $0x70] sm:$0xff]
      %v3831 = vld [vmem:[#allocation3 + $0x78] sm:$0xff]
      %v3832 = vld [vmem:[%s1] sm:$0xf]
      %v3833 = vld [vmem:[%s1 + $0x4] sm:$0xf]
      %v3834 = vld [vmem:[%s1 + $0x8] sm:$0xf]
      %v3835 = vld [vmem:[%s1 + $0xc] sm:$0xf]
      %v3836 = vld [vmem:[%s1 + $0x10] sm:$0x3]
      %v3842 = vunpack.c.l.b16 %v3832
      %v3843 = vunpack.c.l.b16 %v3833
      %v3844 = vunpack.c.l.b16 %v3834
      %v3845 = vunpack.c.l.b16 %v3835
      %v3846 = vunpack.c.l.b16 %v3836
      %v3847 = vpack.c.b16 %v3843, %v3842
      %v3848 = vpack.c.b16 %v3845, %v3844
      %v3849 = vpack.c.b16 %v3846, %v3846
      %vm3852 = vcmask 293888
      %v3854 = vsel %vm3852, %v3816, 0
      %v3857 = vsel %vm3852, %v3817, 0
      %v3860 = vsel %vm3852, %v3818, 0
      %v3863 = vsel %vm3852, %v3819, 0
      %v3866 = vsel %vm3852, %v3820, 0
      %v3869 = vsel %vm3852, %v3821, 0
      %v3872 = vsel %vm3852, %v3822, 0
      %v3875 = vsel %vm3852, %v3823, 0
      %v3878 = vsel %vm3852, %v3824, 0
      %v3881 = vsel %vm3852, %v3825, 0
      %v3884 = vsel %vm3852, %v3826, 0
      %v3887 = vsel %vm3852, %v3827, 0
      %v3890 = vsel %vm3852, %v3828, 0
      %v3893 = vsel %vm3852, %v3829, 0
      %v3896 = vsel %vm3852, %v3830, 0
      %v3899 = vsel %vm3852, %v3831, 0
      %vm3901 = vcmask 1041408
      %v3903 = vsel %vm3901, %v3849, 0
      %3905 = vmatprep.subr.bf16.mxu0 0
      %3906 = vmatpush1.bf16.msra.mxu0 %v3847
      %3907 = vmatprep.subr.bf16.mxu0 0
      %3908 = vmatpush1.bf16.msra.mxu0 %v3848
      %3909 = vmatprep.subr.bf16.mxu0 0
      %3910 = vmatpush1.bf16.msra.mxu0 %v3903
      %3911 = vmatprep.subr.bf16.mxu0 0
      %3912 = vmatpush1.bf16.msra.mxu0 0
      %3913 = vmatprep.subr.bf16.mxu0 0
      %3914 = vmatpush1.bf16.msra.mxu0 0
      %3915 = vmatprep.subr.bf16.mxu0 0
      %3916 = vmatpush1.bf16.msra.mxu0 0
      %3917 = vmatprep.subr.bf16.mxu0 0
      %3918 = vmatpush1.bf16.msra.mxu0 0
      %3919 = vmatprep.subr.bf16.mxu0 0
      %3920 = vmatpush1.bf16.msra.mxu0 0
      %3921 = vmatprep.subr.bf16.mxu0 0
      %3922 = vmatpush1.bf16.msra.mxu0 0
      %3923 = vmatprep.subr.bf16.mxu0 0
      %3924 = vmatpush1.bf16.msra.mxu0 0
      %3925 = vmatprep.subr.bf16.mxu0 0
      %3926 = vmatpush1.bf16.msra.mxu0 0
      %3927 = vmatprep.subr.bf16.mxu0 0
      %3928 = vmatpush1.bf16.msra.mxu0 0
      %3929 = vmatprep.subr.bf16.mxu0 0
      %3930 = vmatpush1.bf16.msra.mxu0 0
      %3931 = vmatprep.subr.bf16.mxu0 0
      %3932 = vmatpush1.bf16.msra.mxu0 0
      %3933 = vmatprep.subr.bf16.mxu0 0
      %3934 = vmatpush1.bf16.msra.mxu0 0
      %3935 = vmatprep.subr.bf16.mxu0 0
      %3936 = vmatpush1.bf16.msra.mxu0 0
      %3937 = vmatprep.mubr.bf16.mxu0 0
      %3938 = vmatmul.mubr.bf16.gmra.mrb[0].mxu0 %v3854
      %v3939 = vpop.f32.mrb[0].mxu0
      %v3940 = vadd.f32 0.0, %v3939
      %v3941 = vpop.f32.mrb[0].mxu0
      %v3942 = vpop.f32.mrb[0].mxu0
      %v3943 = vadd.f32 0.0, %v3942
      %v3944 = vpop.f32.mrb[0].mxu0
      %3945 = vmatprep.mubr.bf16.mxu0 0
      %3946 = vmatmul.mubr.bf16.gmra.mrb[0].mxu0 %v3857
      %v3947 = vpop.f32.mrb[0].mxu0
      %v3948 = vadd.f32 0.0, %v3947
      %v3949 = vpop.f32.mrb[0].mxu0
      %v3950 = vpop.f32.mrb[0].mxu0
      %v3951 = vadd.f32 0.0, %v3950
      %v3952 = vpop.f32.mrb[0].mxu0
      %3953 = vmatprep.mubr.bf16.mxu0 0
      %3954 = vmatmul.mubr.bf16.gmra.mrb[0].mxu0 %v3860
      %v3955 = vpop.f32.mrb[0].mxu0
      %v3956 = vadd.f32 0.0, %v3955
      %v3957 = vpop.f32.mrb[0].mxu0
      %v3958 = vpop.f32.mrb[0].mxu0
      %v3959 = vadd.f32 0.0, %v3958
      %v3960 = vpop.f32.mrb[0].mxu0
      %3961 = vmatprep.mubr.bf16.mxu0 0
      %3962 = vmatmul.mubr.bf16.gmra.mrb[0].mxu0 %v3863
      %v3963 = vpop.f32.mrb[0].mxu0
      %v3964 = vadd.f32 0.0, %v3963
      %v3965 = vpop.f32.mrb[0].mxu0
      %v3966 = vpop.f32.mrb[0].mxu0
      %v3967 = vadd.f32 0.0, %v3966
      %v3968 = vpop.f32.mrb[0].mxu0
      %3969 = vmatprep.mubr.bf16.mxu0 0
      %3970 = vmatmul.mubr.bf16.gmra.mrb[0].mxu0 %v3866
      %v3971 = vpop.f32.mrb[0].mxu0
      %v3972 = vadd.f32 0.0, %v3971
      %v3973 = vpop.f32.mrb[0].mxu0
      %v3974 = vpop.f32.mrb[0].mxu0
      %v3975 = vadd.f32 0.0, %v3974
      %v3976 = vpop.f32.mrb[0].mxu0
      %3977 = vmatprep.mubr.bf16.mxu0 0
      %3978 = vmatmul.mubr.bf16.gmra.mrb[0].mxu0 %v3869
      %v3979 = vpop.f32.mrb[0].mxu0
      %v3980 = vadd.f32 0.0, %v3979
      %v3981 = vpop.f32.mrb[0].mxu0
      %v3982 = vpop.f32.mrb[0].mxu0
      %v3983 = vadd.f32 0.0, %v3982
      %v3984 = vpop.f32.mrb[0].mxu0
      %3985 = vmatprep.mubr.bf16.mxu0 0
      %3986 = vmatmul.mubr.bf16.gmra.mrb[0].mxu0 %v3872
      %v3987 = vpop.f32.mrb[0].mxu0
      %v3988 = vadd.f32 0.0, %v3987
      %v3989 = vpop.f32.mrb[0].mxu0
      %v3990 = vpop.f32.mrb[0].mxu0
      %v3991 = vadd.f32 0.0, %v3990
      %v3992 = vpop.f32.mrb[0].mxu0
      %3993 = vmatprep.mubr.bf16.mxu0 0
      %3994 = vmatmul.mubr.bf16.gmra.mrb[0].mxu0 %v3875
      %v3995 = vpop.f32.mrb[0].mxu0
      %v3996 = vadd.f32 0.0, %v3995
      %v3997 = vpop.f32.mrb[0].mxu0
      %v3998 = vpop.f32.mrb[0].mxu0
      %v3999 = vadd.f32 0.0, %v3998
      %v4000 = vpop.f32.mrb[0].mxu0
      %4001 = vmatprep.mubr.bf16.mxu0 0
      %4002 = vmatmul.mubr.bf16.gmra.mrb[0].mxu0 %v3878
      %v4003 = vpop.f32.mrb[0].mxu0
      %v4004 = vadd.f32 0.0, %v4003
      %v4005 = vpop.f32.mrb[0].mxu0
      %v4006 = vpop.f32.mrb[0].mxu0
      %v4007 = vadd.f32 0.0, %v4006
      %v4008 = vpop.f32.mrb[0].mxu0
      %4009 = vmatprep.mubr.bf16.mxu0 0
      %4010 = vmatmul.mubr.bf16.gmra.mrb[0].mxu0 %v3881
      %v4011 = vpop.f32.mrb[0].mxu0
      %v4012 = vadd.f32 0.0, %v4011
      %v4013 = vpop.f32.mrb[0].mxu0
      %v4014 = vpop.f32.mrb[0].mxu0
      %v4015 = vadd.f32 0.0, %v4014
      %v4016 = vpop.f32.mrb[0].mxu0
      %4017 = vmatprep.mubr.bf16.mxu0 0
      %4018 = vmatmul.mubr.bf16.gmra.mrb[0].mxu0 %v3884
      %v4019 = vpop.f32.mrb[0].mxu0
      %v4020 = vadd.f32 0.0, %v4019
      %v4021 = vpop.f32.mrb[0].mxu0
      %v4022 = vpop.f32.mrb[0].mxu0
      %v4023 = vadd.f32 0.0, %v4022
      %v4024 = vpop.f32.mrb[0].mxu0
      %4025 = vmatprep.mubr.bf16.mxu0 0
      %4026 = vmatmul.mubr.bf16.gmra.mrb[0].mxu0 %v3887
      %v4027 = vpop.f32.mrb[0].mxu0
      %v4028 = vadd.f32 0.0, %v4027
      %v4029 = vpop.f32.mrb[0].mxu0
      %v4030 = vpop.f32.mrb[0].mxu0
      %v4031 = vadd.f32 0.0, %v4030
      %v4032 = vpop.f32.mrb[0].mxu0
      %4033 = vmatprep.mubr.bf16.mxu0 0
      %4034 = vmatmul.mubr.bf16.gmra.mrb[0].mxu0 %v3890
      %v4035 = vpop.f32.mrb[0].mxu0
      %v4036 = vadd.f32 0.0, %v4035
      %v4037 = vpop.f32.mrb[0].mxu0
      %v4038 = vpop.f32.mrb[0].mxu0
      %v4039 = vadd.f32 0.0, %v4038
      %v4040 = vpop.f32.mrb[0].mxu0
      %4041 = vmatprep.mubr.bf16.mxu0 0
      %4042 = vmatmul.mubr.bf16.gmra.mrb[0].mxu0 %v3893
      %v4043 = vpop.f32.mrb[0].mxu0
      %v4044 = vadd.f32 0.0, %v4043
      %v4045 = vpop.f32.mrb[0].mxu0
      %v4046 = vpop.f32.mrb[0].mxu0
      %v4047 = vadd.f32 0.0, %v4046
      %v4048 = vpop.f32.mrb[0].mxu0
      %4049 = vmatprep.mubr.bf16.mxu0 0
      %4050 = vmatmul.mubr.bf16.gmra.mrb[0].mxu0 %v3896
      %v4051 = vpop.f32.mrb[0].mxu0
      %v4052 = vadd.f32 0.0, %v4051
      %v4053 = vpop.f32.mrb[0].mxu0
      %v4054 = vpop.f32.mrb[0].mxu0
      %v4055 = vadd.f32 0.0, %v4054
      %v4056 = vpop.f32.mrb[0].mxu0
      %4057 = vmatprep.mubr.bf16.mxu0 0
      %4058 = vmatmul.mubr.bf16.gmra.mrb[0].mxu0 %v3899
      %v4059 = vpop.f32.mrb[0].mxu0
      %v4060 = vadd.f32 0.0, %v4059
      %v4061 = vpop.f32.mrb[0].mxu0
      %v4062 = vpop.f32.mrb[0].mxu0
      %v4063 = vadd.f32 0.0, %v4062
      %v4064 = vpop.f32.mrb[0].mxu0
      %4065 = vdwg.mxu0
      %vm4066 = vcmask 64512
      %4067 = vst.msk [vmem:[%s177] sm:$0xff] %vm4066, %v3940
      %4068 = vst.msk [vmem:[%s177 + $0x8] sm:$0xff] %vm4066, %v3943
      %4069 = vst.msk [vmem:[%s177 + $0x10] sm:$0xff] %vm4066, %v3948
      %4070 = vst.msk [vmem:[%s177 + $0x18] sm:$0xff] %vm4066, %v3951
      %4071 = vst.msk [vmem:[%s177 + $0x20] sm:$0xff] %vm4066, %v3956
      %4072 = vst.msk [vmem:[%s177 + $0x28] sm:$0xff] %vm4066, %v3959
      %4073 = vst.msk [vmem:[%s177 + $0x30] sm:$0xff] %vm4066, %v3964
      %4074 = vst.msk [vmem:[%s177 + $0x38] sm:$0xff] %vm4066, %v3967
      %4075 = vst.msk [vmem:[%s177 + $0x40] sm:$0xff] %vm4066, %v3972
      %4076 = vst.msk [vmem:[%s177 + $0x48] sm:$0xff] %vm4066, %v3975
      %4077 = vst.msk [vmem:[%s177 + $0x50] sm:$0xff] %vm4066, %v3980
      %4078 = vst.msk [vmem:[%s177 + $0x58] sm:$0xff] %vm4066, %v3983
      %4079 = vst.msk [vmem:[%s177 + $0x60] sm:$0xff] %vm4066, %v3988
      %4080 = vst.msk [vmem:[%s177 + $0x68] sm:$0xff] %vm4066, %v3991
      %4081 = vst.msk [vmem:[%s177 + $0x70] sm:$0xff] %vm4066, %v3996
      %4082 = vst.msk [vmem:[%s177 + $0x78] sm:$0xff] %vm4066, %v3999
      %4083 = vst.msk [vmem:[%s177 + $0x80] sm:$0xff] %vm4066, %v4004
      %4084 = vst.msk [vmem:[%s177 + $0x88] sm:$0xff] %vm4066, %v4007
      %4085 = vst.msk [vmem:[%s177 + $0x90] sm:$0xff] %vm4066, %v4012
      %4086 = vst.msk [vmem:[%s177 + $0x98] sm:$0xff] %vm4066, %v4015
      %4087 = vst.msk [vmem:[%s177 + $0xa0] sm:$0xff] %vm4066, %v4020
      %4088 = vst.msk [vmem:[%s177 + $0xa8] sm:$0xff] %vm4066, %v4023
      %4089 = vst.msk [vmem:[%s177 + $0xb0] sm:$0xff] %vm4066, %v4028
      %4090 = vst.msk [vmem:[%s177 + $0xb8] sm:$0xff] %vm4066, %v4031
      %4091 = vst.msk [vmem:[%s177 + $0xc0] sm:$0xff] %vm4066, %v4036
      %4092 = vst.msk [vmem:[%s177 + $0xc8] sm:$0xff] %vm4066, %v4039
      %4093 = vst.msk [vmem:[%s177 + $0xd0] sm:$0xff] %vm4066, %v4044
      %4094 = vst.msk [vmem:[%s177 + $0xd8] sm:$0xff] %vm4066, %v4047
      %4095 = vst.msk [vmem:[%s177 + $0xe0] sm:$0xff] %vm4066, %v4052
      %4096 = vst.msk [vmem:[%s177 + $0xe8] sm:$0xff] %vm4066, %v4055
      %4097 = vst.msk [vmem:[%s177 + $0xf0] sm:$0xff] %vm4066, %v4060
      %4098 = vst.msk [vmem:[%s177 + $0xf8] sm:$0xff] %vm4066, %v4063
      %v4099 = vsel %vm4066, %v3940, 0.0
      %v4100 = vsel %vm4066, %v3943, 0.0
      %v4101 = vadd.f32 %v4099, %v4100
      %v4102 = vsel %vm4066, %v3948, 0.0
      %v4103 = vadd.f32 %v4101, %v4102
      %v4104 = vsel %vm4066, %v3951, 0.0
      %v4105 = vadd.f32 %v4103, %v4104
      %v4106 = vsel %vm4066, %v3956, 0.0
      %v4107 = vadd.f32 %v4105, %v4106
      %v4108 = vsel %vm4066, %v3959, 0.0
      %v4109 = vadd.f32 %v4107, %v4108
      %v4110 = vsel %vm4066, %v3964, 0.0
      %v4111 = vadd.f32 %v4109, %v4110
      %v4112 = vsel %vm4066, %v3967, 0.0
      %v4113 = vadd.f32 %v4111, %v4112
      %v4114 = vsel %vm4066, %v3972, 0.0
      %v4115 = vadd.f32 %v4113, %v4114
      %v4116 = vsel %vm4066, %v3975, 0.0
      %v4117 = vadd.f32 %v4115, %v4116
      %v4118 = vsel %vm4066, %v3980, 0.0
      %v4119 = vadd.f32 %v4117, %v4118
      %v4120 = vsel %vm4066, %v3983, 0.0
      %v4121 = vadd.f32 %v4119, %v4120
      %v4122 = vsel %vm4066, %v3988, 0.0
      %v4123 = vadd.f32 %v4121, %v4122
      %v4124 = vsel %vm4066, %v3991, 0.0
      %v4125 = vadd.f32 %v4123, %v4124
      %v4126 = vsel %vm4066, %v3996, 0.0
      %v4127 = vadd.f32 %v4125, %v4126
      %v4128 = vsel %vm4066, %v3999, 0.0
      %v4129 = vadd.f32 %v4127, %v4128
      %v4130 = vsel %vm4066, %v4004, 0.0
      %v4131 = vadd.f32 %v4129, %v4130
      %v4132 = vsel %vm4066, %v4007, 0.0
      %v4133 = vadd.f32 %v4131, %v4132
      %v4134 = vsel %vm4066, %v4012, 0.0
      %v4135 = vadd.f32 %v4133, %v4134
      %v4136 = vsel %vm4066, %v4015, 0.0
      %v4137 = vadd.f32 %v4135, %v4136
      %v4138 = vsel %vm4066, %v4020, 0.0
      %v4139 = vadd.f32 %v4137, %v4138
      %v4140 = vsel %vm4066, %v4023, 0.0
      %v4141 = vadd.f32 %v4139, %v4140
      %v4142 = vsel %vm4066, %v4028, 0.0
      %v4143 = vadd.f32 %v4141, %v4142
      %v4144 = vsel %vm4066, %v4031, 0.0
      %v4145 = vadd.f32 %v4143, %v4144
      %v4146 = vsel %vm4066, %v4036, 0.0
      %v4147 = vadd.f32 %v4145, %v4146
      %v4148 = vsel %vm4066, %v4039, 0.0
      %v4149 = vadd.f32 %v4147, %v4148
      %v4150 = vsel %vm4066, %v4044, 0.0
      %v4151 = vadd.f32 %v4149, %v4150
      %v4152 = vsel %vm4066, %v4047, 0.0
      %v4153 = vadd.f32 %v4151, %v4152
      %v4154 = vsel %vm4066, %v4052, 0.0
      %v4155 = vadd.f32 %v4153, %v4154
      %v4156 = vsel %vm4066, %v4055, 0.0
      %v4157 = vadd.f32 %v4155, %v4156
      %v4158 = vsel %vm4066, %v4060, 0.0
      %v4159 = vadd.f32 %v4157, %v4158
      %v4160 = vsel %vm4066, %v4063, 0.0
      %v4161 = vadd.f32 %v4159, %v4160
      %v4162 = vrot.slane %v4161, 4
      %v4163 = vadd.f32 %v4161, %v4162
      %v4164 = vrot.slane %v4163, 2
      %v4165 = vadd.f32 %v4163, %v4164
      %v4166 = vrot.slane %v4165, 1
      %v4167 = vadd.f32 %v4165, %v4166
      %v4168 = vmul.f32 %v3940, %v3940
      %v4169 = vmul.f32 %v3943, %v3943
      %v4170 = vmul.f32 %v3948, %v3948
      %v4171 = vmul.f32 %v3951, %v3951
      %v4172 = vmul.f32 %v3956, %v3956
      %v4173 = vmul.f32 %v3959, %v3959
      %v4174 = vmul.f32 %v3964, %v3964
      %v4175 = vmul.f32 %v3967, %v3967
      %v4176 = vmul.f32 %v3972, %v3972
      %v4177 = vmul.f32 %v3975, %v3975
      %v4178 = vmul.f32 %v3980, %v3980
      %v4179 = vmul.f32 %v3983, %v3983
      %v4180 = vmul.f32 %v3988, %v3988
      %v4181 = vmul.f32 %v3991, %v3991
      %v4182 = vmul.f32 %v3996, %v3996
      %v4183 = vmul.f32 %v3999, %v3999
      %v4184 = vmul.f32 %v4004, %v4004
      %v4185 = vmul.f32 %v4007, %v4007
      %v4186 = vmul.f32 %v4012, %v4012
      %v4187 = vmul.f32 %v4015, %v4015
      %v4188 = vmul.f32 %v4020, %v4020
      %v4189 = vmul.f32 %v4023, %v4023
      %v4190 = vmul.f32 %v4028, %v4028
      %v4191 = vmul.f32 %v4031, %v4031
      %v4192 = vmul.f32 %v4036, %v4036
      %v4193 = vmul.f32 %v4039, %v4039
      %v4194 = vmul.f32 %v4044, %v4044
      %v4195 = vmul.f32 %v4047, %v4047
      %v4196 = vmul.f32 %v4052, %v4052
      %v4197 = vmul.f32 %v4055, %v4055
      %v4198 = vmul.f32 %v4060, %v4060
      %v4199 = vmul.f32 %v4063, %v4063
      %v4200 = vsel %vm4066, %v4168, 0.0
      %v4201 = vsel %vm4066, %v4169, 0.0
      %v4202 = vadd.f32 %v4200, %v4201
      %v4203 = vsel %vm4066, %v4170, 0.0
      %v4204 = vadd.f32 %v4202, %v4203
      %v4205 = vsel %vm4066, %v4171, 0.0
      %v4206 = vadd.f32 %v4204, %v4205
      %v4207 = vsel %vm4066, %v4172, 0.0
      %v4208 = vadd.f32 %v4206, %v4207
      %v4209 = vsel %vm4066, %v4173, 0.0
      %v4210 = vadd.f32 %v4208, %v4209
      %v4211 = vsel %vm4066, %v4174, 0.0
      %v4212 = vadd.f32 %v4210, %v4211
      %v4213 = vsel %vm4066, %v4175, 0.0
      %v4214 = vadd.f32 %v4212, %v4213
      %v4215 = vsel %vm4066, %v4176, 0.0
      %v4216 = vadd.f32 %v4214, %v4215
      %v4217 = vsel %vm4066, %v4177, 0.0
      %v4218 = vadd.f32 %v4216, %v4217
      %v4219 = vsel %vm4066, %v4178, 0.0
      %v4220 = vadd.f32 %v4218, %v4219
      %v4221 = vsel %vm4066, %v4179, 0.0
      %v4222 = vadd.f32 %v4220, %v4221
      %v4223 = vsel %vm4066, %v4180, 0.0
      %v4224 = vadd.f32 %v4222, %v4223
      %v4225 = vsel %vm4066, %v4181, 0.0
      %v4226 = vadd.f32 %v4224, %v4225
      %v4227 = vsel %vm4066, %v4182, 0.0
      %v4228 = vadd.f32 %v4226, %v4227
      %v4229 = vsel %vm4066, %v4183, 0.0
      %v4230 = vadd.f32 %v4228, %v4229
      %v4231 = vsel %vm4066, %v4184, 0.0
      %v4232 = vadd.f32 %v4230, %v4231
      %v4233 = vsel %vm4066, %v4185, 0.0
      %v4234 = vadd.f32 %v4232, %v4233
      %v4235 = vsel %vm4066, %v4186, 0.0
      %v4236 = vadd.f32 %v4234, %v4235
      %v4237 = vsel %vm4066, %v4187, 0.0
      %v4238 = vadd.f32 %v4236, %v4237
      %v4239 = vsel %vm4066, %v4188, 0.0
      %v4240 = vadd.f32 %v4238, %v4239
      %v4241 = vsel %vm4066, %v4189, 0.0
      %v4242 = vadd.f32 %v4240, %v4241
      %v4243 = vsel %vm4066, %v4190, 0.0
      %v4244 = vadd.f32 %v4242, %v4243
      %v4245 = vsel %vm4066, %v4191, 0.0
      %v4246 = vadd.f32 %v4244, %v4245
      %v4247 = vsel %vm4066, %v4192, 0.0
      %v4248 = vadd.f32 %v4246, %v4247
      %v4249 = vsel %vm4066, %v4193, 0.0
      %v4250 = vadd.f32 %v4248, %v4249
      %v4251 = vsel %vm4066, %v4194, 0.0
      %v4252 = vadd.f32 %v4250, %v4251
      %v4253 = vsel %vm4066, %v4195, 0.0
      %v4254 = vadd.f32 %v4252, %v4253
      %v4255 = vsel %vm4066, %v4196, 0.0
      %v4256 = vadd.f32 %v4254, %v4255
      %v4257 = vsel %vm4066, %v4197, 0.0
      %v4258 = vadd.f32 %v4256, %v4257
      %v4259 = vsel %vm4066, %v4198, 0.0
      %v4260 = vadd.f32 %v4258, %v4259
      %v4261 = vsel %vm4066, %v4199, 0.0
      %v4262 = vadd.f32 %v4260, %v4261
      %v4263 = vrot.slane %v4262, 4
      %v4264 = vadd.f32 %v4262, %v4263
      %v4265 = vrot.slane %v4264, 2
      %v4266 = vadd.f32 %v4264, %v4265
      %v4267 = vrot.slane %v4266, 1
      %v4268 = vadd.f32 %v4266, %v4267
      %vm4269 = vcmask 1040384
      %v4270 = vsel %vm4269, %v4167, %v4268
      %vm4271 = vcmask 58368
      %4272 = vst.msk [vmem:[%s181] sm:$0x3] %vm4271, %v4270
      %p4273 = scmp.lt.s32.totalorder %s15, 1
      %s4274 = scalar_select %p4273, %s15, 1
      %s4275 = smul.addr %s4274, 32
      %s4276 = smul.addr %s4275, 8
      %s4277 = scalar_lea.vmem %s2, %s4276
      %p4278 = scmp.lt.s32.totalorder %s15, 1
      %s4279 = scalar_select %p4278, %s15, 1
      %s4280 = smul.addr %s4279, 2
      %s4281 = scalar_lea.vmem %s3, %s4280
      // Predicated region
      $region29: #{basic_block_forward.5} parent=27 // pred_check
        %p4282 = pneg %p80
      $region30: #{basic_block_forward.5} parent=27 // pred_check_branch
        %4284 = sbr.rel (%p4282) target = $region32
      $region31: #{basic_block_forward.5} parent=27 // pred_region
        _
      $region32: #{basic_block_forward.5} parent=27 // pred_fallthru
        _
      // Predicated region
      $region33: #{basic_block_forward.5} parent=27 // pred_check
        %p4285 = pneg %p106
      $region34: #{basic_block_forward.5} parent=27 // pred_check_branch
        %4287 = sbr.rel (%p4285) target = $region36
      $region35: #{basic_block_forward.5} parent=27 // pred_region
        _
      $region36: #{basic_block_forward.5} parent=27 // pred_fallthru
        _
    $region28: #{basic_block_forward.5} parent=5 // pred_fallthru
      _
    %p4288 = scmp.le.s32.totalorder 2, %s10
    // Predicated region
    $region37: #{basic_block_forward.5} parent=5 // pred_check
      %p4289 = pneg %p4288
    $region38: #{basic_block_forward.5} parent=5 // pred_check_branch
      %4291 = sbr.rel (%p4289) target = $region40
    $region39: #{basic_block_forward.5} parent=5 // pred_region
      %s4292 = ssub.s32 %s10, 2
      // Predicated region
      $region41: #{basic_block_forward.5} parent=39 // pred_check
        %p4293 = pneg %p86
      $region42: #{basic_block_forward.5} parent=39 // pred_check_branch
        %4295 = sbr.rel (%p4293) target = $region44
      $region43: #{basic_block_forward.5} parent=39 // pred_region
        %p4296 = scmp.lt.s32.totalorder %s16, 1
        %s4297 = scalar_select %p4296, %s16, 1
        %s4298 = smul.addr %s4297, 32
        %s4299 = smul.addr %s4298, 8
        %s4300 = scalar_lea.vmem %s2, %s4299
      $region44: #{basic_block_forward.5} parent=39 // pred_fallthru
        _
      // Predicated region
      $region45: #{basic_block_forward.5} parent=39 // pred_check
        %p4301 = pneg %p112
      $region46: #{basic_block_forward.5} parent=39 // pred_check_branch
        %4303 = sbr.rel (%p4301) target = $region48
      $region47: #{basic_block_forward.5} parent=39 // pred_region
        %p4304 = scmp.lt.s32.totalorder %s16, 1
        %s4305 = scalar_select %p4304, %s16, 1
        %s4306 = smul.addr %s4305, 2
        %s4307 = scalar_lea.vmem %s3, %s4306
      $region48: #{basic_block_forward.5} parent=39 // pred_fallthru
        _
    $region40: #{basic_block_forward.5} parent=5 // pred_fallthru
      _
  $region6: #{basic_block_forward.5} parent=0 // loop_footer
    %s14 = sadd.s32 1, %s10
  $region7: #{basic_block_forward.5} parent=0 // loop_footer_branch
    %9 = sbr.rel target = $region3
  $region8: #{basic_block_forward.5} parent=0 // loop_exit
    _

// kernel: basic_block_forward.7
$region0: #{basic_block_forward.7}
  #allocation0 [shape = 'u32[]', space=smem, size = 0x4, offset = 0x4, fixed_abs, tag = 'smem constant byte address 0x4 - core index']
  #allocation1 [shape = 'u32[144,128]{1,0:T(1,128)}', space=vmem, size = 0x12000, scoped, tag = 'internal scratch']
  #allocation2 [shape = 'bf16[18,18,8]{2,1,0:T(8,128)(2,1)}', space=vmem, size = 0x1b000, scoped, tag = 'scratch operand']
  #allocation3 [shape = 'bf16[256,72]{1,0:T(16,128)(2,1)}', space=vmem, size = 0x10000, scoped, tag = 'scratch operand']
  %s0 = inlined_call_operand.vmem [shape: bf16[2,16,16,8], index: 0, kind: input, shape index: {}]
  %s1 = inlined_call_operand.vmem [shape: bf16[72,8], index: 1, kind: input, shape index: {}]
  %s2 = inlined_call_operand.vmem [shape: f32[2,16,16,8], index: 2, kind: output, shape index: {0}]
  %s3 = inlined_call_operand.vmem [shape: f32[2,2,8], index: 3, kind: output, shape index: {1}]
  %4 = xla_tuple %s2, %s3
  %s5 = sld [smem:[#allocation0]]
  $region49: #{basic_block_forward.7} parent=0
    _
  %s7 = ssub.s32 1, %s5
  %s8 = scalar_select 0, %s7, %s5
  loop: start=0, step=1, limit=4
  $region2: #{basic_block_forward.7} parent=0 // loop_pre_header
    _
  $region3: #{basic_block_forward.7} parent=0 // loop_header
    %s10 = sphi 0, %s14
    %p11 = scmp.ge.s32.totalorder %s10, 4
    %s20 = sphi 0, %s22
    %s23 = sphi 0, %s20
    %s24 = sphi 0, %s23
    %s40 = sphi 0, %s24
    %s44 = sphi 0, %s44
    %s46 = sphi 0, %s44
    %s47 = sphi 0, %s46
    %s61 = sphi 0, %s47
    %s67 = sphi 0, %s69
    %s70 = sphi 0, %s67
    %s71 = sphi 0, %s70
    %s87 = sphi 0, %s71
    %s93 = sphi 0, %s95
    %s96 = sphi 0, %s93
    %s97 = sphi 0, %s96
    %s113 = sphi 0, %s97
  $region4: #{basic_block_forward.7} parent=0 // loop_header_branch
    %13 = sbr.rel (%p11) target = $region8
  $region5: #{basic_block_forward.7} parent=0 // loop_body
    %s15 = ssub.s32 %s10, 1
    %s16 = ssub.s32 %s10, 2
    %s17 = sadd.s32 %s10, 1
    %s18 = ssub.s32 %s10, %s17
    %p19 = scmp.eq.s32.totalorder %s18, 0
    %s21 = sadd.s32 %s20, 1
    %s22 = scalar_select %p19, %s20, %s21
    %p25 = pneg %p19
    %p26 = scmp.eq.s32.totalorder %s10, 1
    %p27 = por %p25, %p26
    %p28 = scmp.ne.s32.totalorder %s20, %s23
    %p29 = scmp.eq.s32.totalorder %s10, 0
    %p30 = por %p28, %p29
    %p31 = scmp.ne.s32.totalorder %s20, %s23
    %p32 = scmp.eq.s32.totalorder %s15, 1
    %p33 = por %p31, %p32
    %p34 = scmp.ne.s32.totalorder %s23, %s24
    %p35 = scmp.eq.s32.totalorder %s15, 0
    %p36 = por %p34, %p35
    %p37 = scmp.ne.s32.totalorder %s23, %s24
    %p38 = scmp.eq.s32.totalorder %s16, 1
    %p39 = por %p37, %p38
    %p41 = scmp.ne.s32.totalorder %s24, %s40
    %p42 = scmp.eq.s32.totalorder %s16, 0
    %p43 = por %p41, %p42
    %s45 = sadd.s32 %s44, 1
    %p48 = scmp.eq.s32.totalorder %s10, 1
    %p49 = scmp.ne.s32.totalorder %s44, %s46
    %p50 = scmp.eq.s32.totalorder %s10, 0
    %p51 = por %p49, %p50
    %p52 = scmp.ne.s32.totalorder %s44, %s46
    %p53 = scmp.eq.s32.totalorder %s15, 1
    %p54 = por %p52, %p53
    %p55 = scmp.ne.s32.totalorder %s46, %s47
    %p56 = scmp.eq.s32.totalorder %s15, 0
    %p57 = por %p55, %p56
    %p58 = scmp.ne.s32.totalorder %s46, %s47
    %p59 = scmp.eq.s32.totalorder %s16, 1
    %p60 = por %p58, %p59
    %p62 = scmp.ne.s32.totalorder %s47, %s61
    %p63 = scmp.eq.s32.totalorder %s16, 0
    %p64 = por %p62, %p63
    %s65 = ssub.s32 %s10, %s17
    %p66 = scmp.eq.s32.totalorder %s65, 0
    %s68 = sadd.s32 %s67, 1
    %s69 = scalar_select %p66, %s67, %s68
    %p72 = pneg %p66
    %p73 = scmp.eq.s32.totalorder %s10, 1
    %p74 = por %p72, %p73
    %p75 = scmp.ne.s32.totalorder %s67, %s70
    %p76 = scmp.eq.s32.totalorder %s10, 0
    %p77 = por %p75, %p76
    %p78 = scmp.ne.s32.totalorder %s67, %s70
    %p79 = scmp.eq.s32.totalorder %s15, 1
    %p80 = por %p78, %p79
    %p81 = scmp.ne.s32.totalorder %s70, %s71
    %p82 = scmp.eq.s32.totalorder %s15, 0
    %p83 = por %p81, %p82
    %p84 = scmp.ne.s32.totalorder %s70, %s71
    %p85 = scmp.eq.s32.totalorder %s16, 1
    %p86 = por %p84, %p85
    %p88 = scmp.ne.s32.totalorder %s71, %s87
    %p89 = scmp.eq.s32.totalorder %s16, 0
    %p90 = por %p88, %p89
    %s91 = ssub.s32 %s10, %s17
    %p92 = scmp.eq.s32.totalorder %s91, 0
    %s94 = sadd.s32 %s93, 1
    %s95 = scalar_select %p92, %s93, %s94
    %p98 = pneg %p92
    %p99 = scmp.eq.s32.totalorder %s10, 1
    %p100 = por %p98, %p99
    %p101 = scmp.ne.s32.totalorder %s93, %s96
    %p102 = scmp.eq.s32.totalorder %s10, 0
    %p103 = por %p101, %p102
    %p104 = scmp.ne.s32.totalorder %s93, %s96
    %p105 = scmp.eq.s32.totalorder %s15, 1
    %p106 = por %p104, %p105
    %p107 = scmp.ne.s32.totalorder %s96, %s97
    %p108 = scmp.eq.s32.totalorder %s15, 0
    %p109 = por %p107, %p108
    %p110 = scmp.ne.s32.totalorder %s96, %s97
    %p111 = scmp.eq.s32.totalorder %s16, 1
    %p112 = por %p110, %p111
    %p114 = scmp.ne.s32.totalorder %s97, %s113
    %p115 = scmp.eq.s32.totalorder %s16, 0
    %p116 = por %p114, %p115
    %p117 = scmp.le.s32.totalorder 1, %s10
    %p118 = scmp.lt.s32.totalorder %s10, 3
    %p119 = pnand %p117, %p118
    %p120 = pneg %p119
    // Predicated region
    $region9: #{basic_block_forward.7} parent=5 // pred_check
      _
    $region10: #{basic_block_forward.7} parent=5 // pred_check_branch
      %122 = sbr.rel (%p119) target = $region12
    $region11: #{basic_block_forward.7} parent=5 // pred_region
      %s123 = ssub.s32 %s10, 1
      // Predicated region
      $region13: #{basic_block_forward.7} parent=11 // pred_check
        %p124 = pneg %p57
      $region14: #{basic_block_forward.7} parent=11 // pred_check_branch
        %126 = sbr.rel (%p124) target = $region16
      $region15: #{basic_block_forward.7} parent=11 // pred_region
        _
      $region16: #{basic_block_forward.7} parent=11 // pred_fallthru
        _
    $region12: #{basic_block_forward.7} parent=5 // pred_fallthru
      _
    %p127 = scmp.lt.s32.totalorder %s10, 2
    // Predicated region
    $region17: #{basic_block_forward.7} parent=5 // pred_check
      %p128 = pneg %p127
    $region18: #{basic_block_forward.7} parent=5 // pred_check_branch
      %130 = sbr.rel (%p128) target = $region20
    $region19: #{basic_block_forward.7} parent=5 // pred_region
      // Predicated region
      $region21: #{basic_block_forward.7} parent=19 // pred_check
        %p131 = pneg %p30
      $region22: #{basic_block_forward.7} parent=19 // pred_check_branch
        %133 = sbr.rel (%p131) target = $region24
      $region23: #{basic_block_forward.7} parent=19 // pred_region
        %p134 = scmp.lt.s32.totalorder %s10, 1
        %s135 = scalar_select %p134, %s10, 1
        %s136 = smul.addr %s135, 32
        %s137 = smul.addr %s136, 4
        %s138 = scalar_lea.vmem %s0, %s137
      $region24: #{basic_block_forward.7} parent=19 // pred_fallthru
        _
    $region20: #{basic_block_forward.7} parent=5 // pred_fallthru
      _
    %p139 = scmp.le.s32.totalorder 1, %s10
    %p140 = scmp.lt.s32.totalorder %s10, 3
    %p141 = pnand %p139, %p140
    %p142 = pneg %p141
    // Predicated region
    $region25: #{basic_block_forward.7} parent=5 // pred_check
      _
    $region26: #{basic_block_forward.7} parent=5 // pred_check_branch
      %144 = sbr.rel (%p141) target = $region28
    $region27: #{basic_block_forward.7} parent=5 // pred_region
      %s145 = ssub.s32 %s10, 1
      %p146 = scmp.lt.s32.totalorder %s15, 1
      %s147 = scalar_select %p146, %s15, 1
      %s148 = smul.addr %s147, 32
      %s149 = smul.addr %s148, 4
      %s150 = scalar_lea.vmem %s0, %s149
      %p151 = pneg %p36
      %p152 = pneg %p33
      %p153 = pneg %p57
      %p154 = pneg %p54
      %p155 = pneg %p83
      %p156 = pneg %p80
      %p157 = scmp.lt.s32.totalorder %s15, 1
      %s158 = scalar_select %p157, %s15, 1
      %s159 = smul.addr %s158, 32
      %s160 = smul.addr %s159, 8
      %s161 = scalar_lea.vmem %s2, %s160
      %p162 = pneg %p109
      %p163 = pneg %p106
      %p164 = scmp.lt.s32.totalorder %s15, 1
      %s165 = scalar_select %p164, %s15, 1
      %s166 = smul.addr %s165, 2
      %s167 = scalar_lea.vmem %s3, %s166
      %p168 = scmp.lt.s32.totalorder %s15, 1
      %s169 = scalar_select %p168, %s15, 1
      %s170 = smul.addr %s169, 32
      %s171 = smul.addr %s170, 4
      %s172 = scalar_lea.vmem %s0, %s171
      %p173 = scmp.lt.s32.totalorder %s15, 1
      %s174 = scalar_select %p173, %s15, 1
      %s175 = smul.addr %s174, 32
      %s176 = smul.addr %s175, 8
      %s177 = scalar_lea.vmem %s2, %s176
      %p178 = scmp.lt.s32.totalorder %s15, 1
      %s179 = scalar_select %p178, %s15, 1
      %s180 = smul.addr %s179, 2
      %s181 = scalar_lea.vmem %s3, %s180
      %vm183 = vcmask 60416
      %184 = vst.msk [vmem:[#allocation2] sm:$0xf] %vm183, 0
      %185 = vst.msk [vmem:[#allocation2 + $0x4] sm:$0xf] %vm183, 0
      %vm186 = vcmask 57344
      %187 = vst.msk [vmem:[#allocation2 + $0x8] sm:$0x1] %vm186, 0
      %188 = vst.msk [vmem:[#allocation2 + $0xc] sm:$0xf] %vm183, 0
      %189 = vst.msk [vmem:[#allocation2 + $0x10] sm:$0xf] %vm183, 0
      %190 = vst.msk [vmem:[#allocation2 + $0x14] sm:$0x1] %vm186, 0
      %191 = vst.msk [vmem:[#allocation2 + $0x18] sm:$0xf] %vm183, 0
      %192 = vst.msk [vmem:[#allocation2 + $0x1c] sm:$0xf] %vm183, 0
      %193 = vst.msk [vmem:[#allocation2 + $0x20] sm:$0x1] %vm186, 0
      %194 = vst.msk [vmem:[#allocation2 + $0x24] sm:$0xf] %vm183, 0
      %195 = vst.msk [vmem:[#allocation2 + $0x28] sm:$0xf] %vm183, 0
      %196 = vst.msk [vmem:[#allocation2 + $0x2c] sm:$0x1] %vm186, 0
      %197 = vst.msk [vmem:[#allocation2 + $0x30] sm:$0xf] %vm183, 0
      %198 = vst.msk [vmem:[#allocation2 + $0x34] sm:$0xf] %vm183, 0
      %199 = vst.msk [vmem:[#allocation2 + $0x38] sm:$0x1] %vm186, 0
      %200 = vst.msk [vmem:[#allocation2 + $0x3c] sm:$0xf] %vm183, 0
      %201 = vst.msk [vmem:[#allocation2 + $0x40] sm:$0xf] %vm183, 0
      %202 = vst.msk [vmem:[#allocation2 + $0x44] sm:$0x1] %vm186, 0
      %203 = vst.msk [vmem:[#allocation2 + $0x48] sm:$0xf] %vm183, 0
      %204 = vst.msk [vmem:[#allocation2 + $0x4c] sm:$0xf] %vm183, 0
      %205 = vst.msk [vmem:[#allocation2 + $0x50] sm:$0x1] %vm186, 0
      %206 = vst.msk [vmem:[#allocation2 + $0x54] sm:$0xf] %vm183, 0
      %207 = vst.msk [vmem:[#allocation2 + $0x58] sm:$0xf] %vm183, 0
      %208 = vst.msk [vmem:[#allocation2 + $0x5c] sm:$0x1] %vm186, 0
      %209 = vst.msk [vmem:[#allocation2 + $0x60] sm:$0xf] %vm183, 0
      %210 = vst.msk [vmem:[#allocation2 + $0x64] sm:$0xf] %vm183, 0
      %211 = vst.msk [vmem:[#allocation2 + $0x68] sm:$0x1] %vm186, 0
      %212 = vst.msk [vmem:[#allocation2 + $0x6c] sm:$0xf] %vm183, 0
      %213 = vst.msk [vmem:[#allocation2 + $0x70] sm:$0xf] %vm183, 0
      %214 = vst.msk [vmem:[#allocation2 + $0x74] sm:$0x1] %vm186, 0
      %215 = vst.msk [vmem:[#allocation2 + $0x78] sm:$0xf] %vm183, 0
      %216 = vst.msk [vmem:[#allocation2 + $0x7c] sm:$0xf] %vm183, 0
      %217 = vst.msk [vmem:[#allocation2 + $0x80] sm:$0x1] %vm186, 0
      %218 = vst.msk [vmem:[#allocation2 + $0x84] sm:$0xf] %vm183, 0
      %219 = vst.msk [vmem:[#allocation2 + $0x88] sm:$0xf] %vm183, 0
      %220 = vst.msk [vmem:[#allocation2 + $0x8c] sm:$0x1] %vm186, 0
      %221 = vst.msk [vmem:[#allocation2 + $0x90] sm:$0xf] %vm183, 0
      %222 = vst.msk [vmem:[#allocation2 + $0x94] sm:$0xf] %vm183, 0
      %223 = vst.msk [vmem:[#allocation2 + $0x98] sm:$0x1] %vm186, 0
      %224 = vst.msk [vmem:[#allocation2 + $0x9c] sm:$0xf] %vm183, 0
      %225 = vst.msk [vmem:[#allocation2 + $0xa0] sm:$0xf] %vm183, 0
      %226 = vst.msk [vmem:[#allocation2 + $0xa4] sm:$0x1] %vm186, 0
      %227 = vst.msk [vmem:[#allocation2 + $0xa8] sm:$0xf] %vm183, 0
      %228 = vst.msk [vmem:[#allocation2 + $0xac] sm:$0xf] %vm183, 0
      %229 = vst.msk [vmem:[#allocation2 + $0xb0] sm:$0x1] %vm186, 0
      %230 = vst.msk [vmem:[#allocation2 + $0xb4] sm:$0xf] %vm183, 0
      %231 = vst.msk [vmem:[#allocation2 + $0xb8] sm:$0xf] %vm183, 0
      %232 = vst.msk [vmem:[#allocation2 + $0xbc] sm:$0x1] %vm186, 0
      %233 = vst.msk [vmem:[#allocation2 + $0xc0] sm:$0xf] %vm183, 0
      %234 = vst.msk [vmem:[#allocation2 + $0xc4] sm:$0xf] %vm183, 0
      %235 = vst.msk [vmem:[#allocation2 + $0xc8] sm:$0x1] %vm186, 0
      %236 = vst.msk [vmem:[#allocation2 + $0xcc] sm:$0xf] %vm183, 0
      %237 = vst.msk [vmem:[#allocation2 + $0xd0] sm:$0xf] %vm183, 0
      %238 = vst.msk [vmem:[#allocation2 + $0xd4] sm:$0x1] %vm186, 0
      %v239 = vld [vmem:[%s172] sm:$0xf]
      %v240 = vld [vmem:[%s172 + $0x4] sm:$0xf]
      %v241 = vld [vmem:[%s172 + $0x8] sm:$0xf]
      %v242 = vld [vmem:[%s172 + $0xc] sm:$0xf]
      %v243 = vld [vmem:[%s172 + $0x10] sm:$0xf]
      %v244 = vld [vmem:[%s172 + $0x14] sm:$0xf]
      %v245 = vld [vmem:[%s172 + $0x18] sm:$0xf]
      %v246 = vld [vmem:[%s172 + $0x1c] sm:$0xf]
      %v247 = vld [vmem:[%s172 + $0x20] sm:$0xf]
      %v248 = vld [vmem:[%s172 + $0x24] sm:$0xf]
      %v249 = vld [vmem:[%s172 + $0x28] sm:$0xf]
      %v250 = vld [vmem:[%s172 + $0x2c] sm:$0xf]
      %v251 = vld [vmem:[%s172 + $0x30] sm:$0xf]
      %v252 = vld [vmem:[%s172 + $0x34] sm:$0xf]
      %v253 = vld [vmem:[%s172 + $0x38] sm:$0xf]
      %v254 = vld [vmem:[%s172 + $0x3c] sm:$0xf]
      %v255 = vld [vmem:[%s172 + $0x40] sm:$0xf]
      %v256 = vld [vmem:[%s172 + $0x44] sm:$0xf]
      %v257 = vld [vmem:[%s172 + $0x48] sm:$0xf]
      %v258 = vld [vmem:[%s172 + $0x4c] sm:$0xf]
      %v259 = vld [vmem:[%s172 + $0x50] sm:$0xf]
      %v260 = vld [vmem:[%s172 + $0x54] sm:$0xf]
      %v261 = vld [vmem:[%s172 + $0x58] sm:$0xf]
      %v262 = vld [vmem:[%s172 + $0x5c] sm:$0xf]
      %v263 = vld [vmem:[%s172 + $0x60] sm:$0xf]
      %v264 = vld [vmem:[%s172 + $0x64] sm:$0xf]
      %v265 = vld [vmem:[%s172 + $0x68] sm:$0xf]
      %v266 = vld [vmem:[%s172 + $0x6c] sm:$0xf]
      %v267 = vld [vmem:[%s172 + $0x70] sm:$0xf]
      %v268 = vld [vmem:[%s172 + $0x74] sm:$0xf]
      %v269 = vld [vmem:[%s172 + $0x78] sm:$0xf]
      %v270 = vld [vmem:[%s172 + $0x7c] sm:$0xf]
      %vm271 = vsmask.f32 256
      %vm272 = vsmask.f32 4368
      %vm273 = vmor %vm271, %vm272
      %v275 = vshrl.u32 %v239, 16
      %v277 = vrot.slane %v275, 7
      %v278 = vshll.u32 %v239, 16
      %v280 = vor.u32 %v277, %v278
      %v281 = vrot.slane %v277, 4
      %v283 = vshrl.u32 %v240, 16
      %v285 = vrot.slane %v283, 7
      %v286 = vshll.u32 %v240, 16
      %v288 = vor.u32 %v285, %v286
      %v289 = vsel %vm273, %v281, %v288
      %v290 = vrot.slane %v285, 4
      %v292 = vshrl.u32 %v241, 16
      %v294 = vrot.slane %v292, 7
      %v295 = vshll.u32 %v241, 16
      %v297 = vor.u32 %v294, %v295
      %v298 = vrot.slane %v294, 4
      %v300 = vshrl.u32 %v242, 16
      %v302 = vrot.slane %v300, 7
      %v303 = vshll.u32 %v242, 16
      %v305 = vor.u32 %v302, %v303
      %v306 = vsel %vm273, %v298, %v305
      %v307 = vrot.slane %v302, 4
      %v309 = vshrl.u32 %v243, 16
      %v311 = vrot.slane %v309, 7
      %v312 = vshll.u32 %v243, 16
      %v314 = vor.u32 %v311, %v312
      %v315 = vrot.slane %v311, 4
      %v317 = vshrl.u32 %v244, 16
      %v319 = vrot.slane %v317, 7
      %v320 = vshll.u32 %v244, 16
      %v322 = vor.u32 %v319, %v320
      %v323 = vsel %vm273, %v315, %v322
      %v324 = vrot.slane %v319, 4
      %v326 = vshrl.u32 %v245, 16
      %v328 = vrot.slane %v326, 7
      %v329 = vshll.u32 %v245, 16
      %v331 = vor.u32 %v328, %v329
      %v332 = vrot.slane %v328, 4
      %v334 = vshrl.u32 %v246, 16
      %v336 = vrot.slane %v334, 7
      %v337 = vshll.u32 %v246, 16
      %v339 = vor.u32 %v336, %v337
      %v340 = vsel %vm273, %v332, %v339
      %v341 = vrot.slane %v336, 4
      %v343 = vshrl.u32 %v247, 16
      %v345 = vrot.slane %v343, 7
      %v346 = vshll.u32 %v247, 16
      %v348 = vor.u32 %v345, %v346
      %v349 = vrot.slane %v345, 4
      %v351 = vshrl.u32 %v248, 16
      %v353 = vrot.slane %v351, 7
      %v354 = vshll.u32 %v248, 16
      %v356 = vor.u32 %v353, %v354
      %v357 = vsel %vm273, %v349, %v356
      %v358 = vrot.slane %v353, 4
      %v360 = vshrl.u32 %v249, 16
      %v362 = vrot.slane %v360, 7
      %v363 = vshll.u32 %v249, 16
      %v365 = vor.u32 %v362, %v363
      %v366 = vrot.slane %v362, 4
      %v368 = vshrl.u32 %v250, 16
      %v370 = vrot.slane %v368, 7
      %v371 = vshll.u32 %v250, 16
      %v373 = vor.u32 %v370, %v371
      %v374 = vsel %vm273, %v366, %v373
      %v375 = vrot.slane %v370, 4
      %v377 = vshrl.u32 %v251, 16
      %v379 = vrot.slane %v377, 7
      %v380 = vshll.u32 %v251, 16
      %v382 = vor.u32 %v379, %v380
      %v383 = vrot.slane %v379, 4
      %v385 = vshrl.u32 %v252, 16
      %v387 = vrot.slane %v385, 7
      %v388 = vshll.u32 %v252, 16
      %v390 = vor.u32 %v387, %v388
      %v391 = vsel %vm273, %v383, %v390
      %v392 = vrot.slane %v387, 4
      %v394 = vshrl.u32 %v253, 16
      %v396 = vrot.slane %v394, 7
      %v397 = vshll.u32 %v253, 16
      %v399 = vor.u32 %v396, %v397
      %v400 = vrot.slane %v396, 4
      %v402 = vshrl.u32 %v254, 16
      %v404 = vrot.slane %v402, 7
      %v405 = vshll.u32 %v254, 16
      %v407 = vor.u32 %v404, %v405
      %v408 = vsel %vm273, %v400, %v407
      %v409 = vrot.slane %v404, 4
      %v411 = vshrl.u32 %v255, 16
      %v413 = vrot.slane %v411, 7
      %v414 = vshll.u32 %v255, 16
      %v416 = vor.u32 %v413, %v414
      %v417 = vrot.slane %v413, 4
      %v419 = vshrl.u32 %v256, 16
      %v421 = vrot.slane %v419, 7
      %v422 = vshll.u32 %v256, 16
      %v424 = vor.u32 %v421, %v422
      %v425 = vsel %vm273, %v417, %v424
      %v426 = vrot.slane %v421, 4
      %v428 = vshrl.u32 %v257, 16
      %v430 = vrot.slane %v428, 7
      %v431 = vshll.u32 %v257, 16
      %v433 = vor.u32 %v430, %v431
      %v434 = vrot.slane %v430, 4
      %v436 = vshrl.u32 %v258, 16
      %v438 = vrot.slane %v436, 7
      %v439 = vshll.u32 %v258, 16
      %v441 = vor.u32 %v438, %v439
      %v442 = vsel %vm273, %v434, %v441
      %v443 = vrot.slane %v438, 4
      %v445 = vshrl.u32 %v259, 16
      %v447 = vrot.slane %v445, 7
      %v448 = vshll.u32 %v259, 16
      %v450 = vor.u32 %v447, %v448
      %v451 = vrot.slane %v447, 4
      %v453 = vshrl.u32 %v260, 16
      %v455 = vrot.slane %v453, 7
      %v456 = vshll.u32 %v260, 16
      %v458 = vor.u32 %v455, %v456
      %v459 = vsel %vm273, %v451, %v458
      %v460 = vrot.slane %v455, 4
      %v462 = vshrl.u32 %v261, 16
      %v464 = vrot.slane %v462, 7
      %v465 = vshll.u32 %v261, 16
      %v467 = vor.u32 %v464, %v465
      %v468 = vrot.slane %v464, 4
      %v470 = vshrl.u32 %v262, 16
      %v472 = vrot.slane %v470, 7
      %v473 = vshll.u32 %v262, 16
      %v475 = vor.u32 %v472, %v473
      %v476 = vsel %vm273, %v468, %v475
      %v477 = vrot.slane %v472, 4
      %v479 = vshrl.u32 %v263, 16
      %v481 = vrot.slane %v479, 7
      %v482 = vshll.u32 %v263, 16
      %v484 = vor.u32 %v481, %v482
      %v485 = vrot.slane %v481, 4
      %v487 = vshrl.u32 %v264, 16
      %v489 = vrot.slane %v487, 7
      %v490 = vshll.u32 %v264, 16
      %v492 = vor.u32 %v489, %v490
      %v493 = vsel %vm273, %v485, %v492
      %v494 = vrot.slane %v489, 4
      %v496 = vshrl.u32 %v265, 16
      %v498 = vrot.slane %v496, 7
      %v499 = vshll.u32 %v265, 16
      %v501 = vor.u32 %v498, %v499
      %v502 = vrot.slane %v498, 4
      %v504 = vshrl.u32 %v266, 16
      %v506 = vrot.slane %v504, 7
      %v507 = vshll.u32 %v266, 16
      %v509 = vor.u32 %v506, %v507
      %v510 = vsel %vm273, %v502, %v509
      %v511 = vrot.slane %v506, 4
      %v513 = vshrl.u32 %v267, 16
      %v515 = vrot.slane %v513, 7
      %v516 = vshll.u32 %v267, 16
      %v518 = vor.u32 %v515, %v516
      %v519 = vrot.slane %v515, 4
      %v521 = vshrl.u32 %v268, 16
      %v523 = vrot.slane %v521, 7
      %v524 = vshll.u32 %v268, 16
      %v526 = vor.u32 %v523, %v524
      %v527 = vsel %vm273, %v519, %v526
      %v528 = vrot.slane %v523, 4
      %v530 = vshrl.u32 %v269, 16
      %v532 = vrot.slane %v530, 7
      %v533 = vshll.u32 %v269, 16
      %v535 = vor.u32 %v532, %v533
      %v536 = vrot.slane %v532, 4
      %v538 = vshrl.u32 %v270, 16
      %v540 = vrot.slane %v538, 7
      %v541 = vshll.u32 %v270, 16
      %v543 = vor.u32 %v540, %v541
      %v544 = vsel %vm273, %v536, %v543
      %v545 = vrot.slane %v540, 4
      %s594 = scalar_lea.vmem [#allocation2], 12
      %vm595 = vcmask 60416
      %vm596 = vsmask.f32 7938
      %vm597 = vmand %vm595, %vm596
      %v598 = vld [vmem:[%s594] sm:$0xf]
      %v599 = vsel %vm597, %v280, %v598
      %600 = vst [vmem:[%s594] sm:$0xf] %v599
      %601 = vst.msk [vmem:[%s594 + $0x4] sm:$0xf] %vm183, %v289
      %vm602 = vcmask 57344
      %vm603 = vmand %vm602, %vm271
      %v604 = vld [vmem:[%s594 + $0x8] sm:$0x1]
      %v605 = vsel %vm603, %v290, %v604
      %606 = vst [vmem:[%s594 + $0x8] sm:$0x1] %v605
      %v607 = vld [vmem:[%s594 + $0xc] sm:$0xf]
      %v608 = vsel %vm597, %v297, %v607
      %609 = vst [vmem:[%s594 + $0xc] sm:$0xf] %v608
      %610 = vst.msk [vmem:[%s594 + $0x10] sm:$0xf] %vm183, %v306
      %v611 = vld [vmem:[%s594 + $0x14] sm:$0x1]
      %v612 = vsel %vm603, %v307, %v611
      %613 = vst [vmem:[%s594 + $0x14] sm:$0x1] %v612
      %v614 = vld [vmem:[%s594 + $0x18] sm:$0xf]
      %v615 = vsel %vm597, %v314, %v614
      %616 = vst [vmem:[%s594 + $0x18] sm:$0xf] %v615
      %617 = vst.msk [vmem:[%s594 + $0x1c] sm:$0xf] %vm183, %v323
      %v618 = vld [vmem:[%s594 + $0x20] sm:$0x1]
      %v619 = vsel %vm603, %v324, %v618
      %620 = vst [vmem:[%s594 + $0x20] sm:$0x1] %v619
      %v621 = vld [vmem:[%s594 + $0x24] sm:$0xf]
      %v622 = vsel %vm597, %v331, %v621
      %623 = vst [vmem:[%s594 + $0x24] sm:$0xf] %v622
      %624 = vst.msk [vmem:[%s594 + $0x28] sm:$0xf] %vm183, %v340
      %v625 = vld [vmem:[%s594 + $0x2c] sm:$0x1]
      %v626 = vsel %vm603, %v341, %v625
      %627 = vst [vmem:[%s594 + $0x2c] sm:$0x1] %v626
      %v628 = vld [vmem:[%s594 + $0x30] sm:$0xf]
      %v629 = vsel %vm597, %v348, %v628
      %630 = vst [vmem:[%s594 + $0x30] sm:$0xf] %v629
      %631 = vst.msk [vmem:[%s594 + $0x34] sm:$0xf] %vm183, %v357
      %v632 = vld [vmem:[%s594 + $0x38] sm:$0x1]
      %v633 = vsel %vm603, %v358, %v632
      %634 = vst [vmem:[%s594 + $0x38] sm:$0x1] %v633
      %v635 = vld [vmem:[%s594 + $0x3c] sm:$0xf]
      %v636 = vsel %vm597, %v365, %v635
      %637 = vst [vmem:[%s594 + $0x3c] sm:$0xf] %v636
      %638 = vst.msk [vmem:[%s594 + $0x40] sm:$0xf] %vm183, %v374
      %v639 = vld [vmem:[%s594 + $0x44] sm:$0x1]
      %v640 = vsel %vm603, %v375, %v639
      %641 = vst [vmem:[%s594 + $0x44] sm:$0x1] %v640
      %v642 = vld [vmem:[%s594 + $0x48] sm:$0xf]
      %v643 = vsel %vm597, %v382, %v642
      %644 = vst [vmem:[%s594 + $0x48] sm:$0xf] %v643
      %645 = vst.msk [vmem:[%s594 + $0x4c] sm:$0xf] %vm183, %v391
      %v646 = vld [vmem:[%s594 + $0x50] sm:$0x1]
      %v647 = vsel %vm603, %v392, %v646
      %648 = vst [vmem:[%s594 + $0x50] sm:$0x1] %v647
      %v649 = vld [vmem:[%s594 + $0x54] sm:$0xf]
      %v650 = vsel %vm597, %v399, %v649
      %651 = vst [vmem:[%s594 + $0x54] sm:$0xf] %v650
      %652 = vst.msk [vmem:[%s594 + $0x58] sm:$0xf] %vm183, %v408
      %v653 = vld [vmem:[%s594 + $0x5c] sm:$0x1]
      %v654 = vsel %vm603, %v409, %v653
      %655 = vst [vmem:[%s594 + $0x5c] sm:$0x1] %v654
      %v656 = vld [vmem:[%s594 + $0x60] sm:$0xf]
      %v657 = vsel %vm597, %v416, %v656
      %658 = vst [vmem:[%s594 + $0x60] sm:$0xf] %v657
      %659 = vst.msk [vmem:[%s594 + $0x64] sm:$0xf] %vm183, %v425
      %v660 = vld [vmem:[%s594 + $0x68] sm:$0x1]
      %v661 = vsel %vm603, %v426, %v660
      %662 = vst [vmem:[%s594 + $0x68] sm:$0x1] %v661
      %v663 = vld [vmem:[%s594 + $0x6c] sm:$0xf]
      %v664 = vsel %vm597, %v433, %v663
      %665 = vst [vmem:[%s594 + $0x6c] sm:$0xf] %v664
      %666 = vst.msk [vmem:[%s594 + $0x70] sm:$0xf] %vm183, %v442
      %v667 = vld [vmem:[%s594 + $0x74] sm:$0x1]
      %v668 = vsel %vm603, %v443, %v667
      %669 = vst [vmem:[%s594 + $0x74] sm:$0x1] %v668
      %v670 = vld [vmem:[%s594 + $0x78] sm:$0xf]
      %v671 = vsel %vm597, %v450, %v670
      %672 = vst [vmem:[%s594 + $0x78] sm:$0xf] %v671
      %673 = vst.msk [vmem:[%s594 + $0x7c] sm:$0xf] %vm183, %v459
      %v674 = vld [vmem:[%s594 + $0x80] sm:$0x1]
      %v675 = vsel %vm603, %v460, %v674
      %676 = vst [vmem:[%s594 + $0x80] sm:$0x1] %v675
      %v677 = vld [vmem:[%s594 + $0x84] sm:$0xf]
      %v678 = vsel %vm597, %v467, %v677
      %679 = vst [vmem:[%s594 + $0x84] sm:$0xf] %v678
      %680 = vst.msk [vmem:[%s594 + $0x88] sm:$0xf] %vm183, %v476
      %v681 = vld [vmem:[%s594 + $0x8c] sm:$0x1]
      %v682 = vsel %vm603, %v477, %v681
      %683 = vst [vmem:[%s594 + $0x8c] sm:$0x1] %v682
      %v684 = vld [vmem:[%s594 + $0x90] sm:$0xf]
      %v685 = vsel %vm597, %v484, %v684
      %686 = vst [vmem:[%s594 + $0x90] sm:$0xf] %v685
      %687 = vst.msk [vmem:[%s594 + $0x94] sm:$0xf] %vm183, %v493
      %v688 = vld [vmem:[%s594 + $0x98] sm:$0x1]
      %v689 = vsel %vm603, %v494, %v688
      %690 = vst [vmem:[%s594 + $0x98] sm:$0x1] %v689
      %v691 = vld [vmem:[%s594 + $0x9c] sm:$0xf]
      %v692 = vsel %vm597, %v501, %v691
      %693 = vst [vmem:[%s594 + $0x9c] sm:$0xf] %v692
      %694 = vst.msk [vmem:[%s594 + $0xa0] sm:$0xf] %vm183, %v510
      %v695 = vld [vmem:[%s594 + $0xa4] sm:$0x1]
      %v696 = vsel %vm603, %v511, %v695
      %697 = vst [vmem:[%s594 + $0xa4] sm:$0x1] %v696
      %v698 = vld [vmem:[%s594 + $0xa8] sm:$0xf]
      %v699 = vsel %vm597, %v518, %v698
      %700 = vst [vmem:[%s594 + $0xa8] sm:$0xf] %v699
      %701 = vst.msk [vmem:[%s594 + $0xac] sm:$0xf] %vm183, %v527
      %v702 = vld [vmem:[%s594 + $0xb0] sm:$0x1]
      %v703 = vsel %vm603, %v528, %v702
      %704 = vst [vmem:[%s594 + $0xb0] sm:$0x1] %v703
      %v705 = vld [vmem:[%s594 + $0xb4] sm:$0xf]
      %v706 = vsel %vm597, %v535, %v705
      %707 = vst [vmem:[%s594 + $0xb4] sm:$0xf] %v706
      %708 = vst.msk [vmem:[%s594 + $0xb8] sm:$0xf] %vm183, %v544
      %v709 = vld [vmem:[%s594 + $0xbc] sm:$0x1]
      %v710 = vsel %vm603, %v545, %v709
      %711 = vst [vmem:[%s594 + $0xbc] sm:$0x1] %v710
      %v712 = vld [vmem:[#allocation2] sm:$0xf]
      %v713 = vld [vmem:[#allocation2 + $0x4] sm:$0xf]
      %v714 = vld [vmem:[#allocation2 + $0xc] sm:$0xf]
      %v715 = vld [vmem:[#allocation2 + $0x10] sm:$0xf]
      %v716 = vld [vmem:[#allocation2 + $0x18] sm:$0xf]
      %v717 = vld [vmem:[#allocation2 + $0x1c] sm:$0xf]
      %v718 = vld [vmem:[#allocation2 + $0x24] sm:$0xf]
      %v719 = vld [vmem:[#allocation2 + $0x28] sm:$0xf]
      %v720 = vld [vmem:[#allocation2 + $0x30] sm:$0xf]
      %v721 = vld [vmem:[#allocation2 + $0x34] sm:$0xf]
      %v722 = vld [vmem:[#allocation2 + $0x3c] sm:$0xf]
      %v723 = vld [vmem:[#allocation2 + $0x40] sm:$0xf]
      %v724 = vld [vmem:[#allocation2 + $0x48] sm:$0xf]
      %v725 = vld [vmem:[#allocation2 + $0x4c] sm:$0xf]
      %v726 = vld [vmem:[#allocation2 + $0x54] sm:$0xf]
      %v727 = vld [vmem:[#allocation2 + $0x58] sm:$0xf]
      %v728 = vld [vmem:[#allocation2 + $0x60] sm:$0xf]
      %v729 = vld [vmem:[#allocation2 + $0x64] sm:$0xf]
      %v730 = vld [vmem:[#allocation2 + $0x6c] sm:$0xf]
      %v731 = vld [vmem:[#allocation2 + $0x70] sm:$0xf]
      %v732 = vld [vmem:[#allocation2 + $0x78] sm:$0xf]
      %v733 = vld [vmem:[#allocation2 + $0x7c] sm:$0xf]
      %v734 = vld [vmem:[#allocation2 + $0x84] sm:$0xf]
      %v735 = vld [vmem:[#allocation2 + $0x88] sm:$0xf]
      %v736 = vld [vmem:[#allocation2 + $0x90] sm:$0xf]
      %v737 = vld [vmem:[#allocation2 + $0x94] sm:$0xf]
      %v738 = vld [vmem:[#allocation2 + $0x9c] sm:$0xf]
      %v739 = vld [vmem:[#allocation2 + $0xa0] sm:$0xf]
      %v740 = vld [vmem:[#allocation2 + $0xa8] sm:$0xf]
      %v741 = vld [vmem:[#allocation2 + $0xac] sm:$0xf]
      %v742 = vld [vmem:[#allocation2 + $0xb4] sm:$0xf]
      %v743 = vld [vmem:[#allocation2 + $0xb8] sm:$0xf]
      %v776 = vunpack.c.l.b16 %v712
      %v777 = vunpack.c.l.b16 %v713
      %v778 = vunpack.c.l.b16 %v714
      %v779 = vunpack.c.l.b16 %v715
      %v780 = vunpack.c.l.b16 %v716
      %v781 = vunpack.c.l.b16 %v717
      %v782 = vunpack.c.l.b16 %v718
      %v783 = vunpack.c.l.b16 %v719
      %v784 = vunpack.c.l.b16 %v720
      %v785 = vunpack.c.l.b16 %v721
      %v786 = vunpack.c.l.b16 %v722
      %v787 = vunpack.c.l.b16 %v723
      %v788 = vunpack.c.l.b16 %v724
      %v789 = vunpack.c.l.b16 %v725
      %v790 = vunpack.c.l.b16 %v726
      %v791 = vunpack.c.l.b16 %v727
      %v792 = vunpack.c.l.b16 %v728
      %v793 = vunpack.c.l.b16 %v729
      %v794 = vunpack.c.l.b16 %v730
      %v795 = vunpack.c.l.b16 %v731
      %v796 = vunpack.c.l.b16 %v732
      %v797 = vunpack.c.l.b16 %v733
      %v798 = vunpack.c.l.b16 %v734
      %v799 = vunpack.c.l.b16 %v735
      %v800 = vunpack.c.l.b16 %v736
      %v801 = vunpack.c.l.b16 %v737
      %v802 = vunpack.c.l.b16 %v738
      %v803 = vunpack.c.l.b16 %v739
      %v804 = vunpack.c.l.b16 %v740
      %v805 = vunpack.c.l.b16 %v741
      %v806 = vunpack.c.l.b16 %v742
      %v807 = vunpack.c.l.b16 %v743
      %v808 = vpack.c.b16 %v777, %v776
      %v809 = vpack.c.b16 %v779, %v778
      %v810 = vpack.c.b16 %v781, %v780
      %v811 = vpack.c.b16 %v783, %v782
      %v812 = vpack.c.b16 %v785, %v784
      %v813 = vpack.c.b16 %v787, %v786
      %v814 = vpack.c.b16 %v789, %v788
      %v815 = vpack.c.b16 %v791, %v790
      %v816 = vpack.c.b16 %v793, %v792
      %v817 = vpack.c.b16 %v795, %v794
      %v818 = vpack.c.b16 %v797, %v796
      %v819 = vpack.c.b16 %v799, %v798
      %v820 = vpack.c.b16 %v801, %v800
      %v821 = vpack.c.b16 %v803, %v802
      %v822 = vpack.c.b16 %v805, %v804
      %v823 = vpack.c.b16 %v807, %v806
      %vm840 = vcmask 64512
      %841 = vst.msk [vmem:[#allocation3] sm:$0xff] %vm840, %v808
      %842 = vst.msk [vmem:[#allocation3 + $0x8] sm:$0xff] %vm840, %v809
      %843 = vst.msk [vmem:[#allocation3 + $0x10] sm:$0xff] %vm840, %v810
      %844 = vst.msk [vmem:[#allocation3 + $0x18] sm:$0xff] %vm840, %v811
      %845 = vst.msk [vmem:[#allocation3 + $0x20] sm:$0xff] %vm840, %v812
      %846 = vst.msk [vmem:[#allocation3 + $0x28] sm:$0xff] %vm840, %v813
      %847 = vst.msk [vmem:[#allocation3 + $0x30] sm:$0xff] %vm840, %v814
      %848 = vst.msk [vmem:[#allocation3 + $0x38] sm:$0xff] %vm840, %v815
      %849 = vst.msk [vmem:[#allocation3 + $0x40] sm:$0xff] %vm840, %v816
      %850 = vst.msk [vmem:[#allocation3 + $0x48] sm:$0xff] %vm840, %v817
      %851 = vst.msk [vmem:[#allocation3 + $0x50] sm:$0xff] %vm840, %v818
      %852 = vst.msk [vmem:[#allocation3 + $0x58] sm:$0xff] %vm840, %v819
      %853 = vst.msk [vmem:[#allocation3 + $0x60] sm:$0xff] %vm840, %v820
      %854 = vst.msk [vmem:[#allocation3 + $0x68] sm:$0xff] %vm840, %v821
      %855 = vst.msk [vmem:[#allocation3 + $0x70] sm:$0xff] %vm840, %v822
      %856 = vst.msk [vmem:[#allocation3 + $0x78] sm:$0xff] %vm840, %v823
      %v857 = vld [vmem:[#allocation2] sm:$0xf]
      %v858 = vld [vmem:[#allocation2 + $0x4] sm:$0xf]
      %v859 = vld [vmem:[#allocation2 + $0x8] sm:$0x1]
      %v860 = vld [vmem:[#allocation2 + $0xc] sm:$0xf]
      %v861 = vld [vmem:[#allocation2 + $0x10] sm:$0xf]
      %v862 = vld [vmem:[#allocation2 + $0x14] sm:$0x1]
      %v863 = vld [vmem:[#allocation2 + $0x18] sm:$0xf]
      %v864 = vld [vmem:[#allocation2 + $0x1c] sm:$0xf]
      %v865 = vld [vmem:[#allocation2 + $0x20] sm:$0x1]
      %v866 = vld [vmem:[#allocation2 + $0x24] sm:$0xf]
      %v867 = vld [vmem:[#allocation2 + $0x28] sm:$0xf]
      %v868 = vld [vmem:[#allocation2 + $0x2c] sm:$0x1]
      %v869 = vld [vmem:[#allocation2 + $0x30] sm:$0xf]
      %v870 = vld [vmem:[#allocation2 + $0x34] sm:$0xf]
      %v871 = vld [vmem:[#allocation2 + $0x38] sm:$0x1]
      %v872 = vld [vmem:[#allocation2 + $0x3c] sm:$0xf]
      %v873 = vld [vmem:[#allocation2 + $0x40] sm:$0xf]
      %v874 = vld [vmem:[#allocation2 + $0x44] sm:$0x1]
      %v875 = vld [vmem:[#allocation2 + $0x48] sm:$0xf]
      %v876 = vld [vmem:[#allocation2 + $0x4c] sm:$0xf]
      %v877 = vld [vmem:[#allocation2 + $0x50] sm:$0x1]
      %v878 = vld [vmem:[#allocation2 + $0x54] sm:$0xf]
      %v879 = vld [vmem:[#allocation2 + $0x58] sm:$0xf]
      %v880 = vld [vmem:[#allocation2 + $0x5c] sm:$0x1]
      %v881 = vld [vmem:[#allocation2 + $0x60] sm:$0xf]
      %v882 = vld [vmem:[#allocation2 + $0x64] sm:$0xf]
      %v883 = vld [vmem:[#allocation2 + $0x68] sm:$0x1]
      %v884 = vld [vmem:[#allocation2 + $0x6c] sm:$0xf]
      %v885 = vld [vmem:[#allocation2 + $0x70] sm:$0xf]
      %v886 = vld [vmem:[#allocation2 + $0x74] sm:$0x1]
      %v887 = vld [vmem:[#allocation2 + $0x78] sm:$0xf]
      %v888 = vld [vmem:[#allocation2 + $0x7c] sm:$0xf]
      %v889 = vld [vmem:[#allocation2 + $0x80] sm:$0x1]
      %v890 = vld [vmem:[#allocation2 + $0x84] sm:$0xf]
      %v891 = vld [vmem:[#allocation2 + $0x88] sm:$0xf]
      %v892 = vld [vmem:[#allocation2 + $0x8c] sm:$0x1]
      %v893 = vld [vmem:[#allocation2 + $0x90] sm:$0xf]
      %v894 = vld [vmem:[#allocation2 + $0x94] sm:$0xf]
      %v895 = vld [vmem:[#allocation2 + $0x98] sm:$0x1]
      %v896 = vld [vmem:[#allocation2 + $0x9c] sm:$0xf]
      %v897 = vld [vmem:[#allocation2 + $0xa0] sm:$0xf]
      %v898 = vld [vmem:[#allocation2 + $0xa4] sm:$0x1]
      %v899 = vld [vmem:[#allocation2 + $0xa8] sm:$0xf]
      %v900 = vld [vmem:[#allocation2 + $0xac] sm:$0xf]
      %v901 = vld [vmem:[#allocation2 + $0xb0] sm:$0x1]
      %v902 = vld [vmem:[#allocation2 + $0xb4] sm:$0xf]
      %v903 = vld [vmem:[#allocation2 + $0xb8] sm:$0xf]
      %v904 = vld [vmem:[#allocation2 + $0xbc] sm:$0x1]
      %vm905 = vsmask.f32 3328
      %vm906 = vsmask.f32 7440
      %vm907 = vmor %vm905, %vm906
      %v909 = vshrl.u32 %v857, 16
      %v911 = vrot.slane %v909, 4
      %v912 = vshll.u32 %v857, 16
      %v914 = vrot.slane %v912, 5
      %v915 = vor.u32 %v911, %v914
      %v916 = vrot.slane %v915, 4
      %v918 = vshll.u32 %v858, 16
      %v920 = vrot.slane %v918, 5
      %v921 = vsel %vm907, %v916, %v920
      %v922 = vshrl.u32 %v858, 16
      %v924 = vrot.slane %v922, 4
      %v925 = vor.u32 %v924, %v920
      %v926 = vrot.slane %v925, 4
      %v928 = vshll.u32 %v859, 16
      %v930 = vrot.slane %v928, 5
      %v931 = vsel %vm907, %v926, %v930
      %v933 = vshrl.u32 %v860, 16
      %v935 = vrot.slane %v933, 4
      %v936 = vshll.u32 %v860, 16
      %v938 = vrot.slane %v936, 5
      %v939 = vor.u32 %v935, %v938
      %v940 = vrot.slane %v939, 4
      %v942 = vshll.u32 %v861, 16
      %v944 = vrot.slane %v942, 5
      %v945 = vsel %vm907, %v940, %v944
      %v946 = vshrl.u32 %v861, 16
      %v948 = vrot.slane %v946, 4
      %v949 = vor.u32 %v948, %v944
      %v950 = vrot.slane %v949, 4
      %v952 = vshll.u32 %v862, 16
      %v954 = vrot.slane %v952, 5
      %v955 = vsel %vm907, %v950, %v954
      %v957 = vshrl.u32 %v863, 16
      %v959 = vrot.slane %v957, 4
      %v960 = vshll.u32 %v863, 16
      %v962 = vrot.slane %v960, 5
      %v963 = vor.u32 %v959, %v962
      %v964 = vrot.slane %v963, 4
      %v966 = vshll.u32 %v864, 16
      %v968 = vrot.slane %v966, 5
      %v969 = vsel %vm907, %v964, %v968
      %v970 = vshrl.u32 %v864, 16
      %v972 = vrot.slane %v970, 4
      %v973 = vor.u32 %v972, %v968
      %v974 = vrot.slane %v973, 4
      %v976 = vshll.u32 %v865, 16
      %v978 = vrot.slane %v976, 5
      %v979 = vsel %vm907, %v974, %v978
      %v981 = vshrl.u32 %v866, 16
      %v983 = vrot.slane %v981, 4
      %v984 = vshll.u32 %v866, 16
      %v986 = vrot.slane %v984, 5
      %v987 = vor.u32 %v983, %v986
      %v988 = vrot.slane %v987, 4
      %v990 = vshll.u32 %v867, 16
      %v992 = vrot.slane %v990, 5
      %v993 = vsel %vm907, %v988, %v992
      %v994 = vshrl.u32 %v867, 16
      %v996 = vrot.slane %v994, 4
      %v997 = vor.u32 %v996, %v992
      %v998 = vrot.slane %v997, 4
      %v1000 = vshll.u32 %v868, 16
      %v1002 = vrot.slane %v1000, 5
      %v1003 = vsel %vm907, %v998, %v1002
      %v1005 = vshrl.u32 %v869, 16
      %v1007 = vrot.slane %v1005, 4
      %v1008 = vshll.u32 %v869, 16
      %v1010 = vrot.slane %v1008, 5
      %v1011 = vor.u32 %v1007, %v1010
      %v1012 = vrot.slane %v1011, 4
      %v1014 = vshll.u32 %v870, 16
      %v1016 = vrot.slane %v1014, 5
      %v1017 = vsel %vm907, %v1012, %v1016
      %v1018 = vshrl.u32 %v870, 16
      %v1020 = vrot.slane %v1018, 4
      %v1021 = vor.u32 %v1020, %v1016
      %v1022 = vrot.slane %v1021, 4
      %v1024 = vshll.u32 %v871, 16
      %v1026 = vrot.slane %v1024, 5
      %v1027 = vsel %vm907, %v1022, %v1026
      %v1029 = vshrl.u32 %v872, 16
      %v1031 = vrot.slane %v1029, 4
      %v1032 = vshll.u32 %v872, 16
      %v1034 = vrot.slane %v1032, 5
      %v1035 = vor.u32 %v1031, %v1034
      %v1036 = vrot.slane %v1035, 4
      %v1038 = vshll.u32 %v873, 16
      %v1040 = vrot.slane %v1038, 5
      %v1041 = vsel %vm907, %v1036, %v1040
      %v1042 = vshrl.u32 %v873, 16
      %v1044 = vrot.slane %v1042, 4
      %v1045 = vor.u32 %v1044, %v1040
      %v1046 = vrot.slane %v1045, 4
      %v1048 = vshll.u32 %v874, 16
      %v1050 = vrot.slane %v1048, 5
      %v1051 = vsel %vm907, %v1046, %v1050
      %v1053 = vshrl.u32 %v875, 16
      %v1055 = vrot.slane %v1053, 4
      %v1056 = vshll.u32 %v875, 16
      %v1058 = vrot.slane %v1056, 5
      %v1059 = vor.u32 %v1055, %v1058
      %v1060 = vrot.slane %v1059, 4
      %v1062 = vshll.u32 %v876, 16
      %v1064 = vrot.slane %v1062, 5
      %v1065 = vsel %vm907, %v1060, %v1064
      %v1066 = vshrl.u32 %v876, 16
      %v1068 = vrot.slane %v1066, 4
      %v1069 = vor.u32 %v1068, %v1064
      %v1070 = vrot.slane %v1069, 4
      %v1072 = vshll.u32 %v877, 16
      %v1074 = vrot.slane %v1072, 5
      %v1075 = vsel %vm907, %v1070, %v1074
      %v1077 = vshrl.u32 %v878, 16
      %v1079 = vrot.slane %v1077, 4
      %v1080 = vshll.u32 %v878, 16
      %v1082 = vrot.slane %v1080, 5
      %v1083 = vor.u32 %v1079, %v1082
      %v1084 = vrot.slane %v1083, 4
      %v1086 = vshll.u32 %v879, 16
      %v1088 = vrot.slane %v1086, 5
      %v1089 = vsel %vm907, %v1084, %v1088
      %v1090 = vshrl.u32 %v879, 16
      %v1092 = vrot.slane %v1090, 4
      %v1093 = vor.u32 %v1092, %v1088
      %v1094 = vrot.slane %v1093, 4
      %v1096 = vshll.u32 %v880, 16
      %v1098 = vrot.slane %v1096, 5
      %v1099 = vsel %vm907, %v1094, %v1098
      %v1101 = vshrl.u32 %v881, 16
      %v1103 = vrot.slane %v1101, 4
      %v1104 = vshll.u32 %v881, 16
      %v1106 = vrot.slane %v1104, 5
      %v1107 = vor.u32 %v1103, %v1106
      %v1108 = vrot.slane %v1107, 4
      %v1110 = vshll.u32 %v882, 16
      %v1112 = vrot.slane %v1110, 5
      %v1113 = vsel %vm907, %v1108, %v1112
      %v1114 = vshrl.u32 %v882, 16
      %v1116 = vrot.slane %v1114, 4
      %v1117 = vor.u32 %v1116, %v1112
      %v1118 = vrot.slane %v1117, 4
      %v1120 = vshll.u32 %v883, 16
      %v1122 = vrot.slane %v1120, 5
      %v1123 = vsel %vm907, %v1118, %v1122
      %v1125 = vshrl.u32 %v884, 16
      %v1127 = vrot.slane %v1125, 4
      %v1128 = vshll.u32 %v884, 16
      %v1130 = vrot.slane %v1128, 5
      %v1131 = vor.u32 %v1127, %v1130
      %v1132 = vrot.slane %v1131, 4
      %v1134 = vshll.u32 %v885, 16
      %v1136 = vrot.slane %v1134, 5
      %v1137 = vsel %vm907, %v1132, %v1136
      %v1138 = vshrl.u32 %v885, 16
      %v1140 = vrot.slane %v1138, 4
      %v1141 = vor.u32 %v1140, %v1136
      %v1142 = vrot.slane %v1141, 4
      %v1144 = vshll.u32 %v886, 16
      %v1146 = vrot.slane %v1144, 5
      %v1147 = vsel %vm907, %v1142, %v1146
      %v1149 = vshrl.u32 %v887, 16
      %v1151 = vrot.slane %v1149, 4
      %v1152 = vshll.u32 %v887, 16
      %v1154 = vrot.slane %v1152, 5
      %v1155 = vor.u32 %v1151, %v1154
      %v1156 = vrot.slane %v1155, 4
      %v1158 = vshll.u32 %v888, 16
      %v1160 = vrot.slane %v1158, 5
      %v1161 = vsel %vm907, %v1156, %v1160
      %v1162 = vshrl.u32 %v888, 16
      %v1164 = vrot.slane %v1162, 4
      %v1165 = vor.u32 %v1164, %v1160
      %v1166 = vrot.slane %v1165, 4
      %v1168 = vshll.u32 %v889, 16
      %v1170 = vrot.slane %v1168, 5
      %v1171 = vsel %vm907, %v1166, %v1170
      %v1173 = vshrl.u32 %v890, 16
      %v1175 = vrot.slane %v1173, 4
      %v1176 = vshll.u32 %v890, 16
      %v1178 = vrot.slane %v1176, 5
      %v1179 = vor.u32 %v1175, %v1178
      %v1180 = vrot.slane %v1179, 4
      %v1182 = vshll.u32 %v891, 16
      %v1184 = vrot.slane %v1182, 5
      %v1185 = vsel %vm907, %v1180, %v1184
      %v1186 = vshrl.u32 %v891, 16
      %v1188 = vrot.slane %v1186, 4
      %v1189 = vor.u32 %v1188, %v1184
      %v1190 = vrot.slane %v1189, 4
      %v1192 = vshll.u32 %v892, 16
      %v1194 = vrot.slane %v1192, 5
      %v1195 = vsel %vm907, %v1190, %v1194
      %v1197 = vshrl.u32 %v893, 16
      %v1199 = vrot.slane %v1197, 4
      %v1200 = vshll.u32 %v893, 16
      %v1202 = vrot.slane %v1200, 5
      %v1203 = vor.u32 %v1199, %v1202
      %v1204 = vrot.slane %v1203, 4
      %v1206 = vshll.u32 %v894, 16
      %v1208 = vrot.slane %v1206, 5
      %v1209 = vsel %vm907, %v1204, %v1208
      %v1210 = vshrl.u32 %v894, 16
      %v1212 = vrot.slane %v1210, 4
      %v1213 = vor.u32 %v1212, %v1208
      %v1214 = vrot.slane %v1213, 4
      %v1216 = vshll.u32 %v895, 16
      %v1218 = vrot.slane %v1216, 5
      %v1219 = vsel %vm907, %v1214, %v1218
      %v1221 = vshrl.u32 %v896, 16
      %v1223 = vrot.slane %v1221, 4
      %v1224 = vshll.u32 %v896, 16
      %v1226 = vrot.slane %v1224, 5
      %v1227 = vor.u32 %v1223, %v1226
      %v1228 = vrot.slane %v1227, 4
      %v1230 = vshll.u32 %v897, 16
      %v1232 = vrot.slane %v1230, 5
      %v1233 = vsel %vm907, %v1228, %v1232
      %v1234 = vshrl.u32 %v897, 16
      %v1236 = vrot.slane %v1234, 4
      %v1237 = vor.u32 %v1236, %v1232
      %v1238 = vrot.slane %v1237, 4
      %v1240 = vshll.u32 %v898, 16
      %v1242 = vrot.slane %v1240, 5
      %v1243 = vsel %vm907, %v1238, %v1242
      %v1245 = vshrl.u32 %v899, 16
      %v1247 = vrot.slane %v1245, 4
      %v1248 = vshll.u32 %v899, 16
      %v1250 = vrot.slane %v1248, 5
      %v1251 = vor.u32 %v1247, %v1250
      %v1252 = vrot.slane %v1251, 4
      %v1254 = vshll.u32 %v900, 16
      %v1256 = vrot.slane %v1254, 5
      %v1257 = vsel %vm907, %v1252, %v1256
      %v1258 = vshrl.u32 %v900, 16
      %v1260 = vrot.slane %v1258, 4
      %v1261 = vor.u32 %v1260, %v1256
      %v1262 = vrot.slane %v1261, 4
      %v1264 = vshll.u32 %v901, 16
      %v1266 = vrot.slane %v1264, 5
      %v1267 = vsel %vm907, %v1262, %v1266
      %v1269 = vshrl.u32 %v902, 16
      %v1271 = vrot.slane %v1269, 4
      %v1272 = vshll.u32 %v902, 16
      %v1274 = vrot.slane %v1272, 5
      %v1275 = vor.u32 %v1271, %v1274
      %v1276 = vrot.slane %v1275, 4
      %v1278 = vshll.u32 %v903, 16
      %v1280 = vrot.slane %v1278, 5
      %v1281 = vsel %vm907, %v1276, %v1280
      %v1282 = vshrl.u32 %v903, 16
      %v1284 = vrot.slane %v1282, 4
      %v1285 = vor.u32 %v1284, %v1280
      %v1286 = vrot.slane %v1285, 4
      %v1288 = vshll.u32 %v904, 16
      %v1290 = vrot.slane %v1288, 5
      %v1291 = vsel %vm907, %v1286, %v1290
      %v1292 = vunpack.c.l.b16 %v921
      %v1293 = vunpack.c.l.b16 %v931
      %v1294 = vunpack.c.l.b16 %v945
      %v1295 = vunpack.c.l.b16 %v955
      %v1296 = vunpack.c.l.b16 %v969
      %v1297 = vunpack.c.l.b16 %v979
      %v1298 = vunpack.c.l.b16 %v993
      %v1299 = vunpack.c.l.b16 %v1003
      %v1300 = vunpack.c.l.b16 %v1017
      %v1301 = vunpack.c.l.b16 %v1027
      %v1302 = vunpack.c.l.b16 %v1041
      %v1303 = vunpack.c.l.b16 %v1051
      %v1304 = vunpack.c.l.b16 %v1065
      %v1305 = vunpack.c.l.b16 %v1075
      %v1306 = vunpack.c.l.b16 %v1089
      %v1307 = vunpack.c.l.b16 %v1099
      %v1308 = vunpack.c.l.b16 %v1113
      %v1309 = vunpack.c.l.b16 %v1123
      %v1310 = vunpack.c.l.b16 %v1137
      %v1311 = vunpack.c.l.b16 %v1147
      %v1312 = vunpack.c.l.b16 %v1161
      %v1313 = vunpack.c.l.b16 %v1171
      %v1314 = vunpack.c.l.b16 %v1185
      %v1315 = vunpack.c.l.b16 %v1195
      %v1316 = vunpack.c.l.b16 %v1209
      %v1317 = vunpack.c.l.b16 %v1219
      %v1318 = vunpack.c.l.b16 %v1233
      %v1319 = vunpack.c.l.b16 %v1243
      %v1320 = vunpack.c.l.b16 %v1257
      %v1321 = vunpack.c.l.b16 %v1267
      %v1322 = vunpack.c.l.b16 %v1281
      %v1323 = vunpack.c.l.b16 %v1291
      %v1324 = vpack.c.b16 %v1293, %v1292
      %v1325 = vpack.c.b16 %v1295, %v1294
      %v1326 = vpack.c.b16 %v1297, %v1296
      %v1327 = vpack.c.b16 %v1299, %v1298
      %v1328 = vpack.c.b16 %v1301, %v1300
      %v1329 = vpack.c.b16 %v1303, %v1302
      %v1330 = vpack.c.b16 %v1305, %v1304
      %v1331 = vpack.c.b16 %v1307, %v1306
      %v1332 = vpack.c.b16 %v1309, %v1308
      %v1333 = vpack.c.b16 %v1311, %v1310
      %v1334 = vpack.c.b16 %v1313, %v1312
      %v1335 = vpack.c.b16 %v1315, %v1314
      %v1336 = vpack.c.b16 %v1317, %v1316
      %v1337 = vpack.c.b16 %v1319, %v1318
      %v1338 = vpack.c.b16 %v1321, %v1320
      %v1339 = vpack.c.b16 %v1323, %v1322
      %1340 = vrot.lane.b32.xlu0 %v1324, 8
      %v1341 = vpop.permute.xlu0 %1340
      %1342 = vrot.lane.b32.xlu0 %v1325, 8
      %v1343 = vpop.permute.xlu0 %1342
      %1344 = vrot.lane.b32.xlu0 %v1326, 8
      %v1345 = vpop.permute.xlu0 %1344
      %1346 = vrot.lane.b32.xlu0 %v1327, 8
      %v1347 = vpop.permute.xlu0 %1346
      %1348 = vrot.lane.b32.xlu0 %v1328, 8
      %v1349 = vpop.permute.xlu0 %1348
      %1350 = vrot.lane.b32.xlu0 %v1329, 8
      %v1351 = vpop.permute.xlu0 %1350
      %1352 = vrot.lane.b32.xlu0 %v1330, 8
      %v1353 = vpop.permute.xlu0 %1352
      %1354 = vrot.lane.b32.xlu0 %v1331, 8
      %v1355 = vpop.permute.xlu0 %1354
      %1356 = vrot.lane.b32.xlu0 %v1332, 8
      %v1357 = vpop.permute.xlu0 %1356
      %1358 = vrot.lane.b32.xlu0 %v1333, 8
      %v1359 = vpop.permute.xlu0 %1358
      %1360 = vrot.lane.b32.xlu0 %v1334, 8
      %v1361 = vpop.permute.xlu0 %1360
      %1362 = vrot.lane.b32.xlu0 %v1335, 8
      %v1363 = vpop.permute.xlu0 %1362
      %1364 = vrot.lane.b32.xlu0 %v1336, 8
      %v1365 = vpop.permute.xlu0 %1364
      %1366 = vrot.lane.b32.xlu0 %v1337, 8
      %v1367 = vpop.permute.xlu0 %1366
      %1368 = vrot.lane.b32.xlu0 %v1338, 8
      %v1369 = vpop.permute.xlu0 %1368
      %1370 = vrot.lane.b32.xlu0 %v1339, 8
      %v1371 = vpop.permute.xlu0 %1370
      %vm1388 = vcmask 130112
      %1389 = vst.msk [vmem:[#allocation3] sm:$0xff] %vm1388, %v1341
      %1390 = vst.msk [vmem:[#allocation3 + $0x8] sm:$0xff] %vm1388, %v1343
      %1391 = vst.msk [vmem:[#allocation3 + $0x10] sm:$0xff] %vm1388, %v1345
      %1392 = vst.msk [vmem:[#allocation3 + $0x18] sm:$0xff] %vm1388, %v1347
      %1393 = vst.msk [vmem:[#allocation3 + $0x20] sm:$0xff] %vm1388, %v1349
      %1394 = vst.msk [vmem:[#allocation3 + $0x28] sm:$0xff] %vm1388, %v1351
      %1395 = vst.msk [vmem:[#allocation3 + $0x30] sm:$0xff] %vm1388, %v1353
      %1396 = vst.msk [vmem:[#allocation3 + $0x38] sm:$0xff] %vm1388, %v1355
      %1397 = vst.msk [vmem:[#allocation3 + $0x40] sm:$0xff] %vm1388, %v1357
      %1398 = vst.msk [vmem:[#allocation3 + $0x48] sm:$0xff] %vm1388, %v1359
      %1399 = vst.msk [vmem:[#allocation3 + $0x50] sm:$0xff] %vm1388, %v1361
      %1400 = vst.msk [vmem:[#allocation3 + $0x58] sm:$0xff] %vm1388, %v1363
      %1401 = vst.msk [vmem:[#allocation3 + $0x60] sm:$0xff] %vm1388, %v1365
      %1402 = vst.msk [vmem:[#allocation3 + $0x68] sm:$0xff] %vm1388, %v1367
      %1403 = vst.msk [vmem:[#allocation3 + $0x70] sm:$0xff] %vm1388, %v1369
      %1404 = vst.msk [vmem:[#allocation3 + $0x78] sm:$0xff] %vm1388, %v1371
      %v1405 = vld [vmem:[#allocation2] sm:$0xe]
      %v1406 = vld [vmem:[#allocation2 + $0x4] sm:$0xf]
      %v1407 = vld [vmem:[#allocation2 + $0x8] sm:$0x1]
      %v1408 = vld [vmem:[#allocation2 + $0xc] sm:$0xe]
      %v1409 = vld [vmem:[#allocation2 + $0x10] sm:$0xf]
      %v1410 = vld [vmem:[#allocation2 + $0x14] sm:$0x1]
      %v1411 = vld [vmem:[#allocation2 + $0x18] sm:$0xe]
      %v1412 = vld [vmem:[#allocation2 + $0x1c] sm:$0xf]
      %v1413 = vld [vmem:[#allocation2 + $0x20] sm:$0x1]
      %v1414 = vld [vmem:[#allocation2 + $0x24] sm:$0xe]
      %v1415 = vld [vmem:[#allocation2 + $0x28] sm:$0xf]
      %v1416 = vld [vmem:[#allocation2 + $0x2c] sm:$0x1]
      %v1417 = vld [vmem:[#allocation2 + $0x30] sm:$0xe]
      %v1418 = vld [vmem:[#allocation2 + $0x34] sm:$0xf]
      %v1419 = vld [vmem:[#allocation2 + $0x38] sm:$0x1]
      %v1420 = vld [vmem:[#allocation2 + $0x3c] sm:$0xe]
      %v1421 = vld [vmem:[#allocation2 + $0x40] sm:$0xf]
      %v1422 = vld [vmem:[#allocation2 + $0x44] sm:$0x1]
      %v1423 = vld [vmem:[#allocation2 + $0x48] sm:$0xe]
      %v1424 = vld [vmem:[#allocation2 + $0x4c] sm:$0xf]
      %v1425 = vld [vmem:[#allocation2 + $0x50] sm:$0x1]
      %v1426 = vld [vmem:[#allocation2 + $0x54] sm:$0xe]
      %v1427 = vld [vmem:[#allocation2 + $0x58] sm:$0xf]
      %v1428 = vld [vmem:[#allocation2 + $0x5c] sm:$0x1]
      %v1429 = vld [vmem:[#allocation2 + $0x60] sm:$0xe]
      %v1430 = vld [vmem:[#allocation2 + $0x64] sm:$0xf]
      %v1431 = vld [vmem:[#allocation2 + $0x68] sm:$0x1]
      %v1432 = vld [vmem:[#allocation2 + $0x6c] sm:$0xe]
      %v1433 = vld [vmem:[#allocation2 + $0x70] sm:$0xf]
      %v1434 = vld [vmem:[#allocation2 + $0x74] sm:$0x1]
      %v1435 = vld [vmem:[#allocation2 + $0x78] sm:$0xe]
      %v1436 = vld [vmem:[#allocation2 + $0x7c] sm:$0xf]
      %v1437 = vld [vmem:[#allocation2 + $0x80] sm:$0x1]
      %v1438 = vld [vmem:[#allocation2 + $0x84] sm:$0xe]
      %v1439 = vld [vmem:[#allocation2 + $0x88] sm:$0xf]
      %v1440 = vld [vmem:[#allocation2 + $0x8c] sm:$0x1]
      %v1441 = vld [vmem:[#allocation2 + $0x90] sm:$0xe]
      %v1442 = vld [vmem:[#allocation2 + $0x94] sm:$0xf]
      %v1443 = vld [vmem:[#allocation2 + $0x98] sm:$0x1]
      %v1444 = vld [vmem:[#allocation2 + $0x9c] sm:$0xe]
      %v1445 = vld [vmem:[#allocation2 + $0xa0] sm:$0xf]
      %v1446 = vld [vmem:[#allocation2 + $0xa4] sm:$0x1]
      %v1447 = vld [vmem:[#allocation2 + $0xa8] sm:$0xe]
      %v1448 = vld [vmem:[#allocation2 + $0xac] sm:$0xf]
      %v1449 = vld [vmem:[#allocation2 + $0xb0] sm:$0x1]
      %v1450 = vld [vmem:[#allocation2 + $0xb4] sm:$0xe]
      %v1451 = vld [vmem:[#allocation2 + $0xb8] sm:$0xf]
      %v1452 = vld [vmem:[#allocation2 + $0xbc] sm:$0x1]
      %vm1501 = vcmask 1042432
      %vm1502 = vcmask 1046532
      %vm1503 = vmor %vm1501, %vm1502
      %v1504 = vrot.slane %v1405, 5
      %v1505 = vrot.slane %v1504, 4
      %v1506 = vrot.slane %v1406, 5
      %v1507 = vsel %vm1503, %v1505, %v1506
      %v1508 = vrot.slane %v1506, 4
      %v1509 = vrot.slane %v1407, 5
      %v1510 = vsel %vm1503, %v1508, %v1509
      %v1511 = vrot.slane %v1408, 5
      %v1512 = vrot.slane %v1511, 4
      %v1513 = vrot.slane %v1409, 5
      %v1514 = vsel %vm1503, %v1512, %v1513
      %v1515 = vrot.slane %v1513, 4
      %v1516 = vrot.slane %v1410, 5
      %v1517 = vsel %vm1503, %v1515, %v1516
      %v1518 = vrot.slane %v1411, 5
      %v1519 = vrot.slane %v1518, 4
      %v1520 = vrot.slane %v1412, 5
      %v1521 = vsel %vm1503, %v1519, %v1520
      %v1522 = vrot.slane %v1520, 4
      %v1523 = vrot.slane %v1413, 5
      %v1524 = vsel %vm1503, %v1522, %v1523
      %v1525 = vrot.slane %v1414, 5
      %v1526 = vrot.slane %v1525, 4
      %v1527 = vrot.slane %v1415, 5
      %v1528 = vsel %vm1503, %v1526, %v1527
      %v1529 = vrot.slane %v1527, 4
      %v1530 = vrot.slane %v1416, 5
      %v1531 = vsel %vm1503, %v1529, %v1530
      %v1532 = vrot.slane %v1417, 5
      %v1533 = vrot.slane %v1532, 4
      %v1534 = vrot.slane %v1418, 5
      %v1535 = vsel %vm1503, %v1533, %v1534
      %v1536 = vrot.slane %v1534, 4
      %v1537 = vrot.slane %v1419, 5
      %v1538 = vsel %vm1503, %v1536, %v1537
      %v1539 = vrot.slane %v1420, 5
      %v1540 = vrot.slane %v1539, 4
      %v1541 = vrot.slane %v1421, 5
      %v1542 = vsel %vm1503, %v1540, %v1541
      %v1543 = vrot.slane %v1541, 4
      %v1544 = vrot.slane %v1422, 5
      %v1545 = vsel %vm1503, %v1543, %v1544
      %v1546 = vrot.slane %v1423, 5
      %v1547 = vrot.slane %v1546, 4
      %v1548 = vrot.slane %v1424, 5
      %v1549 = vsel %vm1503, %v1547, %v1548
      %v1550 = vrot.slane %v1548, 4
      %v1551 = vrot.slane %v1425, 5
      %v1552 = vsel %vm1503, %v1550, %v1551
      %v1553 = vrot.slane %v1426, 5
      %v1554 = vrot.slane %v1553, 4
      %v1555 = vrot.slane %v1427, 5
      %v1556 = vsel %vm1503, %v1554, %v1555
      %v1557 = vrot.slane %v1555, 4
      %v1558 = vrot.slane %v1428, 5
      %v1559 = vsel %vm1503, %v1557, %v1558
      %v1560 = vrot.slane %v1429, 5
      %v1561 = vrot.slane %v1560, 4
      %v1562 = vrot.slane %v1430, 5
      %v1563 = vsel %vm1503, %v1561, %v1562
      %v1564 = vrot.slane %v1562, 4
      %v1565 = vrot.slane %v1431, 5
      %v1566 = vsel %vm1503, %v1564, %v1565
      %v1567 = vrot.slane %v1432, 5
      %v1568 = vrot.slane %v1567, 4
      %v1569 = vrot.slane %v1433, 5
      %v1570 = vsel %vm1503, %v1568, %v1569
      %v1571 = vrot.slane %v1569, 4
      %v1572 = vrot.slane %v1434, 5
      %v1573 = vsel %vm1503, %v1571, %v1572
      %v1574 = vrot.slane %v1435, 5
      %v1575 = vrot.slane %v1574, 4
      %v1576 = vrot.slane %v1436, 5
      %v1577 = vsel %vm1503, %v1575, %v1576
      %v1578 = vrot.slane %v1576, 4
      %v1579 = vrot.slane %v1437, 5
      %v1580 = vsel %vm1503, %v1578, %v1579
      %v1581 = vrot.slane %v1438, 5
      %v1582 = vrot.slane %v1581, 4
      %v1583 = vrot.slane %v1439, 5
      %v1584 = vsel %vm1503, %v1582, %v1583
      %v1585 = vrot.slane %v1583, 4
      %v1586 = vrot.slane %v1440, 5
      %v1587 = vsel %vm1503, %v1585, %v1586
      %v1588 = vrot.slane %v1441, 5
      %v1589 = vrot.slane %v1588, 4
      %v1590 = vrot.slane %v1442, 5
      %v1591 = vsel %vm1503, %v1589, %v1590
      %v1592 = vrot.slane %v1590, 4
      %v1593 = vrot.slane %v1443, 5
      %v1594 = vsel %vm1503, %v1592, %v1593
      %v1595 = vrot.slane %v1444, 5
      %v1596 = vrot.slane %v1595, 4
      %v1597 = vrot.slane %v1445, 5
      %v1598 = vsel %vm1503, %v1596, %v1597
      %v1599 = vrot.slane %v1597, 4
      %v1600 = vrot.slane %v1446, 5
      %v1601 = vsel %vm1503, %v1599, %v1600
      %v1602 = vrot.slane %v1447, 5
      %v1603 = vrot.slane %v1602, 4
      %v1604 = vrot.slane %v1448, 5
      %v1605 = vsel %vm1503, %v1603, %v1604
      %v1606 = vrot.slane %v1604, 4
      %v1607 = vrot.slane %v1449, 5
      %v1608 = vsel %vm1503, %v1606, %v1607
      %v1609 = vrot.slane %v1450, 5
      %v1610 = vrot.slane %v1609, 4
      %v1611 = vrot.slane %v1451, 5
      %v1612 = vsel %vm1503, %v1610, %v1611
      %v1613 = vrot.slane %v1611, 4
      %v1614 = vrot.slane %v1452, 5
      %v1615 = vsel %vm1503, %v1613, %v1614
      %v1616 = vunpack.c.l.b16 %v1507
      %v1617 = vunpack.c.l.b16 %v1510
      %v1618 = vunpack.c.l.b16 %v1514
      %v1619 = vunpack.c.l.b16 %v1517
      %v1620 = vunpack.c.l.b16 %v1521
      %v1621 = vunpack.c.l.b16 %v1524
      %v1622 = vunpack.c.l.b16 %v1528
      %v1623 = vunpack.c.l.b16 %v1531
      %v1624 = vunpack.c.l.b16 %v1535
      %v1625 = vunpack.c.l.b16 %v1538
      %v1626 = vunpack.c.l.b16 %v1542
      %v1627 = vunpack.c.l.b16 %v1545
      %v1628 = vunpack.c.l.b16 %v1549
      %v1629 = vunpack.c.l.b16 %v1552
      %v1630 = vunpack.c.l.b16 %v1556
      %v1631 = vunpack.c.l.b16 %v1559
      %v1632 = vunpack.c.l.b16 %v1563
      %v1633 = vunpack.c.l.b16 %v1566
      %v1634 = vunpack.c.l.b16 %v1570
      %v1635 = vunpack.c.l.b16 %v1573
      %v1636 = vunpack.c.l.b16 %v1577
      %v1637 = vunpack.c.l.b16 %v1580
      %v1638 = vunpack.c.l.b16 %v1584
      %v1639 = vunpack.c.l.b16 %v1587
      %v1640 = vunpack.c.l.b16 %v1591
      %v1641 = vunpack.c.l.b16 %v1594
      %v1642 = vunpack.c.l.b16 %v1598
      %v1643 = vunpack.c.l.b16 %v1601
      %v1644 = vunpack.c.l.b16 %v1605
      %v1645 = vunpack.c.l.b16 %v1608
      %v1646 = vunpack.c.l.b16 %v1612
      %v1647 = vunpack.c.l.b16 %v1615
      %v1648 = vpack.c.b16 %v1617, %v1616
      %v1649 = vpack.c.b16 %v1619, %v1618
      %v1650 = vpack.c.b16 %v1621, %v1620
      %v1651 = vpack.c.b16 %v1623, %v1622
      %v1652 = vpack.c.b16 %v1625, %v1624
      %v1653 = vpack.c.b16 %v1627, %v1626
      %v1654 = vpack.c.b16 %v1629, %v1628
      %v1655 = vpack.c.b16 %v1631, %v1630
      %v1656 = vpack.c.b16 %v1633, %v1632
      %v1657 = vpack.c.b16 %v1635, %v1634
      %v1658 = vpack.c.b16 %v1637, %v1636
      %v1659 = vpack.c.b16 %v1639, %v1638
      %v1660 = vpack.c.b16 %v1641, %v1640
      %v1661 = vpack.c.b16 %v1643, %v1642
      %v1662 = vpack.c.b16 %v1645, %v1644
      %v1663 = vpack.c.b16 %v1647, %v1646
      %1664 = vrot.lane.b32.xlu0 %v1648, 16
      %v1665 = vpop.permute.xlu0 %1664
      %1666 = vrot.lane.b32.xlu0 %v1649, 16
      %v1667 = vpop.permute.xlu0 %1666
      %1668 = vrot.lane.b32.xlu0 %v1650, 16
      %v1669 = vpop.permute.xlu0 %1668
      %1670 = vrot.lane.b32.xlu0 %v1651, 16
      %v1671 = vpop.permute.xlu0 %1670
      %1672 = vrot.lane.b32.xlu0 %v1652, 16
      %v1673 = vpop.permute.xlu0 %1672
      %1674 = vrot.lane.b32.xlu0 %v1653, 16
      %v1675 = vpop.permute.xlu0 %1674
      %1676 = vrot.lane.b32.xlu0 %v1654, 16
      %v1677 = vpop.permute.xlu0 %1676
      %1678 = vrot.lane.b32.xlu0 %v1655, 16
      %v1679 = vpop.permute.xlu0 %1678
      %1680 = vrot.lane.b32.xlu0 %v1656, 16
      %v1681 = vpop.permute.xlu0 %1680
      %1682 = vrot.lane.b32.xlu0 %v1657, 16
      %v1683 = vpop.permute.xlu0 %1682
      %1684 = vrot.lane.b32.xlu0 %v1658, 16
      %v1685 = vpop.permute.xlu0 %1684
      %1686 = vrot.lane.b32.xlu0 %v1659, 16
      %v1687 = vpop.permute.xlu0 %1686
      %1688 = vrot.lane.b32.xlu0 %v1660, 16
      %v1689 = vpop.permute.xlu0 %1688
      %1690 = vrot.lane.b32.xlu0 %v1661, 16
      %v1691 = vpop.permute.xlu0 %1690
      %1692 = vrot.lane.b32.xlu0 %v1662, 16
      %v1693 = vpop.permute.xlu0 %1692
      %1694 = vrot.lane.b32.xlu0 %v1663, 16
      %v1695 = vpop.permute.xlu0 %1694
      %vm1712 = vcmask 195712
      %1713 = vst.msk [vmem:[#allocation3] sm:$0xff] %vm1712, %v1665
      %1714 = vst.msk [vmem:[#allocation3 + $0x8] sm:$0xff] %vm1712, %v1667
      %1715 = vst.msk [vmem:[#allocation3 + $0x10] sm:$0xff] %vm1712, %v1669
      %1716 = vst.msk [vmem:[#allocation3 + $0x18] sm:$0xff] %vm1712, %v1671
      %1717 = vst.msk [vmem:[#allocation3 + $0x20] sm:$0xff] %vm1712, %v1673
      %1718 = vst.msk [vmem:[#allocation3 + $0x28] sm:$0xff] %vm1712, %v1675
      %1719 = vst.msk [vmem:[#allocation3 + $0x30] sm:$0xff] %vm1712, %v1677
      %1720 = vst.msk [vmem:[#allocation3 + $0x38] sm:$0xff] %vm1712, %v1679
      %1721 = vst.msk [vmem:[#allocation3 + $0x40] sm:$0xff] %vm1712, %v1681
      %1722 = vst.msk [vmem:[#allocation3 + $0x48] sm:$0xff] %vm1712, %v1683
      %1723 = vst.msk [vmem:[#allocation3 + $0x50] sm:$0xff] %vm1712, %v1685
      %1724 = vst.msk [vmem:[#allocation3 + $0x58] sm:$0xff] %vm1712, %v1687
      %1725 = vst.msk [vmem:[#allocation3 + $0x60] sm:$0xff] %vm1712, %v1689
      %1726 = vst.msk [vmem:[#allocation3 + $0x68] sm:$0xff] %vm1712, %v1691
      %1727 = vst.msk [vmem:[#allocation3 + $0x70] sm:$0xff] %vm1712, %v1693
      %1728 = vst.msk [vmem:[#allocation3 + $0x78] sm:$0xff] %vm1712, %v1695
      %v1729 = vld [vmem:[%s594] sm:$0xf]
      %v1730 = vld [vmem:[%s594 + $0x4] sm:$0xf]
      %v1731 = vld [vmem:[%s594 + $0xc] sm:$0xf]
      %v1732 = vld [vmem:[%s594 + $0x10] sm:$0xf]
      %v1733 = vld [vmem:[%s594 + $0x18] sm:$0xf]
      %v1734 = vld [vmem:[%s594 + $0x1c] sm:$0xf]
      %v1735 = vld [vmem:[%s594 + $0x24] sm:$0xf]
      %v1736 = vld [vmem:[%s594 + $0x28] sm:$0xf]
      %v1737 = vld [vmem:[%s594 + $0x30] sm:$0xf]
      %v1738 = vld [vmem:[%s594 + $0x34] sm:$0xf]
      %v1739 = vld [vmem:[%s594 + $0x3c] sm:$0xf]
      %v1740 = vld [vmem:[%s594 + $0x40] sm:$0xf]
      %v1741 = vld [vmem:[%s594 + $0x48] sm:$0xf]
      %v1742 = vld [vmem:[%s594 + $0x4c] sm:$0xf]
      %v1743 = vld [vmem:[%s594 + $0x54] sm:$0xf]
      %v1744 = vld [vmem:[%s594 + $0x58] sm:$0xf]
      %v1745 = vld [vmem:[%s594 + $0x60] sm:$0xf]
      %v1746 = vld [vmem:[%s594 + $0x64] sm:$0xf]
      %v1747 = vld [vmem:[%s594 + $0x6c] sm:$0xf]
      %v1748 = vld [vmem:[%s594 + $0x70] sm:$0xf]
      %v1749 = vld [vmem:[%s594 + $0x78] sm:$0xf]
      %v1750 = vld [vmem:[%s594 + $0x7c] sm:$0xf]
      %v1751 = vld [vmem:[%s594 + $0x84] sm:$0xf]
      %v1752 = vld [vmem:[%s594 + $0x88] sm:$0xf]
      %v1753 = vld [vmem:[%s594 + $0x90] sm:$0xf]
      %v1754 = vld [vmem:[%s594 + $0x94] sm:$0xf]
      %v1755 = vld [vmem:[%s594 + $0x9c] sm:$0xf]
      %v1756 = vld [vmem:[%s594 + $0xa0] sm:$0xf]
      %v1757 = vld [vmem:[%s594 + $0xa8] sm:$0xf]
      %v1758 = vld [vmem:[%s594 + $0xac] sm:$0xf]
      %v1759 = vld [vmem:[%s594 + $0xb4] sm:$0xf]
      %v1760 = vld [vmem:[%s594 + $0xb8] sm:$0xf]
      %v1793 = vunpack.c.l.b16 %v1729
      %v1794 = vunpack.c.l.b16 %v1730
      %v1795 = vunpack.c.l.b16 %v1731
      %v1796 = vunpack.c.l.b16 %v1732
      %v1797 = vunpack.c.l.b16 %v1733
      %v1798 = vunpack.c.l.b16 %v1734
      %v1799 = vunpack.c.l.b16 %v1735
      %v1800 = vunpack.c.l.b16 %v1736
      %v1801 = vunpack.c.l.b16 %v1737
      %v1802 = vunpack.c.l.b16 %v1738
      %v1803 = vunpack.c.l.b16 %v1739
      %v1804 = vunpack.c.l.b16 %v1740
      %v1805 = vunpack.c.l.b16 %v1741
      %v1806 = vunpack.c.l.b16 %v1742
      %v1807 = vunpack.c.l.b16 %v1743
      %v1808 = vunpack.c.l.b16 %v1744
      %v1809 = vunpack.c.l.b16 %v1745
      %v1810 = vunpack.c.l.b16 %v1746
      %v1811 = vunpack.c.l.b16 %v1747
      %v1812 = vunpack.c.l.b16 %v1748
      %v1813 = vunpack.c.l.b16 %v1749
      %v1814 = vunpack.c.l.b16 %v1750
      %v1815 = vunpack.c.l.b16 %v1751
      %v1816 = vunpack.c.l.b16 %v1752
      %v1817 = vunpack.c.l.b16 %v1753
      %v1818 = vunpack.c.l.b16 %v1754
      %v1819 = vunpack.c.l.b16 %v1755
      %v1820 = vunpack.c.l.b16 %v1756
      %v1821 = vunpack.c.l.b16 %v1757
      %v1822 = vunpack.c.l.b16 %v1758
      %v1823 = vunpack.c.l.b16 %v1759
      %v1824 = vunpack.c.l.b16 %v1760
      %v1825 = vpack.c.b16 %v1794, %v1793
      %v1826 = vpack.c.b16 %v1796, %v1795
      %v1827 = vpack.c.b16 %v1798, %v1797
      %v1828 = vpack.c.b16 %v1800, %v1799
      %v1829 = vpack.c.b16 %v1802, %v1801
      %v1830 = vpack.c.b16 %v1804, %v1803
      %v1831 = vpack.c.b16 %v1806, %v1805
      %v1832 = vpack.c.b16 %v1808, %v1807
      %v1833 = vpack.c.b16 %v1810, %v1809
      %v1834 = vpack.c.b16 %v1812, %v1811
      %v1835 = vpack.c.b16 %v1814, %v1813
      %v1836 = vpack.c.b16 %v1816, %v1815
      %v1837 = vpack.c.b16 %v1818, %v1817
      %v1838 = vpack.c.b16 %v1820, %v1819
      %v1839 = vpack.c.b16 %v1822, %v1821
      %v1840 = vpack.c.b16 %v1824, %v1823
      %1841 = vrot.lane.b32.xlu0 %v1825, 24
      %v1842 = vpop.permute.xlu0 %1841
      %1843 = vrot.lane.b32.xlu0 %v1826, 24
      %v1844 = vpop.permute.xlu0 %1843
      %1845 = vrot.lane.b32.xlu0 %v1827, 24
      %v1846 = vpop.permute.xlu0 %1845
      %1847 = vrot.lane.b32.xlu0 %v1828, 24
      %v1848 = vpop.permute.xlu0 %1847
      %1849 = vrot.lane.b32.xlu0 %v1829, 24
      %v1850 = vpop.permute.xlu0 %1849
      %1851 = vrot.lane.b32.xlu0 %v1830, 24
      %v1852 = vpop.permute.xlu0 %1851
      %1853 = vrot.lane.b32.xlu0 %v1831, 24
      %v1854 = vpop.permute.xlu0 %1853
      %1855 = vrot.lane.b32.xlu0 %v1832, 24
      %v1856 = vpop.permute.xlu0 %1855
      %1857 = vrot.lane.b32.xlu0 %v1833, 24
      %v1858 = vpop.permute.xlu0 %1857
      %1859 = vrot.lane.b32.xlu0 %v1834, 24
      %v1860 = vpop.permute.xlu0 %1859
      %1861 = vrot.lane.b32.xlu0 %v1835, 24
      %v1862 = vpop.permute.xlu0 %1861
      %1863 = vrot.lane.b32.xlu0 %v1836, 24
      %v1864 = vpop.permute.xlu0 %1863
      %1865 = vrot.lane.b32.xlu0 %v1837, 24
      %v1866 = vpop.permute.xlu0 %1865
      %1867 = vrot.lane.b32.xlu0 %v1838, 24
      %v1868 = vpop.permute.xlu0 %1867
      %1869 = vrot.lane.b32.xlu0 %v1839, 24
      %v1870 = vpop.permute.xlu0 %1869
      %1871 = vrot.lane.b32.xlu0 %v1840, 24
      %v1872 = vpop.permute.xlu0 %1871
      %vm1889 = vcmask 261312
      %1890 = vst.msk [vmem:[#allocation3] sm:$0xff] %vm1889, %v1842
      %1891 = vst.msk [vmem:[#allocation3 + $0x8] sm:$0xff] %vm1889, %v1844
      %1892 = vst.msk [vmem:[#allocation3 + $0x10] sm:$0xff] %vm1889, %v1846
      %1893 = vst.msk [vmem:[#allocation3 + $0x18] sm:$0xff] %vm1889, %v1848
      %1894 = vst.msk [vmem:[#allocation3 + $0x20] sm:$0xff] %vm1889, %v1850
      %1895 = vst.msk [vmem:[#allocation3 + $0x28] sm:$0xff] %vm1889, %v1852
      %1896 = vst.msk [vmem:[#allocation3 + $0x30] sm:$0xff] %vm1889, %v1854
      %1897 = vst.msk [vmem:[#allocation3 + $0x38] sm:$0xff] %vm1889, %v1856
      %1898 = vst.msk [vmem:[#allocation3 + $0x40] sm:$0xff] %vm1889, %v1858
      %1899 = vst.msk [vmem:[#allocation3 + $0x48] sm:$0xff] %vm1889, %v1860
      %1900 = vst.msk [vmem:[#allocation3 + $0x50] sm:$0xff] %vm1889, %v1862
      %1901 = vst.msk [vmem:[#allocation3 + $0x58] sm:$0xff] %vm1889, %v1864
      %1902 = vst.msk [vmem:[#allocation3 + $0x60] sm:$0xff] %vm1889, %v1866
      %1903 = vst.msk [vmem:[#allocation3 + $0x68] sm:$0xff] %vm1889, %v1868
      %1904 = vst.msk [vmem:[#allocation3 + $0x70] sm:$0xff] %vm1889, %v1870
      %1905 = vst.msk [vmem:[#allocation3 + $0x78] sm:$0xff] %vm1889, %v1872
      %v1906 = vld [vmem:[%s594] sm:$0xf]
      %v1907 = vld [vmem:[%s594 + $0x4] sm:$0xf]
      %v1908 = vld [vmem:[%s594 + $0x8] sm:$0x1]
      %v1909 = vld [vmem:[%s594 + $0xc] sm:$0xf]
      %v1910 = vld [vmem:[%s594 + $0x10] sm:$0xf]
      %v1911 = vld [vmem:[%s594 + $0x14] sm:$0x1]
      %v1912 = vld [vmem:[%s594 + $0x18] sm:$0xf]
      %v1913 = vld [vmem:[%s594 + $0x1c] sm:$0xf]
      %v1914 = vld [vmem:[%s594 + $0x20] sm:$0x1]
      %v1915 = vld [vmem:[%s594 + $0x24] sm:$0xf]
      %v1916 = vld [vmem:[%s594 + $0x28] sm:$0xf]
      %v1917 = vld [vmem:[%s594 + $0x2c] sm:$0x1]
      %v1918 = vld [vmem:[%s594 + $0x30] sm:$0xf]
      %v1919 = vld [vmem:[%s594 + $0x34] sm:$0xf]
      %v1920 = vld [vmem:[%s594 + $0x38] sm:$0x1]
      %v1921 = vld [vmem:[%s594 + $0x3c] sm:$0xf]
      %v1922 = vld [vmem:[%s594 + $0x40] sm:$0xf]
      %v1923 = vld [vmem:[%s594 + $0x44] sm:$0x1]
      %v1924 = vld [vmem:[%s594 + $0x48] sm:$0xf]
      %v1925 = vld [vmem:[%s594 + $0x4c] sm:$0xf]
      %v1926 = vld [vmem:[%s594 + $0x50] sm:$0x1]
      %v1927 = vld [vmem:[%s594 + $0x54] sm:$0xf]
      %v1928 = vld [vmem:[%s594 + $0x58] sm:$0xf]
      %v1929 = vld [vmem:[%s594 + $0x5c] sm:$0x1]
      %v1930 = vld [vmem:[%s594 + $0x60] sm:$0xf]
      %v1931 = vld [vmem:[%s594 + $0x64] sm:$0xf]
      %v1932 = vld [vmem:[%s594 + $0x68] sm:$0x1]
      %v1933 = vld [vmem:[%s594 + $0x6c] sm:$0xf]
      %v1934 = vld [vmem:[%s594 + $0x70] sm:$0xf]
      %v1935 = vld [vmem:[%s594 + $0x74] sm:$0x1]
      %v1936 = vld [vmem:[%s594 + $0x78] sm:$0xf]
      %v1937 = vld [vmem:[%s594 + $0x7c] sm:$0xf]
      %v1938 = vld [vmem:[%s594 + $0x80] sm:$0x1]
      %v1939 = vld [vmem:[%s594 + $0x84] sm:$0xf]
      %v1940 = vld [vmem:[%s594 + $0x88] sm:$0xf]
      %v1941 = vld [vmem:[%s594 + $0x8c] sm:$0x1]
      %v1942 = vld [vmem:[%s594 + $0x90] sm:$0xf]
      %v1943 = vld [vmem:[%s594 + $0x94] sm:$0xf]
      %v1944 = vld [vmem:[%s594 + $0x98] sm:$0x1]
      %v1945 = vld [vmem:[%s594 + $0x9c] sm:$0xf]
      %v1946 = vld [vmem:[%s594 + $0xa0] sm:$0xf]
      %v1947 = vld [vmem:[%s594 + $0xa4] sm:$0x1]
      %v1948 = vld [vmem:[%s594 + $0xa8] sm:$0xf]
      %v1949 = vld [vmem:[%s594 + $0xac] sm:$0xf]
      %v1950 = vld [vmem:[%s594 + $0xb0] sm:$0x1]
      %v1951 = vld [vmem:[%s594 + $0xb4] sm:$0xf]
      %v1952 = vld [vmem:[%s594 + $0xb8] sm:$0xf]
      %v1953 = vld [vmem:[%s594 + $0xbc] sm:$0x1]
      %v1955 = vshrl.u32 %v1906, 16
      %v1957 = vrot.slane %v1955, 4
      %v1958 = vshll.u32 %v1906, 16
      %v1960 = vrot.slane %v1958, 5
      %v1961 = vor.u32 %v1957, %v1960
      %v1962 = vrot.slane %v1961, 4
      %v1964 = vshll.u32 %v1907, 16
      %v1966 = vrot.slane %v1964, 5
      %v1967 = vsel %vm907, %v1962, %v1966
      %v1968 = vshrl.u32 %v1907, 16
      %v1970 = vrot.slane %v1968, 4
      %v1971 = vor.u32 %v1970, %v1966
      %v1972 = vrot.slane %v1971, 4
      %v1974 = vshll.u32 %v1908, 16
      %v1976 = vrot.slane %v1974, 5
      %v1977 = vsel %vm907, %v1972, %v1976
      %v1979 = vshrl.u32 %v1909, 16
      %v1981 = vrot.slane %v1979, 4
      %v1982 = vshll.u32 %v1909, 16
      %v1984 = vrot.slane %v1982, 5
      %v1985 = vor.u32 %v1981, %v1984
      %v1986 = vrot.slane %v1985, 4
      %v1988 = vshll.u32 %v1910, 16
      %v1990 = vrot.slane %v1988, 5
      %v1991 = vsel %vm907, %v1986, %v1990
      %v1992 = vshrl.u32 %v1910, 16
      %v1994 = vrot.slane %v1992, 4
      %v1995 = vor.u32 %v1994, %v1990
      %v1996 = vrot.slane %v1995, 4
      %v1998 = vshll.u32 %v1911, 16
      %v2000 = vrot.slane %v1998, 5
      %v2001 = vsel %vm907, %v1996, %v2000
      %v2003 = vshrl.u32 %v1912, 16
      %v2005 = vrot.slane %v2003, 4
      %v2006 = vshll.u32 %v1912, 16
      %v2008 = vrot.slane %v2006, 5
      %v2009 = vor.u32 %v2005, %v2008
      %v2010 = vrot.slane %v2009, 4
      %v2012 = vshll.u32 %v1913, 16
      %v2014 = vrot.slane %v2012, 5
      %v2015 = vsel %vm907, %v2010, %v2014
      %v2016 = vshrl.u32 %v1913, 16
      %v2018 = vrot.slane %v2016, 4
      %v2019 = vor.u32 %v2018, %v2014
      %v2020 = vrot.slane %v2019, 4
      %v2022 = vshll.u32 %v1914, 16
      %v2024 = vrot.slane %v2022, 5
      %v2025 = vsel %vm907, %v2020, %v2024
      %v2027 = vshrl.u32 %v1915, 16
      %v2029 = vrot.slane %v2027, 4
      %v2030 = vshll.u32 %v1915, 16
      %v2032 = vrot.slane %v2030, 5
      %v2033 = vor.u32 %v2029, %v2032
      %v2034 = vrot.slane %v2033, 4
      %v2036 = vshll.u32 %v1916, 16
      %v2038 = vrot.slane %v2036, 5
      %v2039 = vsel %vm907, %v2034, %v2038
      %v2040 = vshrl.u32 %v1916, 16
      %v2042 = vrot.slane %v2040, 4
      %v2043 = vor.u32 %v2042, %v2038
      %v2044 = vrot.slane %v2043, 4
      %v2046 = vshll.u32 %v1917, 16
      %v2048 = vrot.slane %v2046, 5
      %v2049 = vsel %vm907, %v2044, %v2048
      %v2051 = vshrl.u32 %v1918, 16
      %v2053 = vrot.slane %v2051, 4
      %v2054 = vshll.u32 %v1918, 16
      %v2056 = vrot.slane %v2054, 5
      %v2057 = vor.u32 %v2053, %v2056
      %v2058 = vrot.slane %v2057, 4
      %v2060 = vshll.u32 %v1919, 16
      %v2062 = vrot.slane %v2060, 5
      %v2063 = vsel %vm907, %v2058, %v2062
      %v2064 = vshrl.u32 %v1919, 16
      %v2066 = vrot.slane %v2064, 4
      %v2067 = vor.u32 %v2066, %v2062
      %v2068 = vrot.slane %v2067, 4
      %v2070 = vshll.u32 %v1920, 16
      %v2072 = vrot.slane %v2070, 5
      %v2073 = vsel %vm907, %v2068, %v2072
      %v2075 = vshrl.u32 %v1921, 16
      %v2077 = vrot.slane %v2075, 4
      %v2078 = vshll.u32 %v1921, 16
      %v2080 = vrot.slane %v2078, 5
      %v2081 = vor.u32 %v2077, %v2080
      %v2082 = vrot.slane %v2081, 4
      %v2084 = vshll.u32 %v1922, 16
      %v2086 = vrot.slane %v2084, 5
      %v2087 = vsel %vm907, %v2082, %v2086
      %v2088 = vshrl.u32 %v1922, 16
      %v2090 = vrot.slane %v2088, 4
      %v2091 = vor.u32 %v2090, %v2086
      %v2092 = vrot.slane %v2091, 4
      %v2094 = vshll.u32 %v1923, 16
      %v2096 = vrot.slane %v2094, 5
      %v2097 = vsel %vm907, %v2092, %v2096
      %v2099 = vshrl.u32 %v1924, 16
      %v2101 = vrot.slane %v2099, 4
      %v2102 = vshll.u32 %v1924, 16
      %v2104 = vrot.slane %v2102, 5
      %v2105 = vor.u32 %v2101, %v2104
      %v2106 = vrot.slane %v2105, 4
      %v2108 = vshll.u32 %v1925, 16
      %v2110 = vrot.slane %v2108, 5
      %v2111 = vsel %vm907, %v2106, %v2110
      %v2112 = vshrl.u32 %v1925, 16
      %v2114 = vrot.slane %v2112, 4
      %v2115 = vor.u32 %v2114, %v2110
      %v2116 = vrot.slane %v2115, 4
      %v2118 = vshll.u32 %v1926, 16
      %v2120 = vrot.slane %v2118, 5
      %v2121 = vsel %vm907, %v2116, %v2120
      %v2123 = vshrl.u32 %v1927, 16
      %v2125 = vrot.slane %v2123, 4
      %v2126 = vshll.u32 %v1927, 16
      %v2128 = vrot.slane %v2126, 5
      %v2129 = vor.u32 %v2125, %v2128
      %v2130 = vrot.slane %v2129, 4
      %v2132 = vshll.u32 %v1928, 16
      %v2134 = vrot.slane %v2132, 5
      %v2135 = vsel %vm907, %v2130, %v2134
      %v2136 = vshrl.u32 %v1928, 16
      %v2138 = vrot.slane %v2136, 4
      %v2139 = vor.u32 %v2138, %v2134
      %v2140 = vrot.slane %v2139, 4
      %v2142 = vshll.u32 %v1929, 16
      %v2144 = vrot.slane %v2142, 5
      %v2145 = vsel %vm907, %v2140, %v2144
      %v2147 = vshrl.u32 %v1930, 16
      %v2149 = vrot.slane %v2147, 4
      %v2150 = vshll.u32 %v1930, 16
      %v2152 = vrot.slane %v2150, 5
      %v2153 = vor.u32 %v2149, %v2152
      %v2154 = vrot.slane %v2153, 4
      %v2156 = vshll.u32 %v1931, 16
      %v2158 = vrot.slane %v2156, 5
      %v2159 = vsel %vm907, %v2154, %v2158
      %v2160 = vshrl.u32 %v1931, 16
      %v2162 = vrot.slane %v2160, 4
      %v2163 = vor.u32 %v2162, %v2158
      %v2164 = vrot.slane %v2163, 4
      %v2166 = vshll.u32 %v1932, 16
      %v2168 = vrot.slane %v2166, 5
      %v2169 = vsel %vm907, %v2164, %v2168
      %v2171 = vshrl.u32 %v1933, 16
      %v2173 = vrot.slane %v2171, 4
      %v2174 = vshll.u32 %v1933, 16
      %v2176 = vrot.slane %v2174, 5
      %v2177 = vor.u32 %v2173, %v2176
      %v2178 = vrot.slane %v2177, 4
      %v2180 = vshll.u32 %v1934, 16
      %v2182 = vrot.slane %v2180, 5
      %v2183 = vsel %vm907, %v2178, %v2182
      %v2184 = vshrl.u32 %v1934, 16
      %v2186 = vrot.slane %v2184, 4
      %v2187 = vor.u32 %v2186, %v2182
      %v2188 = vrot.slane %v2187, 4
      %v2190 = vshll.u32 %v1935, 16
      %v2192 = vrot.slane %v2190, 5
      %v2193 = vsel %vm907, %v2188, %v2192
      %v2195 = vshrl.u32 %v1936, 16
      %v2197 = vrot.slane %v2195, 4
      %v2198 = vshll.u32 %v1936, 16
      %v2200 = vrot.slane %v2198, 5
      %v2201 = vor.u32 %v2197, %v2200
      %v2202 = vrot.slane %v2201, 4
      %v2204 = vshll.u32 %v1937, 16
      %v2206 = vrot.slane %v2204, 5
      %v2207 = vsel %vm907, %v2202, %v2206
      %v2208 = vshrl.u32 %v1937, 16
      %v2210 = vrot.slane %v2208, 4
      %v2211 = vor.u32 %v2210, %v2206
      %v2212 = vrot.slane %v2211, 4
      %v2214 = vshll.u32 %v1938, 16
      %v2216 = vrot.slane %v2214, 5
      %v2217 = vsel %vm907, %v2212, %v2216
      %v2219 = vshrl.u32 %v1939, 16
      %v2221 = vrot.slane %v2219, 4
      %v2222 = vshll.u32 %v1939, 16
      %v2224 = vrot.slane %v2222, 5
      %v2225 = vor.u32 %v2221, %v2224
      %v2226 = vrot.slane %v2225, 4
      %v2228 = vshll.u32 %v1940, 16
      %v2230 = vrot.slane %v2228, 5
      %v2231 = vsel %vm907, %v2226, %v2230
      %v2232 = vshrl.u32 %v1940, 16
      %v2234 = vrot.slane %v2232, 4
      %v2235 = vor.u32 %v2234, %v2230
      %v2236 = vrot.slane %v2235, 4
      %v2238 = vshll.u32 %v1941, 16
      %v2240 = vrot.slane %v2238, 5
      %v2241 = vsel %vm907, %v2236, %v2240
      %v2243 = vshrl.u32 %v1942, 16
      %v2245 = vrot.slane %v2243, 4
      %v2246 = vshll.u32 %v1942, 16
      %v2248 = vrot.slane %v2246, 5
      %v2249 = vor.u32 %v2245, %v2248
      %v2250 = vrot.slane %v2249, 4
      %v2252 = vshll.u32 %v1943, 16
      %v2254 = vrot.slane %v2252, 5
      %v2255 = vsel %vm907, %v2250, %v2254
      %v2256 = vshrl.u32 %v1943, 16
      %v2258 = vrot.slane %v2256, 4
      %v2259 = vor.u32 %v2258, %v2254
      %v2260 = vrot.slane %v2259, 4
      %v2262 = vshll.u32 %v1944, 16
      %v2264 = vrot.slane %v2262, 5
      %v2265 = vsel %vm907, %v2260, %v2264
      %v2267 = vshrl.u32 %v1945, 16
      %v2269 = vrot.slane %v2267, 4
      %v2270 = vshll.u32 %v1945, 16
      %v2272 = vrot.slane %v2270, 5
      %v2273 = vor.u32 %v2269, %v2272
      %v2274 = vrot.slane %v2273, 4
      %v2276 = vshll.u32 %v1946, 16
      %v2278 = vrot.slane %v2276, 5
      %v2279 = vsel %vm907, %v2274, %v2278
      %v2280 = vshrl.u32 %v1946, 16
      %v2282 = vrot.slane %v2280, 4
      %v2283 = vor.u32 %v2282, %v2278
      %v2284 = vrot.slane %v2283, 4
      %v2286 = vshll.u32 %v1947, 16
      %v2288 = vrot.slane %v2286, 5
      %v2289 = vsel %vm907, %v2284, %v2288
      %v2291 = vshrl.u32 %v1948, 16
      %v2293 = vrot.slane %v2291, 4
      %v2294 = vshll.u32 %v1948, 16
      %v2296 = vrot.slane %v2294, 5
      %v2297 = vor.u32 %v2293, %v2296
      %v2298 = vrot.slane %v2297, 4
      %v2300 = vshll.u32 %v1949, 16
      %v2302 = vrot.slane %v2300, 5
      %v2303 = vsel %vm907, %v2298, %v2302
      %v2304 = vshrl.u32 %v1949, 16
      %v2306 = vrot.slane %v2304, 4
      %v2307 = vor.u32 %v2306, %v2302
      %v2308 = vrot.slane %v2307, 4
      %v2310 = vshll.u32 %v1950, 16
      %v2312 = vrot.slane %v2310, 5
      %v2313 = vsel %vm907, %v2308, %v2312
      %v2315 = vshrl.u32 %v1951, 16
      %v2317 = vrot.slane %v2315, 4
      %v2318 = vshll.u32 %v1951, 16
      %v2320 = vrot.slane %v2318, 5
      %v2321 = vor.u32 %v2317, %v2320
      %v2322 = vrot.slane %v2321, 4
      %v2324 = vshll.u32 %v1952, 16
      %v2326 = vrot.slane %v2324, 5
      %v2327 = vsel %vm907, %v2322, %v2326
      %v2328 = vshrl.u32 %v1952, 16
      %v2330 = vrot.slane %v2328, 4
      %v2331 = vor.u32 %v2330, %v2326
      %v2332 = vrot.slane %v2331, 4
      %v2334 = vshll.u32 %v1953, 16
      %v2336 = vrot.slane %v2334, 5
      %v2337 = vsel %vm907, %v2332, %v2336
      %v2338 = vunpack.c.l.b16 %v1967
      %v2339 = vunpack.c.l.b16 %v1977
      %v2340 = vunpack.c.l.b16 %v1991
      %v2341 = vunpack.c.l.b16 %v2001
      %v2342 = vunpack.c.l.b16 %v2015
      %v2343 = vunpack.c.l.b16 %v2025
      %v2344 = vunpack.c.l.b16 %v2039
      %v2345 = vunpack.c.l.b16 %v2049
      %v2346 = vunpack.c.l.b16 %v2063
      %v2347 = vunpack.c.l.b16 %v2073
      %v2348 = vunpack.c.l.b16 %v2087
      %v2349 = vunpack.c.l.b16 %v2097
      %v2350 = vunpack.c.l.b16 %v2111
      %v2351 = vunpack.c.l.b16 %v2121
      %v2352 = vunpack.c.l.b16 %v2135
      %v2353 = vunpack.c.l.b16 %v2145
      %v2354 = vunpack.c.l.b16 %v2159
      %v2355 = vunpack.c.l.b16 %v2169
      %v2356 = vunpack.c.l.b16 %v2183
      %v2357 = vunpack.c.l.b16 %v2193
      %v2358 = vunpack.c.l.b16 %v2207
      %v2359 = vunpack.c.l.b16 %v2217
      %v2360 = vunpack.c.l.b16 %v2231
      %v2361 = vunpack.c.l.b16 %v2241
      %v2362 = vunpack.c.l.b16 %v2255
      %v2363 = vunpack.c.l.b16 %v2265
      %v2364 = vunpack.c.l.b16 %v2279
      %v2365 = vunpack.c.l.b16 %v2289
      %v2366 = vunpack.c.l.b16 %v2303
      %v2367 = vunpack.c.l.b16 %v2313
      %v2368 = vunpack.c.l.b16 %v2327
      %v2369 = vunpack.c.l.b16 %v2337
      %v2370 = vpack.c.b16 %v2339, %v2338
      %v2371 = vpack.c.b16 %v2341, %v2340
      %v2372 = vpack.c.b16 %v2343, %v2342
      %v2373 = vpack.c.b16 %v2345, %v2344
      %v2374 = vpack.c.b16 %v2347, %v2346
      %v2375 = vpack.c.b16 %v2349, %v2348
      %v2376 = vpack.c.b16 %v2351, %v2350
      %v2377 = vpack.c.b16 %v2353, %v2352
      %v2378 = vpack.c.b16 %v2355, %v2354
      %v2379 = vpack.c.b16 %v2357, %v2356
      %v2380 = vpack.c.b16 %v2359, %v2358
      %v2381 = vpack.c.b16 %v2361, %v2360
      %v2382 = vpack.c.b16 %v2363, %v2362
      %v2383 = vpack.c.b16 %v2365, %v2364
      %v2384 = vpack.c.b16 %v2367, %v2366
      %v2385 = vpack.c.b16 %v2369, %v2368
      %2386 = vrot.lane.b32.xlu0 %v2370, 32
      %v2387 = vpop.permute.xlu0 %2386
      %2388 = vrot.lane.b32.xlu0 %v2371, 32
      %v2389 = vpop.permute.xlu0 %2388
      %2390 = vrot.lane.b32.xlu0 %v2372, 32
      %v2391 = vpop.permute.xlu0 %2390
      %2392 = vrot.lane.b32.xlu0 %v2373, 32
      %v2393 = vpop.permute.xlu0 %2392
      %2394 = vrot.lane.b32.xlu0 %v2374, 32
      %v2395 = vpop.permute.xlu0 %2394
      %2396 = vrot.lane.b32.xlu0 %v2375, 32
      %v2397 = vpop.permute.xlu0 %2396
      %2398 = vrot.lane.b32.xlu0 %v2376, 32
      %v2399 = vpop.permute.xlu0 %2398
      %2400 = vrot.lane.b32.xlu0 %v2377, 32
      %v2401 = vpop.permute.xlu0 %2400
      %2402 = vrot.lane.b32.xlu0 %v2378, 32
      %v2403 = vpop.permute.xlu0 %2402
      %2404 = vrot.lane.b32.xlu0 %v2379, 32
      %v2405 = vpop.permute.xlu0 %2404
      %2406 = vrot.lane.b32.xlu0 %v2380, 32
      %v2407 = vpop.permute.xlu0 %2406
      %2408 = vrot.lane.b32.xlu0 %v2381, 32
      %v2409 = vpop.permute.xlu0 %2408
      %2410 = vrot.lane.b32.xlu0 %v2382, 32
      %v2411 = vpop.permute.xlu0 %2410
      %2412 = vrot.lane.b32.xlu0 %v2383, 32
      %v2413 = vpop.permute.xlu0 %2412
      %2414 = vrot.lane.b32.xlu0 %v2384, 32
      %v2415 = vpop.permute.xlu0 %2414
      %2416 = vrot.lane.b32.xlu0 %v2385, 32
      %v2417 = vpop.permute.xlu0 %2416
      %vm2434 = vcmask 326912
      %2435 = vst.msk [vmem:[#allocation3] sm:$0xff] %vm2434, %v2387
      %2436 = vst.msk [vmem:[#allocation3 + $0x8] sm:$0xff] %vm2434, %v2389
      %2437 = vst.msk [vmem:[#allocation3 + $0x10] sm:$0xff] %vm2434, %v2391
      %2438 = vst.msk [vmem:[#allocation3 + $0x18] sm:$0xff] %vm2434, %v2393
      %2439 = vst.msk [vmem:[#allocation3 + $0x20] sm:$0xff] %vm2434, %v2395
      %2440 = vst.msk [vmem:[#allocation3 + $0x28] sm:$0xff] %vm2434, %v2397
      %2441 = vst.msk [vmem:[#allocation3 + $0x30] sm:$0xff] %vm2434, %v2399
      %2442 = vst.msk [vmem:[#allocation3 + $0x38] sm:$0xff] %vm2434, %v2401
      %2443 = vst.msk [vmem:[#allocation3 + $0x40] sm:$0xff] %vm2434, %v2403
      %2444 = vst.msk [vmem:[#allocation3 + $0x48] sm:$0xff] %vm2434, %v2405
      %2445 = vst.msk [vmem:[#allocation3 + $0x50] sm:$0xff] %vm2434, %v2407
      %2446 = vst.msk [vmem:[#allocation3 + $0x58] sm:$0xff] %vm2434, %v2409
      %2447 = vst.msk [vmem:[#allocation3 + $0x60] sm:$0xff] %vm2434, %v2411
      %2448 = vst.msk [vmem:[#allocation3 + $0x68] sm:$0xff] %vm2434, %v2413
      %2449 = vst.msk [vmem:[#allocation3 + $0x70] sm:$0xff] %vm2434, %v2415
      %2450 = vst.msk [vmem:[#allocation3 + $0x78] sm:$0xff] %vm2434, %v2417
      %v2451 = vld [vmem:[%s594] sm:$0xe]
      %v2452 = vld [vmem:[%s594 + $0x4] sm:$0xf]
      %v2453 = vld [vmem:[%s594 + $0x8] sm:$0x1]
      %v2454 = vld [vmem:[%s594 + $0xc] sm:$0xe]
      %v2455 = vld [vmem:[%s594 + $0x10] sm:$0xf]
      %v2456 = vld [vmem:[%s594 + $0x14] sm:$0x1]
      %v2457 = vld [vmem:[%s594 + $0x18] sm:$0xe]
      %v2458 = vld [vmem:[%s594 + $0x1c] sm:$0xf]
      %v2459 = vld [vmem:[%s594 + $0x20] sm:$0x1]
      %v2460 = vld [vmem:[%s594 + $0x24] sm:$0xe]
      %v2461 = vld [vmem:[%s594 + $0x28] sm:$0xf]
      %v2462 = vld [vmem:[%s594 + $0x2c] sm:$0x1]
      %v2463 = vld [vmem:[%s594 + $0x30] sm:$0xe]
      %v2464 = vld [vmem:[%s594 + $0x34] sm:$0xf]
      %v2465 = vld [vmem:[%s594 + $0x38] sm:$0x1]
      %v2466 = vld [vmem:[%s594 + $0x3c] sm:$0xe]
      %v2467 = vld [vmem:[%s594 + $0x40] sm:$0xf]
      %v2468 = vld [vmem:[%s594 + $0x44] sm:$0x1]
      %v2469 = vld [vmem:[%s594 + $0x48] sm:$0xe]
      %v2470 = vld [vmem:[%s594 + $0x4c] sm:$0xf]
      %v2471 = vld [vmem:[%s594 + $0x50] sm:$0x1]
      %v2472 = vld [vmem:[%s594 + $0x54] sm:$0xe]
      %v2473 = vld [vmem:[%s594 + $0x58] sm:$0xf]
      %v2474 = vld [vmem:[%s594 + $0x5c] sm:$0x1]
      %v2475 = vld [vmem:[%s594 + $0x60] sm:$0xe]
      %v2476 = vld [vmem:[%s594 + $0x64] sm:$0xf]
      %v2477 = vld [vmem:[%s594 + $0x68] sm:$0x1]
      %v2478 = vld [vmem:[%s594 + $0x6c] sm:$0xe]
      %v2479 = vld [vmem:[%s594 + $0x70] sm:$0xf]
      %v2480 = vld [vmem:[%s594 + $0x74] sm:$0x1]
      %v2481 = vld [vmem:[%s594 + $0x78] sm:$0xe]
      %v2482 = vld [vmem:[%s594 + $0x7c] sm:$0xf]
      %v2483 = vld [vmem:[%s594 + $0x80] sm:$0x1]
      %v2484 = vld [vmem:[%s594 + $0x84] sm:$0xe]
      %v2485 = vld [vmem:[%s594 + $0x88] sm:$0xf]
      %v2486 = vld [vmem:[%s594 + $0x8c] sm:$0x1]
      %v2487 = vld [vmem:[%s594 + $0x90] sm:$0xe]
      %v2488 = vld [vmem:[%s594 + $0x94] sm:$0xf]
      %v2489 = vld [vmem:[%s594 + $0x98] sm:$0x1]
      %v2490 = vld [vmem:[%s594 + $0x9c] sm:$0xe]
      %v2491 = vld [vmem:[%s594 + $0xa0] sm:$0xf]
      %v2492 = vld [vmem:[%s594 + $0xa4] sm:$0x1]
      %v2493 = vld [vmem:[%s594 + $0xa8] sm:$0xe]
      %v2494 = vld [vmem:[%s594 + $0xac] sm:$0xf]
      %v2495 = vld [vmem:[%s594 + $0xb0] sm:$0x1]
      %v2496 = vld [vmem:[%s594 + $0xb4] sm:$0xe]
      %v2497 = vld [vmem:[%s594 + $0xb8] sm:$0xf]
      %v2498 = vld [vmem:[%s594 + $0xbc] sm:$0x1]
      %v2547 = vrot.slane %v2451, 5
      %v2548 = vrot.slane %v2547, 4
      %v2549 = vrot.slane %v2452, 5
      %v2550 = vsel %vm1503, %v2548, %v2549
      %v2551 = vrot.slane %v2549, 4
      %v2552 = vrot.slane %v2453, 5
      %v2553 = vsel %vm1503, %v2551, %v2552
      %v2554 = vrot.slane %v2454, 5
      %v2555 = vrot.slane %v2554, 4
      %v2556 = vrot.slane %v2455, 5
      %v2557 = vsel %vm1503, %v2555, %v2556
      %v2558 = vrot.slane %v2556, 4
      %v2559 = vrot.slane %v2456, 5
      %v2560 = vsel %vm1503, %v2558, %v2559
      %v2561 = vrot.slane %v2457, 5
      %v2562 = vrot.slane %v2561, 4
      %v2563 = vrot.slane %v2458, 5
      %v2564 = vsel %vm1503, %v2562, %v2563
      %v2565 = vrot.slane %v2563, 4
      %v2566 = vrot.slane %v2459, 5
      %v2567 = vsel %vm1503, %v2565, %v2566
      %v2568 = vrot.slane %v2460, 5
      %v2569 = vrot.slane %v2568, 4
      %v2570 = vrot.slane %v2461, 5
      %v2571 = vsel %vm1503, %v2569, %v2570
      %v2572 = vrot.slane %v2570, 4
      %v2573 = vrot.slane %v2462, 5
      %v2574 = vsel %vm1503, %v2572, %v2573
      %v2575 = vrot.slane %v2463, 5
      %v2576 = vrot.slane %v2575, 4
      %v2577 = vrot.slane %v2464, 5
      %v2578 = vsel %vm1503, %v2576, %v2577
      %v2579 = vrot.slane %v2577, 4
      %v2580 = vrot.slane %v2465, 5
      %v2581 = vsel %vm1503, %v2579, %v2580
      %v2582 = vrot.slane %v2466, 5
      %v2583 = vrot.slane %v2582, 4
      %v2584 = vrot.slane %v2467, 5
      %v2585 = vsel %vm1503, %v2583, %v2584
      %v2586 = vrot.slane %v2584, 4
      %v2587 = vrot.slane %v2468, 5
      %v2588 = vsel %vm1503, %v2586, %v2587
      %v2589 = vrot.slane %v2469, 5
      %v2590 = vrot.slane %v2589, 4
      %v2591 = vrot.slane %v2470, 5
      %v2592 = vsel %vm1503, %v2590, %v2591
      %v2593 = vrot.slane %v2591, 4
      %v2594 = vrot.slane %v2471, 5
      %v2595 = vsel %vm1503, %v2593, %v2594
      %v2596 = vrot.slane %v2472, 5
      %v2597 = vrot.slane %v2596, 4
      %v2598 = vrot.slane %v2473, 5
      %v2599 = vsel %vm1503, %v2597, %v2598
      %v2600 = vrot.slane %v2598, 4
      %v2601 = vrot.slane %v2474, 5
      %v2602 = vsel %vm1503, %v2600, %v2601
      %v2603 = vrot.slane %v2475, 5
      %v2604 = vrot.slane %v2603, 4
      %v2605 = vrot.slane %v2476, 5
      %v2606 = vsel %vm1503, %v2604, %v2605
      %v2607 = vrot.slane %v2605, 4
      %v2608 = vrot.slane %v2477, 5
      %v2609 = vsel %vm1503, %v2607, %v2608
      %v2610 = vrot.slane %v2478, 5
      %v2611 = vrot.slane %v2610, 4
      %v2612 = vrot.slane %v2479, 5
      %v2613 = vsel %vm1503, %v2611, %v2612
      %v2614 = vrot.slane %v2612, 4
      %v2615 = vrot.slane %v2480, 5
      %v2616 = vsel %vm1503, %v2614, %v2615
      %v2617 = vrot.slane %v2481, 5
      %v2618 = vrot.slane %v2617, 4
      %v2619 = vrot.slane %v2482, 5
      %v2620 = vsel %vm1503, %v2618, %v2619
      %v2621 = vrot.slane %v2619, 4
      %v2622 = vrot.slane %v2483, 5
      %v2623 = vsel %vm1503, %v2621, %v2622
      %v2624 = vrot.slane %v2484, 5
      %v2625 = vrot.slane %v2624, 4
      %v2626 = vrot.slane %v2485, 5
      %v2627 = vsel %vm1503, %v2625, %v2626
      %v2628 = vrot.slane %v2626, 4
      %v2629 = vrot.slane %v2486, 5
      %v2630 = vsel %vm1503, %v2628, %v2629
      %v2631 = vrot.slane %v2487, 5
      %v2632 = vrot.slane %v2631, 4
      %v2633 = vrot.slane %v2488, 5
      %v2634 = vsel %vm1503, %v2632, %v2633
      %v2635 = vrot.slane %v2633, 4
      %v2636 = vrot.slane %v2489, 5
      %v2637 = vsel %vm1503, %v2635, %v2636
      %v2638 = vrot.slane %v2490, 5
      %v2639 = vrot.slane %v2638, 4
      %v2640 = vrot.slane %v2491, 5
      %v2641 = vsel %vm1503, %v2639, %v2640
      %v2642 = vrot.slane %v2640, 4
      %v2643 = vrot.slane %v2492, 5
      %v2644 = vsel %vm1503, %v2642, %v2643
      %v2645 = vrot.slane %v2493, 5
      %v2646 = vrot.slane %v2645, 4
      %v2647 = vrot.slane %v2494, 5
      %v2648 = vsel %vm1503, %v2646, %v2647
      %v2649 = vrot.slane %v2647, 4
      %v2650 = vrot.slane %v2495, 5
      %v2651 = vsel %vm1503, %v2649, %v2650
      %v2652 = vrot.slane %v2496, 5
      %v2653 = vrot.slane %v2652, 4
      %v2654 = vrot.slane %v2497, 5
      %v2655 = vsel %vm1503, %v2653, %v2654
      %v2656 = vrot.slane %v2654, 4
      %v2657 = vrot.slane %v2498, 5
      %v2658 = vsel %vm1503, %v2656, %v2657
      %v2659 = vunpack.c.l.b16 %v2550
      %v2660 = vunpack.c.l.b16 %v2553
      %v2661 = vunpack.c.l.b16 %v2557
      %v2662 = vunpack.c.l.b16 %v2560
      %v2663 = vunpack.c.l.b16 %v2564
      %v2664 = vunpack.c.l.b16 %v2567
      %v2665 = vunpack.c.l.b16 %v2571
      %v2666 = vunpack.c.l.b16 %v2574
      %v2667 = vunpack.c.l.b16 %v2578
      %v2668 = vunpack.c.l.b16 %v2581
      %v2669 = vunpack.c.l.b16 %v2585
      %v2670 = vunpack.c.l.b16 %v2588
      %v2671 = vunpack.c.l.b16 %v2592
      %v2672 = vunpack.c.l.b16 %v2595
      %v2673 = vunpack.c.l.b16 %v2599
      %v2674 = vunpack.c.l.b16 %v2602
      %v2675 = vunpack.c.l.b16 %v2606
      %v2676 = vunpack.c.l.b16 %v2609
      %v2677 = vunpack.c.l.b16 %v2613
      %v2678 = vunpack.c.l.b16 %v2616
      %v2679 = vunpack.c.l.b16 %v2620
      %v2680 = vunpack.c.l.b16 %v2623
      %v2681 = vunpack.c.l.b16 %v2627
      %v2682 = vunpack.c.l.b16 %v2630
      %v2683 = vunpack.c.l.b16 %v2634
      %v2684 = vunpack.c.l.b16 %v2637
      %v2685 = vunpack.c.l.b16 %v2641
      %v2686 = vunpack.c.l.b16 %v2644
      %v2687 = vunpack.c.l.b16 %v2648
      %v2688 = vunpack.c.l.b16 %v2651
      %v2689 = vunpack.c.l.b16 %v2655
      %v2690 = vunpack.c.l.b16 %v2658
      %v2691 = vpack.c.b16 %v2660, %v2659
      %v2692 = vpack.c.b16 %v2662, %v2661
      %v2693 = vpack.c.b16 %v2664, %v2663
      %v2694 = vpack.c.b16 %v2666, %v2665
      %v2695 = vpack.c.b16 %v2668, %v2667
      %v2696 = vpack.c.b16 %v2670, %v2669
      %v2697 = vpack.c.b16 %v2672, %v2671
      %v2698 = vpack.c.b16 %v2674, %v2673
      %v2699 = vpack.c.b16 %v2676, %v2675
      %v2700 = vpack.c.b16 %v2678, %v2677
      %v2701 = vpack.c.b16 %v2680, %v2679
      %v2702 = vpack.c.b16 %v2682, %v2681
      %v2703 = vpack.c.b16 %v2684, %v2683
      %v2704 = vpack.c.b16 %v2686, %v2685
      %v2705 = vpack.c.b16 %v2688, %v2687
      %v2706 = vpack.c.b16 %v2690, %v2689
      %2707 = vrot.lane.b32.xlu0 %v2691, 40
      %v2708 = vpop.permute.xlu0 %2707
      %2709 = vrot.lane.b32.xlu0 %v2692, 40
      %v2710 = vpop.permute.xlu0 %2709
      %2711 = vrot.lane.b32.xlu0 %v2693, 40
      %v2712 = vpop.permute.xlu0 %2711
      %2713 = vrot.lane.b32.xlu0 %v2694, 40
      %v2714 = vpop.permute.xlu0 %2713
      %2715 = vrot.lane.b32.xlu0 %v2695, 40
      %v2716 = vpop.permute.xlu0 %2715
      %2717 = vrot.lane.b32.xlu0 %v2696, 40
      %v2718 = vpop.permute.xlu0 %2717
      %2719 = vrot.lane.b32.xlu0 %v2697, 40
      %v2720 = vpop.permute.xlu0 %2719
      %2721 = vrot.lane.b32.xlu0 %v2698, 40
      %v2722 = vpop.permute.xlu0 %2721
      %2723 = vrot.lane.b32.xlu0 %v2699, 40
      %v2724 = vpop.permute.xlu0 %2723
      %2725 = vrot.lane.b32.xlu0 %v2700, 40
      %v2726 = vpop.permute.xlu0 %2725
      %2727 = vrot.lane.b32.xlu0 %v2701, 40
      %v2728 = vpop.permute.xlu0 %2727
      %2729 = vrot.lane.b32.xlu0 %v2702, 40
      %v2730 = vpop.permute.xlu0 %2729
      %2731 = vrot.lane.b32.xlu0 %v2703, 40
      %v2732 = vpop.permute.xlu0 %2731
      %2733 = vrot.lane.b32.xlu0 %v2704, 40
      %v2734 = vpop.permute.xlu0 %2733
      %2735 = vrot.lane.b32.xlu0 %v2705, 40
      %v2736 = vpop.permute.xlu0 %2735
      %2737 = vrot.lane.b32.xlu0 %v2706, 40
      %v2738 = vpop.permute.xlu0 %2737
      %vm2755 = vcmask 392512
      %2756 = vst.msk [vmem:[#allocation3] sm:$0xff] %vm2755, %v2708
      %2757 = vst.msk [vmem:[#allocation3 + $0x8] sm:$0xff] %vm2755, %v2710
      %2758 = vst.msk [vmem:[#allocation3 + $0x10] sm:$0xff] %vm2755, %v2712
      %2759 = vst.msk [vmem:[#allocation3 + $0x18] sm:$0xff] %vm2755, %v2714
      %2760 = vst.msk [vmem:[#allocation3 + $0x20] sm:$0xff] %vm2755, %v2716
      %2761 = vst.msk [vmem:[#allocation3 + $0x28] sm:$0xff] %vm2755, %v2718
      %2762 = vst.msk [vmem:[#allocation3 + $0x30] sm:$0xff] %vm2755, %v2720
      %2763 = vst.msk [vmem:[#allocation3 + $0x38] sm:$0xff] %vm2755, %v2722
      %2764 = vst.msk [vmem:[#allocation3 + $0x40] sm:$0xff] %vm2755, %v2724
      %2765 = vst.msk [vmem:[#allocation3 + $0x48] sm:$0xff] %vm2755, %v2726
      %2766 = vst.msk [vmem:[#allocation3 + $0x50] sm:$0xff] %vm2755, %v2728
      %2767 = vst.msk [vmem:[#allocation3 + $0x58] sm:$0xff] %vm2755, %v2730
      %2768 = vst.msk [vmem:[#allocation3 + $0x60] sm:$0xff] %vm2755, %v2732
      %2769 = vst.msk [vmem:[#allocation3 + $0x68] sm:$0xff] %vm2755, %v2734
      %2770 = vst.msk [vmem:[#allocation3 + $0x70] sm:$0xff] %vm2755, %v2736
      %2771 = vst.msk [vmem:[#allocation3 + $0x78] sm:$0xff] %vm2755, %v2738
      %s2772 = scalar_lea.vmem [#allocation2], 24
      %v2773 = vld [vmem:[%s2772] sm:$0xf]
      %v2774 = vld [vmem:[%s2772 + $0x4] sm:$0xf]
      %v2775 = vld [vmem:[%s2772 + $0xc] sm:$0xf]
      %v2776 = vld [vmem:[%s2772 + $0x10] sm:$0xf]
      %v2777 = vld [vmem:[%s2772 + $0x18] sm:$0xf]
      %v2778 = vld [vmem:[%s2772 + $0x1c] sm:$0xf]
      %v2779 = vld [vmem:[%s2772 + $0x24] sm:$0xf]
      %v2780 = vld [vmem:[%s2772 + $0x28] sm:$0xf]
      %v2781 = vld [vmem:[%s2772 + $0x30] sm:$0xf]
      %v2782 = vld [vmem:[%s2772 + $0x34] sm:$0xf]
      %v2783 = vld [vmem:[%s2772 + $0x3c] sm:$0xf]
      %v2784 = vld [vmem:[%s2772 + $0x40] sm:$0xf]
      %v2785 = vld [vmem:[%s2772 + $0x48] sm:$0xf]
      %v2786 = vld [vmem:[%s2772 + $0x4c] sm:$0xf]
      %v2787 = vld [vmem:[%s2772 + $0x54] sm:$0xf]
      %v2788 = vld [vmem:[%s2772 + $0x58] sm:$0xf]
      %v2789 = vld [vmem:[%s2772 + $0x60] sm:$0xf]
      %v2790 = vld [vmem:[%s2772 + $0x64] sm:$0xf]
      %v2791 = vld [vmem:[%s2772 + $0x6c] sm:$0xf]
      %v2792 = vld [vmem:[%s2772 + $0x70] sm:$0xf]
      %v2793 = vld [vmem:[%s2772 + $0x78] sm:$0xf]
      %v2794 = vld [vmem:[%s2772 + $0x7c] sm:$0xf]
      %v2795 = vld [vmem:[%s2772 + $0x84] sm:$0xf]
      %v2796 = vld [vmem:[%s2772 + $0x88] sm:$0xf]
      %v2797 = vld [vmem:[%s2772 + $0x90] sm:$0xf]
      %v2798 = vld [vmem:[%s2772 + $0x94] sm:$0xf]
      %v2799 = vld [vmem:[%s2772 + $0x9c] sm:$0xf]
      %v2800 = vld [vmem:[%s2772 + $0xa0] sm:$0xf]
      %v2801 = vld [vmem:[%s2772 + $0xa8] sm:$0xf]
      %v2802 = vld [vmem:[%s2772 + $0xac] sm:$0xf]
      %v2803 = vld [vmem:[%s2772 + $0xb4] sm:$0xf]
      %v2804 = vld [vmem:[%s2772 + $0xb8] sm:$0xf]
      %v2837 = vunpack.c.l.b16 %v2773
      %v2838 = vunpack.c.l.b16 %v2774
      %v2839 = vunpack.c.l.b16 %v2775
      %v2840 = vunpack.c.l.b16 %v2776
      %v2841 = vunpack.c.l.b16 %v2777
      %v2842 = vunpack.c.l.b16 %v2778
      %v2843 = vunpack.c.l.b16 %v2779
      %v2844 = vunpack.c.l.b16 %v2780
      %v2845 = vunpack.c.l.b16 %v2781
      %v2846 = vunpack.c.l.b16 %v2782
      %v2847 = vunpack.c.l.b16 %v2783
      %v2848 = vunpack.c.l.b16 %v2784
      %v2849 = vunpack.c.l.b16 %v2785
      %v2850 = vunpack.c.l.b16 %v2786
      %v2851 = vunpack.c.l.b16 %v2787
      %v2852 = vunpack.c.l.b16 %v2788
      %v2853 = vunpack.c.l.b16 %v2789
      %v2854 = vunpack.c.l.b16 %v2790
      %v2855 = vunpack.c.l.b16 %v2791
      %v2856 = vunpack.c.l.b16 %v2792
      %v2857 = vunpack.c.l.b16 %v2793
      %v2858 = vunpack.c.l.b16 %v2794
      %v2859 = vunpack.c.l.b16 %v2795
      %v2860 = vunpack.c.l.b16 %v2796
      %v2861 = vunpack.c.l.b16 %v2797
      %v2862 = vunpack.c.l.b16 %v2798
      %v2863 = vunpack.c.l.b16 %v2799
      %v2864 = vunpack.c.l.b16 %v2800
      %v2865 = vunpack.c.l.b16 %v2801
      %v2866 = vunpack.c.l.b16 %v2802
      %v2867 = vunpack.c.l.b16 %v2803
      %v2868 = vunpack.c.l.b16 %v2804
      %v2869 = vpack.c.b16 %v2838, %v2837
      %v2870 = vpack.c.b16 %v2840, %v2839
      %v2871 = vpack.c.b16 %v2842, %v2841
      %v2872 = vpack.c.b16 %v2844, %v2843
      %v2873 = vpack.c.b16 %v2846, %v2845
      %v2874 = vpack.c.b16 %v2848, %v2847
      %v2875 = vpack.c.b16 %v2850, %v2849
      %v2876 = vpack.c.b16 %v2852, %v2851
      %v2877 = vpack.c.b16 %v2854, %v2853
      %v2878 = vpack.c.b16 %v2856, %v2855
      %v2879 = vpack.c.b16 %v2858, %v2857
      %v2880 = vpack.c.b16 %v2860, %v2859
      %v2881 = vpack.c.b16 %v2862, %v2861
      %v2882 = vpack.c.b16 %v2864, %v2863
      %v2883 = vpack.c.b16 %v2866, %v2865
      %v2884 = vpack.c.b16 %v2868, %v2867
      %2885 = vrot.lane.b32.xlu0 %v2869, 48
      %v2886 = vpop.permute.xlu0 %2885
      %2887 = vrot.lane.b32.xlu0 %v2870, 48
      %v2888 = vpop.permute.xlu0 %2887
      %2889 = vrot.lane.b32.xlu0 %v2871, 48
      %v2890 = vpop.permute.xlu0 %2889
      %2891 = vrot.lane.b32.xlu0 %v2872, 48
      %v2892 = vpop.permute.xlu0 %2891
      %2893 = vrot.lane.b32.xlu0 %v2873, 48
      %v2894 = vpop.permute.xlu0 %2893
      %2895 = vrot.lane.b32.xlu0 %v2874, 48
      %v2896 = vpop.permute.xlu0 %2895
      %2897 = vrot.lane.b32.xlu0 %v2875, 48
      %v2898 = vpop.permute.xlu0 %2897
      %2899 = vrot.lane.b32.xlu0 %v2876, 48
      %v2900 = vpop.permute.xlu0 %2899
      %2901 = vrot.lane.b32.xlu0 %v2877, 48
      %v2902 = vpop.permute.xlu0 %2901
      %2903 = vrot.lane.b32.xlu0 %v2878, 48
      %v2904 = vpop.permute.xlu0 %2903
      %2905 = vrot.lane.b32.xlu0 %v2879, 48
      %v2906 = vpop.permute.xlu0 %2905
      %2907 = vrot.lane.b32.xlu0 %v2880, 48
      %v2908 = vpop.permute.xlu0 %2907
      %2909 = vrot.lane.b32.xlu0 %v2881, 48
      %v2910 = vpop.permute.xlu0 %2909
      %2911 = vrot.lane.b32.xlu0 %v2882, 48
      %v2912 = vpop.permute.xlu0 %2911
      %2913 = vrot.lane.b32.xlu0 %v2883, 48
      %v2914 = vpop.permute.xlu0 %2913
      %2915 = vrot.lane.b32.xlu0 %v2884, 48
      %v2916 = vpop.permute.xlu0 %2915
      %vm2933 = vcmask 458112
      %2934 = vst.msk [vmem:[#allocation3] sm:$0xff] %vm2933, %v2886
      %2935 = vst.msk [vmem:[#allocation3 + $0x8] sm:$0xff] %vm2933, %v2888
      %2936 = vst.msk [vmem:[#allocation3 + $0x10] sm:$0xff] %vm2933, %v2890
      %2937 = vst.msk [vmem:[#allocation3 + $0x18] sm:$0xff] %vm2933, %v2892
      %2938 = vst.msk [vmem:[#allocation3 + $0x20] sm:$0xff] %vm2933, %v2894
      %2939 = vst.msk [vmem:[#allocation3 + $0x28] sm:$0xff] %vm2933, %v2896
      %2940 = vst.msk [vmem:[#allocation3 + $0x30] sm:$0xff] %vm2933, %v2898
      %2941 = vst.msk [vmem:[#allocation3 + $0x38] sm:$0xff] %vm2933, %v2900
      %2942 = vst.msk [vmem:[#allocation3 + $0x40] sm:$0xff] %vm2933, %v2902
      %2943 = vst.msk [vmem:[#allocation3 + $0x48] sm:$0xff] %vm2933, %v2904
      %2944 = vst.msk [vmem:[#allocation3 + $0x50] sm:$0xff] %vm2933, %v2906
      %2945 = vst.msk [vmem:[#allocation3 + $0x58] sm:$0xff] %vm2933, %v2908
      %2946 = vst.msk [vmem:[#allocation3 + $0x60] sm:$0xff] %vm2933, %v2910
      %2947 = vst.msk [vmem:[#allocation3 + $0x68] sm:$0xff] %vm2933, %v2912
      %2948 = vst.msk [vmem:[#allocation3 + $0x70] sm:$0xff] %vm2933, %v2914
      %2949 = vst.msk [vmem:[#allocation3 + $0x78] sm:$0xff] %vm2933, %v2916
      %v2950 = vld [vmem:[%s2772] sm:$0xf]
      %v2951 = vld [vmem:[%s2772 + $0x4] sm:$0xf]
      %v2952 = vld [vmem:[%s2772 + $0x8] sm:$0x1]
      %v2953 = vld [vmem:[%s2772 + $0xc] sm:$0xf]
      %v2954 = vld [vmem:[%s2772 + $0x10] sm:$0xf]
      %v2955 = vld [vmem:[%s2772 + $0x14] sm:$0x1]
      %v2956 = vld [vmem:[%s2772 + $0x18] sm:$0xf]
      %v2957 = vld [vmem:[%s2772 + $0x1c] sm:$0xf]
      %v2958 = vld [vmem:[%s2772 + $0x20] sm:$0x1]
      %v2959 = vld [vmem:[%s2772 + $0x24] sm:$0xf]
      %v2960 = vld [vmem:[%s2772 + $0x28] sm:$0xf]
      %v2961 = vld [vmem:[%s2772 + $0x2c] sm:$0x1]
      %v2962 = vld [vmem:[%s2772 + $0x30] sm:$0xf]
      %v2963 = vld [vmem:[%s2772 + $0x34] sm:$0xf]
      %v2964 = vld [vmem:[%s2772 + $0x38] sm:$0x1]
      %v2965 = vld [vmem:[%s2772 + $0x3c] sm:$0xf]
      %v2966 = vld [vmem:[%s2772 + $0x40] sm:$0xf]
      %v2967 = vld [vmem:[%s2772 + $0x44] sm:$0x1]
      %v2968 = vld [vmem:[%s2772 + $0x48] sm:$0xf]
      %v2969 = vld [vmem:[%s2772 + $0x4c] sm:$0xf]
      %v2970 = vld [vmem:[%s2772 + $0x50] sm:$0x1]
      %v2971 = vld [vmem:[%s2772 + $0x54] sm:$0xf]
      %v2972 = vld [vmem:[%s2772 + $0x58] sm:$0xf]
      %v2973 = vld [vmem:[%s2772 + $0x5c] sm:$0x1]
      %v2974 = vld [vmem:[%s2772 + $0x60] sm:$0xf]
      %v2975 = vld [vmem:[%s2772 + $0x64] sm:$0xf]
      %v2976 = vld [vmem:[%s2772 + $0x68] sm:$0x1]
      %v2977 = vld [vmem:[%s2772 + $0x6c] sm:$0xf]
      %v2978 = vld [vmem:[%s2772 + $0x70] sm:$0xf]
      %v2979 = vld [vmem:[%s2772 + $0x74] sm:$0x1]
      %v2980 = vld [vmem:[%s2772 + $0x78] sm:$0xf]
      %v2981 = vld [vmem:[%s2772 + $0x7c] sm:$0xf]
      %v2982 = vld [vmem:[%s2772 + $0x80] sm:$0x1]
      %v2983 = vld [vmem:[%s2772 + $0x84] sm:$0xf]
      %v2984 = vld [vmem:[%s2772 + $0x88] sm:$0xf]
      %v2985 = vld [vmem:[%s2772 + $0x8c] sm:$0x1]
      %v2986 = vld [vmem:[%s2772 + $0x90] sm:$0xf]
      %v2987 = vld [vmem:[%s2772 + $0x94] sm:$0xf]
      %v2988 = vld [vmem:[%s2772 + $0x98] sm:$0x1]
      %v2989 = vld [vmem:[%s2772 + $0x9c] sm:$0xf]
      %v2990 = vld [vmem:[%s2772 + $0xa0] sm:$0xf]
      %v2991 = vld [vmem:[%s2772 + $0xa4] sm:$0x1]
      %v2992 = vld [vmem:[%s2772 + $0xa8] sm:$0xf]
      %v2993 = vld [vmem:[%s2772 + $0xac] sm:$0xf]
      %v2994 = vld [vmem:[%s2772 + $0xb0] sm:$0x1]
      %v2995 = vld [vmem:[%s2772 + $0xb4] sm:$0xf]
      %v2996 = vld [vmem:[%s2772 + $0xb8] sm:$0xf]
      %v2997 = vld [vmem:[%s2772 + $0xbc] sm:$0x1]
      %v2999 = vshrl.u32 %v2950, 16
      %v3001 = vrot.slane %v2999, 4
      %v3002 = vshll.u32 %v2950, 16
      %v3004 = vrot.slane %v3002, 5
      %v3005 = vor.u32 %v3001, %v3004
      %v3006 = vrot.slane %v3005, 4
      %v3008 = vshll.u32 %v2951, 16
      %v3010 = vrot.slane %v3008, 5
      %v3011 = vsel %vm907, %v3006, %v3010
      %v3012 = vshrl.u32 %v2951, 16
      %v3014 = vrot.slane %v3012, 4
      %v3015 = vor.u32 %v3014, %v3010
      %v3016 = vrot.slane %v3015, 4
      %v3018 = vshll.u32 %v2952, 16
      %v3020 = vrot.slane %v3018, 5
      %v3021 = vsel %vm907, %v3016, %v3020
      %v3023 = vshrl.u32 %v2953, 16
      %v3025 = vrot.slane %v3023, 4
      %v3026 = vshll.u32 %v2953, 16
      %v3028 = vrot.slane %v3026, 5
      %v3029 = vor.u32 %v3025, %v3028
      %v3030 = vrot.slane %v3029, 4
      %v3032 = vshll.u32 %v2954, 16
      %v3034 = vrot.slane %v3032, 5
      %v3035 = vsel %vm907, %v3030, %v3034
      %v3036 = vshrl.u32 %v2954, 16
      %v3038 = vrot.slane %v3036, 4
      %v3039 = vor.u32 %v3038, %v3034
      %v3040 = vrot.slane %v3039, 4
      %v3042 = vshll.u32 %v2955, 16
      %v3044 = vrot.slane %v3042, 5
      %v3045 = vsel %vm907, %v3040, %v3044
      %v3047 = vshrl.u32 %v2956, 16
      %v3049 = vrot.slane %v3047, 4
      %v3050 = vshll.u32 %v2956, 16
      %v3052 = vrot.slane %v3050, 5
      %v3053 = vor.u32 %v3049, %v3052
      %v3054 = vrot.slane %v3053, 4
      %v3056 = vshll.u32 %v2957, 16
      %v3058 = vrot.slane %v3056, 5
      %v3059 = vsel %vm907, %v3054, %v3058
      %v3060 = vshrl.u32 %v2957, 16
      %v3062 = vrot.slane %v3060, 4
      %v3063 = vor.u32 %v3062, %v3058
      %v3064 = vrot.slane %v3063, 4
      %v3066 = vshll.u32 %v2958, 16
      %v3068 = vrot.slane %v3066, 5
      %v3069 = vsel %vm907, %v3064, %v3068
      %v3071 = vshrl.u32 %v2959, 16
      %v3073 = vrot.slane %v3071, 4
      %v3074 = vshll.u32 %v2959, 16
      %v3076 = vrot.slane %v3074, 5
      %v3077 = vor.u32 %v3073, %v3076
      %v3078 = vrot.slane %v3077, 4
      %v3080 = vshll.u32 %v2960, 16
      %v3082 = vrot.slane %v3080, 5
      %v3083 = vsel %vm907, %v3078, %v3082
      %v3084 = vshrl.u32 %v2960, 16
      %v3086 = vrot.slane %v3084, 4
      %v3087 = vor.u32 %v3086, %v3082
      %v3088 = vrot.slane %v3087, 4
      %v3090 = vshll.u32 %v2961, 16
      %v3092 = vrot.slane %v3090, 5
      %v3093 = vsel %vm907, %v3088, %v3092
      %v3095 = vshrl.u32 %v2962, 16
      %v3097 = vrot.slane %v3095, 4
      %v3098 = vshll.u32 %v2962, 16
      %v3100 = vrot.slane %v3098, 5
      %v3101 = vor.u32 %v3097, %v3100
      %v3102 = vrot.slane %v3101, 4
      %v3104 = vshll.u32 %v2963, 16
      %v3106 = vrot.slane %v3104, 5
      %v3107 = vsel %vm907, %v3102, %v3106
      %v3108 = vshrl.u32 %v2963, 16
      %v3110 = vrot.slane %v3108, 4
      %v3111 = vor.u32 %v3110, %v3106
      %v3112 = vrot.slane %v3111, 4
      %v3114 = vshll.u32 %v2964, 16
      %v3116 = vrot.slane %v3114, 5
      %v3117 = vsel %vm907, %v3112, %v3116
      %v3119 = vshrl.u32 %v2965, 16
      %v3121 = vrot.slane %v3119, 4
      %v3122 = vshll.u32 %v2965, 16
      %v3124 = vrot.slane %v3122, 5
      %v3125 = vor.u32 %v3121, %v3124
      %v3126 = vrot.slane %v3125, 4
      %v3128 = vshll.u32 %v2966, 16
      %v3130 = vrot.slane %v3128, 5
      %v3131 = vsel %vm907, %v3126, %v3130
      %v3132 = vshrl.u32 %v2966, 16
      %v3134 = vrot.slane %v3132, 4
      %v3135 = vor.u32 %v3134, %v3130
      %v3136 = vrot.slane %v3135, 4
      %v3138 = vshll.u32 %v2967, 16
      %v3140 = vrot.slane %v3138, 5
      %v3141 = vsel %vm907, %v3136, %v3140
      %v3143 = vshrl.u32 %v2968, 16
      %v3145 = vrot.slane %v3143, 4
      %v3146 = vshll.u32 %v2968, 16
      %v3148 = vrot.slane %v3146, 5
      %v3149 = vor.u32 %v3145, %v3148
      %v3150 = vrot.slane %v3149, 4
      %v3152 = vshll.u32 %v2969, 16
      %v3154 = vrot.slane %v3152, 5
      %v3155 = vsel %vm907, %v3150, %v3154
      %v3156 = vshrl.u32 %v2969, 16
      %v3158 = vrot.slane %v3156, 4
      %v3159 = vor.u32 %v3158, %v3154
      %v3160 = vrot.slane %v3159, 4
      %v3162 = vshll.u32 %v2970, 16
      %v3164 = vrot.slane %v3162, 5
      %v3165 = vsel %vm907, %v3160, %v3164
      %v3167 = vshrl.u32 %v2971, 16
      %v3169 = vrot.slane %v3167, 4
      %v3170 = vshll.u32 %v2971, 16
      %v3172 = vrot.slane %v3170, 5
      %v3173 = vor.u32 %v3169, %v3172
      %v3174 = vrot.slane %v3173, 4
      %v3176 = vshll.u32 %v2972, 16
      %v3178 = vrot.slane %v3176, 5
      %v3179 = vsel %vm907, %v3174, %v3178
      %v3180 = vshrl.u32 %v2972, 16
      %v3182 = vrot.slane %v3180, 4
      %v3183 = vor.u32 %v3182, %v3178
      %v3184 = vrot.slane %v3183, 4
      %v3186 = vshll.u32 %v2973, 16
      %v3188 = vrot.slane %v3186, 5
      %v3189 = vsel %vm907, %v3184, %v3188
      %v3191 = vshrl.u32 %v2974, 16
      %v3193 = vrot.slane %v3191, 4
      %v3194 = vshll.u32 %v2974, 16
      %v3196 = vrot.slane %v3194, 5
      %v3197 = vor.u32 %v3193, %v3196
      %v3198 = vrot.slane %v3197, 4
      %v3200 = vshll.u32 %v2975, 16
      %v3202 = vrot.slane %v3200, 5
      %v3203 = vsel %vm907, %v3198, %v3202
      %v3204 = vshrl.u32 %v2975, 16
      %v3206 = vrot.slane %v3204, 4
      %v3207 = vor.u32 %v3206, %v3202
      %v3208 = vrot.slane %v3207, 4
      %v3210 = vshll.u32 %v2976, 16
      %v3212 = vrot.slane %v3210, 5
      %v3213 = vsel %vm907, %v3208, %v3212
      %v3215 = vshrl.u32 %v2977, 16
      %v3217 = vrot.slane %v3215, 4
      %v3218 = vshll.u32 %v2977, 16
      %v3220 = vrot.slane %v3218, 5
      %v3221 = vor.u32 %v3217, %v3220
      %v3222 = vrot.slane %v3221, 4
      %v3224 = vshll.u32 %v2978, 16
      %v3226 = vrot.slane %v3224, 5
      %v3227 = vsel %vm907, %v3222, %v3226
      %v3228 = vshrl.u32 %v2978, 16
      %v3230 = vrot.slane %v3228, 4
      %v3231 = vor.u32 %v3230, %v3226
      %v3232 = vrot.slane %v3231, 4
      %v3234 = vshll.u32 %v2979, 16
      %v3236 = vrot.slane %v3234, 5
      %v3237 = vsel %vm907, %v3232, %v3236
      %v3239 = vshrl.u32 %v2980, 16
      %v3241 = vrot.slane %v3239, 4
      %v3242 = vshll.u32 %v2980, 16
      %v3244 = vrot.slane %v3242, 5
      %v3245 = vor.u32 %v3241, %v3244
      %v3246 = vrot.slane %v3245, 4
      %v3248 = vshll.u32 %v2981, 16
      %v3250 = vrot.slane %v3248, 5
      %v3251 = vsel %vm907, %v3246, %v3250
      %v3252 = vshrl.u32 %v2981, 16
      %v3254 = vrot.slane %v3252, 4
      %v3255 = vor.u32 %v3254, %v3250
      %v3256 = vrot.slane %v3255, 4
      %v3258 = vshll.u32 %v2982, 16
      %v3260 = vrot.slane %v3258, 5
      %v3261 = vsel %vm907, %v3256, %v3260
      %v3263 = vshrl.u32 %v2983, 16
      %v3265 = vrot.slane %v3263, 4
      %v3266 = vshll.u32 %v2983, 16
      %v3268 = vrot.slane %v3266, 5
      %v3269 = vor.u32 %v3265, %v3268
      %v3270 = vrot.slane %v3269, 4
      %v3272 = vshll.u32 %v2984, 16
      %v3274 = vrot.slane %v3272, 5
      %v3275 = vsel %vm907, %v3270, %v3274
      %v3276 = vshrl.u32 %v2984, 16
      %v3278 = vrot.slane %v3276, 4
      %v3279 = vor.u32 %v3278, %v3274
      %v3280 = vrot.slane %v3279, 4
      %v3282 = vshll.u32 %v2985, 16
      %v3284 = vrot.slane %v3282, 5
      %v3285 = vsel %vm907, %v3280, %v3284
      %v3287 = vshrl.u32 %v2986, 16
      %v3289 = vrot.slane %v3287, 4
      %v3290 = vshll.u32 %v2986, 16
      %v3292 = vrot.slane %v3290, 5
      %v3293 = vor.u32 %v3289, %v3292
      %v3294 = vrot.slane %v3293, 4
      %v3296 = vshll.u32 %v2987, 16
      %v3298 = vrot.slane %v3296, 5
      %v3299 = vsel %vm907, %v3294, %v3298
      %v3300 = vshrl.u32 %v2987, 16
      %v3302 = vrot.slane %v3300, 4
      %v3303 = vor.u32 %v3302, %v3298
      %v3304 = vrot.slane %v3303, 4
      %v3306 = vshll.u32 %v2988, 16
      %v3308 = vrot.slane %v3306, 5
      %v3309 = vsel %vm907, %v3304, %v3308
      %v3311 = vshrl.u32 %v2989, 16
      %v3313 = vrot.slane %v3311, 4
      %v3314 = vshll.u32 %v2989, 16
      %v3316 = vrot.slane %v3314, 5
      %v3317 = vor.u32 %v3313, %v3316
      %v3318 = vrot.slane %v3317, 4
      %v3320 = vshll.u32 %v2990, 16
      %v3322 = vrot.slane %v3320, 5
      %v3323 = vsel %vm907, %v3318, %v3322
      %v3324 = vshrl.u32 %v2990, 16
      %v3326 = vrot.slane %v3324, 4
      %v3327 = vor.u32 %v3326, %v3322
      %v3328 = vrot.slane %v3327, 4
      %v3330 = vshll.u32 %v2991, 16
      %v3332 = vrot.slane %v3330, 5
      %v3333 = vsel %vm907, %v3328, %v3332
      %v3335 = vshrl.u32 %v2992, 16
      %v3337 = vrot.slane %v3335, 4
      %v3338 = vshll.u32 %v2992, 16
      %v3340 = vrot.slane %v3338, 5
      %v3341 = vor.u32 %v3337, %v3340
      %v3342 = vrot.slane %v3341, 4
      %v3344 = vshll.u32 %v2993, 16
      %v3346 = vrot.slane %v3344, 5
      %v3347 = vsel %vm907, %v3342, %v3346
      %v3348 = vshrl.u32 %v2993, 16
      %v3350 = vrot.slane %v3348, 4
      %v3351 = vor.u32 %v3350, %v3346
      %v3352 = vrot.slane %v3351, 4
      %v3354 = vshll.u32 %v2994, 16
      %v3356 = vrot.slane %v3354, 5
      %v3357 = vsel %vm907, %v3352, %v3356
      %v3359 = vshrl.u32 %v2995, 16
      %v3361 = vrot.slane %v3359, 4
      %v3362 = vshll.u32 %v2995, 16
      %v3364 = vrot.slane %v3362, 5
      %v3365 = vor.u32 %v3361, %v3364
      %v3366 = vrot.slane %v3365, 4
      %v3368 = vshll.u32 %v2996, 16
      %v3370 = vrot.slane %v3368, 5
      %v3371 = vsel %vm907, %v3366, %v3370
      %v3372 = vshrl.u32 %v2996, 16
      %v3374 = vrot.slane %v3372, 4
      %v3375 = vor.u32 %v3374, %v3370
      %v3376 = vrot.slane %v3375, 4
      %v3378 = vshll.u32 %v2997, 16
      %v3380 = vrot.slane %v3378, 5
      %v3381 = vsel %vm907, %v3376, %v3380
      %v3382 = vunpack.c.l.b16 %v3011
      %v3383 = vunpack.c.l.b16 %v3021
      %v3384 = vunpack.c.l.b16 %v3035
      %v3385 = vunpack.c.l.b16 %v3045
      %v3386 = vunpack.c.l.b16 %v3059
      %v3387 = vunpack.c.l.b16 %v3069
      %v3388 = vunpack.c.l.b16 %v3083
      %v3389 = vunpack.c.l.b16 %v3093
      %v3390 = vunpack.c.l.b16 %v3107
      %v3391 = vunpack.c.l.b16 %v3117
      %v3392 = vunpack.c.l.b16 %v3131
      %v3393 = vunpack.c.l.b16 %v3141
      %v3394 = vunpack.c.l.b16 %v3155
      %v3395 = vunpack.c.l.b16 %v3165
      %v3396 = vunpack.c.l.b16 %v3179
      %v3397 = vunpack.c.l.b16 %v3189
      %v3398 = vunpack.c.l.b16 %v3203
      %v3399 = vunpack.c.l.b16 %v3213
      %v3400 = vunpack.c.l.b16 %v3227
      %v3401 = vunpack.c.l.b16 %v3237
      %v3402 = vunpack.c.l.b16 %v3251
      %v3403 = vunpack.c.l.b16 %v3261
      %v3404 = vunpack.c.l.b16 %v3275
      %v3405 = vunpack.c.l.b16 %v3285
      %v3406 = vunpack.c.l.b16 %v3299
      %v3407 = vunpack.c.l.b16 %v3309
      %v3408 = vunpack.c.l.b16 %v3323
      %v3409 = vunpack.c.l.b16 %v3333
      %v3410 = vunpack.c.l.b16 %v3347
      %v3411 = vunpack.c.l.b16 %v3357
      %v3412 = vunpack.c.l.b16 %v3371
      %v3413 = vunpack.c.l.b16 %v3381
      %v3414 = vpack.c.b16 %v3383, %v3382
      %v3415 = vpack.c.b16 %v3385, %v3384
      %v3416 = vpack.c.b16 %v3387, %v3386
      %v3417 = vpack.c.b16 %v3389, %v3388
      %v3418 = vpack.c.b16 %v3391, %v3390
      %v3419 = vpack.c.b16 %v3393, %v3392
      %v3420 = vpack.c.b16 %v3395, %v3394
      %v3421 = vpack.c.b16 %v3397, %v3396
      %v3422 = vpack.c.b16 %v3399, %v3398
      %v3423 = vpack.c.b16 %v3401, %v3400
      %v3424 = vpack.c.b16 %v3403, %v3402
      %v3425 = vpack.c.b16 %v3405, %v3404
      %v3426 = vpack.c.b16 %v3407, %v3406
      %v3427 = vpack.c.b16 %v3409, %v3408
      %v3428 = vpack.c.b16 %v3411, %v3410
      %v3429 = vpack.c.b16 %v3413, %v3412
      %3430 = vrot.lane.b32.xlu0 %v3414, 56
      %v3431 = vpop.permute.xlu0 %3430
      %3432 = vrot.lane.b32.xlu0 %v3415, 56
      %v3433 = vpop.permute.xlu0 %3432
      %3434 = vrot.lane.b32.xlu0 %v3416, 56
      %v3435 = vpop.permute.xlu0 %3434
      %3436 = vrot.lane.b32.xlu0 %v3417, 56
      %v3437 = vpop.permute.xlu0 %3436
      %3438 = vrot.lane.b32.xlu0 %v3418, 56
      %v3439 = vpop.permute.xlu0 %3438
      %3440 = vrot.lane.b32.xlu0 %v3419, 56
      %v3441 = vpop.permute.xlu0 %3440
      %3442 = vrot.lane.b32.xlu0 %v3420, 56
      %v3443 = vpop.permute.xlu0 %3442
      %3444 = vrot.lane.b32.xlu0 %v3421, 56
      %v3445 = vpop.permute.xlu0 %3444
      %3446 = vrot.lane.b32.xlu0 %v3422, 56
      %v3447 = vpop.permute.xlu0 %3446
      %3448 = vrot.lane.b32.xlu0 %v3423, 56
      %v3449 = vpop.permute.xlu0 %3448
      %3450 = vrot.lane.b32.xlu0 %v3424, 56
      %v3451 = vpop.permute.xlu0 %3450
      %3452 = vrot.lane.b32.xlu0 %v3425, 56
      %v3453 = vpop.permute.xlu0 %3452
      %3454 = vrot.lane.b32.xlu0 %v3426, 56
      %v3455 = vpop.permute.xlu0 %3454
      %3456 = vrot.lane.b32.xlu0 %v3427, 56
      %v3457 = vpop.permute.xlu0 %3456
      %3458 = vrot.lane.b32.xlu0 %v3428, 56
      %v3459 = vpop.permute.xlu0 %3458
      %3460 = vrot.lane.b32.xlu0 %v3429, 56
      %v3461 = vpop.permute.xlu0 %3460
      %vm3478 = vcmask 523712
      %3479 = vst.msk [vmem:[#allocation3] sm:$0xff] %vm3478, %v3431
      %3480 = vst.msk [vmem:[#allocation3 + $0x8] sm:$0xff] %vm3478, %v3433
      %3481 = vst.msk [vmem:[#allocation3 + $0x10] sm:$0xff] %vm3478, %v3435
      %3482 = vst.msk [vmem:[#allocation3 + $0x18] sm:$0xff] %vm3478, %v3437
      %3483 = vst.msk [vmem:[#allocation3 + $0x20] sm:$0xff] %vm3478, %v3439
      %3484 = vst.msk [vmem:[#allocation3 + $0x28] sm:$0xff] %vm3478, %v3441
      %3485 = vst.msk [vmem:[#allocation3 + $0x30] sm:$0xff] %vm3478, %v3443
      %3486 = vst.msk [vmem:[#allocation3 + $0x38] sm:$0xff] %vm3478, %v3445
      %3487 = vst.msk [vmem:[#allocation3 + $0x40] sm:$0xff] %vm3478, %v3447
      %3488 = vst.msk [vmem:[#allocation3 + $0x48] sm:$0xff] %vm3478, %v3449
      %3489 = vst.msk [vmem:[#allocation3 + $0x50] sm:$0xff] %vm3478, %v3451
      %3490 = vst.msk [vmem:[#allocation3 + $0x58] sm:$0xff] %vm3478, %v3453
      %3491 = vst.msk [vmem:[#allocation3 + $0x60] sm:$0xff] %vm3478, %v3455
      %3492 = vst.msk [vmem:[#allocation3 + $0x68] sm:$0xff] %vm3478, %v3457
      %3493 = vst.msk [vmem:[#allocation3 + $0x70] sm:$0xff] %vm3478, %v3459
      %3494 = vst.msk [vmem:[#allocation3 + $0x78] sm:$0xff] %vm3478, %v3461
      %v3495 = vld [vmem:[%s2772] sm:$0xe]
      %v3496 = vld [vmem:[%s2772 + $0x4] sm:$0xf]
      %v3497 = vld [vmem:[%s2772 + $0x8] sm:$0x1]
      %v3498 = vld [vmem:[%s2772 + $0xc] sm:$0xe]
      %v3499 = vld [vmem:[%s2772 + $0x10] sm:$0xf]
      %v3500 = vld [vmem:[%s2772 + $0x14] sm:$0x1]
      %v3501 = vld [vmem:[%s2772 + $0x18] sm:$0xe]
      %v3502 = vld [vmem:[%s2772 + $0x1c] sm:$0xf]
      %v3503 = vld [vmem:[%s2772 + $0x20] sm:$0x1]
      %v3504 = vld [vmem:[%s2772 + $0x24] sm:$0xe]
      %v3505 = vld [vmem:[%s2772 + $0x28] sm:$0xf]
      %v3506 = vld [vmem:[%s2772 + $0x2c] sm:$0x1]
      %v3507 = vld [vmem:[%s2772 + $0x30] sm:$0xe]
      %v3508 = vld [vmem:[%s2772 + $0x34] sm:$0xf]
      %v3509 = vld [vmem:[%s2772 + $0x38] sm:$0x1]
      %v3510 = vld [vmem:[%s2772 + $0x3c] sm:$0xe]
      %v3511 = vld [vmem:[%s2772 + $0x40] sm:$0xf]
      %v3512 = vld [vmem:[%s2772 + $0x44] sm:$0x1]
      %v3513 = vld [vmem:[%s2772 + $0x48] sm:$0xe]
      %v3514 = vld [vmem:[%s2772 + $0x4c] sm:$0xf]
      %v3515 = vld [vmem:[%s2772 + $0x50] sm:$0x1]
      %v3516 = vld [vmem:[%s2772 + $0x54] sm:$0xe]
      %v3517 = vld [vmem:[%s2772 + $0x58] sm:$0xf]
      %v3518 = vld [vmem:[%s2772 + $0x5c] sm:$0x1]
      %v3519 = vld [vmem:[%s2772 + $0x60] sm:$0xe]
      %v3520 = vld [vmem:[%s2772 + $0x64] sm:$0xf]
      %v3521 = vld [vmem:[%s2772 + $0x68] sm:$0x1]
      %v3522 = vld [vmem:[%s2772 + $0x6c] sm:$0xe]
      %v3523 = vld [vmem:[%s2772 + $0x70] sm:$0xf]
      %v3524 = vld [vmem:[%s2772 + $0x74] sm:$0x1]
      %v3525 = vld [vmem:[%s2772 + $0x78] sm:$0xe]
      %v3526 = vld [vmem:[%s2772 + $0x7c] sm:$0xf]
      %v3527 = vld [vmem:[%s2772 + $0x80] sm:$0x1]
      %v3528 = vld [vmem:[%s2772 + $0x84] sm:$0xe]
      %v3529 = vld [vmem:[%s2772 + $0x88] sm:$0xf]
      %v3530 = vld [vmem:[%s2772 + $0x8c] sm:$0x1]
      %v3531 = vld [vmem:[%s2772 + $0x90] sm:$0xe]
      %v3532 = vld [vmem:[%s2772 + $0x94] sm:$0xf]
      %v3533 = vld [vmem:[%s2772 + $0x98] sm:$0x1]
      %v3534 = vld [vmem:[%s2772 + $0x9c] sm:$0xe]
      %v3535 = vld [vmem:[%s2772 + $0xa0] sm:$0xf]
      %v3536 = vld [vmem:[%s2772 + $0xa4] sm:$0x1]
      %v3537 = vld [vmem:[%s2772 + $0xa8] sm:$0xe]
      %v3538 = vld [vmem:[%s2772 + $0xac] sm:$0xf]
      %v3539 = vld [vmem:[%s2772 + $0xb0] sm:$0x1]
      %v3540 = vld [vmem:[%s2772 + $0xb4] sm:$0xe]
      %v3541 = vld [vmem:[%s2772 + $0xb8] sm:$0xf]
      %v3542 = vld [vmem:[%s2772 + $0xbc] sm:$0x1]
      %v3591 = vrot.slane %v3495, 5
      %v3592 = vrot.slane %v3591, 4
      %v3593 = vrot.slane %v3496, 5
      %v3594 = vsel %vm1503, %v3592, %v3593
      %v3595 = vrot.slane %v3593, 4
      %v3596 = vrot.slane %v3497, 5
      %v3597 = vsel %vm1503, %v3595, %v3596
      %v3598 = vrot.slane %v3498, 5
      %v3599 = vrot.slane %v3598, 4
      %v3600 = vrot.slane %v3499, 5
      %v3601 = vsel %vm1503, %v3599, %v3600
      %v3602 = vrot.slane %v3600, 4
      %v3603 = vrot.slane %v3500, 5
      %v3604 = vsel %vm1503, %v3602, %v3603
      %v3605 = vrot.slane %v3501, 5
      %v3606 = vrot.slane %v3605, 4
      %v3607 = vrot.slane %v3502, 5
      %v3608 = vsel %vm1503, %v3606, %v3607
      %v3609 = vrot.slane %v3607, 4
      %v3610 = vrot.slane %v3503, 5
      %v3611 = vsel %vm1503, %v3609, %v3610
      %v3612 = vrot.slane %v3504, 5
      %v3613 = vrot.slane %v3612, 4
      %v3614 = vrot.slane %v3505, 5
      %v3615 = vsel %vm1503, %v3613, %v3614
      %v3616 = vrot.slane %v3614, 4
      %v3617 = vrot.slane %v3506, 5
      %v3618 = vsel %vm1503, %v3616, %v3617
      %v3619 = vrot.slane %v3507, 5
      %v3620 = vrot.slane %v3619, 4
      %v3621 = vrot.slane %v3508, 5
      %v3622 = vsel %vm1503, %v3620, %v3621
      %v3623 = vrot.slane %v3621, 4
      %v3624 = vrot.slane %v3509, 5
      %v3625 = vsel %vm1503, %v3623, %v3624
      %v3626 = vrot.slane %v3510, 5
      %v3627 = vrot.slane %v3626, 4
      %v3628 = vrot.slane %v3511, 5
      %v3629 = vsel %vm1503, %v3627, %v3628
      %v3630 = vrot.slane %v3628, 4
      %v3631 = vrot.slane %v3512, 5
      %v3632 = vsel %vm1503, %v3630, %v3631
      %v3633 = vrot.slane %v3513, 5
      %v3634 = vrot.slane %v3633, 4
      %v3635 = vrot.slane %v3514, 5
      %v3636 = vsel %vm1503, %v3634, %v3635
      %v3637 = vrot.slane %v3635, 4
      %v3638 = vrot.slane %v3515, 5
      %v3639 = vsel %vm1503, %v3637, %v3638
      %v3640 = vrot.slane %v3516, 5
      %v3641 = vrot.slane %v3640, 4
      %v3642 = vrot.slane %v3517, 5
      %v3643 = vsel %vm1503, %v3641, %v3642
      %v3644 = vrot.slane %v3642, 4
      %v3645 = vrot.slane %v3518, 5
      %v3646 = vsel %vm1503, %v3644, %v3645
      %v3647 = vrot.slane %v3519, 5
      %v3648 = vrot.slane %v3647, 4
      %v3649 = vrot.slane %v3520, 5
      %v3650 = vsel %vm1503, %v3648, %v3649
      %v3651 = vrot.slane %v3649, 4
      %v3652 = vrot.slane %v3521, 5
      %v3653 = vsel %vm1503, %v3651, %v3652
      %v3654 = vrot.slane %v3522, 5
      %v3655 = vrot.slane %v3654, 4
      %v3656 = vrot.slane %v3523, 5
      %v3657 = vsel %vm1503, %v3655, %v3656
      %v3658 = vrot.slane %v3656, 4
      %v3659 = vrot.slane %v3524, 5
      %v3660 = vsel %vm1503, %v3658, %v3659
      %v3661 = vrot.slane %v3525, 5
      %v3662 = vrot.slane %v3661, 4
      %v3663 = vrot.slane %v3526, 5
      %v3664 = vsel %vm1503, %v3662, %v3663
      %v3665 = vrot.slane %v3663, 4
      %v3666 = vrot.slane %v3527, 5
      %v3667 = vsel %vm1503, %v3665, %v3666
      %v3668 = vrot.slane %v3528, 5
      %v3669 = vrot.slane %v3668, 4
      %v3670 = vrot.slane %v3529, 5
      %v3671 = vsel %vm1503, %v3669, %v3670
      %v3672 = vrot.slane %v3670, 4
      %v3673 = vrot.slane %v3530, 5
      %v3674 = vsel %vm1503, %v3672, %v3673
      %v3675 = vrot.slane %v3531, 5
      %v3676 = vrot.slane %v3675, 4
      %v3677 = vrot.slane %v3532, 5
      %v3678 = vsel %vm1503, %v3676, %v3677
      %v3679 = vrot.slane %v3677, 4
      %v3680 = vrot.slane %v3533, 5
      %v3681 = vsel %vm1503, %v3679, %v3680
      %v3682 = vrot.slane %v3534, 5
      %v3683 = vrot.slane %v3682, 4
      %v3684 = vrot.slane %v3535, 5
      %v3685 = vsel %vm1503, %v3683, %v3684
      %v3686 = vrot.slane %v3684, 4
      %v3687 = vrot.slane %v3536, 5
      %v3688 = vsel %vm1503, %v3686, %v3687
      %v3689 = vrot.slane %v3537, 5
      %v3690 = vrot.slane %v3689, 4
      %v3691 = vrot.slane %v3538, 5
      %v3692 = vsel %vm1503, %v3690, %v3691
      %v3693 = vrot.slane %v3691, 4
      %v3694 = vrot.slane %v3539, 5
      %v3695 = vsel %vm1503, %v3693, %v3694
      %v3696 = vrot.slane %v3540, 5
      %v3697 = vrot.slane %v3696, 4
      %v3698 = vrot.slane %v3541, 5
      %v3699 = vsel %vm1503, %v3697, %v3698
      %v3700 = vrot.slane %v3698, 4
      %v3701 = vrot.slane %v3542, 5
      %v3702 = vsel %vm1503, %v3700, %v3701
      %v3703 = vunpack.c.l.b16 %v3594
      %v3704 = vunpack.c.l.b16 %v3597
      %v3705 = vunpack.c.l.b16 %v3601
      %v3706 = vunpack.c.l.b16 %v3604
      %v3707 = vunpack.c.l.b16 %v3608
      %v3708 = vunpack.c.l.b16 %v3611
      %v3709 = vunpack.c.l.b16 %v3615
      %v3710 = vunpack.c.l.b16 %v3618
      %v3711 = vunpack.c.l.b16 %v3622
      %v3712 = vunpack.c.l.b16 %v3625
      %v3713 = vunpack.c.l.b16 %v3629
      %v3714 = vunpack.c.l.b16 %v3632
      %v3715 = vunpack.c.l.b16 %v3636
      %v3716 = vunpack.c.l.b16 %v3639
      %v3717 = vunpack.c.l.b16 %v3643
      %v3718 = vunpack.c.l.b16 %v3646
      %v3719 = vunpack.c.l.b16 %v3650
      %v3720 = vunpack.c.l.b16 %v3653
      %v3721 = vunpack.c.l.b16 %v3657
      %v3722 = vunpack.c.l.b16 %v3660
      %v3723 = vunpack.c.l.b16 %v3664
      %v3724 = vunpack.c.l.b16 %v3667
      %v3725 = vunpack.c.l.b16 %v3671
      %v3726 = vunpack.c.l.b16 %v3674
      %v3727 = vunpack.c.l.b16 %v3678
      %v3728 = vunpack.c.l.b16 %v3681
      %v3729 = vunpack.c.l.b16 %v3685
      %v3730 = vunpack.c.l.b16 %v3688
      %v3731 = vunpack.c.l.b16 %v3692
      %v3732 = vunpack.c.l.b16 %v3695
      %v3733 = vunpack.c.l.b16 %v3699
      %v3734 = vunpack.c.l.b16 %v3702
      %v3735 = vpack.c.b16 %v3704, %v3703
      %v3736 = vpack.c.b16 %v3706, %v3705
      %v3737 = vpack.c.b16 %v3708, %v3707
      %v3738 = vpack.c.b16 %v3710, %v3709
      %v3739 = vpack.c.b16 %v3712, %v3711
      %v3740 = vpack.c.b16 %v3714, %v3713
      %v3741 = vpack.c.b16 %v3716, %v3715
      %v3742 = vpack.c.b16 %v3718, %v3717
      %v3743 = vpack.c.b16 %v3720, %v3719
      %v3744 = vpack.c.b16 %v3722, %v3721
      %v3745 = vpack.c.b16 %v3724, %v3723
      %v3746 = vpack.c.b16 %v3726, %v3725
      %v3747 = vpack.c.b16 %v3728, %v3727
      %v3748 = vpack.c.b16 %v3730, %v3729
      %v3749 = vpack.c.b16 %v3732, %v3731
      %v3750 = vpack.c.b16 %v3734, %v3733
      %3751 = vrot.lane.b32.xlu0 %v3735, 64
      %v3752 = vpop.permute.xlu0 %3751
      %3753 = vrot.lane.b32.xlu0 %v3736, 64
      %v3754 = vpop.permute.xlu0 %3753
      %3755 = vrot.lane.b32.xlu0 %v3737, 64
      %v3756 = vpop.permute.xlu0 %3755
      %3757 = vrot.lane.b32.xlu0 %v3738, 64
      %v3758 = vpop.permute.xlu0 %3757
      %3759 = vrot.lane.b32.xlu0 %v3739, 64
      %v3760 = vpop.permute.xlu0 %3759
      %3761 = vrot.lane.b32.xlu0 %v3740, 64
      %v3762 = vpop.permute.xlu0 %3761
      %3763 = vrot.lane.b32.xlu0 %v3741, 64
      %v3764 = vpop.permute.xlu0 %3763
      %3765 = vrot.lane.b32.xlu0 %v3742, 64
      %v3766 = vpop.permute.xlu0 %3765
      %3767 = vrot.lane.b32.xlu0 %v3743, 64
      %v3768 = vpop.permute.xlu0 %3767
      %3769 = vrot.lane.b32.xlu0 %v3744, 64
      %v3770 = vpop.permute.xlu0 %3769
      %3771 = vrot.lane.b32.xlu0 %v3745, 64
      %v3772 = vpop.permute.xlu0 %3771
      %3773 = vrot.lane.b32.xlu0 %v3746, 64
      %v3774 = vpop.permute.xlu0 %3773
      %3775 = vrot.lane.b32.xlu0 %v3747, 64
      %v3776 = vpop.permute.xlu0 %3775
      %3777 = vrot.lane.b32.xlu0 %v3748, 64
      %v3778 = vpop.permute.xlu0 %3777
      %3779 = vrot.lane.b32.xlu0 %v3749, 64
      %v3780 = vpop.permute.xlu0 %3779
      %3781 = vrot.lane.b32.xlu0 %v3750, 64
      %v3782 = vpop.permute.xlu0 %3781
      %vm3799 = vcmask 589312
      %3800 = vst.msk [vmem:[#allocation3] sm:$0xff] %vm3799, %v3752
      %3801 = vst.msk [vmem:[#allocation3 + $0x8] sm:$0xff] %vm3799, %v3754
      %3802 = vst.msk [vmem:[#allocation3 + $0x10] sm:$0xff] %vm3799, %v3756
      %3803 = vst.msk [vmem:[#allocation3 + $0x18] sm:$0xff] %vm3799, %v3758
      %3804 = vst.msk [vmem:[#allocation3 + $0x20] sm:$0xff] %vm3799, %v3760
      %3805 = vst.msk [vmem:[#allocation3 + $0x28] sm:$0xff] %vm3799, %v3762
      %3806 = vst.msk [vmem:[#allocation3 + $0x30] sm:$0xff] %vm3799, %v3764
      %3807 = vst.msk [vmem:[#allocation3 + $0x38] sm:$0xff] %vm3799, %v3766
      %3808 = vst.msk [vmem:[#allocation3 + $0x40] sm:$0xff] %vm3799, %v3768
      %3809 = vst.msk [vmem:[#allocation3 + $0x48] sm:$0xff] %vm3799, %v3770
      %3810 = vst.msk [vmem:[#allocation3 + $0x50] sm:$0xff] %vm3799, %v3772
      %3811 = vst.msk [vmem:[#allocation3 + $0x58] sm:$0xff] %vm3799, %v3774
      %3812 = vst.msk [vmem:[#allocation3 + $0x60] sm:$0xff] %vm3799, %v3776
      %3813 = vst.msk [vmem:[#allocation3 + $0x68] sm:$0xff] %vm3799, %v3778
      %3814 = vst.msk [vmem:[#allocation3 + $0x70] sm:$0xff] %vm3799, %v3780
      %3815 = vst.msk [vmem:[#allocation3 + $0x78] sm:$0xff] %vm3799, %v3782
      %v3816 = vld [vmem:[#allocation3] sm:$0xff]
      %v3817 = vld [vmem:[#allocation3 + $0x8] sm:$0xff]
      %v3818 = vld [vmem:[#allocation3 + $0x10] sm:$0xff]
      %v3819 = vld [vmem:[#allocation3 + $0x18] sm:$0xff]
      %v3820 = vld [vmem:[#allocation3 + $0x20] sm:$0xff]
      %v3821 = vld [vmem:[#allocation3 + $0x28] sm:$0xff]
      %v3822 = vld [vmem:[#allocation3 + $0x30] sm:$0xff]
      %v3823 = vld [vmem:[#allocation3 + $0x38] sm:$0xff]
      %v3824 = vld [vmem:[#allocation3 + $0x40] sm:$0xff]
      %v3825 = vld [vmem:[#allocation3 + $0x48] sm:$0xff]
      %v3826 = vld [vmem:[#allocation3 + $0x50] sm:$0xff]
      %v3827 = vld [vmem:[#allocation3 + $0x58] sm:$0xff]
      %v3828 = vld [vmem:[#allocation3 + $0x60] sm:$0xff]
      %v3829 = vld [vmem:[#allocation3 + $0x68] sm:$0xff]
      %v3830 = vld [vmem:[#allocation3 + $0x70] sm:$0xff]
      %v3831 = vld [vmem:[#allocation3 + $0x78] sm:$0xff]
      %v3832 = vld [vmem:[%s1] sm:$0xf]
      %v3833 = vld [vmem:[%s1 + $0x4] sm:$0xf]
      %v3834 = vld [vmem:[%s1 + $0x8] sm:$0xf]
      %v3835 = vld [vmem:[%s1 + $0xc] sm:$0xf]
      %v3836 = vld [vmem:[%s1 + $0x10] sm:$0xf]
      %v3837 = vld [vmem:[%s1 + $0x14] sm:$0xf]
      %v3838 = vld [vmem:[%s1 + $0x18] sm:$0xf]
      %v3839 = vld [vmem:[%s1 + $0x1c] sm:$0xf]
      %v3840 = vld [vmem:[%s1 + $0x20] sm:$0xf]
      %v3850 = vunpack.c.l.b16 %v3832
      %v3851 = vunpack.c.l.b16 %v3833
      %v3852 = vunpack.c.l.b16 %v3834
      %v3853 = vunpack.c.l.b16 %v3835
      %v3854 = vunpack.c.l.b16 %v3836
      %v3855 = vunpack.c.l.b16 %v3837
      %v3856 = vunpack.c.l.b16 %v3838
      %v3857 = vunpack.c.l.b16 %v3839
      %v3858 = vunpack.c.l.b16 %v3840
      %v3859 = vpack.c.b16 %v3851, %v3850
      %v3860 = vpack.c.b16 %v3853, %v3852
      %v3861 = vpack.c.b16 %v3855, %v3854
      %v3862 = vpack.c.b16 %v3857, %v3856
      %v3863 = vpack.c.b16 %v3858, %v3858
      %vm3868 = vcmask 588800
      %v3870 = vsel %vm3868, %v3816, 0
      %v3873 = vsel %vm3868, %v3817, 0
      %v3876 = vsel %vm3868, %v3818, 0
      %v3879 = vsel %vm3868, %v3819, 0
      %v3882 = vsel %vm3868, %v3820, 0
      %v3885 = vsel %vm3868, %v3821, 0
      %v3888 = vsel %vm3868, %v3822, 0
      %v3891 = vsel %vm3868, %v3823, 0
      %v3894 = vsel %vm3868, %v3824, 0
      %v3897 = vsel %vm3868, %v3825, 0
      %v3900 = vsel %vm3868, %v3826, 0
      %v3903 = vsel %vm3868, %v3827, 0
      %v3906 = vsel %vm3868, %v3828, 0
      %v3909 = vsel %vm3868, %v3829, 0
      %v3912 = vsel %vm3868, %v3830, 0
      %v3915 = vsel %vm3868, %v3831, 0
      %vm3917 = vcmask 1043456
      %v3919 = vsel %vm3917, %v3863, 0
      %3921 = vmatprep.subr.bf16.mxu0 0
      %3922 = vmatpush1.bf16.msra.mxu0 %v3859
      %3923 = vmatprep.subr.bf16.mxu0 0
      %3924 = vmatpush1.bf16.msra.mxu0 %v3860
      %3925 = vmatprep.subr.bf16.mxu0 0
      %3926 = vmatpush1.bf16.msra.mxu0 %v3861
      %3927 = vmatprep.subr.bf16.mxu0 0
      %3928 = vmatpush1.bf16.msra.mxu0 %v3862
      %3929 = vmatprep.subr.bf16.mxu0 0
      %3930 = vmatpush1.bf16.msra.mxu0 %v3919
      %3931 = vmatprep.subr.bf16.mxu0 0
      %3932 = vmatpush1.bf16.msra.mxu0 0
      %3933 = vmatprep.subr.bf16.mxu0 0
      %3934 = vmatpush1.bf16.msra.mxu0 0
      %3935 = vmatprep.subr.bf16.mxu0 0
      %3936 = vmatpush1.bf16.msra.mxu0 0
      %3937 = vmatprep.subr.bf16.mxu0 0
      %3938 = vmatpush1.bf16.msra.mxu0 0
      %3939 = vmatprep.subr.bf16.mxu0 0
      %3940 = vmatpush1.bf16.msra.mxu0 0
      %3941 = vmatprep.subr.bf16.mxu0 0
      %3942 = vmatpush1.bf16.msra.mxu0 0
      %3943 = vmatprep.subr.bf16.mxu0 0
      %3944 = vmatpush1.bf16.msra.mxu0 0
      %3945 = vmatprep.subr.bf16.mxu0 0
      %3946 = vmatpush1.bf16.msra.mxu0 0
      %3947 = vmatprep.subr.bf16.mxu0 0
      %3948 = vmatpush1.bf16.msra.mxu0 0
      %3949 = vmatprep.subr.bf16.mxu0 0
      %3950 = vmatpush1.bf16.msra.mxu0 0
      %3951 = vmatprep.subr.bf16.mxu0 0
      %3952 = vmatpush1.bf16.msra.mxu0 0
      %3953 = vmatprep.mubr.bf16.mxu0 0
      %3954 = vmatmul.mubr.bf16.gmra.mrb[0].mxu0 %v3870
      %v3955 = vpop.f32.mrb[0].mxu0
      %v3956 = vadd.f32 0.0, %v3955
      %v3957 = vpop.f32.mrb[0].mxu0
      %v3958 = vpop.f32.mrb[0].mxu0
      %v3959 = vadd.f32 0.0, %v3958
      %v3960 = vpop.f32.mrb[0].mxu0
      %3961 = vmatprep.mubr.bf16.mxu0 0
      %3962 = vmatmul.mubr.bf16.gmra.mrb[0].mxu0 %v3873
      %v3963 = vpop.f32.mrb[0].mxu0
      %v3964 = vadd.f32 0.0, %v3963
      %v3965 = vpop.f32.mrb[0].mxu0
      %v3966 = vpop.f32.mrb[0].mxu0
      %v3967 = vadd.f32 0.0, %v3966
      %v3968 = vpop.f32.mrb[0].mxu0
      %3969 = vmatprep.mubr.bf16.mxu0 0
      %3970 = vmatmul.mubr.bf16.gmra.mrb[0].mxu0 %v3876
      %v3971 = vpop.f32.mrb[0].mxu0
      %v3972 = vadd.f32 0.0, %v3971
      %v3973 = vpop.f32.mrb[0].mxu0
      %v3974 = vpop.f32.mrb[0].mxu0
      %v3975 = vadd.f32 0.0, %v3974
      %v3976 = vpop.f32.mrb[0].mxu0
      %3977 = vmatprep.mubr.bf16.mxu0 0
      %3978 = vmatmul.mubr.bf16.gmra.mrb[0].mxu0 %v3879
      %v3979 = vpop.f32.mrb[0].mxu0
      %v3980 = vadd.f32 0.0, %v3979
      %v3981 = vpop.f32.mrb[0].mxu0
      %v3982 = vpop.f32.mrb[0].mxu0
      %v3983 = vadd.f32 0.0, %v3982
      %v3984 = vpop.f32.mrb[0].mxu0
      %3985 = vmatprep.mubr.bf16.mxu0 0
      %3986 = vmatmul.mubr.bf16.gmra.mrb[0].mxu0 %v3882
      %v3987 = vpop.f32.mrb[0].mxu0
      %v3988 = vadd.f32 0.0, %v3987
      %v3989 = vpop.f32.mrb[0].mxu0
      %v3990 = vpop.f32.mrb[0].mxu0
      %v3991 = vadd.f32 0.0, %v3990
      %v3992 = vpop.f32.mrb[0].mxu0
      %3993 = vmatprep.mubr.bf16.mxu0 0
      %3994 = vmatmul.mubr.bf16.gmra.mrb[0].mxu0 %v3885
      %v3995 = vpop.f32.mrb[0].mxu0
      %v3996 = vadd.f32 0.0, %v3995
      %v3997 = vpop.f32.mrb[0].mxu0
      %v3998 = vpop.f32.mrb[0].mxu0
      %v3999 = vadd.f32 0.0, %v3998
      %v4000 = vpop.f32.mrb[0].mxu0
      %4001 = vmatprep.mubr.bf16.mxu0 0
      %4002 = vmatmul.mubr.bf16.gmra.mrb[0].mxu0 %v3888
      %v4003 = vpop.f32.mrb[0].mxu0
      %v4004 = vadd.f32 0.0, %v4003
      %v4005 = vpop.f32.mrb[0].mxu0
      %v4006 = vpop.f32.mrb[0].mxu0
      %v4007 = vadd.f32 0.0, %v4006
      %v4008 = vpop.f32.mrb[0].mxu0
      %4009 = vmatprep.mubr.bf16.mxu0 0
      %4010 = vmatmul.mubr.bf16.gmra.mrb[0].mxu0 %v3891
      %v4011 = vpop.f32.mrb[0].mxu0
      %v4012 = vadd.f32 0.0, %v4011
      %v4013 = vpop.f32.mrb[0].mxu0
      %v4014 = vpop.f32.mrb[0].mxu0
      %v4015 = vadd.f32 0.0, %v4014
      %v4016 = vpop.f32.mrb[0].mxu0
      %4017 = vmatprep.mubr.bf16.mxu0 0
      %4018 = vmatmul.mubr.bf16.gmra.mrb[0].mxu0 %v3894
      %v4019 = vpop.f32.mrb[0].mxu0
      %v4020 = vadd.f32 0.0, %v4019
      %v4021 = vpop.f32.mrb[0].mxu0
      %v4022 = vpop.f32.mrb[0].mxu0
      %v4023 = vadd.f32 0.0, %v4022
      %v4024 = vpop.f32.mrb[0].mxu0
      %4025 = vmatprep.mubr.bf16.mxu0 0
      %4026 = vmatmul.mubr.bf16.gmra.mrb[0].mxu0 %v3897
      %v4027 = vpop.f32.mrb[0].mxu0
      %v4028 = vadd.f32 0.0, %v4027
      %v4029 = vpop.f32.mrb[0].mxu0
      %v4030 = vpop.f32.mrb[0].mxu0
      %v4031 = vadd.f32 0.0, %v4030
      %v4032 = vpop.f32.mrb[0].mxu0
      %4033 = vmatprep.mubr.bf16.mxu0 0
      %4034 = vmatmul.mubr.bf16.gmra.mrb[0].mxu0 %v3900
      %v4035 = vpop.f32.mrb[0].mxu0
      %v4036 = vadd.f32 0.0, %v4035
      %v4037 = vpop.f32.mrb[0].mxu0
      %v4038 = vpop.f32.mrb[0].mxu0
      %v4039 = vadd.f32 0.0, %v4038
      %v4040 = vpop.f32.mrb[0].mxu0
      %4041 = vmatprep.mubr.bf16.mxu0 0
      %4042 = vmatmul.mubr.bf16.gmra.mrb[0].mxu0 %v3903
      %v4043 = vpop.f32.mrb[0].mxu0
      %v4044 = vadd.f32 0.0, %v4043
      %v4045 = vpop.f32.mrb[0].mxu0
      %v4046 = vpop.f32.mrb[0].mxu0
      %v4047 = vadd.f32 0.0, %v4046
      %v4048 = vpop.f32.mrb[0].mxu0
      %4049 = vmatprep.mubr.bf16.mxu0 0
      %4050 = vmatmul.mubr.bf16.gmra.mrb[0].mxu0 %v3906
      %v4051 = vpop.f32.mrb[0].mxu0
      %v4052 = vadd.f32 0.0, %v4051
      %v4053 = vpop.f32.mrb[0].mxu0
      %v4054 = vpop.f32.mrb[0].mxu0
      %v4055 = vadd.f32 0.0, %v4054
      %v4056 = vpop.f32.mrb[0].mxu0
      %4057 = vmatprep.mubr.bf16.mxu0 0
      %4058 = vmatmul.mubr.bf16.gmra.mrb[0].mxu0 %v3909
      %v4059 = vpop.f32.mrb[0].mxu0
      %v4060 = vadd.f32 0.0, %v4059
      %v4061 = vpop.f32.mrb[0].mxu0
      %v4062 = vpop.f32.mrb[0].mxu0
      %v4063 = vadd.f32 0.0, %v4062
      %v4064 = vpop.f32.mrb[0].mxu0
      %4065 = vmatprep.mubr.bf16.mxu0 0
      %4066 = vmatmul.mubr.bf16.gmra.mrb[0].mxu0 %v3912
      %v4067 = vpop.f32.mrb[0].mxu0
      %v4068 = vadd.f32 0.0, %v4067
      %v4069 = vpop.f32.mrb[0].mxu0
      %v4070 = vpop.f32.mrb[0].mxu0
      %v4071 = vadd.f32 0.0, %v4070
      %v4072 = vpop.f32.mrb[0].mxu0
      %4073 = vmatprep.mubr.bf16.mxu0 0
      %4074 = vmatmul.mubr.bf16.gmra.mrb[0].mxu0 %v3915
      %v4075 = vpop.f32.mrb[0].mxu0
      %v4076 = vadd.f32 0.0, %v4075
      %v4077 = vpop.f32.mrb[0].mxu0
      %v4078 = vpop.f32.mrb[0].mxu0
      %v4079 = vadd.f32 0.0, %v4078
      %v4080 = vpop.f32.mrb[0].mxu0
      %4081 = vdwg.mxu0
      %4082 = vst.msk [vmem:[%s177] sm:$0xff] %vm840, %v3956
      %4083 = vst.msk [vmem:[%s177 + $0x8] sm:$0xff] %vm840, %v3959
      %4084 = vst.msk [vmem:[%s177 + $0x10] sm:$0xff] %vm840, %v3964
      %4085 = vst.msk [vmem:[%s177 + $0x18] sm:$0xff] %vm840, %v3967
      %4086 = vst.msk [vmem:[%s177 + $0x20] sm:$0xff] %vm840, %v3972
      %4087 = vst.msk [vmem:[%s177 + $0x28] sm:$0xff] %vm840, %v3975
      %4088 = vst.msk [vmem:[%s177 + $0x30] sm:$0xff] %vm840, %v3980
      %4089 = vst.msk [vmem:[%s177 + $0x38] sm:$0xff] %vm840, %v3983
      %4090 = vst.msk [vmem:[%s177 + $0x40] sm:$0xff] %vm840, %v3988
      %4091 = vst.msk [vmem:[%s177 + $0x48] sm:$0xff] %vm840, %v3991
      %4092 = vst.msk [vmem:[%s177 + $0x50] sm:$0xff] %vm840, %v3996
      %4093 = vst.msk [vmem:[%s177 + $0x58] sm:$0xff] %vm840, %v3999
      %4094 = vst.msk [vmem:[%s177 + $0x60] sm:$0xff] %vm840, %v4004
      %4095 = vst.msk [vmem:[%s177 + $0x68] sm:$0xff] %vm840, %v4007
      %4096 = vst.msk [vmem:[%s177 + $0x70] sm:$0xff] %vm840, %v4012
      %4097 = vst.msk [vmem:[%s177 + $0x78] sm:$0xff] %vm840, %v4015
      %4098 = vst.msk [vmem:[%s177 + $0x80] sm:$0xff] %vm840, %v4020
      %4099 = vst.msk [vmem:[%s177 + $0x88] sm:$0xff] %vm840, %v4023
      %4100 = vst.msk [vmem:[%s177 + $0x90] sm:$0xff] %vm840, %v4028
      %4101 = vst.msk [vmem:[%s177 + $0x98] sm:$0xff] %vm840, %v4031
      %4102 = vst.msk [vmem:[%s177 + $0xa0] sm:$0xff] %vm840, %v4036
      %4103 = vst.msk [vmem:[%s177 + $0xa8] sm:$0xff] %vm840, %v4039
      %4104 = vst.msk [vmem:[%s177 + $0xb0] sm:$0xff] %vm840, %v4044
      %4105 = vst.msk [vmem:[%s177 + $0xb8] sm:$0xff] %vm840, %v4047
      %4106 = vst.msk [vmem:[%s177 + $0xc0] sm:$0xff] %vm840, %v4052
      %4107 = vst.msk [vmem:[%s177 + $0xc8] sm:$0xff] %vm840, %v4055
      %4108 = vst.msk [vmem:[%s177 + $0xd0] sm:$0xff] %vm840, %v4060
      %4109 = vst.msk [vmem:[%s177 + $0xd8] sm:$0xff] %vm840, %v4063
      %4110 = vst.msk [vmem:[%s177 + $0xe0] sm:$0xff] %vm840, %v4068
      %4111 = vst.msk [vmem:[%s177 + $0xe8] sm:$0xff] %vm840, %v4071
      %4112 = vst.msk [vmem:[%s177 + $0xf0] sm:$0xff] %vm840, %v4076
      %4113 = vst.msk [vmem:[%s177 + $0xf8] sm:$0xff] %vm840, %v4079
      %v4114 = vsel %vm840, %v3956, 0.0
      %v4115 = vsel %vm840, %v3959, 0.0
      %v4116 = vadd.f32 %v4114, %v4115
      %v4117 = vsel %vm840, %v3964, 0.0
      %v4118 = vadd.f32 %v4116, %v4117
      %v4119 = vsel %vm840, %v3967, 0.0
      %v4120 = vadd.f32 %v4118, %v4119
      %v4121 = vsel %vm840, %v3972, 0.0
      %v4122 = vadd.f32 %v4120, %v4121
      %v4123 = vsel %vm840, %v3975, 0.0
      %v4124 = vadd.f32 %v4122, %v4123
      %v4125 = vsel %vm840, %v3980, 0.0
      %v4126 = vadd.f32 %v4124, %v4125
      %v4127 = vsel %vm840, %v3983, 0.0
      %v4128 = vadd.f32 %v4126, %v4127
      %v4129 = vsel %vm840, %v3988, 0.0
      %v4130 = vadd.f32 %v4128, %v4129
      %v4131 = vsel %vm840, %v3991, 0.0
      %v4132 = vadd.f32 %v4130, %v4131
      %v4133 = vsel %vm840, %v3996, 0.0
      %v4134 = vadd.f32 %v4132, %v4133
      %v4135 = vsel %vm840, %v3999, 0.0
      %v4136 = vadd.f32 %v4134, %v4135
      %v4137 = vsel %vm840, %v4004, 0.0
      %v4138 = vadd.f32 %v4136, %v4137
      %v4139 = vsel %vm840, %v4007, 0.0
      %v4140 = vadd.f32 %v4138, %v4139
      %v4141 = vsel %vm840, %v4012, 0.0
      %v4142 = vadd.f32 %v4140, %v4141
      %v4143 = vsel %vm840, %v4015, 0.0
      %v4144 = vadd.f32 %v4142, %v4143
      %v4145 = vsel %vm840, %v4020, 0.0
      %v4146 = vadd.f32 %v4144, %v4145
      %v4147 = vsel %vm840, %v4023, 0.0
      %v4148 = vadd.f32 %v4146, %v4147
      %v4149 = vsel %vm840, %v4028, 0.0
      %v4150 = vadd.f32 %v4148, %v4149
      %v4151 = vsel %vm840, %v4031, 0.0
      %v4152 = vadd.f32 %v4150, %v4151
      %v4153 = vsel %vm840, %v4036, 0.0
      %v4154 = vadd.f32 %v4152, %v4153
      %v4155 = vsel %vm840, %v4039, 0.0
      %v4156 = vadd.f32 %v4154, %v4155
      %v4157 = vsel %vm840, %v4044, 0.0
      %v4158 = vadd.f32 %v4156, %v4157
      %v4159 = vsel %vm840, %v4047, 0.0
      %v4160 = vadd.f32 %v4158, %v4159
      %v4161 = vsel %vm840, %v4052, 0.0
      %v4162 = vadd.f32 %v4160, %v4161
      %v4163 = vsel %vm840, %v4055, 0.0
      %v4164 = vadd.f32 %v4162, %v4163
      %v4165 = vsel %vm840, %v4060, 0.0
      %v4166 = vadd.f32 %v4164, %v4165
      %v4167 = vsel %vm840, %v4063, 0.0
      %v4168 = vadd.f32 %v4166, %v4167
      %v4169 = vsel %vm840, %v4068, 0.0
      %v4170 = vadd.f32 %v4168, %v4169
      %v4171 = vsel %vm840, %v4071, 0.0
      %v4172 = vadd.f32 %v4170, %v4171
      %v4173 = vsel %vm840, %v4076, 0.0
      %v4174 = vadd.f32 %v4172, %v4173
      %v4175 = vsel %vm840, %v4079, 0.0
      %v4176 = vadd.f32 %v4174, %v4175
      %v4177 = vrot.slane %v4176, 4
      %v4178 = vadd.f32 %v4176, %v4177
      %v4179 = vrot.slane %v4178, 2
      %v4180 = vadd.f32 %v4178, %v4179
      %v4181 = vrot.slane %v4180, 1
      %v4182 = vadd.f32 %v4180, %v4181
      %v4183 = vmul.f32 %v3956, %v3956
      %v4184 = vmul.f32 %v3959, %v3959
      %v4185 = vmul.f32 %v3964, %v3964
      %v4186 = vmul.f32 %v3967, %v3967
      %v4187 = vmul.f32 %v3972, %v3972
      %v4188 = vmul.f32 %v3975, %v3975
      %v4189 = vmul.f32 %v3980, %v3980
      %v4190 = vmul.f32 %v3983, %v3983
      %v4191 = vmul.f32 %v3988, %v3988
      %v4192 = vmul.f32 %v3991, %v3991
      %v4193 = vmul.f32 %v3996, %v3996
      %v4194 = vmul.f32 %v3999, %v3999
      %v4195 = vmul.f32 %v4004, %v4004
      %v4196 = vmul.f32 %v4007, %v4007
      %v4197 = vmul.f32 %v4012, %v4012
      %v4198 = vmul.f32 %v4015, %v4015
      %v4199 = vmul.f32 %v4020, %v4020
      %v4200 = vmul.f32 %v4023, %v4023
      %v4201 = vmul.f32 %v4028, %v4028
      %v4202 = vmul.f32 %v4031, %v4031
      %v4203 = vmul.f32 %v4036, %v4036
      %v4204 = vmul.f32 %v4039, %v4039
      %v4205 = vmul.f32 %v4044, %v4044
      %v4206 = vmul.f32 %v4047, %v4047
      %v4207 = vmul.f32 %v4052, %v4052
      %v4208 = vmul.f32 %v4055, %v4055
      %v4209 = vmul.f32 %v4060, %v4060
      %v4210 = vmul.f32 %v4063, %v4063
      %v4211 = vmul.f32 %v4068, %v4068
      %v4212 = vmul.f32 %v4071, %v4071
      %v4213 = vmul.f32 %v4076, %v4076
      %v4214 = vmul.f32 %v4079, %v4079
      %v4215 = vsel %vm840, %v4183, 0.0
      %v4216 = vsel %vm840, %v4184, 0.0
      %v4217 = vadd.f32 %v4215, %v4216
      %v4218 = vsel %vm840, %v4185, 0.0
      %v4219 = vadd.f32 %v4217, %v4218
      %v4220 = vsel %vm840, %v4186, 0.0
      %v4221 = vadd.f32 %v4219, %v4220
      %v4222 = vsel %vm840, %v4187, 0.0
      %v4223 = vadd.f32 %v4221, %v4222
      %v4224 = vsel %vm840, %v4188, 0.0
      %v4225 = vadd.f32 %v4223, %v4224
      %v4226 = vsel %vm840, %v4189, 0.0
      %v4227 = vadd.f32 %v4225, %v4226
      %v4228 = vsel %vm840, %v4190, 0.0
      %v4229 = vadd.f32 %v4227, %v4228
      %v4230 = vsel %vm840, %v4191, 0.0
      %v4231 = vadd.f32 %v4229, %v4230
      %v4232 = vsel %vm840, %v4192, 0.0
      %v4233 = vadd.f32 %v4231, %v4232
      %v4234 = vsel %vm840, %v4193, 0.0
      %v4235 = vadd.f32 %v4233, %v4234
      %v4236 = vsel %vm840, %v4194, 0.0
      %v4237 = vadd.f32 %v4235, %v4236
      %v4238 = vsel %vm840, %v4195, 0.0
      %v4239 = vadd.f32 %v4237, %v4238
      %v4240 = vsel %vm840, %v4196, 0.0
      %v4241 = vadd.f32 %v4239, %v4240
      %v4242 = vsel %vm840, %v4197, 0.0
      %v4243 = vadd.f32 %v4241, %v4242
      %v4244 = vsel %vm840, %v4198, 0.0
      %v4245 = vadd.f32 %v4243, %v4244
      %v4246 = vsel %vm840, %v4199, 0.0
      %v4247 = vadd.f32 %v4245, %v4246
      %v4248 = vsel %vm840, %v4200, 0.0
      %v4249 = vadd.f32 %v4247, %v4248
      %v4250 = vsel %vm840, %v4201, 0.0
      %v4251 = vadd.f32 %v4249, %v4250
      %v4252 = vsel %vm840, %v4202, 0.0
      %v4253 = vadd.f32 %v4251, %v4252
      %v4254 = vsel %vm840, %v4203, 0.0
      %v4255 = vadd.f32 %v4253, %v4254
      %v4256 = vsel %vm840, %v4204, 0.0
      %v4257 = vadd.f32 %v4255, %v4256
      %v4258 = vsel %vm840, %v4205, 0.0
      %v4259 = vadd.f32 %v4257, %v4258
      %v4260 = vsel %vm840, %v4206, 0.0
      %v4261 = vadd.f32 %v4259, %v4260
      %v4262 = vsel %vm840, %v4207, 0.0
      %v4263 = vadd.f32 %v4261, %v4262
      %v4264 = vsel %vm840, %v4208, 0.0
      %v4265 = vadd.f32 %v4263, %v4264
      %v4266 = vsel %vm840, %v4209, 0.0
      %v4267 = vadd.f32 %v4265, %v4266
      %v4268 = vsel %vm840, %v4210, 0.0
      %v4269 = vadd.f32 %v4267, %v4268
      %v4270 = vsel %vm840, %v4211, 0.0
      %v4271 = vadd.f32 %v4269, %v4270
      %v4272 = vsel %vm840, %v4212, 0.0
      %v4273 = vadd.f32 %v4271, %v4272
      %v4274 = vsel %vm840, %v4213, 0.0
      %v4275 = vadd.f32 %v4273, %v4274
      %v4276 = vsel %vm840, %v4214, 0.0
      %v4277 = vadd.f32 %v4275, %v4276
      %v4278 = vrot.slane %v4277, 4
      %v4279 = vadd.f32 %v4277, %v4278
      %v4280 = vrot.slane %v4279, 2
      %v4281 = vadd.f32 %v4279, %v4280
      %v4282 = vrot.slane %v4281, 1
      %v4283 = vadd.f32 %v4281, %v4282
      %vm4284 = vcmask 1040384
      %v4285 = vsel %vm4284, %v4182, %v4283
      %vm4286 = vcmask 58368
      %4287 = vst.msk [vmem:[%s181] sm:$0x3] %vm4286, %v4285
      %p4288 = scmp.lt.s32.totalorder %s15, 1
      %s4289 = scalar_select %p4288, %s15, 1
      %s4290 = smul.addr %s4289, 32
      %s4291 = smul.addr %s4290, 8
      %s4292 = scalar_lea.vmem %s2, %s4291
      %p4293 = scmp.lt.s32.totalorder %s15, 1
      %s4294 = scalar_select %p4293, %s15, 1
      %s4295 = smul.addr %s4294, 2
      %s4296 = scalar_lea.vmem %s3, %s4295
      // Predicated region
      $region29: #{basic_block_forward.7} parent=27 // pred_check
        %p4297 = pneg %p80
      $region30: #{basic_block_forward.7} parent=27 // pred_check_branch
        %4299 = sbr.rel (%p4297) target = $region32
      $region31: #{basic_block_forward.7} parent=27 // pred_region
        _
      $region32: #{basic_block_forward.7} parent=27 // pred_fallthru
        _
      // Predicated region
      $region33: #{basic_block_forward.7} parent=27 // pred_check
        %p4300 = pneg %p106
      $region34: #{basic_block_forward.7} parent=27 // pred_check_branch
        %4302 = sbr.rel (%p4300) target = $region36
      $region35: #{basic_block_forward.7} parent=27 // pred_region
        _
      $region36: #{basic_block_forward.7} parent=27 // pred_fallthru
        _
    $region28: #{basic_block_forward.7} parent=5 // pred_fallthru
      _
    %p4303 = scmp.le.s32.totalorder 2, %s10
    // Predicated region
    $region37: #{basic_block_forward.7} parent=5 // pred_check
      %p4304 = pneg %p4303
    $region38: #{basic_block_forward.7} parent=5 // pred_check_branch
      %4306 = sbr.rel (%p4304) target = $region40
    $region39: #{basic_block_forward.7} parent=5 // pred_region
      %s4307 = ssub.s32 %s10, 2
      // Predicated region
      $region41: #{basic_block_forward.7} parent=39 // pred_check
        %p4308 = pneg %p86
      $region42: #{basic_block_forward.7} parent=39 // pred_check_branch
        %4310 = sbr.rel (%p4308) target = $region44
      $region43: #{basic_block_forward.7} parent=39 // pred_region
        %p4311 = scmp.lt.s32.totalorder %s16, 1
        %s4312 = scalar_select %p4311, %s16, 1
        %s4313 = smul.addr %s4312, 32
        %s4314 = smul.addr %s4313, 8
        %s4315 = scalar_lea.vmem %s2, %s4314
      $region44: #{basic_block_forward.7} parent=39 // pred_fallthru
        _
      // Predicated region
      $region45: #{basic_block_forward.7} parent=39 // pred_check
        %p4316 = pneg %p112
      $region46: #{basic_block_forward.7} parent=39 // pred_check_branch
        %4318 = sbr.rel (%p4316) target = $region48
      $region47: #{basic_block_forward.7} parent=39 // pred_region
        %p4319 = scmp.lt.s32.totalorder %s16, 1
        %s4320 = scalar_select %p4319, %s16, 1
        %s4321 = smul.addr %s4320, 2
        %s4322 = scalar_lea.vmem %s3, %s4321
      $region48: #{basic_block_forward.7} parent=39 // pred_fallthru
        _
    $region40: #{basic_block_forward.7} parent=5 // pred_fallthru
      _
  $region6: #{basic_block_forward.7} parent=0 // loop_footer
    %s14 = sadd.s32 1, %s10
  $region7: #{basic_block_forward.7} parent=0 // loop_footer_branch
    %9 = sbr.rel target = $region3
  $region8: #{basic_block_forward.7} parent=0 // loop_exit
    _

</llo_original>
